<compile_context>
chip_gen: v6e
topology: v6e:2x2x1
jax: 0.10.0
libtpu: 0.0.40
codegen_flags: <defaults>
</compile_context>

<pallas_src>
import functools

import jax
import jax.numpy as jnp
from jax import lax
from jax.experimental import pallas as pl
from jax.experimental.pallas import tpu as pltpu


_KS = 7          # final conv kernel size
_TR_MAX = 32     # output rows per grid step in the 7x7 conv
_IN_EPS = 1e-5


def _vmem_limit_bytes():
    try:
        cap = int(pltpu.get_tpu_info().vmem_capacity_bytes)
    except Exception:
        cap = 64 * 1024 * 1024
    # ~62% of physical: ~40 MiB on v7x (64 MiB/TC), ~80 MiB on v5e/v6e (128 MiB)
    return max(32 * 1024 * 1024, (cap * 5) // 8)


# ----------------------------------------------------------------------------
# ConvTranspose2d(3, s=2, p=1, op=1) + InstanceNorm2d + ReLU, fused per image.
# ----------------------------------------------------------------------------
def _subpixel_weight_bias(w_t, b):
    """Fold ConvTranspose2d weights into a (4*Cin, 4*Cout) matrix acting on the
    2x2 (bottom/right zero-padded) input window.  Rows ordered (dy, dx, ci),
    columns ordered (py, px, co)."""
    cin, cf = w_t.shape[0], w_t.shape[1]
    kmap = {(0, 0): 1, (1, 0): 2, (1, 1): 0}   # (output phase, input delta) -> tap
    wc = jnp.zeros((2, 2, cin, 2, 2, cf), w_t.dtype)   # (dy, dx, ci, py, px, co)
    for py in range(2):
        for px in range(2):
            for dy in range(2):
                for dx in range(2):
                    ky = kmap.get((py, dy))
                    kx = kmap.get((px, dx))
                    if ky is None or kx is None:
                        continue
                    wc = wc.at[dy, dx, :, py, px, :].set(w_t[:, :, ky, kx])
    wc = wc.reshape(4 * cin, 4 * cf)
    bc = jnp.tile(b, 4)                                # same bias for every phase
    return wc, bc


def _convt_in_relu_kernel(x_ref, w_ref, b_ref, o_ref, *, h, w, cin, cf):
    """Fused ConvT(3,s2,p1,op1) + InstanceNorm2d(affine=False) + ReLU, one image.

    x_ref: (1, h, w, cin)       input image
    w_ref: (4*cin, 4*cf)        folded sub-pixel weights, columns (py, px, co)
    b_ref: (1, 4*cf) f32        bias tiled per phase
    o_ref: (1, h, 2, w, 2*cf)   reinterprets (free, row-major) as (2h, 2w, cf)
    """
    mdt = w_ref.dtype
    x = x_ref[0].astype(mdt)                                   # (h, w, cin)
    # zero-pad one bottom row / one right col (dy=1 / dx=1 taps at the edge)
    x = jnp.concatenate([x, jnp.zeros((1, w, cin), mdt)], axis=0)
    x = jnp.concatenate([x, jnp.zeros((h + 1, 1, cin), mdt)], axis=1)
    # 2x2 window gather; column order (dy, dx, ci) matches the weight rows
    patches = jnp.concatenate(
        [x[dy:dy + h, dx:dx + w, :] for dy in (0, 1) for dx in (0, 1)],
        axis=-1,
    ).reshape(h * w, 4 * cin)
    y = jnp.dot(patches, w_ref[...], preferred_element_type=jnp.float32)
    y = y + b_ref[...]                                         # (h*w, 4*cf) f32

    # InstanceNorm stats: each channel co appears in 4 phase columns, so the
    # per-channel sums are the 4-way folded column sums.  Centered two-pass
    # variance (everything is already in VMEM -> no extra HBM traffic).
    inv_cnt = 1.0 / float(4 * h * w)
    s = jnp.sum(y, axis=0, keepdims=True)                      # (1, 4*cf)
    mean_c = (s[:, 0 * cf:1 * cf] + s[:, 1 * cf:2 * cf]
              + s[:, 2 * cf:3 * cf] + s[:, 3 * cf:4 * cf]) * inv_cnt
    mean4 = jnp.concatenate([mean_c] * 4, axis=1)              # (1, 4*cf)
    d = y - mean4
    ss = jnp.sum(d * d, axis=0, keepdims=True)
    var_c = (ss[:, 0 * cf:1 * cf] + ss[:, 1 * cf:2 * cf]
             + ss[:, 2 * cf:3 * cf] + ss[:, 3 * cf:4 * cf]) * inv_cnt
    rstd4 = jnp.concatenate([lax.rsqrt(var_c + _IN_EPS)] * 4, axis=1)
    yn = jnp.maximum(d * rstd4, 0.0)                           # (h*w, 4*cf)

    # pixel shuffle folded into the store: column half py -> output sub-row py
    for py in range(2):
        o_ref[0, :, py, :, :] = (
            yn[:, py * 2 * cf:(py + 1) * 2 * cf]
            .reshape(h, w, 2 * cf).astype(o_ref.dtype))


def conv_transpose_in_relu(x, w_t, b, *, mat_dtype, out_dtype):
    """x: (n,h,w,cin) NHWC; w_t: (cin,cf,3,3) PyTorch ConvTranspose2d weight."""
    n, h, w, cin = x.shape
    cf = int(w_t.shape[1])
    wc, bc = _subpixel_weight_bias(w_t, b)
    wc = wc.astype(mat_dtype)
    bc = bc.reshape(1, 4 * cf).astype(jnp.float32)

    cost = pl.CostEstimate(
        flops=2 * n * h * w * (4 * cin) * (4 * cf) + 8 * n * h * w * cf,
        transcendentals=n * cf,
        bytes_accessed=(x.size * x.dtype.itemsize + wc.size * wc.dtype.itemsize
                        + n * 4 * h * w * cf * jnp.dtype(out_dtype).itemsize),
    )
    out = pl.pallas_call(
        functools.partial(_convt_in_relu_kernel, h=h, w=w, cin=cin, cf=cf),
        out_shape=jax.ShapeDtypeStruct((n, h, 2, w, 2 * cf), out_dtype),
        grid=(n,),
        in_specs=[
            pl.BlockSpec((1, h, w, cin), lambda i: (i, 0, 0, 0)),
            pl.BlockSpec((4 * cin, 4 * cf), lambda i: (0, 0)),
            pl.BlockSpec((1, 4 * cf), lambda i: (0, 0)),
        ],
        out_specs=pl.BlockSpec((1, h, 2, w, 2 * cf), lambda i: (i, 0, 0, 0, 0)),
        compiler_params=pltpu.CompilerParams(
            dimension_semantics=("parallel",),
            vmem_limit_bytes=_vmem_limit_bytes()),
        cost_estimate=cost,
    )(x, wc, bc)
    # (n,h,2,w,2cf) and (n,2h,2w,cf) share the same row-major layout: this is a
    # free metadata reshape in HBM, no transpose pass.
    return out.reshape(n, 2 * h, 2 * w, cf)


# ----------------------------------------------------------------------------
# ReflectionPad2d(3) + Conv2d(k=7): direct conv, channel-major (NCHW) output.
# ----------------------------------------------------------------------------
def _conv7_kernel(x_ref, w_ref, b_ref, o_ref, *, tr, out_w, cin, cout):
    """x_ref: (1, hp, wp, cin) padded image, resident across the row-tile axis
    w_ref: (7, 7*cin, cout)   taps per kernel row, rows ordered (dj, ci)
    b_ref: (1, cout) f32
    o_ref: (1, cout, tr*out_w)  NCHW rows [ti*tr, ti*tr+tr) flattened over (y,x)
    """
    ti = pl.program_id(1)
    row0 = ti * tr
    if tr % 8 == 0:
        row0 = pl.multiple_of(row0, 8)
    xi = x_ref[0, pl.ds(row0, tr + _KS - 1)]                   # (tr+6, wp, cin)
    # hoisted dj gather: one lane concat per grid step (not per output row)
    cols = jnp.concatenate(
        [xi[:, dj:dj + out_w, :] for dj in range(_KS)], axis=-1)
    c2 = cols.reshape((tr + _KS - 1) * out_w, _KS * cin)
    acc = jnp.zeros((tr * out_w, cout), jnp.float32)
    for di in range(_KS):                                      # 7 matmuls, M=tr*out_w
        acc = acc + jnp.dot(c2[di * out_w:(di + tr) * out_w, :], w_ref[di],
                            preferred_element_type=jnp.float32)
    acc = acc + b_ref[...]
    # channel-major store: tr*out_w lanes instead of cout(=3) masked lanes
    o_ref[0] = jnp.transpose(acc, (1, 0)).astype(o_ref.dtype)


def conv2d_reflect7(x, w, b, *, mat_dtype):
    """ReflectionPad2d(3)+Conv2d(7x7). x: (n,h,wd,cin) NHWC -> (n,cout,h,wd)."""
    n, h, wd, cin = x.shape
    cout = int(w.shape[0])
    tr = min(_TR_MAX, h)
    t = -(-h // tr)

    xr = jnp.pad(x.astype(mat_dtype), ((0, 0), (3, 3), (3, 3), (0, 0)),
                 mode="reflect")
    rows_needed = t * tr + _KS - 1
    if rows_needed > xr.shape[1]:
        xr = jnp.pad(xr, ((0, 0), (0, rows_needed - xr.shape[1]), (0, 0), (0, 0)))
    hp, wp = xr.shape[1], xr.shape[2]

    w_mat = w.transpose(2, 3, 1, 0).reshape(_KS, _KS * cin, cout).astype(mat_dtype)
    b2 = b.reshape(1, cout).astype(jnp.float32)

    cost = pl.CostEstimate(
        flops=2 * n * t * tr * wd * _KS * _KS * cin * cout,
        transcendentals=0,
        bytes_accessed=(xr.size * xr.dtype.itemsize
                        + w_mat.size * w_mat.dtype.itemsize
                        + n * t * tr * wd * cout * 4),
    )
    y = pl.pallas_call(
        functools.partial(_conv7_kernel, tr=tr, out_w=wd, cin=cin, cout=cout),
        out_shape=jax.ShapeDtypeStruct((n, cout, t * tr * wd), jnp.float32),
        grid=(n, t),
        in_specs=[
            # block index depends only on the batch axis -> the padded image is
            # fetched once per n and stays resident in VMEM across row tiles.
            pl.BlockSpec((1, hp, wp, cin), lambda bi, ti: (bi, 0, 0, 0)),
            pl.BlockSpec((_KS, _KS * cin, cout), lambda bi, ti: (0, 0, 0)),
            pl.BlockSpec((1, cout), lambda bi, ti: (0, 0)),
        ],
        out_specs=pl.BlockSpec((1, cout, tr * wd), lambda bi, ti: (bi, 0, ti)),
        compiler_params=pltpu.CompilerParams(
            dimension_semantics=("parallel", "arbitrary"),
            vmem_limit_bytes=_vmem_limit_bytes()),
        cost_estimate=cost,
    )(xr, w_mat, b2)
    y = y.reshape(n, cout, t * tr, wd)                 # free contiguous reshape
    return y[:, :, :h, :] if t * tr != h else y


# ----------------------------------------------------------------------------
# The full module forward (external interface NCHW, like PyTorch).
# ----------------------------------------------------------------------------
def init_params(key, nc=3, nf=32):
    k1, k2, k3, k4, k5, k6 = jax.random.split(key, 6)
    return {
        "w1": 0.1 * jax.random.normal(k1, (nf, nf // 2, 3, 3), jnp.float32),
        "b1": 0.1 * jax.random.normal(k2, (nf // 2,), jnp.float32),
        "w2": 0.1 * jax.random.normal(k3, (nf // 2, nf // 4, 3, 3), jnp.float32),
        "b2": 0.1 * jax.random.normal(k4, (nf // 4,), jnp.float32),
        "w3": 0.1 * jax.random.normal(k5, (nc, nf // 4, 7, 7), jnp.float32),
        "b3": 0.1 * jax.random.normal(k6, (nc,), jnp.float32),
    }


@functools.partial(jax.jit, static_argnums=(2,))
def _res_decoder_impl(x_nchw, params, act_dtype_name):
    adt = jnp.dtype(act_dtype_name)
    x = jnp.transpose(x_nchw, (0, 2, 3, 1))                    # NCHW -> NHWC
    x = conv_transpose_in_relu(x, params["w1"], params["b1"],
                               mat_dtype=adt, out_dtype=adt)   # 2x up + IN + ReLU
    x = conv_transpose_in_relu(x, params["w2"], params["b2"],
                               mat_dtype=adt, out_dtype=adt)   # 2x up + IN + ReLU
    return conv2d_reflect7(x, params["w3"], params["b3"], mat_dtype=adt)  # NCHW


def res_decoder(x_nchw, params, act_dtype=jnp.bfloat16):
    return _res_decoder_impl(x_nchw, params, jnp.dtype(act_dtype).name)


# Pure-XLA reference (PyTorch semantics) used only to validate the kernels.
def _ref_decoder(x_nchw, params):
    dn = ("NHWC", "HWIO", "NHWC")

    def convt(x, w_t, b):
        w_hwio = jnp.flip(w_t, (2, 3)).transpose(2, 3, 0, 1)
        y = jax.lax.conv_general_dilated(
            x, w_hwio, window_strides=(1, 1), padding=[(1, 2), (1, 2)],
            lhs_dilation=(2, 2), dimension_numbers=dn)
        return y + b

    def in_relu(x):
        mean = jnp.mean(x, axis=(1, 2), keepdims=True)
        var = jnp.mean((x - mean) ** 2, axis=(1, 2), keepdims=True)
        return jnp.maximum((x - mean) * jax.lax.rsqrt(var + 1e-5), 0.0)

    def conv7(x, w, b):
        xr = jnp.pad(x, ((0, 0), (3, 3), (3, 3), (0, 0)), mode="reflect")
        w_hwio = w.transpose(2, 3, 1, 0)
        y = jax.lax.conv_general_dilated(
            xr, w_hwio, window_strides=(1, 1), padding=[(0, 0), (0, 0)],
            dimension_numbers=dn)
        return y + b

    x = jnp.transpose(x_nchw, (0, 2, 3, 1))
    x = in_relu(convt(x, params["w1"], params["b1"]))
    x = in_relu(convt(x, params["w2"], params["b2"]))
    x = conv7(x, params["w3"], params["b3"])
    return jnp.transpose(x, (0, 3, 1, 2))


if __name__ == "__main__":
    key = jax.random.PRNGKey(0)
    kx, kp = jax.random.split(key)

    NC, NF = 3, 32          # module default is nf=128; small shapes here
    B, H, W = 2, 8, 8
    x = jax.random.normal(kx, (B, NF, H, W), jnp.float32)   # NCHW like PyTorch
    params = init_params(kp, nc=NC, nf=NF)

    out = res_decoder(x, params)                 # bf16 activations (perf path)
    jax.block_until_ready(out)

    assert out.shape == (B, NC, 4 * H, 4 * W), out.shape
    assert bool(jnp.all(jnp.isfinite(out)))

    ref = _ref_decoder(x, params)
    err = float(jnp.linalg.norm(out - ref) / (jnp.linalg.norm(ref) + 1e-8))
    assert err < 5e-2, err                       # bf16 operands, f32 accumulation

    # tighter check of the sub-pixel weight fold / pixel-shuffle path in f32
    out32 = res_decoder(x, params, act_dtype=jnp.float32)
    err32 = float(jnp.linalg.norm(out32 - ref) / (jnp.linalg.norm(ref) + 1e-8))
    assert err32 < 1e-2, err32

    print("KERNEL_OK")
</pallas_src>

<mosaic_0001>
module attributes {stable_mosaic.version = 11 : i64} {
  func.func @_convt_in_relu_kernel(%arg0: i32, %arg1: memref<1x8x8x32xf32, #tpu.memory_space<vmem>>, %arg2: memref<128x64xbf16, #tpu.memory_space<vmem>>, %arg3: memref<1x64xf32, #tpu.memory_space<vmem>>, %arg4: memref<1x8x2x8x32xbf16, #tpu.memory_space<vmem>>) attributes {dimension_semantics = [#tpu.dimension_semantics<parallel>], iteration_bounds = array<i64: 2>, scalar_prefetch = 0 : i64, scratch_operands = 0 : i64, tpu.core_type = #tpu.core_type<tc>, window_params = [{transform_indices = @transform_0, window_bounds = array<i64: 1, 8, 8, 32>}, {pipeline_mode = #tpu.pipeline_mode<synchronous>, transform_indices = @transform_1, window_bounds = array<i64: 128, 64>}, {pipeline_mode = #tpu.pipeline_mode<synchronous>, transform_indices = @transform_2, window_bounds = array<i64: 1, 64>}, {transform_indices = @transform_3, window_bounds = array<i64: 1, 8, 2, 8, 32>}]} {
    %c0 = arith.constant 0 : index
    %c0_0 = arith.constant 0 : index
    %c0_1 = arith.constant 0 : index
    %c0_2 = arith.constant 0 : index
    %0 = vector.load %arg1[%c0, %c0_0, %c0_1, %c0_2] : memref<1x8x8x32xf32, #tpu.memory_space<vmem>>, vector<1x8x8x32xf32>
    %1 = vector.shape_cast %0 : vector<1x8x8x32xf32> to vector<8x8x32xf32>
    %2 = arith.truncf %1 : vector<8x8x32xf32> to vector<8x8x32xbf16>
    %cst = arith.constant 0.000000e+00 : bf16
    %3 = vector.broadcast %cst : bf16 to vector<1x8x32xbf16>
    %4 = tpu.concatenate %2, %3 in 0 : vector<8x8x32xbf16>, vector<1x8x32xbf16> -> vector<9x8x32xbf16>
    %cst_3 = arith.constant 0.000000e+00 : bf16
    %5 = vector.broadcast %cst_3 : bf16 to vector<9x1x32xbf16>
    %6 = tpu.concatenate %4, %5 in 1 : vector<9x8x32xbf16>, vector<9x1x32xbf16> -> vector<9x9x32xbf16>
    %7 = vector.extract_strided_slice %6 {offsets = [0, 0, 0], sizes = [8, 8, 32], strides = [1, 1, 1]} : vector<9x9x32xbf16> to vector<8x8x32xbf16>
    %8 = vector.extract_strided_slice %6 {offsets = [0, 1, 0], sizes = [8, 8, 32], strides = [1, 1, 1]} : vector<9x9x32xbf16> to vector<8x8x32xbf16>
    %9 = vector.extract_strided_slice %6 {offsets = [1, 0, 0], sizes = [8, 8, 32], strides = [1, 1, 1]} : vector<9x9x32xbf16> to vector<8x8x32xbf16>
    %10 = vector.extract_strided_slice %6 {offsets = [1, 1, 0], sizes = [8, 8, 32], strides = [1, 1, 1]} : vector<9x9x32xbf16> to vector<8x8x32xbf16>
    %11 = tpu.concatenate %7, %8, %9, %10 in 2 : vector<8x8x32xbf16>, vector<8x8x32xbf16>, vector<8x8x32xbf16>, vector<8x8x32xbf16> -> vector<8x8x128xbf16>
    %12 = vector.shape_cast %11 : vector<8x8x128xbf16> to vector<64x128xbf16>
    %c0_4 = arith.constant 0 : index
    %c0_5 = arith.constant 0 : index
    %13 = vector.load %arg2[%c0_4, %c0_5] : memref<128x64xbf16, #tpu.memory_space<vmem>>, vector<128x64xbf16>
    %cst_6 = arith.constant dense<0.000000e+00> : vector<64x64xf32>
    %14 = tpu.matmul %12, %13, %cst_6 {dimension_numbers = #tpu.dot_dimension_numbers<[1], [0], [0], [1], [0, 0, 1, 1], [], []>} : vector<64x128xbf16>, vector<128x64xbf16>, vector<64x64xf32> -> vector<64x64xf32>
    %c0_7 = arith.constant 0 : index
    %c0_8 = arith.constant 0 : index
    %15 = vector.load %arg3[%c0_7, %c0_8] : memref<1x64xf32, #tpu.memory_space<vmem>>, vector<1x64xf32>
    %16 = vector.broadcast %15 : vector<1x64xf32> to vector<64x64xf32>
    %17 = arith.addf %14, %16 : vector<64x64xf32>
    %cst_9 = arith.constant dense<0.000000e+00> : vector<64xf32>
    %18 = vector.multi_reduction <add>, %17, %cst_9 [0] : vector<64x64xf32> to vector<64xf32>
    %19 = vector.shape_cast %18 : vector<64xf32> to vector<1x64xf32>
    %20 = vector.extract_strided_slice %19 {offsets = [0, 0], sizes = [1, 16], strides = [1, 1]} : vector<1x64xf32> to vector<1x16xf32>
    %21 = vector.extract_strided_slice %19 {offsets = [0, 16], sizes = [1, 16], strides = [1, 1]} : vector<1x64xf32> to vector<1x16xf32>
    %22 = arith.addf %20, %21 : vector<1x16xf32>
    %23 = vector.extract_strided_slice %19 {offsets = [0, 32], sizes = [1, 16], strides = [1, 1]} : vector<1x64xf32> to vector<1x16xf32>
    %24 = arith.addf %22, %23 : vector<1x16xf32>
    %25 = vector.extract_strided_slice %19 {offsets = [0, 48], sizes = [1, 16], strides = [1, 1]} : vector<1x64xf32> to vector<1x16xf32>
    %26 = arith.addf %24, %25 : vector<1x16xf32>
    %cst_10 = arith.constant 3.906250e-03 : f32
    %27 = vector.broadcast %cst_10 : f32 to vector<1x16xf32>
    %28 = arith.mulf %26, %27 : vector<1x16xf32>
    %29 = tpu.concatenate %28, %28, %28, %28 in 1 : vector<1x16xf32>, vector<1x16xf32>, vector<1x16xf32>, vector<1x16xf32> -> vector<1x64xf32>
    %30 = vector.broadcast %29 : vector<1x64xf32> to vector<64x64xf32>
    %31 = arith.subf %17, %30 : vector<64x64xf32>
    %32 = arith.mulf %31, %31 : vector<64x64xf32>
    %cst_11 = arith.constant dense<0.000000e+00> : vector<64xf32>
    %33 = vector.multi_reduction <add>, %32, %cst_11 [0] : vector<64x64xf32> to vector<64xf32>
    %34 = vector.shape_cast %33 : vector<64xf32> to vector<1x64xf32>
    %35 = vector.extract_strided_slice %34 {offsets = [0, 0], sizes = [1, 16], strides = [1, 1]} : vector<1x64xf32> to vector<1x16xf32>
    %36 = vector.extract_strided_slice %34 {offsets = [0, 16], sizes = [1, 16], strides = [1, 1]} : vector<1x64xf32> to vector<1x16xf32>
    %37 = arith.addf %35, %36 : vector<1x16xf32>
    %38 = vector.extract_strided_slice %34 {offsets = [0, 32], sizes = [1, 16], strides = [1, 1]} : vector<1x64xf32> to vector<1x16xf32>
    %39 = arith.addf %37, %38 : vector<1x16xf32>
    %40 = vector.extract_strided_slice %34 {offsets = [0, 48], sizes = [1, 16], strides = [1, 1]} : vector<1x64xf32> to vector<1x16xf32>
    %41 = arith.addf %39, %40 : vector<1x16xf32>
    %cst_12 = arith.constant 3.906250e-03 : f32
    %42 = vector.broadcast %cst_12 : f32 to vector<1x16xf32>
    %43 = arith.mulf %41, %42 : vector<1x16xf32>
    %cst_13 = arith.constant 9.99999974E-6 : f32
    %44 = vector.broadcast %cst_13 : f32 to vector<1x16xf32>
    %45 = arith.addf %43, %44 : vector<1x16xf32>
    %46 = math.rsqrt %45 : vector<1x16xf32>
    %47 = tpu.concatenate %46, %46, %46, %46 in 1 : vector<1x16xf32>, vector<1x16xf32>, vector<1x16xf32>, vector<1x16xf32> -> vector<1x64xf32>
    %48 = vector.broadcast %47 : vector<1x64xf32> to vector<64x64xf32>
    %49 = arith.mulf %31, %48 : vector<64x64xf32>
    %cst_14 = arith.constant 0.000000e+00 : f32
    %50 = vector.broadcast %cst_14 : f32 to vector<64x64xf32>
    %51 = arith.maximumf %49, %50 : vector<64x64xf32>
    %52 = vector.extract_strided_slice %51 {offsets = [0, 0], sizes = [64, 32], strides = [1, 1]} : vector<64x64xf32> to vector<64x32xf32>
    %53 = vector.shape_cast %52 : vector<64x32xf32> to vector<8x8x32xf32>
    %54 = arith.truncf %53 : vector<8x8x32xf32> to vector<8x8x32xbf16>
    %c0_15 = arith.constant 0 : index
    %c0_16 = arith.constant 0 : index
    %c0_17 = arith.constant 0 : index
    %c0_18 = arith.constant 0 : index
    %c0_19 = arith.constant 0 : index
    %55 = vector.load %arg4[%c0_15, %c0_16, %c0_17, %c0_18, %c0_19] : memref<1x8x2x8x32xbf16, #tpu.memory_space<vmem>>, vector<1x8x1x8x32xbf16>
    %56 = vector.shape_cast %55 : vector<1x8x1x8x32xbf16> to vector<8x8x32xbf16>
    %57 = vector.shape_cast %54 : vector<8x8x32xbf16> to vector<1x8x1x8x32xbf16>
    tpu.vector_store %arg4[%c0_15, %c0_16, %c0_17, %c0_18, %c0_19], %57 {strides = array<i32>} : memref<1x8x2x8x32xbf16, #tpu.memory_space<vmem>>, vector<1x8x1x8x32xbf16>,
    %58 = vector.extract_strided_slice %51 {offsets = [0, 32], sizes = [64, 32], strides = [1, 1]} : vector<64x64xf32> to vector<64x32xf32>
    %59 = vector.shape_cast %58 : vector<64x32xf32> to vector<8x8x32xf32>
    %60 = arith.truncf %59 : vector<8x8x32xf32> to vector<8x8x32xbf16>
    %c0_20 = arith.constant 0 : index
    %c0_21 = arith.constant 0 : index
    %c1 = arith.constant 1 : index
    %c0_22 = arith.constant 0 : index
    %c0_23 = arith.constant 0 : index
    %61 = vector.load %arg4[%c0_20, %c0_21, %c1, %c0_22, %c0_23] : memref<1x8x2x8x32xbf16, #tpu.memory_space<vmem>>, vector<1x8x1x8x32xbf16>
    %62 = vector.shape_cast %61 : vector<1x8x1x8x32xbf16> to vector<8x8x32xbf16>
    %63 = vector.shape_cast %60 : vector<8x8x32xbf16> to vector<1x8x1x8x32xbf16>
    tpu.vector_store %arg4[%c0_20, %c0_21, %c1, %c0_22, %c0_23], %63 {strides = array<i32>} : memref<1x8x2x8x32xbf16, #tpu.memory_space<vmem>>, vector<1x8x1x8x32xbf16>,
    return
  }
  func.func @transform_0(%arg0: i32) -> (i32, i32, i32, i32) {
    %c0_i32 = arith.constant 0 : i32
    %c0_i32_0 = arith.constant 0 : i32
    %c0_i32_1 = arith.constant 0 : i32
    %c0_i32_2 = arith.constant 0 : i32
    return %arg0, %c0_i32, %c0_i32_0, %c0_i32_1 : i32, i32, i32, i32
  }
  func.func @transform_1(%arg0: i32) -> (i32, i32) {
    %c0_i32 = arith.constant 0 : i32
    %c0_i32_0 = arith.constant 0 : i32
    %c0_i32_1 = arith.constant 0 : i32
    return %c0_i32, %c0_i32_0 : i32, i32
  }
  func.func @transform_2(%arg0: i32) -> (i32, i32) {
    %c0_i32 = arith.constant 0 : i32
    %c0_i32_0 = arith.constant 0 : i32
    %c0_i32_1 = arith.constant 0 : i32
    return %c0_i32, %c0_i32_0 : i32, i32
  }
  func.func @transform_3(%arg0: i32) -> (i32, i32, i32, i32, i32) {
    %c0_i32 = arith.constant 0 : i32
    %c0_i32_0 = arith.constant 0 : i32
    %c0_i32_1 = arith.constant 0 : i32
    %c0_i32_2 = arith.constant 0 : i32
    %c0_i32_3 = arith.constant 0 : i32
    return %arg0, %c0_i32, %c0_i32_0, %c0_i32_1, %c0_i32_2 : i32, i32, i32, i32, i32
  }
}

module attributes {stable_mosaic.version = 11 : i64} {
  func.func @_convt_in_relu_kernel(%arg0: i32, %arg1: memref<1x16x16x16xbf16, #tpu.memory_space<vmem>>, %arg2: memref<64x32xbf16, #tpu.memory_space<vmem>>, %arg3: memref<1x32xf32, #tpu.memory_space<vmem>>, %arg4: memref<1x16x2x16x16xbf16, #tpu.memory_space<vmem>>) attributes {dimension_semantics = [#tpu.dimension_semantics<parallel>], iteration_bounds = array<i64: 2>, scalar_prefetch = 0 : i64, scratch_operands = 0 : i64, tpu.core_type = #tpu.core_type<tc>, window_params = [{transform_indices = @transform_0, window_bounds = array<i64: 1, 16, 16, 16>}, {pipeline_mode = #tpu.pipeline_mode<synchronous>, transform_indices = @transform_1, window_bounds = array<i64: 64, 32>}, {pipeline_mode = #tpu.pipeline_mode<synchronous>, transform_indices = @transform_2, window_bounds = array<i64: 1, 32>}, {transform_indices = @transform_3, window_bounds = array<i64: 1, 16, 2, 16, 16>}]} {
    %c0 = arith.constant 0 : index
    %c0_0 = arith.constant 0 : index
    %c0_1 = arith.constant 0 : index
    %c0_2 = arith.constant 0 : index
    %0 = vector.load %arg1[%c0, %c0_0, %c0_1, %c0_2] : memref<1x16x16x16xbf16, #tpu.memory_space<vmem>>, vector<1x16x16x16xbf16>
    %1 = vector.shape_cast %0 : vector<1x16x16x16xbf16> to vector<16x16x16xbf16>
    %cst = arith.constant 0.000000e+00 : bf16
    %2 = vector.broadcast %cst : bf16 to vector<1x16x16xbf16>
    %3 = tpu.concatenate %1, %2 in 0 : vector<16x16x16xbf16>, vector<1x16x16xbf16> -> vector<17x16x16xbf16>
    %cst_3 = arith.constant 0.000000e+00 : bf16
    %4 = vector.broadcast %cst_3 : bf16 to vector<17x1x16xbf16>
    %5 = tpu.concatenate %3, %4 in 1 : vector<17x16x16xbf16>, vector<17x1x16xbf16> -> vector<17x17x16xbf16>
    %6 = vector.extract_strided_slice %5 {offsets = [0, 0, 0], sizes = [16, 16, 16], strides = [1, 1, 1]} : vector<17x17x16xbf16> to vector<16x16x16xbf16>
    %7 = vector.extract_strided_slice %5 {offsets = [0, 1, 0], sizes = [16, 16, 16], strides = [1, 1, 1]} : vector<17x17x16xbf16> to vector<16x16x16xbf16>
    %8 = vector.extract_strided_slice %5 {offsets = [1, 0, 0], sizes = [16, 16, 16], strides = [1, 1, 1]} : vector<17x17x16xbf16> to vector<16x16x16xbf16>
    %9 = vector.extract_strided_slice %5 {offsets = [1, 1, 0], sizes = [16, 16, 16], strides = [1, 1, 1]} : vector<17x17x16xbf16> to vector<16x16x16xbf16>
    %10 = tpu.concatenate %6, %7, %8, %9 in 2 : vector<16x16x16xbf16>, vector<16x16x16xbf16>, vector<16x16x16xbf16>, vector<16x16x16xbf16> -> vector<16x16x64xbf16>
    %11 = vector.shape_cast %10 : vector<16x16x64xbf16> to vector<256x64xbf16>
    %c0_4 = arith.constant 0 : index
    %c0_5 = arith.constant 0 : index
    %12 = vector.load %arg2[%c0_4, %c0_5] : memref<64x32xbf16, #tpu.memory_space<vmem>>, vector<64x32xbf16>
    %cst_6 = arith.constant dense<0.000000e+00> : vector<256x32xf32>
    %13 = tpu.matmul %11, %12, %cst_6 {dimension_numbers = #tpu.dot_dimension_numbers<[1], [0], [0], [1], [0, 0, 1, 1], [], []>} : vector<256x64xbf16>, vector<64x32xbf16>, vector<256x32xf32> -> vector<256x32xf32>
    %c0_7 = arith.constant 0 : index
    %c0_8 = arith.constant 0 : index
    %14 = vector.load %arg3[%c0_7, %c0_8] : memref<1x32xf32, #tpu.memory_space<vmem>>, vector<1x32xf32>
    %15 = vector.broadcast %14 : vector<1x32xf32> to vector<256x32xf32>
    %16 = arith.addf %13, %15 : vector<256x32xf32>
    %cst_9 = arith.constant dense<0.000000e+00> : vector<32xf32>
    %17 = vector.multi_reduction <add>, %16, %cst_9 [0] : vector<256x32xf32> to vector<32xf32>
    %18 = vector.shape_cast %17 : vector<32xf32> to vector<1x32xf32>
    %19 = vector.extract_strided_slice %18 {offsets = [0, 0], sizes = [1, 8], strides = [1, 1]} : vector<1x32xf32> to vector<1x8xf32>
    %20 = vector.extract_strided_slice %18 {offsets = [0, 8], sizes = [1, 8], strides = [1, 1]} : vector<1x32xf32> to vector<1x8xf32>
    %21 = arith.addf %19, %20 : vector<1x8xf32>
    %22 = vector.extract_strided_slice %18 {offsets = [0, 16], sizes = [1, 8], strides = [1, 1]} : vector<1x32xf32> to vector<1x8xf32>
    %23 = arith.addf %21, %22 : vector<1x8xf32>
    %24 = vector.extract_strided_slice %18 {offsets = [0, 24], sizes = [1, 8], strides = [1, 1]} : vector<1x32xf32> to vector<1x8xf32>
    %25 = arith.addf %23, %24 : vector<1x8xf32>
    %cst_10 = arith.constant 9.765625E-4 : f32
    %26 = vector.broadcast %cst_10 : f32 to vector<1x8xf32>
    %27 = arith.mulf %25, %26 : vector<1x8xf32>
    %28 = tpu.concatenate %27, %27, %27, %27 in 1 : vector<1x8xf32>, vector<1x8xf32>, vector<1x8xf32>, vector<1x8xf32> -> vector<1x32xf32>
    %29 = vector.broadcast %28 : vector<1x32xf32> to vector<256x32xf32>
    %30 = arith.subf %16, %29 : vector<256x32xf32>
    %31 = arith.mulf %30, %30 : vector<256x32xf32>
    %cst_11 = arith.constant dense<0.000000e+00> : vector<32xf32>
    %32 = vector.multi_reduction <add>, %31, %cst_11 [0] : vector<256x32xf32> to vector<32xf32>
    %33 = vector.shape_cast %32 : vector<32xf32> to vector<1x32xf32>
    %34 = vector.extract_strided_slice %33 {offsets = [0, 0], sizes = [1, 8], strides = [1, 1]} : vector<1x32xf32> to vector<1x8xf32>
    %35 = vector.extract_strided_slice %33 {offsets = [0, 8], sizes = [1, 8], strides = [1, 1]} : vector<1x32xf32> to vector<1x8xf32>
    %36 = arith.addf %34, %35 : vector<1x8xf32>
    %37 = vector.extract_strided_slice %33 {offsets = [0, 16], sizes = [1, 8], strides = [1, 1]} : vector<1x32xf32> to vector<1x8xf32>
    %38 = arith.addf %36, %37 : vector<1x8xf32>
    %39 = vector.extract_strided_slice %33 {offsets = [0, 24], sizes = [1, 8], strides = [1, 1]} : vector<1x32xf32> to vector<1x8xf32>
    %40 = arith.addf %38, %39 : vector<1x8xf32>
    %cst_12 = arith.constant 9.765625E-4 : f32
    %41 = vector.broadcast %cst_12 : f32 to vector<1x8xf32>
    %42 = arith.mulf %40, %41 : vector<1x8xf32>
    %cst_13 = arith.constant 9.99999974E-6 : f32
    %43 = vector.broadcast %cst_13 : f32 to vector<1x8xf32>
    %44 = arith.addf %42, %43 : vector<1x8xf32>
    %45 = math.rsqrt %44 : vector<1x8xf32>
    %46 = tpu.concatenate %45, %45, %45, %45 in 1 : vector<1x8xf32>, vector<1x8xf32>, vector<1x8xf32>, vector<1x8xf32> -> vector<1x32xf32>
    %47 = vector.broadcast %46 : vector<1x32xf32> to vector<256x32xf32>
    %48 = arith.mulf %30, %47 : vector<256x32xf32>
    %cst_14 = arith.constant 0.000000e+00 : f32
    %49 = vector.broadcast %cst_14 : f32 to vector<256x32xf32>
    %50 = arith.maximumf %48, %49 : vector<256x32xf32>
    %51 = vector.extract_strided_slice %50 {offsets = [0, 0], sizes = [256, 16], strides = [1, 1]} : vector<256x32xf32> to vector<256x16xf32>
    %52 = vector.shape_cast %51 : vector<256x16xf32> to vector<16x16x16xf32>
    %53 = arith.truncf %52 : vector<16x16x16xf32> to vector<16x16x16xbf16>
    %c0_15 = arith.constant 0 : index
    %c0_16 = arith.constant 0 : index
    %c0_17 = arith.constant 0 : index
    %c0_18 = arith.constant 0 : index
    %c0_19 = arith.constant 0 : index
    %54 = vector.load %arg4[%c0_15, %c0_16, %c0_17, %c0_18, %c0_19] : memref<1x16x2x16x16xbf16, #tpu.memory_space<vmem>>, vector<1x16x1x16x16xbf16>
    %55 = vector.shape_cast %54 : vector<1x16x1x16x16xbf16> to vector<16x16x16xbf16>
    %56 = vector.shape_cast %53 : vector<16x16x16xbf16> to vector<1x16x1x16x16xbf16>
    tpu.vector_store %arg4[%c0_15, %c0_16, %c0_17, %c0_18, %c0_19], %56 {strides = array<i32>} : memref<1x16x2x16x16xbf16, #tpu.memory_space<vmem>>, vector<1x16x1x16x16xbf16>,
    %57 = vector.extract_strided_slice %50 {offsets = [0, 16], sizes = [256, 16], strides = [1, 1]} : vector<256x32xf32> to vector<256x16xf32>
    %58 = vector.shape_cast %57 : vector<256x16xf32> to vector<16x16x16xf32>
    %59 = arith.truncf %58 : vector<16x16x16xf32> to vector<16x16x16xbf16>
    %c0_20 = arith.constant 0 : index
    %c0_21 = arith.constant 0 : index
    %c1 = arith.constant 1 : index
    %c0_22 = arith.constant 0 : index
    %c0_23 = arith.constant 0 : index
    %60 = vector.load %arg4[%c0_20, %c0_21, %c1, %c0_22, %c0_23] : memref<1x16x2x16x16xbf16, #tpu.memory_space<vmem>>, vector<1x16x1x16x16xbf16>
    %61 = vector.shape_cast %60 : vector<1x16x1x16x16xbf16> to vector<16x16x16xbf16>
    %62 = vector.shape_cast %59 : vector<16x16x16xbf16> to vector<1x16x1x16x16xbf16>
    tpu.vector_store %arg4[%c0_20, %c0_21, %c1, %c0_22, %c0_23], %62 {strides = array<i32>} : memref<1x16x2x16x16xbf16, #tpu.memory_space<vmem>>, vector<1x16x1x16x16xbf16>,
    return
  }
  func.func @transform_0(%arg0: i32) -> (i32, i32, i32, i32) {
    %c0_i32 = arith.constant 0 : i32
    %c0_i32_0 = arith.constant 0 : i32
    %c0_i32_1 = arith.constant 0 : i32
    %c0_i32_2 = arith.constant 0 : i32
    return %arg0, %c0_i32, %c0_i32_0, %c0_i32_1 : i32, i32, i32, i32
  }
  func.func @transform_1(%arg0: i32) -> (i32, i32) {
    %c0_i32 = arith.constant 0 : i32
    %c0_i32_0 = arith.constant 0 : i32
    %c0_i32_1 = arith.constant 0 : i32
    return %c0_i32, %c0_i32_0 : i32, i32
  }
  func.func @transform_2(%arg0: i32) -> (i32, i32) {
    %c0_i32 = arith.constant 0 : i32
    %c0_i32_0 = arith.constant 0 : i32
    %c0_i32_1 = arith.constant 0 : i32
    return %c0_i32, %c0_i32_0 : i32, i32
  }
  func.func @transform_3(%arg0: i32) -> (i32, i32, i32, i32, i32) {
    %c0_i32 = arith.constant 0 : i32
    %c0_i32_0 = arith.constant 0 : i32
    %c0_i32_1 = arith.constant 0 : i32
    %c0_i32_2 = arith.constant 0 : i32
    %c0_i32_3 = arith.constant 0 : i32
    return %arg0, %c0_i32, %c0_i32_0, %c0_i32_1, %c0_i32_2 : i32, i32, i32, i32, i32
  }
}

module attributes {stable_mosaic.version = 11 : i64} {
  func.func @_conv7_kernel(%arg0: i32, %arg1: i32, %arg2: memref<1x38x38x8xbf16, #tpu.memory_space<vmem>>, %arg3: memref<7x56x3xbf16, #tpu.memory_space<vmem>>, %arg4: memref<1x3xf32, #tpu.memory_space<vmem>>, %arg5: memref<1x3x1024xf32, #tpu.memory_space<vmem>>) attributes {dimension_semantics = [#tpu.dimension_semantics<parallel>, #tpu.dimension_semantics<arbitrary>], iteration_bounds = array<i64: 2, 1>, scalar_prefetch = 0 : i64, scratch_operands = 0 : i64, tpu.core_type = #tpu.core_type<tc>, window_params = [{transform_indices = @transform_0, window_bounds = array<i64: 1, 38, 38, 8>}, {pipeline_mode = #tpu.pipeline_mode<synchronous>, transform_indices = @transform_1, window_bounds = array<i64: 7, 56, 3>}, {pipeline_mode = #tpu.pipeline_mode<synchronous>, transform_indices = @transform_2, window_bounds = array<i64: 1, 3>}, {transform_indices = @transform_3, window_bounds = array<i64: 1, 3, 1024>}]} {
    %c32_i32 = arith.constant 32 : i32
    %0 = arith.muli %arg1, %c32_i32 : i32
    %1 = tpu.assume_multiple %0, 8 : i32
    %c0 = arith.constant 0 : index
    %2 = arith.index_cast %1 : i32 to index
    %c0_0 = arith.constant 0 : index
    %c0_1 = arith.constant 0 : index
    %3 = vector.load %arg2[%c0, %2, %c0_0, %c0_1] : memref<1x38x38x8xbf16, #tpu.memory_space<vmem>>, vector<1x38x38x8xbf16>
    %4 = vector.shape_cast %3 : vector<1x38x38x8xbf16> to vector<38x38x8xbf16>
    %5 = vector.extract_strided_slice %4 {offsets = [0, 0, 0], sizes = [38, 32, 8], strides = [1, 1, 1]} : vector<38x38x8xbf16> to vector<38x32x8xbf16>
    %6 = vector.extract_strided_slice %4 {offsets = [0, 1, 0], sizes = [38, 32, 8], strides = [1, 1, 1]} : vector<38x38x8xbf16> to vector<38x32x8xbf16>
    %7 = vector.extract_strided_slice %4 {offsets = [0, 2, 0], sizes = [38, 32, 8], strides = [1, 1, 1]} : vector<38x38x8xbf16> to vector<38x32x8xbf16>
    %8 = vector.extract_strided_slice %4 {offsets = [0, 3, 0], sizes = [38, 32, 8], strides = [1, 1, 1]} : vector<38x38x8xbf16> to vector<38x32x8xbf16>
    %9 = vector.extract_strided_slice %4 {offsets = [0, 4, 0], sizes = [38, 32, 8], strides = [1, 1, 1]} : vector<38x38x8xbf16> to vector<38x32x8xbf16>
    %10 = vector.extract_strided_slice %4 {offsets = [0, 5, 0], sizes = [38, 32, 8], strides = [1, 1, 1]} : vector<38x38x8xbf16> to vector<38x32x8xbf16>
    %11 = vector.extract_strided_slice %4 {offsets = [0, 6, 0], sizes = [38, 32, 8], strides = [1, 1, 1]} : vector<38x38x8xbf16> to vector<38x32x8xbf16>
    %12 = tpu.concatenate %5, %6, %7, %8, %9, %10, %11 in 2 : vector<38x32x8xbf16>, vector<38x32x8xbf16>, vector<38x32x8xbf16>, vector<38x32x8xbf16>, vector<38x32x8xbf16>, vector<38x32x8xbf16>, vector<38x32x8xbf16> -> vector<38x32x56xbf16>
    %13 = vector.shape_cast %12 : vector<38x32x56xbf16> to vector<1216x56xbf16>
    %cst = arith.constant 0.000000e+00 : f32
    %14 = vector.broadcast %cst : f32 to vector<1024x3xf32>
    %15 = vector.extract_strided_slice %13 {offsets = [0, 0], sizes = [1024, 56], strides = [1, 1]} : vector<1216x56xbf16> to vector<1024x56xbf16>
    %c0_2 = arith.constant 0 : index
    %c0_3 = arith.constant 0 : index
    %c0_4 = arith.constant 0 : index
    %16 = vector.load %arg3[%c0_2, %c0_3, %c0_4] : memref<7x56x3xbf16, #tpu.memory_space<vmem>>, vector<1x56x3xbf16>
    %17 = vector.shape_cast %16 : vector<1x56x3xbf16> to vector<56x3xbf16>
    %cst_5 = arith.constant dense<0.000000e+00> : vector<1024x3xf32>
    %18 = tpu.matmul %15, %17, %cst_5 {dimension_numbers = #tpu.dot_dimension_numbers<[1], [0], [0], [1], [0, 0, 1, 1], [], []>} : vector<1024x56xbf16>, vector<56x3xbf16>, vector<1024x3xf32> -> vector<1024x3xf32>
    %19 = arith.addf %14, %18 : vector<1024x3xf32>
    %20 = vector.extract_strided_slice %13 {offsets = [32, 0], sizes = [1024, 56], strides = [1, 1]} : vector<1216x56xbf16> to vector<1024x56xbf16>
    %c1 = arith.constant 1 : index
    %c0_6 = arith.constant 0 : index
    %c0_7 = arith.constant 0 : index
    %21 = vector.load %arg3[%c1, %c0_6, %c0_7] : memref<7x56x3xbf16, #tpu.memory_space<vmem>>, vector<1x56x3xbf16>
    %22 = vector.shape_cast %21 : vector<1x56x3xbf16> to vector<56x3xbf16>
    %cst_8 = arith.constant dense<0.000000e+00> : vector<1024x3xf32>
    %23 = tpu.matmul %20, %22, %cst_8 {dimension_numbers = #tpu.dot_dimension_numbers<[1], [0], [0], [1], [0, 0, 1, 1], [], []>} : vector<1024x56xbf16>, vector<56x3xbf16>, vector<1024x3xf32> -> vector<1024x3xf32>
    %24 = arith.addf %19, %23 : vector<1024x3xf32>
    %25 = vector.extract_strided_slice %13 {offsets = [64, 0], sizes = [1024, 56], strides = [1, 1]} : vector<1216x56xbf16> to vector<1024x56xbf16>
    %c2 = arith.constant 2 : index
    %c0_9 = arith.constant 0 : index
    %c0_10 = arith.constant 0 : index
    %26 = vector.load %arg3[%c2, %c0_9, %c0_10] : memref<7x56x3xbf16, #tpu.memory_space<vmem>>, vector<1x56x3xbf16>
    %27 = vector.shape_cast %26 : vector<1x56x3xbf16> to vector<56x3xbf16>
    %cst_11 = arith.constant dense<0.000000e+00> : vector<1024x3xf32>
    %28 = tpu.matmul %25, %27, %cst_11 {dimension_numbers = #tpu.dot_dimension_numbers<[1], [0], [0], [1], [0, 0, 1, 1], [], []>} : vector<1024x56xbf16>, vector<56x3xbf16>, vector<1024x3xf32> -> vector<1024x3xf32>
    %29 = arith.addf %24, %28 : vector<1024x3xf32>
    %30 = vector.extract_strided_slice %13 {offsets = [96, 0], sizes = [1024, 56], strides = [1, 1]} : vector<1216x56xbf16> to vector<1024x56xbf16>
    %c3 = arith.constant 3 : index
    %c0_12 = arith.constant 0 : index
    %c0_13 = arith.constant 0 : index
    %31 = vector.load %arg3[%c3, %c0_12, %c0_13] : memref<7x56x3xbf16, #tpu.memory_space<vmem>>, vector<1x56x3xbf16>
    %32 = vector.shape_cast %31 : vector<1x56x3xbf16> to vector<56x3xbf16>
    %cst_14 = arith.constant dense<0.000000e+00> : vector<1024x3xf32>
    %33 = tpu.matmul %30, %32, %cst_14 {dimension_numbers = #tpu.dot_dimension_numbers<[1], [0], [0], [1], [0, 0, 1, 1], [], []>} : vector<1024x56xbf16>, vector<56x3xbf16>, vector<1024x3xf32> -> vector<1024x3xf32>
    %34 = arith.addf %29, %33 : vector<1024x3xf32>
    %35 = vector.extract_strided_slice %13 {offsets = [128, 0], sizes = [1024, 56], strides = [1, 1]} : vector<1216x56xbf16> to vector<1024x56xbf16>
    %c4 = arith.constant 4 : index
    %c0_15 = arith.constant 0 : index
    %c0_16 = arith.constant 0 : index
    %36 = vector.load %arg3[%c4, %c0_15, %c0_16] : memref<7x56x3xbf16, #tpu.memory_space<vmem>>, vector<1x56x3xbf16>
    %37 = vector.shape_cast %36 : vector<1x56x3xbf16> to vector<56x3xbf16>
    %cst_17 = arith.constant dense<0.000000e+00> : vector<1024x3xf32>
    %38 = tpu.matmul %35, %37, %cst_17 {dimension_numbers = #tpu.dot_dimension_numbers<[1], [0], [0], [1], [0, 0, 1, 1], [], []>} : vector<1024x56xbf16>, vector<56x3xbf16>, vector<1024x3xf32> -> vector<1024x3xf32>
    %39 = arith.addf %34, %38 : vector<1024x3xf32>
    %40 = vector.extract_strided_slice %13 {offsets = [160, 0], sizes = [1024, 56], strides = [1, 1]} : vector<1216x56xbf16> to vector<1024x56xbf16>
    %c5 = arith.constant 5 : index
    %c0_18 = arith.constant 0 : index
    %c0_19 = arith.constant 0 : index
    %41 = vector.load %arg3[%c5, %c0_18, %c0_19] : memref<7x56x3xbf16, #tpu.memory_space<vmem>>, vector<1x56x3xbf16>
    %42 = vector.shape_cast %41 : vector<1x56x3xbf16> to vector<56x3xbf16>
    %cst_20 = arith.constant dense<0.000000e+00> : vector<1024x3xf32>
    %43 = tpu.matmul %40, %42, %cst_20 {dimension_numbers = #tpu.dot_dimension_numbers<[1], [0], [0], [1], [0, 0, 1, 1], [], []>} : vector<1024x56xbf16>, vector<56x3xbf16>, vector<1024x3xf32> -> vector<1024x3xf32>
    %44 = arith.addf %39, %43 : vector<1024x3xf32>
    %45 = vector.extract_strided_slice %13 {offsets = [192, 0], sizes = [1024, 56], strides = [1, 1]} : vector<1216x56xbf16> to vector<1024x56xbf16>
    %c6 = arith.constant 6 : index
    %c0_21 = arith.constant 0 : index
    %c0_22 = arith.constant 0 : index
    %46 = vector.load %arg3[%c6, %c0_21, %c0_22] : memref<7x56x3xbf16, #tpu.memory_space<vmem>>, vector<1x56x3xbf16>
    %47 = vector.shape_cast %46 : vector<1x56x3xbf16> to vector<56x3xbf16>
    %cst_23 = arith.constant dense<0.000000e+00> : vector<1024x3xf32>
    %48 = tpu.matmul %45, %47, %cst_23 {dimension_numbers = #tpu.dot_dimension_numbers<[1], [0], [0], [1], [0, 0, 1, 1], [], []>} : vector<1024x56xbf16>, vector<56x3xbf16>, vector<1024x3xf32> -> vector<1024x3xf32>
    %49 = arith.addf %44, %48 : vector<1024x3xf32>
    %c0_24 = arith.constant 0 : index
    %c0_25 = arith.constant 0 : index
    %50 = vector.load %arg4[%c0_24, %c0_25] : memref<1x3xf32, #tpu.memory_space<vmem>>, vector<1x3xf32>
    %51 = vector.broadcast %50 : vector<1x3xf32> to vector<1024x3xf32>
    %52 = arith.addf %49, %51 : vector<1024x3xf32>
    %53 = tpu.transpose %52, [1, 0] : vector<1024x3xf32> -> vector<3x1024xf32>
    %c0_26 = arith.constant 0 : index
    %c0_27 = arith.constant 0 : index
    %c0_28 = arith.constant 0 : index
    %54 = vector.load %arg5[%c0_26, %c0_27, %c0_28] : memref<1x3x1024xf32, #tpu.memory_space<vmem>>, vector<1x3x1024xf32>
    %55 = vector.shape_cast %54 : vector<1x3x1024xf32> to vector<3x1024xf32>
    %56 = vector.shape_cast %53 : vector<3x1024xf32> to vector<1x3x1024xf32>
    tpu.vector_store %arg5[%c0_26, %c0_27, %c0_28], %56 {strides = array<i32>} : memref<1x3x1024xf32, #tpu.memory_space<vmem>>, vector<1x3x1024xf32>,
    return
  }
  func.func @transform_0(%arg0: i32, %arg1: i32) -> (i32, i32, i32, i32) {
    %c0_i32 = arith.constant 0 : i32
    %c0_i32_0 = arith.constant 0 : i32
    %c0_i32_1 = arith.constant 0 : i32
    %c0_i32_2 = arith.constant 0 : i32
    return %arg0, %c0_i32, %c0_i32_0, %c0_i32_1 : i32, i32, i32, i32
  }
  func.func @transform_1(%arg0: i32, %arg1: i32) -> (i32, i32, i32) {
    %c0_i32 = arith.constant 0 : i32
    %c0_i32_0 = arith.constant 0 : i32
    %c0_i32_1 = arith.constant 0 : i32
    %c0_i32_2 = arith.constant 0 : i32
    return %c0_i32, %c0_i32_0, %c0_i32_1 : i32, i32, i32
  }
  func.func @transform_2(%arg0: i32, %arg1: i32) -> (i32, i32) {
    %c0_i32 = arith.constant 0 : i32
    %c0_i32_0 = arith.constant 0 : i32
    %c0_i32_1 = arith.constant 0 : i32
    return %c0_i32, %c0_i32_0 : i32, i32
  }
  func.func @transform_3(%arg0: i32, %arg1: i32) -> (i32, i32, i32) {
    %c0_i32 = arith.constant 0 : i32
    %c0_i32_0 = arith.constant 0 : i32
    return %arg0, %c0_i32, %arg1 : i32, i32, i32
  }
}

</mosaic_0001>

<llo_original>
// kernel: tile.13
$region0: #{tile.13}
  #allocation0 [shape = 's32[1]{0}', space=sflag, size = 0x4, scoped, tag = 'scoped memory for tile.13']
  %s0 = inlined_call_operand.vmem [shape: f32[16], index: 0, kind: input, shape index: {}]
  %s1 = inlined_call_operand.vmem [shape: f32[4,16], index: 1, kind: output, shape index: {}]
  // Predicated region
  $region2: #{tile.13} parent=0 // pred_check
    _
  $region3: #{tile.13} parent=0 // pred_check_branch
    %3 = sbr.rel (0) target = $region5
  $region4: #{tile.13} parent=0 // pred_region
    _
  $region5: #{tile.13} parent=0 // pred_fallthru
    _
  %v4 = vld [vmem:[%s0] ss:$0 sm:$0xff]
  %5 = vst [vmem:[%s1] sm:$0xf] %v4

// kernel: tile.14
$region0: #{tile.14}
  %s0 = inlined_call_operand.vmem [shape: f32[4,16], index: 0, kind: input, shape index: {}]
  %s1 = inlined_call_operand.vmem [shape: f32[1,64], index: 1, kind: output, shape index: {}]
  $region1: #{tile.14} parent=0
    #allocation0 [shape = 'u8[4096]{0}', space=vmem, size = 0x1000, scoped, tag = 'scoped mem for output reshape']
    #allocation1 [shape = 'u8[4096]{0}', space=vmem, size = 0x1000, scoped, tag = 'scoped mem for input reshape']
    %s3 = sshll.u32 1, 4
    %s4 = ssub.s32 %s3, 1
    %v5 = vld [vmem:[%s0] sm:%s4]
    %6 = vst [vmem:[#allocation1] sm:%s4] %v5
    %v7 = vld [vmem:[#allocation1] sm:$0x1]
    %vm8 = vcmask 130048
    %9 = vst.msk [vmem:[#allocation0] sm:$0x1] %vm8, %v7
    %s10 = scalar_lea.vmem [#allocation1], 3
    %v11 = vld [vmem:[%s10] sm:$0x1]
    %12 = vrot.lane.b32.xlu0 %v11, 48
    %v13 = vpop.permute.xlu0 %12
    %vm14 = vcmask 523648
    %15 = vst.msk [vmem:[#allocation0] sm:$0x1] %vm14, %v13
    %s16 = scalar_lea.vmem [#allocation1], 2
    %v17 = vld [vmem:[%s16] sm:$0x1]
    %18 = vrot.lane.b32.xlu0 %v17, 32
    %v19 = vpop.permute.xlu0 %18
    %vm20 = vcmask 392448
    %21 = vst.msk [vmem:[#allocation0] sm:$0x1] %vm20, %v19
    %s22 = scalar_lea.vmem [#allocation1], 1
    %v23 = vld [vmem:[%s22] sm:$0x1]
    %24 = vrot.lane.b32.xlu0 %v23, 16
    %v25 = vpop.permute.xlu0 %24
    %vm26 = vcmask 261248
    %27 = vst.msk [vmem:[#allocation0] sm:$0x1] %vm26, %v25
    %s29 = sshll.u32 1, 1
    %s30 = ssub.s32 %s29, 1
    %v32 = vld [vmem:[#allocation0] sm:%s30]
    %s33 = sshll.u32 1, 1
    %s34 = ssub.s32 %s33, 1
    %35 = vst [vmem:[%s1] sm:%s34] %v32

// kernel: tile.18
$region0: #{tile.18}
  #allocation0 [shape = 's32[1]{0}', space=sflag, size = 0x4, scoped, tag = 'scoped memory for tile.18']
  %s0 = inlined_call_operand.vmem [shape: f32[8], index: 0, kind: input, shape index: {}]
  %s1 = inlined_call_operand.vmem [shape: f32[4,8], index: 1, kind: output, shape index: {}]
  // Predicated region
  $region2: #{tile.18} parent=0 // pred_check
    _
  $region3: #{tile.18} parent=0 // pred_check_branch
    %3 = sbr.rel (0) target = $region5
  $region4: #{tile.18} parent=0 // pred_region
    _
  $region5: #{tile.18} parent=0 // pred_fallthru
    _
  %v4 = vld [vmem:[%s0] ss:$0 sm:$0xff]
  %5 = vst [vmem:[%s1] sm:$0xf] %v4

// kernel: tile.19
$region0: #{tile.19}
  %s0 = inlined_call_operand.vmem [shape: f32[4,8], index: 0, kind: input, shape index: {}]
  %s1 = inlined_call_operand.vmem [shape: f32[1,32], index: 1, kind: output, shape index: {}]
  $region1: #{tile.19} parent=0
    #allocation0 [shape = 'u8[4096]{0}', space=vmem, size = 0x1000, scoped, tag = 'scoped mem for output reshape']
    #allocation1 [shape = 'u8[4096]{0}', space=vmem, size = 0x1000, scoped, tag = 'scoped mem for input reshape']
    %s3 = sshll.u32 1, 4
    %s4 = ssub.s32 %s3, 1
    %v5 = vld [vmem:[%s0] sm:%s4]
    %6 = vst [vmem:[#allocation1] sm:%s4] %v5
    %v7 = vld [vmem:[#allocation1] sm:$0x1]
    %vm8 = vcmask 64512
    %9 = vst.msk [vmem:[#allocation0] sm:$0x1] %vm8, %v7
    %s10 = scalar_lea.vmem [#allocation1], 3
    %v11 = vld [vmem:[%s10] sm:$0x1]
    %12 = vrot.lane.b32.xlu0 %v11, 24
    %v13 = vpop.permute.xlu0 %12
    %vm14 = vcmask 261312
    %15 = vst.msk [vmem:[#allocation0] sm:$0x1] %vm14, %v13
    %s16 = scalar_lea.vmem [#allocation1], 2
    %v17 = vld [vmem:[%s16] sm:$0x1]
    %18 = vrot.lane.b32.xlu0 %v17, 16
    %v19 = vpop.permute.xlu0 %18
    %vm20 = vcmask 195712
    %21 = vst.msk [vmem:[#allocation0] sm:$0x1] %vm20, %v19
    %s22 = scalar_lea.vmem [#allocation1], 1
    %v23 = vld [vmem:[%s22] sm:$0x1]
    %24 = vrot.lane.b32.xlu0 %v23, 8
    %v25 = vpop.permute.xlu0 %24
    %vm26 = vcmask 130112
    %27 = vst.msk [vmem:[#allocation0] sm:$0x1] %vm26, %v25
    %s29 = sshll.u32 1, 1
    %s30 = ssub.s32 %s29, 1
    %v32 = vld [vmem:[#allocation0] sm:%s30]
    %s33 = sshll.u32 1, 1
    %s34 = ssub.s32 %s33, 1
    %35 = vst [vmem:[%s1] sm:%s34] %v32

// kernel: _res_decoder_impl.3
$region0: #{_res_decoder_impl.3}
  #allocation0 [shape = 'u32[]', space=smem, size = 0x4, offset = 0x4, fixed_abs, tag = 'smem constant byte address 0x4 - core index']
  #allocation1 [shape = 'u32[144,128]{1,0:T(1,128)}', space=vmem, size = 0x12000, scoped, tag = 'internal scratch']
  %s0 = inlined_call_operand.vmem [shape: f32[2,8,8,32], index: 0, kind: input, shape index: {}]
  %s1 = inlined_call_operand.vmem [shape: bf16[128,64], index: 1, kind: input, shape index: {}]
  %s2 = inlined_call_operand.vmem [shape: f32[1,64], index: 2, kind: input, shape index: {}]
  %s3 = inlined_call_operand.vmem [shape: bf16[2,8,2,8,32], index: 3, kind: output, shape index: {}]
  %s4 = sld [smem:[#allocation0]]
  $region45: #{_res_decoder_impl.3} parent=0
    _
  %s6 = ssub.s32 1, %s4
  %s7 = scalar_select 0, %s6, %s4
  loop: start=0, step=1, limit=4
  $region2: #{_res_decoder_impl.3} parent=0 // loop_pre_header
    _
  $region3: #{_res_decoder_impl.3} parent=0 // loop_header
    %s9 = sphi 0, %s13
    %p10 = scmp.ge.s32.totalorder %s9, 4
    %s19 = sphi 0, %s21
    %s22 = sphi 0, %s19
    %s23 = sphi 0, %s22
    %s39 = sphi 0, %s23
    %s43 = sphi 0, %s43
    %s45 = sphi 0, %s43
    %s46 = sphi 0, %s45
    %s60 = sphi 0, %s46
    %s64 = sphi 0, %s64
    %s66 = sphi 0, %s64
    %s67 = sphi 0, %s66
    %s81 = sphi 0, %s67
    %s87 = sphi 0, %s89
    %s90 = sphi 0, %s87
    %s91 = sphi 0, %s90
    %s107 = sphi 0, %s91
  $region4: #{_res_decoder_impl.3} parent=0 // loop_header_branch
    %12 = sbr.rel (%p10) target = $region8
  $region5: #{_res_decoder_impl.3} parent=0 // loop_body
    %s14 = ssub.s32 %s9, 1
    %s15 = ssub.s32 %s9, 2
    %s16 = sadd.s32 %s9, 1
    %s17 = ssub.s32 %s9, %s16
    %p18 = scmp.eq.s32.totalorder %s17, 0
    %s20 = sadd.s32 %s19, 1
    %s21 = scalar_select %p18, %s19, %s20
    %p24 = pneg %p18
    %p25 = scmp.eq.s32.totalorder %s9, 1
    %p26 = por %p24, %p25
    %p27 = scmp.ne.s32.totalorder %s19, %s22
    %p28 = scmp.eq.s32.totalorder %s9, 0
    %p29 = por %p27, %p28
    %p30 = scmp.ne.s32.totalorder %s19, %s22
    %p31 = scmp.eq.s32.totalorder %s14, 1
    %p32 = por %p30, %p31
    %p33 = scmp.ne.s32.totalorder %s22, %s23
    %p34 = scmp.eq.s32.totalorder %s14, 0
    %p35 = por %p33, %p34
    %p36 = scmp.ne.s32.totalorder %s22, %s23
    %p37 = scmp.eq.s32.totalorder %s15, 1
    %p38 = por %p36, %p37
    %p40 = scmp.ne.s32.totalorder %s23, %s39
    %p41 = scmp.eq.s32.totalorder %s15, 0
    %p42 = por %p40, %p41
    %s44 = sadd.s32 %s43, 1
    %p47 = scmp.eq.s32.totalorder %s9, 1
    %p48 = scmp.ne.s32.totalorder %s43, %s45
    %p49 = scmp.eq.s32.totalorder %s9, 0
    %p50 = por %p48, %p49
    %p51 = scmp.ne.s32.totalorder %s43, %s45
    %p52 = scmp.eq.s32.totalorder %s14, 1
    %p53 = por %p51, %p52
    %p54 = scmp.ne.s32.totalorder %s45, %s46
    %p55 = scmp.eq.s32.totalorder %s14, 0
    %p56 = por %p54, %p55
    %p57 = scmp.ne.s32.totalorder %s45, %s46
    %p58 = scmp.eq.s32.totalorder %s15, 1
    %p59 = por %p57, %p58
    %p61 = scmp.ne.s32.totalorder %s46, %s60
    %p62 = scmp.eq.s32.totalorder %s15, 0
    %p63 = por %p61, %p62
    %s65 = sadd.s32 %s64, 1
    %p68 = scmp.eq.s32.totalorder %s9, 1
    %p69 = scmp.ne.s32.totalorder %s64, %s66
    %p70 = scmp.eq.s32.totalorder %s9, 0
    %p71 = por %p69, %p70
    %p72 = scmp.ne.s32.totalorder %s64, %s66
    %p73 = scmp.eq.s32.totalorder %s14, 1
    %p74 = por %p72, %p73
    %p75 = scmp.ne.s32.totalorder %s66, %s67
    %p76 = scmp.eq.s32.totalorder %s14, 0
    %p77 = por %p75, %p76
    %p78 = scmp.ne.s32.totalorder %s66, %s67
    %p79 = scmp.eq.s32.totalorder %s15, 1
    %p80 = por %p78, %p79
    %p82 = scmp.ne.s32.totalorder %s67, %s81
    %p83 = scmp.eq.s32.totalorder %s15, 0
    %p84 = por %p82, %p83
    %s85 = ssub.s32 %s9, %s16
    %p86 = scmp.eq.s32.totalorder %s85, 0
    %s88 = sadd.s32 %s87, 1
    %s89 = scalar_select %p86, %s87, %s88
    %p92 = pneg %p86
    %p93 = scmp.eq.s32.totalorder %s9, 1
    %p94 = por %p92, %p93
    %p95 = scmp.ne.s32.totalorder %s87, %s90
    %p96 = scmp.eq.s32.totalorder %s9, 0
    %p97 = por %p95, %p96
    %p98 = scmp.ne.s32.totalorder %s87, %s90
    %p99 = scmp.eq.s32.totalorder %s14, 1
    %p100 = por %p98, %p99
    %p101 = scmp.ne.s32.totalorder %s90, %s91
    %p102 = scmp.eq.s32.totalorder %s14, 0
    %p103 = por %p101, %p102
    %p104 = scmp.ne.s32.totalorder %s90, %s91
    %p105 = scmp.eq.s32.totalorder %s15, 1
    %p106 = por %p104, %p105
    %p108 = scmp.ne.s32.totalorder %s91, %s107
    %p109 = scmp.eq.s32.totalorder %s15, 0
    %p110 = por %p108, %p109
    %p111 = scmp.le.s32.totalorder 1, %s9
    %p112 = scmp.lt.s32.totalorder %s9, 3
    %p113 = pnand %p111, %p112
    %p114 = pneg %p113
    // Predicated region
    $region9: #{_res_decoder_impl.3} parent=5 // pred_check
      _
    $region10: #{_res_decoder_impl.3} parent=5 // pred_check_branch
      %116 = sbr.rel (%p113) target = $region12
    $region11: #{_res_decoder_impl.3} parent=5 // pred_region
      %s117 = ssub.s32 %s9, 1
      // Predicated region
      $region13: #{_res_decoder_impl.3} parent=11 // pred_check
        %p118 = pneg %p56
      $region14: #{_res_decoder_impl.3} parent=11 // pred_check_branch
        %120 = sbr.rel (%p118) target = $region16
      $region15: #{_res_decoder_impl.3} parent=11 // pred_region
        _
      $region16: #{_res_decoder_impl.3} parent=11 // pred_fallthru
        _
      // Predicated region
      $region17: #{_res_decoder_impl.3} parent=11 // pred_check
        %p121 = pneg %p77
      $region18: #{_res_decoder_impl.3} parent=11 // pred_check_branch
        %123 = sbr.rel (%p121) target = $region20
      $region19: #{_res_decoder_impl.3} parent=11 // pred_region
        _
      $region20: #{_res_decoder_impl.3} parent=11 // pred_fallthru
        _
    $region12: #{_res_decoder_impl.3} parent=5 // pred_fallthru
      _
    %p124 = scmp.lt.s32.totalorder %s9, 2
    // Predicated region
    $region21: #{_res_decoder_impl.3} parent=5 // pred_check
      %p125 = pneg %p124
    $region22: #{_res_decoder_impl.3} parent=5 // pred_check_branch
      %127 = sbr.rel (%p125) target = $region24
    $region23: #{_res_decoder_impl.3} parent=5 // pred_region
      // Predicated region
      $region25: #{_res_decoder_impl.3} parent=23 // pred_check
        %p128 = pneg %p29
      $region26: #{_res_decoder_impl.3} parent=23 // pred_check_branch
        %130 = sbr.rel (%p128) target = $region28
      $region27: #{_res_decoder_impl.3} parent=23 // pred_region
        %p131 = scmp.lt.s32.totalorder %s9, 1
        %s132 = scalar_select %p131, %s9, 1
        %s133 = smul.addr %s132, 8
        %s134 = smul.addr %s133, 8
        %s135 = scalar_lea.vmem %s0, %s134
      $region28: #{_res_decoder_impl.3} parent=23 // pred_fallthru
        _
    $region24: #{_res_decoder_impl.3} parent=5 // pred_fallthru
      _
    %p136 = scmp.le.s32.totalorder 1, %s9
    %p137 = scmp.lt.s32.totalorder %s9, 3
    %p138 = pnand %p136, %p137
    %p139 = pneg %p138
    // Predicated region
    $region29: #{_res_decoder_impl.3} parent=5 // pred_check
      _
    $region30: #{_res_decoder_impl.3} parent=5 // pred_check_branch
      %141 = sbr.rel (%p138) target = $region32
    $region31: #{_res_decoder_impl.3} parent=5 // pred_region
      %s142 = ssub.s32 %s9, 1
      %p143 = scmp.lt.s32.totalorder %s14, 1
      %s144 = scalar_select %p143, %s14, 1
      %s145 = smul.addr %s144, 8
      %s146 = smul.addr %s145, 8
      %s147 = scalar_lea.vmem %s0, %s146
      %p148 = pneg %p35
      %p149 = pneg %p32
      %p150 = pneg %p56
      %p151 = pneg %p53
      %p152 = pneg %p77
      %p153 = pneg %p74
      %p154 = pneg %p103
      %p155 = pneg %p100
      %p156 = scmp.lt.s32.totalorder %s14, 1
      %s157 = scalar_select %p156, %s14, 1
      %s158 = smul.addr %s157, 16
      %s159 = smul.addr %s158, 4
      %s160 = scalar_lea.vmem %s3, %s159
      %p161 = scmp.lt.s32.totalorder %s14, 1
      %s162 = scalar_select %p161, %s14, 1
      %s163 = smul.addr %s162, 8
      %s164 = smul.addr %s163, 8
      %s165 = scalar_lea.vmem %s0, %s164
      %p166 = scmp.lt.s32.totalorder %s14, 1
      %s167 = scalar_select %p166, %s14, 1
      %s168 = smul.addr %s167, 16
      %s169 = smul.addr %s168, 4
      %s170 = scalar_lea.vmem %s3, %s169
      %v172 = vld [vmem:[%s165] sm:$0xff]
      %v173 = vld [vmem:[%s165 + $0x8] sm:$0xff]
      %v174 = vld [vmem:[%s165 + $0x10] sm:$0xff]
      %v175 = vld [vmem:[%s165 + $0x18] sm:$0xff]
      %v176 = vld [vmem:[%s165 + $0x20] sm:$0xff]
      %v177 = vld [vmem:[%s165 + $0x28] sm:$0xff]
      %v178 = vld [vmem:[%s165 + $0x30] sm:$0xff]
      %v179 = vld [vmem:[%s165 + $0x38] sm:$0xff]
      %v180 = vpack.c.bf16 %v172, %v172
      %v181 = vpack.c.bf16 %v173, %v173
      %v182 = vpack.c.bf16 %v174, %v174
      %v183 = vpack.c.bf16 %v175, %v175
      %v184 = vpack.c.bf16 %v176, %v176
      %v185 = vpack.c.bf16 %v177, %v177
      %v186 = vpack.c.bf16 %v178, %v178
      %v187 = vpack.c.bf16 %v179, %v179
      %vm188 = vcmask 1043456
      %v191 = vsel %vm188, %v180, 0
      %v193 = vsel %vm188, %v181, 0
      %v195 = vsel %vm188, %v182, 0
      %v197 = vsel %vm188, %v183, 0
      %v199 = vsel %vm188, %v184, 0
      %v201 = vsel %vm188, %v185, 0
      %v203 = vsel %vm188, %v186, 0
      %v205 = vsel %vm188, %v187, 0
      %v206 = vshrl.u32 %v191, 16
      %v208 = vshll.u32 %v191, 16
      %v210 = vrot.slane %v208, 1
      %v211 = vor.u32 %v206, %v210
      %v212 = vshrl.u32 %v193, 16
      %v214 = vshll.u32 %v193, 16
      %v216 = vrot.slane %v214, 1
      %v217 = vor.u32 %v212, %v216
      %v218 = vshrl.u32 %v195, 16
      %v220 = vshll.u32 %v195, 16
      %v222 = vrot.slane %v220, 1
      %v223 = vor.u32 %v218, %v222
      %v224 = vshrl.u32 %v197, 16
      %v226 = vshll.u32 %v197, 16
      %v228 = vrot.slane %v226, 1
      %v229 = vor.u32 %v224, %v228
      %v230 = vshrl.u32 %v199, 16
      %v232 = vshll.u32 %v199, 16
      %v234 = vrot.slane %v232, 1
      %v235 = vor.u32 %v230, %v234
      %v236 = vshrl.u32 %v201, 16
      %v238 = vshll.u32 %v201, 16
      %v240 = vrot.slane %v238, 1
      %v241 = vor.u32 %v236, %v240
      %v242 = vshrl.u32 %v203, 16
      %v244 = vshll.u32 %v203, 16
      %v246 = vrot.slane %v244, 1
      %v247 = vor.u32 %v242, %v246
      %v248 = vshrl.u32 %v205, 16
      %v250 = vshll.u32 %v205, 16
      %v252 = vrot.slane %v250, 1
      %v253 = vor.u32 %v248, %v252
      %254 = vrot.lane.b32.xlu0 %v211, 32
      %v255 = vpop.permute.xlu0 %254
      %256 = vrot.lane.b32.xlu0 %v217, 32
      %v257 = vpop.permute.xlu0 %256
      %258 = vrot.lane.b32.xlu0 %v223, 32
      %v259 = vpop.permute.xlu0 %258
      %260 = vrot.lane.b32.xlu0 %v229, 32
      %v261 = vpop.permute.xlu0 %260
      %262 = vrot.lane.b32.xlu0 %v235, 32
      %v263 = vpop.permute.xlu0 %262
      %264 = vrot.lane.b32.xlu0 %v241, 32
      %v265 = vpop.permute.xlu0 %264
      %266 = vrot.lane.b32.xlu0 %v247, 32
      %v267 = vpop.permute.xlu0 %266
      %268 = vrot.lane.b32.xlu0 %v253, 32
      %v269 = vpop.permute.xlu0 %268
      %278 = vrot.lane.b32.xlu0 %v193, 64
      %v279 = vpop.permute.xlu0 %278
      %280 = vrot.lane.b32.xlu0 %v195, 64
      %v281 = vpop.permute.xlu0 %280
      %282 = vrot.lane.b32.xlu0 %v197, 64
      %v283 = vpop.permute.xlu0 %282
      %284 = vrot.lane.b32.xlu0 %v199, 64
      %v285 = vpop.permute.xlu0 %284
      %286 = vrot.lane.b32.xlu0 %v201, 64
      %v287 = vpop.permute.xlu0 %286
      %288 = vrot.lane.b32.xlu0 %v203, 64
      %v289 = vpop.permute.xlu0 %288
      %290 = vrot.lane.b32.xlu0 %v205, 64
      %v291 = vpop.permute.xlu0 %290
      %292 = vrot.lane.b32.xlu0 0, 64
      %v293 = vpop.permute.xlu0 %292
      %v294 = vshrl.u32 0, 16
      %v296 = vshll.u32 0, 16
      %v298 = vrot.slane %v296, 1
      %v299 = vor.u32 %v294, %v298
      %300 = vrot.lane.b32.xlu0 %v217, 96
      %v301 = vpop.permute.xlu0 %300
      %302 = vrot.lane.b32.xlu0 %v223, 96
      %v303 = vpop.permute.xlu0 %302
      %304 = vrot.lane.b32.xlu0 %v229, 96
      %v305 = vpop.permute.xlu0 %304
      %306 = vrot.lane.b32.xlu0 %v235, 96
      %v307 = vpop.permute.xlu0 %306
      %308 = vrot.lane.b32.xlu0 %v241, 96
      %v309 = vpop.permute.xlu0 %308
      %310 = vrot.lane.b32.xlu0 %v247, 96
      %v311 = vpop.permute.xlu0 %310
      %312 = vrot.lane.b32.xlu0 %v253, 96
      %v313 = vpop.permute.xlu0 %312
      %314 = vrot.lane.b32.xlu0 %v299, 96
      %v315 = vpop.permute.xlu0 %314
      %vm316 = vcmask 261120
      %v318 = vsel %vm316, %v191, %v255
      %v320 = vsel %vm316, %v193, %v257
      %v322 = vsel %vm316, %v195, %v259
      %v324 = vsel %vm316, %v197, %v261
      %v326 = vsel %vm316, %v199, %v263
      %v328 = vsel %vm316, %v201, %v265
      %v330 = vsel %vm316, %v203, %v267
      %v332 = vsel %vm316, %v205, %v269
      %vm333 = vcmask 523264
      %v335 = vsel %vm333, %v318, %v279
      %v337 = vsel %vm333, %v320, %v281
      %v339 = vsel %vm333, %v322, %v283
      %v341 = vsel %vm333, %v324, %v285
      %v343 = vsel %vm333, %v326, %v287
      %v345 = vsel %vm333, %v328, %v289
      %v347 = vsel %vm333, %v330, %v291
      %v349 = vsel %vm333, %v332, %v293
      %vm350 = vcmask 785408
      %v352 = vsel %vm350, %v335, %v301
      %v354 = vsel %vm350, %v337, %v303
      %v356 = vsel %vm350, %v339, %v305
      %v358 = vsel %vm350, %v341, %v307
      %v360 = vsel %vm350, %v343, %v309
      %v362 = vsel %vm350, %v345, %v311
      %v364 = vsel %vm350, %v347, %v313
      %v366 = vsel %vm350, %v349, %v315
      %v367 = vld [vmem:[%s1] sm:$0xf]
      %v368 = vld [vmem:[%s1 + $0x4] sm:$0xf]
      %v369 = vld [vmem:[%s1 + $0x8] sm:$0xf]
      %v370 = vld [vmem:[%s1 + $0xc] sm:$0xf]
      %v371 = vld [vmem:[%s1 + $0x10] sm:$0xf]
      %v372 = vld [vmem:[%s1 + $0x14] sm:$0xf]
      %v373 = vld [vmem:[%s1 + $0x18] sm:$0xf]
      %v374 = vld [vmem:[%s1 + $0x1c] sm:$0xf]
      %v375 = vld [vmem:[%s1 + $0x20] sm:$0xf]
      %v376 = vld [vmem:[%s1 + $0x24] sm:$0xf]
      %v377 = vld [vmem:[%s1 + $0x28] sm:$0xf]
      %v378 = vld [vmem:[%s1 + $0x2c] sm:$0xf]
      %v379 = vld [vmem:[%s1 + $0x30] sm:$0xf]
      %v380 = vld [vmem:[%s1 + $0x34] sm:$0xf]
      %v381 = vld [vmem:[%s1 + $0x38] sm:$0xf]
      %v382 = vld [vmem:[%s1 + $0x3c] sm:$0xf]
      %v383 = vld [vmem:[%s2] sm:$0x1]
      %v385 = vlaneseq
      %v386 = vshrl.u32 %v385, 7
      %v387 = vsub.s32 0, %v386
      %v388 = vrot.slane %v383, %v387
      %v398 = vunpack.c.l.b16 %v352
      %v399 = vunpack.c.l.b16 %v354
      %v400 = vunpack.c.l.b16 %v356
      %v401 = vunpack.c.l.b16 %v358
      %v402 = vunpack.c.l.b16 %v360
      %v403 = vunpack.c.l.b16 %v362
      %v404 = vunpack.c.l.b16 %v364
      %v405 = vunpack.c.l.b16 %v366
      %v406 = vpack.c.b16 %v399, %v398
      %v407 = vpack.c.b16 %v401, %v400
      %v408 = vpack.c.b16 %v403, %v402
      %v409 = vpack.c.b16 %v405, %v404
      %v430 = vunpack.c.l.b16 %v367
      %v431 = vunpack.c.l.b16 %v368
      %v432 = vunpack.c.l.b16 %v369
      %v433 = vunpack.c.l.b16 %v370
      %v434 = vunpack.c.l.b16 %v371
      %v435 = vunpack.c.l.b16 %v372
      %v436 = vunpack.c.l.b16 %v373
      %v437 = vunpack.c.l.b16 %v374
      %v438 = vunpack.c.l.b16 %v375
      %v439 = vunpack.c.l.b16 %v376
      %v440 = vunpack.c.l.b16 %v377
      %v441 = vunpack.c.l.b16 %v378
      %v442 = vunpack.c.l.b16 %v379
      %v443 = vunpack.c.l.b16 %v380
      %v444 = vunpack.c.l.b16 %v381
      %v445 = vunpack.c.l.b16 %v382
      %v446 = vpack.c.b16 %v431, %v430
      %v447 = vpack.c.b16 %v433, %v432
      %v448 = vpack.c.b16 %v435, %v434
      %v449 = vpack.c.b16 %v437, %v436
      %v450 = vpack.c.b16 %v439, %v438
      %v451 = vpack.c.b16 %v441, %v440
      %v452 = vpack.c.b16 %v443, %v442
      %v453 = vpack.c.b16 %v445, %v444
      %462 = vmatprep.subr.bf16.mxu0 0
      %463 = vmatpush1.bf16.msra.mxu0 %v453
      %464 = vmatprep.subr.bf16.mxu0 0
      %465 = vmatpush1.bf16.msra.mxu0 %v452
      %466 = vmatprep.subr.bf16.mxu0 0
      %467 = vmatpush1.bf16.msra.mxu0 %v451
      %468 = vmatprep.subr.bf16.mxu0 0
      %469 = vmatpush1.bf16.msra.mxu0 %v450
      %470 = vmatprep.subr.bf16.mxu0 0
      %471 = vmatpush1.bf16.msra.mxu0 %v449
      %472 = vmatprep.subr.bf16.mxu0 0
      %473 = vmatpush1.bf16.msra.mxu0 %v448
      %474 = vmatprep.subr.bf16.mxu0 0
      %475 = vmatpush1.bf16.msra.mxu0 %v447
      %476 = vmatprep.subr.bf16.mxu0 0
      %477 = vmatpush1.bf16.msra.mxu0 %v446
      %478 = vmatprep.subr.bf16.mxu0 0
      %479 = vmatpush2.bf16.msra.mxu0 0
      %480 = vmatprep.subr.bf16.mxu0 0
      %481 = vmatpush2.bf16.msra.mxu0 0
      %482 = vmatprep.subr.bf16.mxu0 0
      %483 = vmatpush2.bf16.msra.mxu0 0
      %484 = vmatprep.subr.bf16.mxu0 0
      %485 = vmatpush2.bf16.msra.mxu0 0
      %486 = vmatprep.subr.bf16.mxu0 0
      %487 = vmatpush2.bf16.msra.mxu0 0
      %488 = vmatprep.subr.bf16.mxu0 0
      %489 = vmatpush2.bf16.msra.mxu0 0
      %490 = vmatprep.subr.bf16.mxu0 0
      %491 = vmatpush2.bf16.msra.mxu0 0
      %492 = vmatprep.subr.bf16.mxu0 0
      %493 = vmatpush2.bf16.msra.mxu0 0
      %494 = vmatprep.mubr.bf16.mxu0 0
      %495 = vmatmul.mubr.bf16.gmra.mxu0 %v406
      %v496 = vpop.f32.mrf.mxu0
      %v497 = vadd.f32 %v388, %v496
      %v498 = vpop.f32.mrf.mxu0
      %v499 = vpop.f32.mrf.mxu0
      %v500 = vadd.f32 %v388, %v499
      %v501 = vpop.f32.mrf.mxu0
      %502 = vmatprep.mubr.bf16.mxu0 0
      %503 = vmatmul.mubr.bf16.gmra.mxu0 %v407
      %v504 = vpop.f32.mrf.mxu0
      %v505 = vadd.f32 %v388, %v504
      %v506 = vpop.f32.mrf.mxu0
      %v507 = vpop.f32.mrf.mxu0
      %v508 = vadd.f32 %v388, %v507
      %v509 = vpop.f32.mrf.mxu0
      %510 = vmatprep.mubr.bf16.mxu0 0
      %511 = vmatmul.mubr.bf16.gmra.mxu0 %v408
      %v512 = vpop.f32.mrf.mxu0
      %v513 = vadd.f32 %v388, %v512
      %v514 = vpop.f32.mrf.mxu0
      %v515 = vpop.f32.mrf.mxu0
      %v516 = vadd.f32 %v388, %v515
      %v517 = vpop.f32.mrf.mxu0
      %518 = vmatprep.mubr.bf16.mxu0 0
      %519 = vmatmul.mubr.bf16.gmra.mxu0 %v409
      %v520 = vpop.f32.mrf.mxu0
      %v521 = vadd.f32 %v388, %v520
      %v522 = vpop.f32.mrf.mxu0
      %v523 = vpop.f32.mrf.mxu0
      %v524 = vadd.f32 %v388, %v523
      %v525 = vpop.f32.mrf.mxu0
      %526 = vdwg.mxu0
      %v527 = vsel %vm333, %v497, 0.0
      %v528 = vsel %vm333, %v500, 0.0
      %v529 = vadd.f32 %v527, %v528
      %v530 = vsel %vm333, %v505, 0.0
      %v531 = vadd.f32 %v529, %v530
      %v532 = vsel %vm333, %v508, 0.0
      %v533 = vadd.f32 %v531, %v532
      %v534 = vsel %vm333, %v513, 0.0
      %v535 = vadd.f32 %v533, %v534
      %v536 = vsel %vm333, %v516, 0.0
      %v537 = vadd.f32 %v535, %v536
      %v538 = vsel %vm333, %v521, 0.0
      %v539 = vadd.f32 %v537, %v538
      %v540 = vsel %vm333, %v524, 0.0
      %v541 = vadd.f32 %v539, %v540
      %v542 = vrot.slane %v541, 4
      %v543 = vadd.f32 %v541, %v542
      %v544 = vrot.slane %v543, 2
      %v545 = vadd.f32 %v543, %v544
      %v546 = vrot.slane %v545, 1
      %v547 = vadd.f32 %v545, %v546
      %549 = vrot.lane.b32.xlu0 %v547, 112
      %v550 = vpop.permute.xlu0 %549
      %v552 = vadd.f32 %v547, %v550
      %553 = vrot.lane.b32.xlu0 %v547, 96
      %v554 = vpop.permute.xlu0 %553
      %v556 = vadd.f32 %v552, %v554
      %557 = vrot.lane.b32.xlu0 %v547, 80
      %v558 = vpop.permute.xlu0 %557
      %v560 = vadd.f32 %v556, %v558
      %v561 = vmul.f32 %v560, 0.00390625
      %563 = vrot.lane.b32.xlu0 %v561, 16
      %v564 = vpop.permute.xlu0 %563
      %566 = vrot.lane.b32.xlu0 %v561, 32
      %v567 = vpop.permute.xlu0 %566
      %569 = vrot.lane.b32.xlu0 %v561, 48
      %v570 = vpop.permute.xlu0 %569
      %vm572 = vcmask 130048
      %v573 = vsel %vm572, %v561, %v564
      %v574 = vsel %vm316, %v573, %v567
      %vm575 = vcmask 392192
      %v576 = vsel %vm575, %v574, %v570
      %v577 = vlaneseq
      %v578 = vshrl.u32 %v577, 7
      %v579 = vsub.s32 0, %v578
      %v580 = vrot.slane %v576, %v579
      %v581 = vsub.f32 %v497, %v580
      %v582 = vsub.f32 %v500, %v580
      %v583 = vsub.f32 %v505, %v580
      %v584 = vsub.f32 %v508, %v580
      %v585 = vsub.f32 %v513, %v580
      %v586 = vsub.f32 %v516, %v580
      %v587 = vsub.f32 %v521, %v580
      %v588 = vsub.f32 %v524, %v580
      %v589 = vmul.f32 %v581, %v581
      %v590 = vmul.f32 %v582, %v582
      %v591 = vmul.f32 %v583, %v583
      %v592 = vmul.f32 %v584, %v584
      %v593 = vmul.f32 %v585, %v585
      %v594 = vmul.f32 %v586, %v586
      %v595 = vmul.f32 %v587, %v587
      %v596 = vmul.f32 %v588, %v588
      %v597 = vsel %vm333, %v589, 0.0
      %v598 = vsel %vm333, %v590, 0.0
      %v599 = vadd.f32 %v597, %v598
      %v600 = vsel %vm333, %v591, 0.0
      %v601 = vadd.f32 %v599, %v600
      %v602 = vsel %vm333, %v592, 0.0
      %v603 = vadd.f32 %v601, %v602
      %v604 = vsel %vm333, %v593, 0.0
      %v605 = vadd.f32 %v603, %v604
      %v606 = vsel %vm333, %v594, 0.0
      %v607 = vadd.f32 %v605, %v606
      %v608 = vsel %vm333, %v595, 0.0
      %v609 = vadd.f32 %v607, %v608
      %v610 = vsel %vm333, %v596, 0.0
      %v611 = vadd.f32 %v609, %v610
      %v612 = vrot.slane %v611, 4
      %v613 = vadd.f32 %v611, %v612
      %v614 = vrot.slane %v613, 2
      %v615 = vadd.f32 %v613, %v614
      %v616 = vrot.slane %v615, 1
      %v617 = vadd.f32 %v615, %v616
      %619 = vrot.lane.b32.xlu0 %v617, 112
      %v620 = vpop.permute.xlu0 %619
      %v622 = vadd.f32 %v617, %v620
      %623 = vrot.lane.b32.xlu0 %v617, 96
      %v624 = vpop.permute.xlu0 %623
      %v626 = vadd.f32 %v622, %v624
      %627 = vrot.lane.b32.xlu0 %v617, 80
      %v628 = vpop.permute.xlu0 %627
      %v630 = vadd.f32 %v626, %v628
      %v631 = vmul.f32 %v630, 0.00390625
      %v632 = vadd.f32 %v631, 1e-05
      %v633 = vrsqrt.pop %v632
      %635 = vrot.lane.b32.xlu0 %v633, 16
      %v636 = vpop.permute.xlu0 %635
      %638 = vrot.lane.b32.xlu0 %v633, 32
      %v639 = vpop.permute.xlu0 %638
      %641 = vrot.lane.b32.xlu0 %v633, 48
      %v642 = vpop.permute.xlu0 %641
      %v644 = vsel %vm572, %v633, %v636
      %v645 = vsel %vm316, %v644, %v639
      %v646 = vsel %vm575, %v645, %v642
      %v647 = vlaneseq
      %v648 = vshrl.u32 %v647, 7
      %v649 = vsub.s32 0, %v648
      %v650 = vrot.slane %v646, %v649
      %v651 = vmul.f32 %v581, %v650
      %v652 = vmul.f32 %v582, %v650
      %v653 = vmul.f32 %v583, %v650
      %v654 = vmul.f32 %v584, %v650
      %v655 = vmul.f32 %v585, %v650
      %v656 = vmul.f32 %v586, %v650
      %v657 = vmul.f32 %v587, %v650
      %v658 = vmul.f32 %v588, %v650
      %v659 = vmax.f32 %v651, 0.0
      %v660 = vmax.f32 %v652, 0.0
      %v661 = vmax.f32 %v653, 0.0
      %v662 = vmax.f32 %v654, 0.0
      %v663 = vmax.f32 %v655, 0.0
      %v664 = vmax.f32 %v656, 0.0
      %v665 = vmax.f32 %v657, 0.0
      %v666 = vmax.f32 %v658, 0.0
      %v667 = vpack.c.bf16 %v659, %v659
      %v668 = vpack.c.bf16 %v660, %v660
      %v669 = vpack.c.bf16 %v661, %v661
      %v670 = vpack.c.bf16 %v662, %v662
      %v671 = vpack.c.bf16 %v663, %v663
      %v672 = vpack.c.bf16 %v664, %v664
      %v673 = vpack.c.bf16 %v665, %v665
      %v674 = vpack.c.bf16 %v666, %v666
      %vm675 = vcmask 257024
      %676 = vst.msk [vmem:[%s170] sm:$0xf] %vm675, %v667
      %677 = vst.msk [vmem:[%s170 + $0x8] sm:$0xf] %vm675, %v668
      %678 = vst.msk [vmem:[%s170 + $0x10] sm:$0xf] %vm675, %v669
      %679 = vst.msk [vmem:[%s170 + $0x18] sm:$0xf] %vm675, %v670
      %680 = vst.msk [vmem:[%s170 + $0x20] sm:$0xf] %vm675, %v671
      %681 = vst.msk [vmem:[%s170 + $0x28] sm:$0xf] %vm675, %v672
      %682 = vst.msk [vmem:[%s170 + $0x30] sm:$0xf] %vm675, %v673
      %683 = vst.msk [vmem:[%s170 + $0x38] sm:$0xf] %vm675, %v674
      %v692 = vunpack.c.l.b16 %v667
      %v693 = vunpack.c.l.b16 %v668
      %v694 = vunpack.c.l.b16 %v669
      %v695 = vunpack.c.l.b16 %v670
      %v696 = vunpack.c.l.b16 %v671
      %v697 = vunpack.c.l.b16 %v672
      %v698 = vunpack.c.l.b16 %v673
      %v699 = vunpack.c.l.b16 %v674
      %v700 = vpack.c.b16 %v692, %v692
      %v701 = vpack.c.b16 %v693, %v693
      %v702 = vpack.c.b16 %v694, %v694
      %v703 = vpack.c.b16 %v695, %v695
      %v704 = vpack.c.b16 %v696, %v696
      %v705 = vpack.c.b16 %v697, %v697
      %v706 = vpack.c.b16 %v698, %v698
      %v707 = vpack.c.b16 %v699, %v699
      %708 = vrot.lane.b32.xlu0 %v700, 96
      %v709 = vpop.permute.xlu0 %708
      %710 = vrot.lane.b32.xlu0 %v701, 96
      %v711 = vpop.permute.xlu0 %710
      %712 = vrot.lane.b32.xlu0 %v702, 96
      %v713 = vpop.permute.xlu0 %712
      %714 = vrot.lane.b32.xlu0 %v703, 96
      %v715 = vpop.permute.xlu0 %714
      %716 = vrot.lane.b32.xlu0 %v704, 96
      %v717 = vpop.permute.xlu0 %716
      %718 = vrot.lane.b32.xlu0 %v705, 96
      %v719 = vpop.permute.xlu0 %718
      %720 = vrot.lane.b32.xlu0 %v706, 96
      %v721 = vpop.permute.xlu0 %720
      %722 = vrot.lane.b32.xlu0 %v707, 96
      %v723 = vpop.permute.xlu0 %722
      %s732 = scalar_lea.vmem %s170, 4
      %733 = vst.msk [vmem:[%s732] sm:$0xf] %vm675, %v709
      %734 = vst.msk [vmem:[%s732 + $0x8] sm:$0xf] %vm675, %v711
      %735 = vst.msk [vmem:[%s732 + $0x10] sm:$0xf] %vm675, %v713
      %736 = vst.msk [vmem:[%s732 + $0x18] sm:$0xf] %vm675, %v715
      %737 = vst.msk [vmem:[%s732 + $0x20] sm:$0xf] %vm675, %v717
      %738 = vst.msk [vmem:[%s732 + $0x28] sm:$0xf] %vm675, %v719
      %739 = vst.msk [vmem:[%s732 + $0x30] sm:$0xf] %vm675, %v721
      %740 = vst.msk [vmem:[%s732 + $0x38] sm:$0xf] %vm675, %v723
      %p741 = scmp.lt.s32.totalorder %s14, 1
      %s742 = scalar_select %p741, %s14, 1
      %s743 = smul.addr %s742, 16
      %s744 = smul.addr %s743, 4
      %s745 = scalar_lea.vmem %s3, %s744
      // Predicated region
      $region33: #{_res_decoder_impl.3} parent=31 // pred_check
        %p746 = pneg %p100
      $region34: #{_res_decoder_impl.3} parent=31 // pred_check_branch
        %748 = sbr.rel (%p746) target = $region36
      $region35: #{_res_decoder_impl.3} parent=31 // pred_region
        _
      $region36: #{_res_decoder_impl.3} parent=31 // pred_fallthru
        _
    $region32: #{_res_decoder_impl.3} parent=5 // pred_fallthru
      _
    %p749 = scmp.le.s32.totalorder 2, %s9
    // Predicated region
    $region37: #{_res_decoder_impl.3} parent=5 // pred_check
      %p750 = pneg %p749
    $region38: #{_res_decoder_impl.3} parent=5 // pred_check_branch
      %752 = sbr.rel (%p750) target = $region40
    $region39: #{_res_decoder_impl.3} parent=5 // pred_region
      %s753 = ssub.s32 %s9, 2
      // Predicated region
      $region41: #{_res_decoder_impl.3} parent=39 // pred_check
        %p754 = pneg %p106
      $region42: #{_res_decoder_impl.3} parent=39 // pred_check_branch
        %756 = sbr.rel (%p754) target = $region44
      $region43: #{_res_decoder_impl.3} parent=39 // pred_region
        %p757 = scmp.lt.s32.totalorder %s15, 1
        %s758 = scalar_select %p757, %s15, 1
        %s759 = smul.addr %s758, 16
        %s760 = smul.addr %s759, 4
        %s761 = scalar_lea.vmem %s3, %s760
      $region44: #{_res_decoder_impl.3} parent=39 // pred_fallthru
        _
    $region40: #{_res_decoder_impl.3} parent=5 // pred_fallthru
      _
  $region6: #{_res_decoder_impl.3} parent=0 // loop_footer
    %s13 = sadd.s32 1, %s9
  $region7: #{_res_decoder_impl.3} parent=0 // loop_footer_branch
    %8 = sbr.rel target = $region3
  $region8: #{_res_decoder_impl.3} parent=0 // loop_exit
    _

// kernel: _res_decoder_impl.4
$region0: #{_res_decoder_impl.4}
  #allocation0 [shape = 'u32[]', space=smem, size = 0x4, offset = 0x4, fixed_abs, tag = 'smem constant byte address 0x4 - core index']
  #allocation1 [shape = 'u32[144,128]{1,0:T(1,128)}', space=vmem, size = 0x12000, scoped, tag = 'internal scratch']
  %s0 = inlined_call_operand.vmem [shape: bf16[2,16,16,16], index: 0, kind: input, shape index: {}]
  %s1 = inlined_call_operand.vmem [shape: bf16[64,32], index: 1, kind: input, shape index: {}]
  %s2 = inlined_call_operand.vmem [shape: f32[1,32], index: 2, kind: input, shape index: {}]
  %s3 = inlined_call_operand.vmem [shape: bf16[2,16,2,16,16], index: 3, kind: output, shape index: {}]
  %s4 = sld [smem:[#allocation0]]
  $region45: #{_res_decoder_impl.4} parent=0
    _
  %s6 = ssub.s32 1, %s4
  %s7 = scalar_select 0, %s6, %s4
  loop: start=0, step=1, limit=4
  $region2: #{_res_decoder_impl.4} parent=0 // loop_pre_header
    _
  $region3: #{_res_decoder_impl.4} parent=0 // loop_header
    %s9 = sphi 0, %s13
    %p10 = scmp.ge.s32.totalorder %s9, 4
    %s19 = sphi 0, %s21
    %s22 = sphi 0, %s19
    %s23 = sphi 0, %s22
    %s39 = sphi 0, %s23
    %s43 = sphi 0, %s43
    %s45 = sphi 0, %s43
    %s46 = sphi 0, %s45
    %s60 = sphi 0, %s46
    %s64 = sphi 0, %s64
    %s66 = sphi 0, %s64
    %s67 = sphi 0, %s66
    %s81 = sphi 0, %s67
    %s87 = sphi 0, %s89
    %s90 = sphi 0, %s87
    %s91 = sphi 0, %s90
    %s107 = sphi 0, %s91
  $region4: #{_res_decoder_impl.4} parent=0 // loop_header_branch
    %12 = sbr.rel (%p10) target = $region8
  $region5: #{_res_decoder_impl.4} parent=0 // loop_body
    %s14 = ssub.s32 %s9, 1
    %s15 = ssub.s32 %s9, 2
    %s16 = sadd.s32 %s9, 1
    %s17 = ssub.s32 %s9, %s16
    %p18 = scmp.eq.s32.totalorder %s17, 0
    %s20 = sadd.s32 %s19, 1
    %s21 = scalar_select %p18, %s19, %s20
    %p24 = pneg %p18
    %p25 = scmp.eq.s32.totalorder %s9, 1
    %p26 = por %p24, %p25
    %p27 = scmp.ne.s32.totalorder %s19, %s22
    %p28 = scmp.eq.s32.totalorder %s9, 0
    %p29 = por %p27, %p28
    %p30 = scmp.ne.s32.totalorder %s19, %s22
    %p31 = scmp.eq.s32.totalorder %s14, 1
    %p32 = por %p30, %p31
    %p33 = scmp.ne.s32.totalorder %s22, %s23
    %p34 = scmp.eq.s32.totalorder %s14, 0
    %p35 = por %p33, %p34
    %p36 = scmp.ne.s32.totalorder %s22, %s23
    %p37 = scmp.eq.s32.totalorder %s15, 1
    %p38 = por %p36, %p37
    %p40 = scmp.ne.s32.totalorder %s23, %s39
    %p41 = scmp.eq.s32.totalorder %s15, 0
    %p42 = por %p40, %p41
    %s44 = sadd.s32 %s43, 1
    %p47 = scmp.eq.s32.totalorder %s9, 1
    %p48 = scmp.ne.s32.totalorder %s43, %s45
    %p49 = scmp.eq.s32.totalorder %s9, 0
    %p50 = por %p48, %p49
    %p51 = scmp.ne.s32.totalorder %s43, %s45
    %p52 = scmp.eq.s32.totalorder %s14, 1
    %p53 = por %p51, %p52
    %p54 = scmp.ne.s32.totalorder %s45, %s46
    %p55 = scmp.eq.s32.totalorder %s14, 0
    %p56 = por %p54, %p55
    %p57 = scmp.ne.s32.totalorder %s45, %s46
    %p58 = scmp.eq.s32.totalorder %s15, 1
    %p59 = por %p57, %p58
    %p61 = scmp.ne.s32.totalorder %s46, %s60
    %p62 = scmp.eq.s32.totalorder %s15, 0
    %p63 = por %p61, %p62
    %s65 = sadd.s32 %s64, 1
    %p68 = scmp.eq.s32.totalorder %s9, 1
    %p69 = scmp.ne.s32.totalorder %s64, %s66
    %p70 = scmp.eq.s32.totalorder %s9, 0
    %p71 = por %p69, %p70
    %p72 = scmp.ne.s32.totalorder %s64, %s66
    %p73 = scmp.eq.s32.totalorder %s14, 1
    %p74 = por %p72, %p73
    %p75 = scmp.ne.s32.totalorder %s66, %s67
    %p76 = scmp.eq.s32.totalorder %s14, 0
    %p77 = por %p75, %p76
    %p78 = scmp.ne.s32.totalorder %s66, %s67
    %p79 = scmp.eq.s32.totalorder %s15, 1
    %p80 = por %p78, %p79
    %p82 = scmp.ne.s32.totalorder %s67, %s81
    %p83 = scmp.eq.s32.totalorder %s15, 0
    %p84 = por %p82, %p83
    %s85 = ssub.s32 %s9, %s16
    %p86 = scmp.eq.s32.totalorder %s85, 0
    %s88 = sadd.s32 %s87, 1
    %s89 = scalar_select %p86, %s87, %s88
    %p92 = pneg %p86
    %p93 = scmp.eq.s32.totalorder %s9, 1
    %p94 = por %p92, %p93
    %p95 = scmp.ne.s32.totalorder %s87, %s90
    %p96 = scmp.eq.s32.totalorder %s9, 0
    %p97 = por %p95, %p96
    %p98 = scmp.ne.s32.totalorder %s87, %s90
    %p99 = scmp.eq.s32.totalorder %s14, 1
    %p100 = por %p98, %p99
    %p101 = scmp.ne.s32.totalorder %s90, %s91
    %p102 = scmp.eq.s32.totalorder %s14, 0
    %p103 = por %p101, %p102
    %p104 = scmp.ne.s32.totalorder %s90, %s91
    %p105 = scmp.eq.s32.totalorder %s15, 1
    %p106 = por %p104, %p105
    %p108 = scmp.ne.s32.totalorder %s91, %s107
    %p109 = scmp.eq.s32.totalorder %s15, 0
    %p110 = por %p108, %p109
    %p111 = scmp.le.s32.totalorder 1, %s9
    %p112 = scmp.lt.s32.totalorder %s9, 3
    %p113 = pnand %p111, %p112
    %p114 = pneg %p113
    // Predicated region
    $region9: #{_res_decoder_impl.4} parent=5 // pred_check
      _
    $region10: #{_res_decoder_impl.4} parent=5 // pred_check_branch
      %116 = sbr.rel (%p113) target = $region12
    $region11: #{_res_decoder_impl.4} parent=5 // pred_region
      %s117 = ssub.s32 %s9, 1
      // Predicated region
      $region13: #{_res_decoder_impl.4} parent=11 // pred_check
        %p118 = pneg %p56
      $region14: #{_res_decoder_impl.4} parent=11 // pred_check_branch
        %120 = sbr.rel (%p118) target = $region16
      $region15: #{_res_decoder_impl.4} parent=11 // pred_region
        _
      $region16: #{_res_decoder_impl.4} parent=11 // pred_fallthru
        _
      // Predicated region
      $region17: #{_res_decoder_impl.4} parent=11 // pred_check
        %p121 = pneg %p77
      $region18: #{_res_decoder_impl.4} parent=11 // pred_check_branch
        %123 = sbr.rel (%p121) target = $region20
      $region19: #{_res_decoder_impl.4} parent=11 // pred_region
        _
      $region20: #{_res_decoder_impl.4} parent=11 // pred_fallthru
        _
    $region12: #{_res_decoder_impl.4} parent=5 // pred_fallthru
      _
    %p124 = scmp.lt.s32.totalorder %s9, 2
    // Predicated region
    $region21: #{_res_decoder_impl.4} parent=5 // pred_check
      %p125 = pneg %p124
    $region22: #{_res_decoder_impl.4} parent=5 // pred_check_branch
      %127 = sbr.rel (%p125) target = $region24
    $region23: #{_res_decoder_impl.4} parent=5 // pred_region
      // Predicated region
      $region25: #{_res_decoder_impl.4} parent=23 // pred_check
        %p128 = pneg %p29
      $region26: #{_res_decoder_impl.4} parent=23 // pred_check_branch
        %130 = sbr.rel (%p128) target = $region28
      $region27: #{_res_decoder_impl.4} parent=23 // pred_region
        %p131 = scmp.lt.s32.totalorder %s9, 1
        %s132 = scalar_select %p131, %s9, 1
        %s133 = smul.addr %s132, 32
        %s134 = smul.addr %s133, 4
        %s135 = scalar_lea.vmem %s0, %s134
      $region28: #{_res_decoder_impl.4} parent=23 // pred_fallthru
        _
    $region24: #{_res_decoder_impl.4} parent=5 // pred_fallthru
      _
    %p136 = scmp.le.s32.totalorder 1, %s9
    %p137 = scmp.lt.s32.totalorder %s9, 3
    %p138 = pnand %p136, %p137
    %p139 = pneg %p138
    // Predicated region
    $region29: #{_res_decoder_impl.4} parent=5 // pred_check
      _
    $region30: #{_res_decoder_impl.4} parent=5 // pred_check_branch
      %141 = sbr.rel (%p138) target = $region32
    $region31: #{_res_decoder_impl.4} parent=5 // pred_region
      %s142 = ssub.s32 %s9, 1
      %p143 = scmp.lt.s32.totalorder %s14, 1
      %s144 = scalar_select %p143, %s14, 1
      %s145 = smul.addr %s144, 32
      %s146 = smul.addr %s145, 4
      %s147 = scalar_lea.vmem %s0, %s146
      %p148 = pneg %p35
      %p149 = pneg %p32
      %p150 = pneg %p56
      %p151 = pneg %p53
      %p152 = pneg %p77
      %p153 = pneg %p74
      %p154 = pneg %p103
      %p155 = pneg %p100
      %p156 = scmp.lt.s32.totalorder %s14, 1
      %s157 = scalar_select %p156, %s14, 1
      %s158 = smul.addr %s157, 64
      %s159 = smul.addr %s158, 4
      %s160 = scalar_lea.vmem %s3, %s159
      %p161 = scmp.lt.s32.totalorder %s14, 1
      %s162 = scalar_select %p161, %s14, 1
      %s163 = smul.addr %s162, 32
      %s164 = smul.addr %s163, 4
      %s165 = scalar_lea.vmem %s0, %s164
      %p166 = scmp.lt.s32.totalorder %s14, 1
      %s167 = scalar_select %p166, %s14, 1
      %s168 = smul.addr %s167, 64
      %s169 = smul.addr %s168, 4
      %s170 = scalar_lea.vmem %s3, %s169
      %v172 = vld [vmem:[%s165] sm:$0xf]
      %v173 = vld [vmem:[%s165 + $0x4] sm:$0xf]
      %v174 = vld [vmem:[%s165 + $0x8] sm:$0xf]
      %v175 = vld [vmem:[%s165 + $0xc] sm:$0xf]
      %v176 = vld [vmem:[%s165 + $0x10] sm:$0xf]
      %v177 = vld [vmem:[%s165 + $0x14] sm:$0xf]
      %v178 = vld [vmem:[%s165 + $0x18] sm:$0xf]
      %v179 = vld [vmem:[%s165 + $0x1c] sm:$0xf]
      %v180 = vld [vmem:[%s165 + $0x20] sm:$0xf]
      %v181 = vld [vmem:[%s165 + $0x24] sm:$0xf]
      %v182 = vld [vmem:[%s165 + $0x28] sm:$0xf]
      %v183 = vld [vmem:[%s165 + $0x2c] sm:$0xf]
      %v184 = vld [vmem:[%s165 + $0x30] sm:$0xf]
      %v185 = vld [vmem:[%s165 + $0x34] sm:$0xf]
      %v186 = vld [vmem:[%s165 + $0x38] sm:$0xf]
      %v187 = vld [vmem:[%s165 + $0x3c] sm:$0xf]
      %v188 = vld [vmem:[%s165 + $0x40] sm:$0xf]
      %v189 = vld [vmem:[%s165 + $0x44] sm:$0xf]
      %v190 = vld [vmem:[%s165 + $0x48] sm:$0xf]
      %v191 = vld [vmem:[%s165 + $0x4c] sm:$0xf]
      %v192 = vld [vmem:[%s165 + $0x50] sm:$0xf]
      %v193 = vld [vmem:[%s165 + $0x54] sm:$0xf]
      %v194 = vld [vmem:[%s165 + $0x58] sm:$0xf]
      %v195 = vld [vmem:[%s165 + $0x5c] sm:$0xf]
      %v196 = vld [vmem:[%s165 + $0x60] sm:$0xf]
      %v197 = vld [vmem:[%s165 + $0x64] sm:$0xf]
      %v198 = vld [vmem:[%s165 + $0x68] sm:$0xf]
      %v199 = vld [vmem:[%s165 + $0x6c] sm:$0xf]
      %v200 = vld [vmem:[%s165 + $0x70] sm:$0xf]
      %v201 = vld [vmem:[%s165 + $0x74] sm:$0xf]
      %v202 = vld [vmem:[%s165 + $0x78] sm:$0xf]
      %v203 = vld [vmem:[%s165 + $0x7c] sm:$0xf]
      %v237 = vunpack.c.l.b16 %v172
      %v238 = vunpack.c.l.b16 %v173
      %v239 = vunpack.c.l.b16 %v174
      %v240 = vunpack.c.l.b16 %v175
      %v241 = vunpack.c.l.b16 %v176
      %v242 = vunpack.c.l.b16 %v177
      %v243 = vunpack.c.l.b16 %v178
      %v244 = vunpack.c.l.b16 %v179
      %v245 = vunpack.c.l.b16 %v180
      %v246 = vunpack.c.l.b16 %v181
      %v247 = vunpack.c.l.b16 %v182
      %v248 = vunpack.c.l.b16 %v183
      %v249 = vunpack.c.l.b16 %v184
      %v250 = vunpack.c.l.b16 %v185
      %v251 = vunpack.c.l.b16 %v186
      %v252 = vunpack.c.l.b16 %v187
      %v253 = vunpack.c.l.b16 %v188
      %v254 = vunpack.c.l.b16 %v189
      %v255 = vunpack.c.l.b16 %v190
      %v256 = vunpack.c.l.b16 %v191
      %v257 = vunpack.c.l.b16 %v192
      %v258 = vunpack.c.l.b16 %v193
      %v259 = vunpack.c.l.b16 %v194
      %v260 = vunpack.c.l.b16 %v195
      %v261 = vunpack.c.l.b16 %v196
      %v262 = vunpack.c.l.b16 %v197
      %v263 = vunpack.c.l.b16 %v198
      %v264 = vunpack.c.l.b16 %v199
      %v265 = vunpack.c.l.b16 %v200
      %v266 = vunpack.c.l.b16 %v201
      %v267 = vunpack.c.l.b16 %v202
      %v268 = vunpack.c.l.b16 %v203
      %v269 = vunpack.c.l.b16 0
      %v270 = vpack.c.b16 %v238, %v237
      %v271 = vpack.c.b16 %v240, %v239
      %v272 = vpack.c.b16 %v242, %v241
      %v273 = vpack.c.b16 %v244, %v243
      %v274 = vpack.c.b16 %v246, %v245
      %v275 = vpack.c.b16 %v248, %v247
      %v276 = vpack.c.b16 %v250, %v249
      %v277 = vpack.c.b16 %v252, %v251
      %v278 = vpack.c.b16 %v254, %v253
      %v279 = vpack.c.b16 %v256, %v255
      %v280 = vpack.c.b16 %v258, %v257
      %v281 = vpack.c.b16 %v260, %v259
      %v282 = vpack.c.b16 %v262, %v261
      %v283 = vpack.c.b16 %v264, %v263
      %v284 = vpack.c.b16 %v266, %v265
      %v285 = vpack.c.b16 %v268, %v267
      %v286 = vpack.c.b16 %v269, %v269
      %vm287 = vsmask.f32 7424
      %v289 = vshrl.u32 %v270, 16
      %v291 = vshll.u32 %v270, 16
      %v293 = vrot.slane %v291, 1
      %v294 = vor.u32 %v289, %v293
      %v296 = vshll.u32 0, 16
      %v298 = vrot.slane %v296, 1
      %v299 = vsel %vm287, %v294, %v298
      %v301 = vshrl.u32 %v271, 16
      %v303 = vshll.u32 %v271, 16
      %v305 = vrot.slane %v303, 1
      %v306 = vor.u32 %v301, %v305
      %v307 = vsel %vm287, %v306, %v298
      %v309 = vshrl.u32 %v272, 16
      %v311 = vshll.u32 %v272, 16
      %v313 = vrot.slane %v311, 1
      %v314 = vor.u32 %v309, %v313
      %v315 = vsel %vm287, %v314, %v298
      %v317 = vshrl.u32 %v273, 16
      %v319 = vshll.u32 %v273, 16
      %v321 = vrot.slane %v319, 1
      %v322 = vor.u32 %v317, %v321
      %v323 = vsel %vm287, %v322, %v298
      %v325 = vshrl.u32 %v274, 16
      %v327 = vshll.u32 %v274, 16
      %v329 = vrot.slane %v327, 1
      %v330 = vor.u32 %v325, %v329
      %v331 = vsel %vm287, %v330, %v298
      %v333 = vshrl.u32 %v275, 16
      %v335 = vshll.u32 %v275, 16
      %v337 = vrot.slane %v335, 1
      %v338 = vor.u32 %v333, %v337
      %v339 = vsel %vm287, %v338, %v298
      %v341 = vshrl.u32 %v276, 16
      %v343 = vshll.u32 %v276, 16
      %v345 = vrot.slane %v343, 1
      %v346 = vor.u32 %v341, %v345
      %v347 = vsel %vm287, %v346, %v298
      %v349 = vshrl.u32 %v277, 16
      %v351 = vshll.u32 %v277, 16
      %v353 = vrot.slane %v351, 1
      %v354 = vor.u32 %v349, %v353
      %v355 = vsel %vm287, %v354, %v298
      %v357 = vshrl.u32 %v278, 16
      %v359 = vshll.u32 %v278, 16
      %v361 = vrot.slane %v359, 1
      %v362 = vor.u32 %v357, %v361
      %v363 = vsel %vm287, %v362, %v298
      %v365 = vshrl.u32 %v279, 16
      %v367 = vshll.u32 %v279, 16
      %v369 = vrot.slane %v367, 1
      %v370 = vor.u32 %v365, %v369
      %v371 = vsel %vm287, %v370, %v298
      %v373 = vshrl.u32 %v280, 16
      %v375 = vshll.u32 %v280, 16
      %v377 = vrot.slane %v375, 1
      %v378 = vor.u32 %v373, %v377
      %v379 = vsel %vm287, %v378, %v298
      %v381 = vshrl.u32 %v281, 16
      %v383 = vshll.u32 %v281, 16
      %v385 = vrot.slane %v383, 1
      %v386 = vor.u32 %v381, %v385
      %v387 = vsel %vm287, %v386, %v298
      %v389 = vshrl.u32 %v282, 16
      %v391 = vshll.u32 %v282, 16
      %v393 = vrot.slane %v391, 1
      %v394 = vor.u32 %v389, %v393
      %v395 = vsel %vm287, %v394, %v298
      %v397 = vshrl.u32 %v283, 16
      %v399 = vshll.u32 %v283, 16
      %v401 = vrot.slane %v399, 1
      %v402 = vor.u32 %v397, %v401
      %v403 = vsel %vm287, %v402, %v298
      %v405 = vshrl.u32 %v284, 16
      %v407 = vshll.u32 %v284, 16
      %v409 = vrot.slane %v407, 1
      %v410 = vor.u32 %v405, %v409
      %v411 = vsel %vm287, %v410, %v298
      %v413 = vshrl.u32 %v285, 16
      %v415 = vshll.u32 %v285, 16
      %v417 = vrot.slane %v415, 1
      %v418 = vor.u32 %v413, %v417
      %v419 = vsel %vm287, %v418, %v298
      %420 = vrot.lane.b32.xlu0 %v299, 16
      %v421 = vpop.permute.xlu0 %420
      %422 = vrot.lane.b32.xlu0 %v307, 16
      %v423 = vpop.permute.xlu0 %422
      %424 = vrot.lane.b32.xlu0 %v315, 16
      %v425 = vpop.permute.xlu0 %424
      %426 = vrot.lane.b32.xlu0 %v323, 16
      %v427 = vpop.permute.xlu0 %426
      %428 = vrot.lane.b32.xlu0 %v331, 16
      %v429 = vpop.permute.xlu0 %428
      %430 = vrot.lane.b32.xlu0 %v339, 16
      %v431 = vpop.permute.xlu0 %430
      %432 = vrot.lane.b32.xlu0 %v347, 16
      %v433 = vpop.permute.xlu0 %432
      %434 = vrot.lane.b32.xlu0 %v355, 16
      %v435 = vpop.permute.xlu0 %434
      %436 = vrot.lane.b32.xlu0 %v363, 16
      %v437 = vpop.permute.xlu0 %436
      %438 = vrot.lane.b32.xlu0 %v371, 16
      %v439 = vpop.permute.xlu0 %438
      %440 = vrot.lane.b32.xlu0 %v379, 16
      %v441 = vpop.permute.xlu0 %440
      %442 = vrot.lane.b32.xlu0 %v387, 16
      %v443 = vpop.permute.xlu0 %442
      %444 = vrot.lane.b32.xlu0 %v395, 16
      %v445 = vpop.permute.xlu0 %444
      %446 = vrot.lane.b32.xlu0 %v403, 16
      %v447 = vpop.permute.xlu0 %446
      %448 = vrot.lane.b32.xlu0 %v411, 16
      %v449 = vpop.permute.xlu0 %448
      %450 = vrot.lane.b32.xlu0 %v419, 16
      %v451 = vpop.permute.xlu0 %450
      %452 = vrot.lane.b32.xlu0 %v271, 32
      %v453 = vpop.permute.xlu0 %452
      %454 = vrot.lane.b32.xlu0 %v272, 32
      %v455 = vpop.permute.xlu0 %454
      %456 = vrot.lane.b32.xlu0 %v273, 32
      %v457 = vpop.permute.xlu0 %456
      %458 = vrot.lane.b32.xlu0 %v274, 32
      %v459 = vpop.permute.xlu0 %458
      %460 = vrot.lane.b32.xlu0 %v275, 32
      %v461 = vpop.permute.xlu0 %460
      %462 = vrot.lane.b32.xlu0 %v276, 32
      %v463 = vpop.permute.xlu0 %462
      %464 = vrot.lane.b32.xlu0 %v277, 32
      %v465 = vpop.permute.xlu0 %464
      %466 = vrot.lane.b32.xlu0 %v278, 32
      %v467 = vpop.permute.xlu0 %466
      %468 = vrot.lane.b32.xlu0 %v279, 32
      %v469 = vpop.permute.xlu0 %468
      %470 = vrot.lane.b32.xlu0 %v280, 32
      %v471 = vpop.permute.xlu0 %470
      %472 = vrot.lane.b32.xlu0 %v281, 32
      %v473 = vpop.permute.xlu0 %472
      %474 = vrot.lane.b32.xlu0 %v282, 32
      %v475 = vpop.permute.xlu0 %474
      %476 = vrot.lane.b32.xlu0 %v283, 32
      %v477 = vpop.permute.xlu0 %476
      %478 = vrot.lane.b32.xlu0 %v284, 32
      %v479 = vpop.permute.xlu0 %478
      %480 = vrot.lane.b32.xlu0 %v285, 32
      %v481 = vpop.permute.xlu0 %480
      %482 = vrot.lane.b32.xlu0 %v286, 32
      %v483 = vpop.permute.xlu0 %482
      %v485 = vshrl.u32 %v286, 16
      %v487 = vshll.u32 %v286, 16
      %v489 = vrot.slane %v487, 1
      %v490 = vor.u32 %v485, %v489
      %v491 = vsel %vm287, %v490, %v298
      %492 = vrot.lane.b32.xlu0 %v307, 48
      %v493 = vpop.permute.xlu0 %492
      %494 = vrot.lane.b32.xlu0 %v315, 48
      %v495 = vpop.permute.xlu0 %494
      %496 = vrot.lane.b32.xlu0 %v323, 48
      %v497 = vpop.permute.xlu0 %496
      %498 = vrot.lane.b32.xlu0 %v331, 48
      %v499 = vpop.permute.xlu0 %498
      %500 = vrot.lane.b32.xlu0 %v339, 48
      %v501 = vpop.permute.xlu0 %500
      %502 = vrot.lane.b32.xlu0 %v347, 48
      %v503 = vpop.permute.xlu0 %502
      %504 = vrot.lane.b32.xlu0 %v355, 48
      %v505 = vpop.permute.xlu0 %504
      %506 = vrot.lane.b32.xlu0 %v363, 48
      %v507 = vpop.permute.xlu0 %506
      %508 = vrot.lane.b32.xlu0 %v371, 48
      %v509 = vpop.permute.xlu0 %508
      %510 = vrot.lane.b32.xlu0 %v379, 48
      %v511 = vpop.permute.xlu0 %510
      %512 = vrot.lane.b32.xlu0 %v387, 48
      %v513 = vpop.permute.xlu0 %512
      %514 = vrot.lane.b32.xlu0 %v395, 48
      %v515 = vpop.permute.xlu0 %514
      %516 = vrot.lane.b32.xlu0 %v403, 48
      %v517 = vpop.permute.xlu0 %516
      %518 = vrot.lane.b32.xlu0 %v411, 48
      %v519 = vpop.permute.xlu0 %518
      %520 = vrot.lane.b32.xlu0 %v419, 48
      %v521 = vpop.permute.xlu0 %520
      %522 = vrot.lane.b32.xlu0 %v491, 48
      %v523 = vpop.permute.xlu0 %522
      %vm524 = vcmask 130048
      %v526 = vsel %vm524, %v270, %v421
      %v528 = vsel %vm524, %v271, %v423
      %v530 = vsel %vm524, %v272, %v425
      %v532 = vsel %vm524, %v273, %v427
      %v534 = vsel %vm524, %v274, %v429
      %v536 = vsel %vm524, %v275, %v431
      %v538 = vsel %vm524, %v276, %v433
      %v540 = vsel %vm524, %v277, %v435
      %v542 = vsel %vm524, %v278, %v437
      %v544 = vsel %vm524, %v279, %v439
      %v546 = vsel %vm524, %v280, %v441
      %v548 = vsel %vm524, %v281, %v443
      %v550 = vsel %vm524, %v282, %v445
      %v552 = vsel %vm524, %v283, %v447
      %v554 = vsel %vm524, %v284, %v449
      %v556 = vsel %vm524, %v285, %v451
      %vm557 = vcmask 261120
      %v559 = vsel %vm557, %v526, %v453
      %v561 = vsel %vm557, %v528, %v455
      %v563 = vsel %vm557, %v530, %v457
      %v565 = vsel %vm557, %v532, %v459
      %v567 = vsel %vm557, %v534, %v461
      %v569 = vsel %vm557, %v536, %v463
      %v571 = vsel %vm557, %v538, %v465
      %v573 = vsel %vm557, %v540, %v467
      %v575 = vsel %vm557, %v542, %v469
      %v577 = vsel %vm557, %v544, %v471
      %v579 = vsel %vm557, %v546, %v473
      %v581 = vsel %vm557, %v548, %v475
      %v583 = vsel %vm557, %v550, %v477
      %v585 = vsel %vm557, %v552, %v479
      %v587 = vsel %vm557, %v554, %v481
      %v589 = vsel %vm557, %v556, %v483
      %vm590 = vcmask 392192
      %v592 = vsel %vm590, %v559, %v493
      %v594 = vsel %vm590, %v561, %v495
      %v596 = vsel %vm590, %v563, %v497
      %v598 = vsel %vm590, %v565, %v499
      %v600 = vsel %vm590, %v567, %v501
      %v602 = vsel %vm590, %v569, %v503
      %v604 = vsel %vm590, %v571, %v505
      %v606 = vsel %vm590, %v573, %v507
      %v608 = vsel %vm590, %v575, %v509
      %v610 = vsel %vm590, %v577, %v511
      %v612 = vsel %vm590, %v579, %v513
      %v614 = vsel %vm590, %v581, %v515
      %v616 = vsel %vm590, %v583, %v517
      %v618 = vsel %vm590, %v585, %v519
      %v620 = vsel %vm590, %v587, %v521
      %v622 = vsel %vm590, %v589, %v523
      %v623 = vld [vmem:[%s1] sm:$0xf]
      %v624 = vld [vmem:[%s1 + $0x4] sm:$0xf]
      %v625 = vld [vmem:[%s1 + $0x8] sm:$0xf]
      %v626 = vld [vmem:[%s1 + $0xc] sm:$0xf]
      %v627 = vld [vmem:[%s1 + $0x10] sm:$0xf]
      %v628 = vld [vmem:[%s1 + $0x14] sm:$0xf]
      %v629 = vld [vmem:[%s1 + $0x18] sm:$0xf]
      %v630 = vld [vmem:[%s1 + $0x1c] sm:$0xf]
      %v631 = vld [vmem:[%s2] sm:$0x1]
      %v633 = vlaneseq
      %v634 = vshrl.u32 %v633, 7
      %v635 = vsub.s32 0, %v634
      %v636 = vrot.slane %v631, %v635
      %v646 = vunpack.c.l.b16 %v623
      %v647 = vunpack.c.l.b16 %v624
      %v648 = vunpack.c.l.b16 %v625
      %v649 = vunpack.c.l.b16 %v626
      %v650 = vunpack.c.l.b16 %v627
      %v651 = vunpack.c.l.b16 %v628
      %v652 = vunpack.c.l.b16 %v629
      %v653 = vunpack.c.l.b16 %v630
      %v654 = vpack.c.b16 %v647, %v646
      %v655 = vpack.c.b16 %v649, %v648
      %v656 = vpack.c.b16 %v651, %v650
      %v657 = vpack.c.b16 %v653, %v652
      %vm662 = vcmask 523264
      %v663 = vsel %vm662, %v592, 0
      %v665 = vsel %vm662, %v594, 0
      %v667 = vsel %vm662, %v596, 0
      %v669 = vsel %vm662, %v598, 0
      %v671 = vsel %vm662, %v600, 0
      %v673 = vsel %vm662, %v602, 0
      %v675 = vsel %vm662, %v604, 0
      %v677 = vsel %vm662, %v606, 0
      %v679 = vsel %vm662, %v608, 0
      %v681 = vsel %vm662, %v610, 0
      %v683 = vsel %vm662, %v612, 0
      %v685 = vsel %vm662, %v614, 0
      %v687 = vsel %vm662, %v616, 0
      %v689 = vsel %vm662, %v618, 0
      %v691 = vsel %vm662, %v620, 0
      %v693 = vsel %vm662, %v622, 0
      %695 = vmatprep.subr.bf16.mxu0 0
      %696 = vmatpush1.bf16.msra.mxu0 0
      %697 = vmatprep.subr.bf16.mxu0 0
      %698 = vmatpush1.bf16.msra.mxu0 0
      %699 = vmatprep.subr.bf16.mxu0 0
      %700 = vmatpush1.bf16.msra.mxu0 0
      %701 = vmatprep.subr.bf16.mxu0 0
      %702 = vmatpush1.bf16.msra.mxu0 0
      %703 = vmatprep.subr.bf16.mxu0 0
      %704 = vmatpush1.bf16.msra.mxu0 %v657
      %705 = vmatprep.subr.bf16.mxu0 0
      %706 = vmatpush1.bf16.msra.mxu0 %v656
      %707 = vmatprep.subr.bf16.mxu0 0
      %708 = vmatpush1.bf16.msra.mxu0 %v655
      %709 = vmatprep.subr.bf16.mxu0 0
      %710 = vmatpush1.bf16.msra.mxu0 %v654
      %711 = vmatprep.subr.bf16.mxu0 0
      %712 = vmatpush2.bf16.msra.mxu0 0
      %713 = vmatprep.subr.bf16.mxu0 0
      %714 = vmatpush2.bf16.msra.mxu0 0
      %715 = vmatprep.subr.bf16.mxu0 0
      %716 = vmatpush2.bf16.msra.mxu0 0
      %717 = vmatprep.subr.bf16.mxu0 0
      %718 = vmatpush2.bf16.msra.mxu0 0
      %719 = vmatprep.subr.bf16.mxu0 0
      %720 = vmatpush2.bf16.msra.mxu0 0
      %721 = vmatprep.subr.bf16.mxu0 0
      %722 = vmatpush2.bf16.msra.mxu0 0
      %723 = vmatprep.subr.bf16.mxu0 0
      %724 = vmatpush2.bf16.msra.mxu0 0
      %725 = vmatprep.subr.bf16.mxu0 0
      %726 = vmatpush2.bf16.msra.mxu0 0
      %727 = vmatprep.mubr.bf16.mxu0 0
      %728 = vmatmul.mubr.bf16.gmra.mxu0 %v663
      %v729 = vpop.f32.mrf.mxu0
      %v730 = vadd.f32 %v636, %v729
      %v731 = vpop.f32.mrf.mxu0
      %v732 = vpop.f32.mrf.mxu0
      %v733 = vadd.f32 %v636, %v732
      %v734 = vpop.f32.mrf.mxu0
      %735 = vmatprep.mubr.bf16.mxu0 0
      %736 = vmatmul.mubr.bf16.gmra.mxu0 %v665
      %v737 = vpop.f32.mrf.mxu0
      %v738 = vadd.f32 %v636, %v737
      %v739 = vpop.f32.mrf.mxu0
      %v740 = vpop.f32.mrf.mxu0
      %v741 = vadd.f32 %v636, %v740
      %v742 = vpop.f32.mrf.mxu0
      %743 = vmatprep.mubr.bf16.mxu0 0
      %744 = vmatmul.mubr.bf16.gmra.mxu0 %v667
      %v745 = vpop.f32.mrf.mxu0
      %v746 = vadd.f32 %v636, %v745
      %v747 = vpop.f32.mrf.mxu0
      %v748 = vpop.f32.mrf.mxu0
      %v749 = vadd.f32 %v636, %v748
      %v750 = vpop.f32.mrf.mxu0
      %751 = vmatprep.mubr.bf16.mxu0 0
      %752 = vmatmul.mubr.bf16.gmra.mxu0 %v669
      %v753 = vpop.f32.mrf.mxu0
      %v754 = vadd.f32 %v636, %v753
      %v755 = vpop.f32.mrf.mxu0
      %v756 = vpop.f32.mrf.mxu0
      %v757 = vadd.f32 %v636, %v756
      %v758 = vpop.f32.mrf.mxu0
      %759 = vmatprep.mubr.bf16.mxu0 0
      %760 = vmatmul.mubr.bf16.gmra.mxu0 %v671
      %v761 = vpop.f32.mrf.mxu0
      %v762 = vadd.f32 %v636, %v761
      %v763 = vpop.f32.mrf.mxu0
      %v764 = vpop.f32.mrf.mxu0
      %v765 = vadd.f32 %v636, %v764
      %v766 = vpop.f32.mrf.mxu0
      %767 = vmatprep.mubr.bf16.mxu0 0
      %768 = vmatmul.mubr.bf16.gmra.mxu0 %v673
      %v769 = vpop.f32.mrf.mxu0
      %v770 = vadd.f32 %v636, %v769
      %v771 = vpop.f32.mrf.mxu0
      %v772 = vpop.f32.mrf.mxu0
      %v773 = vadd.f32 %v636, %v772
      %v774 = vpop.f32.mrf.mxu0
      %775 = vmatprep.mubr.bf16.mxu0 0
      %776 = vmatmul.mubr.bf16.gmra.mxu0 %v675
      %v777 = vpop.f32.mrf.mxu0
      %v778 = vadd.f32 %v636, %v777
      %v779 = vpop.f32.mrf.mxu0
      %v780 = vpop.f32.mrf.mxu0
      %v781 = vadd.f32 %v636, %v780
      %v782 = vpop.f32.mrf.mxu0
      %783 = vmatprep.mubr.bf16.mxu0 0
      %784 = vmatmul.mubr.bf16.gmra.mxu0 %v677
      %v785 = vpop.f32.mrf.mxu0
      %v786 = vadd.f32 %v636, %v785
      %v787 = vpop.f32.mrf.mxu0
      %v788 = vpop.f32.mrf.mxu0
      %v789 = vadd.f32 %v636, %v788
      %v790 = vpop.f32.mrf.mxu0
      %791 = vmatprep.mubr.bf16.mxu0 0
      %792 = vmatmul.mubr.bf16.gmra.mxu0 %v679
      %v793 = vpop.f32.mrf.mxu0
      %v794 = vadd.f32 %v636, %v793
      %v795 = vpop.f32.mrf.mxu0
      %v796 = vpop.f32.mrf.mxu0
      %v797 = vadd.f32 %v636, %v796
      %v798 = vpop.f32.mrf.mxu0
      %799 = vmatprep.mubr.bf16.mxu0 0
      %800 = vmatmul.mubr.bf16.gmra.mxu0 %v681
      %v801 = vpop.f32.mrf.mxu0
      %v802 = vadd.f32 %v636, %v801
      %v803 = vpop.f32.mrf.mxu0
      %v804 = vpop.f32.mrf.mxu0
      %v805 = vadd.f32 %v636, %v804
      %v806 = vpop.f32.mrf.mxu0
      %807 = vmatprep.mubr.bf16.mxu0 0
      %808 = vmatmul.mubr.bf16.gmra.mxu0 %v683
      %v809 = vpop.f32.mrf.mxu0
      %v810 = vadd.f32 %v636, %v809
      %v811 = vpop.f32.mrf.mxu0
      %v812 = vpop.f32.mrf.mxu0
      %v813 = vadd.f32 %v636, %v812
      %v814 = vpop.f32.mrf.mxu0
      %815 = vmatprep.mubr.bf16.mxu0 0
      %816 = vmatmul.mubr.bf16.gmra.mxu0 %v685
      %v817 = vpop.f32.mrf.mxu0
      %v818 = vadd.f32 %v636, %v817
      %v819 = vpop.f32.mrf.mxu0
      %v820 = vpop.f32.mrf.mxu0
      %v821 = vadd.f32 %v636, %v820
      %v822 = vpop.f32.mrf.mxu0
      %823 = vmatprep.mubr.bf16.mxu0 0
      %824 = vmatmul.mubr.bf16.gmra.mxu0 %v687
      %v825 = vpop.f32.mrf.mxu0
      %v826 = vadd.f32 %v636, %v825
      %v827 = vpop.f32.mrf.mxu0
      %v828 = vpop.f32.mrf.mxu0
      %v829 = vadd.f32 %v636, %v828
      %v830 = vpop.f32.mrf.mxu0
      %831 = vmatprep.mubr.bf16.mxu0 0
      %832 = vmatmul.mubr.bf16.gmra.mxu0 %v689
      %v833 = vpop.f32.mrf.mxu0
      %v834 = vadd.f32 %v636, %v833
      %v835 = vpop.f32.mrf.mxu0
      %v836 = vpop.f32.mrf.mxu0
      %v837 = vadd.f32 %v636, %v836
      %v838 = vpop.f32.mrf.mxu0
      %839 = vmatprep.mubr.bf16.mxu0 0
      %840 = vmatmul.mubr.bf16.gmra.mxu0 %v691
      %v841 = vpop.f32.mrf.mxu0
      %v842 = vadd.f32 %v636, %v841
      %v843 = vpop.f32.mrf.mxu0
      %v844 = vpop.f32.mrf.mxu0
      %v845 = vadd.f32 %v636, %v844
      %v846 = vpop.f32.mrf.mxu0
      %847 = vmatprep.mubr.bf16.mxu0 0
      %848 = vmatmul.mubr.bf16.gmra.mxu0 %v693
      %v849 = vpop.f32.mrf.mxu0
      %v850 = vadd.f32 %v636, %v849
      %v851 = vpop.f32.mrf.mxu0
      %v852 = vpop.f32.mrf.mxu0
      %v853 = vadd.f32 %v636, %v852
      %v854 = vpop.f32.mrf.mxu0
      %855 = vdwg.mxu0
      %v856 = vsel %vm557, %v730, 0.0
      %v857 = vsel %vm557, %v733, 0.0
      %v858 = vadd.f32 %v856, %v857
      %v859 = vsel %vm557, %v738, 0.0
      %v860 = vadd.f32 %v858, %v859
      %v861 = vsel %vm557, %v741, 0.0
      %v862 = vadd.f32 %v860, %v861
      %v863 = vsel %vm557, %v746, 0.0
      %v864 = vadd.f32 %v862, %v863
      %v865 = vsel %vm557, %v749, 0.0
      %v866 = vadd.f32 %v864, %v865
      %v867 = vsel %vm557, %v754, 0.0
      %v868 = vadd.f32 %v866, %v867
      %v869 = vsel %vm557, %v757, 0.0
      %v870 = vadd.f32 %v868, %v869
      %v871 = vsel %vm557, %v762, 0.0
      %v872 = vadd.f32 %v870, %v871
      %v873 = vsel %vm557, %v765, 0.0
      %v874 = vadd.f32 %v872, %v873
      %v875 = vsel %vm557, %v770, 0.0
      %v876 = vadd.f32 %v874, %v875
      %v877 = vsel %vm557, %v773, 0.0
      %v878 = vadd.f32 %v876, %v877
      %v879 = vsel %vm557, %v778, 0.0
      %v880 = vadd.f32 %v878, %v879
      %v881 = vsel %vm557, %v781, 0.0
      %v882 = vadd.f32 %v880, %v881
      %v883 = vsel %vm557, %v786, 0.0
      %v884 = vadd.f32 %v882, %v883
      %v885 = vsel %vm557, %v789, 0.0
      %v886 = vadd.f32 %v884, %v885
      %v887 = vsel %vm557, %v794, 0.0
      %v888 = vadd.f32 %v886, %v887
      %v889 = vsel %vm557, %v797, 0.0
      %v890 = vadd.f32 %v888, %v889
      %v891 = vsel %vm557, %v802, 0.0
      %v892 = vadd.f32 %v890, %v891
      %v893 = vsel %vm557, %v805, 0.0
      %v894 = vadd.f32 %v892, %v893
      %v895 = vsel %vm557, %v810, 0.0
      %v896 = vadd.f32 %v894, %v895
      %v897 = vsel %vm557, %v813, 0.0
      %v898 = vadd.f32 %v896, %v897
      %v899 = vsel %vm557, %v818, 0.0
      %v900 = vadd.f32 %v898, %v899
      %v901 = vsel %vm557, %v821, 0.0
      %v902 = vadd.f32 %v900, %v901
      %v903 = vsel %vm557, %v826, 0.0
      %v904 = vadd.f32 %v902, %v903
      %v905 = vsel %vm557, %v829, 0.0
      %v906 = vadd.f32 %v904, %v905
      %v907 = vsel %vm557, %v834, 0.0
      %v908 = vadd.f32 %v906, %v907
      %v909 = vsel %vm557, %v837, 0.0
      %v910 = vadd.f32 %v908, %v909
      %v911 = vsel %vm557, %v842, 0.0
      %v912 = vadd.f32 %v910, %v911
      %v913 = vsel %vm557, %v845, 0.0
      %v914 = vadd.f32 %v912, %v913
      %v915 = vsel %vm557, %v850, 0.0
      %v916 = vadd.f32 %v914, %v915
      %v917 = vsel %vm557, %v853, 0.0
      %v918 = vadd.f32 %v916, %v917
      %v919 = vrot.slane %v918, 4
      %v920 = vadd.f32 %v918, %v919
      %v921 = vrot.slane %v920, 2
      %v922 = vadd.f32 %v920, %v921
      %v923 = vrot.slane %v922, 1
      %v924 = vadd.f32 %v922, %v923
      %926 = vrot.lane.b32.xlu0 %v924, 120
      %v927 = vpop.permute.xlu0 %926
      %v929 = vadd.f32 %v924, %v927
      %930 = vrot.lane.b32.xlu0 %v924, 112
      %v931 = vpop.permute.xlu0 %930
      %v933 = vadd.f32 %v929, %v931
      %934 = vrot.lane.b32.xlu0 %v924, 104
      %v935 = vpop.permute.xlu0 %934
      %v937 = vadd.f32 %v933, %v935
      %v938 = vmul.f32 %v937, 0.0009765625
      %940 = vrot.lane.b32.xlu0 %v938, 8
      %v941 = vpop.permute.xlu0 %940
      %943 = vrot.lane.b32.xlu0 %v938, 16
      %v944 = vpop.permute.xlu0 %943
      %946 = vrot.lane.b32.xlu0 %v938, 24
      %v947 = vpop.permute.xlu0 %946
      %vm949 = vcmask 64512
      %v950 = vsel %vm949, %v938, %v941
      %v951 = vsel %vm524, %v950, %v944
      %vm952 = vcmask 195584
      %v953 = vsel %vm952, %v951, %v947
      %v954 = vlaneseq
      %v955 = vshrl.u32 %v954, 7
      %v956 = vsub.s32 0, %v955
      %v957 = vrot.slane %v953, %v956
      %v958 = vsub.f32 %v730, %v957
      %v959 = vsub.f32 %v733, %v957
      %v960 = vsub.f32 %v738, %v957
      %v961 = vsub.f32 %v741, %v957
      %v962 = vsub.f32 %v746, %v957
      %v963 = vsub.f32 %v749, %v957
      %v964 = vsub.f32 %v754, %v957
      %v965 = vsub.f32 %v757, %v957
      %v966 = vsub.f32 %v762, %v957
      %v967 = vsub.f32 %v765, %v957
      %v968 = vsub.f32 %v770, %v957
      %v969 = vsub.f32 %v773, %v957
      %v970 = vsub.f32 %v778, %v957
      %v971 = vsub.f32 %v781, %v957
      %v972 = vsub.f32 %v786, %v957
      %v973 = vsub.f32 %v789, %v957
      %v974 = vsub.f32 %v794, %v957
      %v975 = vsub.f32 %v797, %v957
      %v976 = vsub.f32 %v802, %v957
      %v977 = vsub.f32 %v805, %v957
      %v978 = vsub.f32 %v810, %v957
      %v979 = vsub.f32 %v813, %v957
      %v980 = vsub.f32 %v818, %v957
      %v981 = vsub.f32 %v821, %v957
      %v982 = vsub.f32 %v826, %v957
      %v983 = vsub.f32 %v829, %v957
      %v984 = vsub.f32 %v834, %v957
      %v985 = vsub.f32 %v837, %v957
      %v986 = vsub.f32 %v842, %v957
      %v987 = vsub.f32 %v845, %v957
      %v988 = vsub.f32 %v850, %v957
      %v989 = vsub.f32 %v853, %v957
      %v990 = vmul.f32 %v958, %v958
      %v991 = vmul.f32 %v959, %v959
      %v992 = vmul.f32 %v960, %v960
      %v993 = vmul.f32 %v961, %v961
      %v994 = vmul.f32 %v962, %v962
      %v995 = vmul.f32 %v963, %v963
      %v996 = vmul.f32 %v964, %v964
      %v997 = vmul.f32 %v965, %v965
      %v998 = vmul.f32 %v966, %v966
      %v999 = vmul.f32 %v967, %v967
      %v1000 = vmul.f32 %v968, %v968
      %v1001 = vmul.f32 %v969, %v969
      %v1002 = vmul.f32 %v970, %v970
      %v1003 = vmul.f32 %v971, %v971
      %v1004 = vmul.f32 %v972, %v972
      %v1005 = vmul.f32 %v973, %v973
      %v1006 = vmul.f32 %v974, %v974
      %v1007 = vmul.f32 %v975, %v975
      %v1008 = vmul.f32 %v976, %v976
      %v1009 = vmul.f32 %v977, %v977
      %v1010 = vmul.f32 %v978, %v978
      %v1011 = vmul.f32 %v979, %v979
      %v1012 = vmul.f32 %v980, %v980
      %v1013 = vmul.f32 %v981, %v981
      %v1014 = vmul.f32 %v982, %v982
      %v1015 = vmul.f32 %v983, %v983
      %v1016 = vmul.f32 %v984, %v984
      %v1017 = vmul.f32 %v985, %v985
      %v1018 = vmul.f32 %v986, %v986
      %v1019 = vmul.f32 %v987, %v987
      %v1020 = vmul.f32 %v988, %v988
      %v1021 = vmul.f32 %v989, %v989
      %v1022 = vsel %vm557, %v990, 0.0
      %v1023 = vsel %vm557, %v991, 0.0
      %v1024 = vadd.f32 %v1022, %v1023
      %v1025 = vsel %vm557, %v992, 0.0
      %v1026 = vadd.f32 %v1024, %v1025
      %v1027 = vsel %vm557, %v993, 0.0
      %v1028 = vadd.f32 %v1026, %v1027
      %v1029 = vsel %vm557, %v994, 0.0
      %v1030 = vadd.f32 %v1028, %v1029
      %v1031 = vsel %vm557, %v995, 0.0
      %v1032 = vadd.f32 %v1030, %v1031
      %v1033 = vsel %vm557, %v996, 0.0
      %v1034 = vadd.f32 %v1032, %v1033
      %v1035 = vsel %vm557, %v997, 0.0
      %v1036 = vadd.f32 %v1034, %v1035
      %v1037 = vsel %vm557, %v998, 0.0
      %v1038 = vadd.f32 %v1036, %v1037
      %v1039 = vsel %vm557, %v999, 0.0
      %v1040 = vadd.f32 %v1038, %v1039
      %v1041 = vsel %vm557, %v1000, 0.0
      %v1042 = vadd.f32 %v1040, %v1041
      %v1043 = vsel %vm557, %v1001, 0.0
      %v1044 = vadd.f32 %v1042, %v1043
      %v1045 = vsel %vm557, %v1002, 0.0
      %v1046 = vadd.f32 %v1044, %v1045
      %v1047 = vsel %vm557, %v1003, 0.0
      %v1048 = vadd.f32 %v1046, %v1047
      %v1049 = vsel %vm557, %v1004, 0.0
      %v1050 = vadd.f32 %v1048, %v1049
      %v1051 = vsel %vm557, %v1005, 0.0
      %v1052 = vadd.f32 %v1050, %v1051
      %v1053 = vsel %vm557, %v1006, 0.0
      %v1054 = vadd.f32 %v1052, %v1053
      %v1055 = vsel %vm557, %v1007, 0.0
      %v1056 = vadd.f32 %v1054, %v1055
      %v1057 = vsel %vm557, %v1008, 0.0
      %v1058 = vadd.f32 %v1056, %v1057
      %v1059 = vsel %vm557, %v1009, 0.0
      %v1060 = vadd.f32 %v1058, %v1059
      %v1061 = vsel %vm557, %v1010, 0.0
      %v1062 = vadd.f32 %v1060, %v1061
      %v1063 = vsel %vm557, %v1011, 0.0
      %v1064 = vadd.f32 %v1062, %v1063
      %v1065 = vsel %vm557, %v1012, 0.0
      %v1066 = vadd.f32 %v1064, %v1065
      %v1067 = vsel %vm557, %v1013, 0.0
      %v1068 = vadd.f32 %v1066, %v1067
      %v1069 = vsel %vm557, %v1014, 0.0
      %v1070 = vadd.f32 %v1068, %v1069
      %v1071 = vsel %vm557, %v1015, 0.0
      %v1072 = vadd.f32 %v1070, %v1071
      %v1073 = vsel %vm557, %v1016, 0.0
      %v1074 = vadd.f32 %v1072, %v1073
      %v1075 = vsel %vm557, %v1017, 0.0
      %v1076 = vadd.f32 %v1074, %v1075
      %v1077 = vsel %vm557, %v1018, 0.0
      %v1078 = vadd.f32 %v1076, %v1077
      %v1079 = vsel %vm557, %v1019, 0.0
      %v1080 = vadd.f32 %v1078, %v1079
      %v1081 = vsel %vm557, %v1020, 0.0
      %v1082 = vadd.f32 %v1080, %v1081
      %v1083 = vsel %vm557, %v1021, 0.0
      %v1084 = vadd.f32 %v1082, %v1083
      %v1085 = vrot.slane %v1084, 4
      %v1086 = vadd.f32 %v1084, %v1085
      %v1087 = vrot.slane %v1086, 2
      %v1088 = vadd.f32 %v1086, %v1087
      %v1089 = vrot.slane %v1088, 1
      %v1090 = vadd.f32 %v1088, %v1089
      %1092 = vrot.lane.b32.xlu0 %v1090, 120
      %v1093 = vpop.permute.xlu0 %1092
      %v1095 = vadd.f32 %v1090, %v1093
      %1096 = vrot.lane.b32.xlu0 %v1090, 112
      %v1097 = vpop.permute.xlu0 %1096
      %v1099 = vadd.f32 %v1095, %v1097
      %1100 = vrot.lane.b32.xlu0 %v1090, 104
      %v1101 = vpop.permute.xlu0 %1100
      %v1103 = vadd.f32 %v1099, %v1101
      %v1104 = vmul.f32 %v1103, 0.0009765625
      %v1105 = vadd.f32 %v1104, 1e-05
      %v1106 = vrsqrt.pop %v1105
      %1108 = vrot.lane.b32.xlu0 %v1106, 8
      %v1109 = vpop.permute.xlu0 %1108
      %1111 = vrot.lane.b32.xlu0 %v1106, 16
      %v1112 = vpop.permute.xlu0 %1111
      %1114 = vrot.lane.b32.xlu0 %v1106, 24
      %v1115 = vpop.permute.xlu0 %1114
      %v1117 = vsel %vm949, %v1106, %v1109
      %v1118 = vsel %vm524, %v1117, %v1112
      %v1119 = vsel %vm952, %v1118, %v1115
      %v1120 = vlaneseq
      %v1121 = vshrl.u32 %v1120, 7
      %v1122 = vsub.s32 0, %v1121
      %v1123 = vrot.slane %v1119, %v1122
      %v1124 = vmul.f32 %v958, %v1123
      %v1125 = vmul.f32 %v959, %v1123
      %v1126 = vmul.f32 %v960, %v1123
      %v1127 = vmul.f32 %v961, %v1123
      %v1128 = vmul.f32 %v962, %v1123
      %v1129 = vmul.f32 %v963, %v1123
      %v1130 = vmul.f32 %v964, %v1123
      %v1131 = vmul.f32 %v965, %v1123
      %v1132 = vmul.f32 %v966, %v1123
      %v1133 = vmul.f32 %v967, %v1123
      %v1134 = vmul.f32 %v968, %v1123
      %v1135 = vmul.f32 %v969, %v1123
      %v1136 = vmul.f32 %v970, %v1123
      %v1137 = vmul.f32 %v971, %v1123
      %v1138 = vmul.f32 %v972, %v1123
      %v1139 = vmul.f32 %v973, %v1123
      %v1140 = vmul.f32 %v974, %v1123
      %v1141 = vmul.f32 %v975, %v1123
      %v1142 = vmul.f32 %v976, %v1123
      %v1143 = vmul.f32 %v977, %v1123
      %v1144 = vmul.f32 %v978, %v1123
      %v1145 = vmul.f32 %v979, %v1123
      %v1146 = vmul.f32 %v980, %v1123
      %v1147 = vmul.f32 %v981, %v1123
      %v1148 = vmul.f32 %v982, %v1123
      %v1149 = vmul.f32 %v983, %v1123
      %v1150 = vmul.f32 %v984, %v1123
      %v1151 = vmul.f32 %v985, %v1123
      %v1152 = vmul.f32 %v986, %v1123
      %v1153 = vmul.f32 %v987, %v1123
      %v1154 = vmul.f32 %v988, %v1123
      %v1155 = vmul.f32 %v989, %v1123
      %v1156 = vmax.f32 %v1124, 0.0
      %v1157 = vmax.f32 %v1125, 0.0
      %v1158 = vmax.f32 %v1126, 0.0
      %v1159 = vmax.f32 %v1127, 0.0
      %v1160 = vmax.f32 %v1128, 0.0
      %v1161 = vmax.f32 %v1129, 0.0
      %v1162 = vmax.f32 %v1130, 0.0
      %v1163 = vmax.f32 %v1131, 0.0
      %v1164 = vmax.f32 %v1132, 0.0
      %v1165 = vmax.f32 %v1133, 0.0
      %v1166 = vmax.f32 %v1134, 0.0
      %v1167 = vmax.f32 %v1135, 0.0
      %v1168 = vmax.f32 %v1136, 0.0
      %v1169 = vmax.f32 %v1137, 0.0
      %v1170 = vmax.f32 %v1138, 0.0
      %v1171 = vmax.f32 %v1139, 0.0
      %v1172 = vmax.f32 %v1140, 0.0
      %v1173 = vmax.f32 %v1141, 0.0
      %v1174 = vmax.f32 %v1142, 0.0
      %v1175 = vmax.f32 %v1143, 0.0
      %v1176 = vmax.f32 %v1144, 0.0
      %v1177 = vmax.f32 %v1145, 0.0
      %v1178 = vmax.f32 %v1146, 0.0
      %v1179 = vmax.f32 %v1147, 0.0
      %v1180 = vmax.f32 %v1148, 0.0
      %v1181 = vmax.f32 %v1149, 0.0
      %v1182 = vmax.f32 %v1150, 0.0
      %v1183 = vmax.f32 %v1151, 0.0
      %v1184 = vmax.f32 %v1152, 0.0
      %v1185 = vmax.f32 %v1153, 0.0
      %v1186 = vmax.f32 %v1154, 0.0
      %v1187 = vmax.f32 %v1155, 0.0
      %v1188 = vpack.c.bf16 %v1157, %v1156
      %v1189 = vpack.c.bf16 %v1159, %v1158
      %v1190 = vpack.c.bf16 %v1161, %v1160
      %v1191 = vpack.c.bf16 %v1163, %v1162
      %v1192 = vpack.c.bf16 %v1165, %v1164
      %v1193 = vpack.c.bf16 %v1167, %v1166
      %v1194 = vpack.c.bf16 %v1169, %v1168
      %v1195 = vpack.c.bf16 %v1171, %v1170
      %v1196 = vpack.c.bf16 %v1173, %v1172
      %v1197 = vpack.c.bf16 %v1175, %v1174
      %v1198 = vpack.c.bf16 %v1177, %v1176
      %v1199 = vpack.c.bf16 %v1179, %v1178
      %v1200 = vpack.c.bf16 %v1181, %v1180
      %v1201 = vpack.c.bf16 %v1183, %v1182
      %v1202 = vpack.c.bf16 %v1185, %v1184
      %v1203 = vpack.c.bf16 %v1187, %v1186
      %v1220 = vunpack.c.l.b16 %v1188
      %v1221 = vunpack.c.h.b16 %v1188
      %v1222 = vunpack.c.l.b16 %v1189
      %v1223 = vunpack.c.h.b16 %v1189
      %v1224 = vunpack.c.l.b16 %v1190
      %v1225 = vunpack.c.h.b16 %v1190
      %v1226 = vunpack.c.l.b16 %v1191
      %v1227 = vunpack.c.h.b16 %v1191
      %v1228 = vunpack.c.l.b16 %v1192
      %v1229 = vunpack.c.h.b16 %v1192
      %v1230 = vunpack.c.l.b16 %v1193
      %v1231 = vunpack.c.h.b16 %v1193
      %v1232 = vunpack.c.l.b16 %v1194
      %v1233 = vunpack.c.h.b16 %v1194
      %v1234 = vunpack.c.l.b16 %v1195
      %v1235 = vunpack.c.h.b16 %v1195
      %v1236 = vunpack.c.l.b16 %v1196
      %v1237 = vunpack.c.h.b16 %v1196
      %v1238 = vunpack.c.l.b16 %v1197
      %v1239 = vunpack.c.h.b16 %v1197
      %v1240 = vunpack.c.l.b16 %v1198
      %v1241 = vunpack.c.h.b16 %v1198
      %v1242 = vunpack.c.l.b16 %v1199
      %v1243 = vunpack.c.h.b16 %v1199
      %v1244 = vunpack.c.l.b16 %v1200
      %v1245 = vunpack.c.h.b16 %v1200
      %v1246 = vunpack.c.l.b16 %v1201
      %v1247 = vunpack.c.h.b16 %v1201
      %v1248 = vunpack.c.l.b16 %v1202
      %v1249 = vunpack.c.h.b16 %v1202
      %v1250 = vunpack.c.l.b16 %v1203
      %v1251 = vunpack.c.h.b16 %v1203
      %v1252 = vpack.c.b16 %v1220, %v1220
      %v1253 = vpack.c.b16 %v1221, %v1221
      %v1254 = vpack.c.b16 %v1222, %v1222
      %v1255 = vpack.c.b16 %v1223, %v1223
      %v1256 = vpack.c.b16 %v1224, %v1224
      %v1257 = vpack.c.b16 %v1225, %v1225
      %v1258 = vpack.c.b16 %v1226, %v1226
      %v1259 = vpack.c.b16 %v1227, %v1227
      %v1260 = vpack.c.b16 %v1228, %v1228
      %v1261 = vpack.c.b16 %v1229, %v1229
      %v1262 = vpack.c.b16 %v1230, %v1230
      %v1263 = vpack.c.b16 %v1231, %v1231
      %v1264 = vpack.c.b16 %v1232, %v1232
      %v1265 = vpack.c.b16 %v1233, %v1233
      %v1266 = vpack.c.b16 %v1234, %v1234
      %v1267 = vpack.c.b16 %v1235, %v1235
      %v1268 = vpack.c.b16 %v1236, %v1236
      %v1269 = vpack.c.b16 %v1237, %v1237
      %v1270 = vpack.c.b16 %v1238, %v1238
      %v1271 = vpack.c.b16 %v1239, %v1239
      %v1272 = vpack.c.b16 %v1240, %v1240
      %v1273 = vpack.c.b16 %v1241, %v1241
      %v1274 = vpack.c.b16 %v1242, %v1242
      %v1275 = vpack.c.b16 %v1243, %v1243
      %v1276 = vpack.c.b16 %v1244, %v1244
      %v1277 = vpack.c.b16 %v1245, %v1245
      %v1278 = vpack.c.b16 %v1246, %v1246
      %v1279 = vpack.c.b16 %v1247, %v1247
      %v1280 = vpack.c.b16 %v1248, %v1248
      %v1281 = vpack.c.b16 %v1249, %v1249
      %v1282 = vpack.c.b16 %v1250, %v1250
      %v1283 = vpack.c.b16 %v1251, %v1251
      %vm1316 = vcmask 125952
      %1317 = vst.msk [vmem:[%s170] sm:$0xf] %vm1316, %v1252
      %1318 = vst.msk [vmem:[%s170 + $0x4] sm:$0xf] %vm1316, %v1253
      %1319 = vst.msk [vmem:[%s170 + $0x10] sm:$0xf] %vm1316, %v1254
      %1320 = vst.msk [vmem:[%s170 + $0x14] sm:$0xf] %vm1316, %v1255
      %1321 = vst.msk [vmem:[%s170 + $0x20] sm:$0xf] %vm1316, %v1256
      %1322 = vst.msk [vmem:[%s170 + $0x24] sm:$0xf] %vm1316, %v1257
      %1323 = vst.msk [vmem:[%s170 + $0x30] sm:$0xf] %vm1316, %v1258
      %1324 = vst.msk [vmem:[%s170 + $0x34] sm:$0xf] %vm1316, %v1259
      %1325 = vst.msk [vmem:[%s170 + $0x40] sm:$0xf] %vm1316, %v1260
      %1326 = vst.msk [vmem:[%s170 + $0x44] sm:$0xf] %vm1316, %v1261
      %1327 = vst.msk [vmem:[%s170 + $0x50] sm:$0xf] %vm1316, %v1262
      %1328 = vst.msk [vmem:[%s170 + $0x54] sm:$0xf] %vm1316, %v1263
      %1329 = vst.msk [vmem:[%s170 + $0x60] sm:$0xf] %vm1316, %v1264
      %1330 = vst.msk [vmem:[%s170 + $0x64] sm:$0xf] %vm1316, %v1265
      %1331 = vst.msk [vmem:[%s170 + $0x70] sm:$0xf] %vm1316, %v1266
      %1332 = vst.msk [vmem:[%s170 + $0x74] sm:$0xf] %vm1316, %v1267
      %1333 = vst.msk [vmem:[%s170 + $0x80] sm:$0xf] %vm1316, %v1268
      %1334 = vst.msk [vmem:[%s170 + $0x84] sm:$0xf] %vm1316, %v1269
      %1335 = vst.msk [vmem:[%s170 + $0x90] sm:$0xf] %vm1316, %v1270
      %1336 = vst.msk [vmem:[%s170 + $0x94] sm:$0xf] %vm1316, %v1271
      %1337 = vst.msk [vmem:[%s170 + $0xa0] sm:$0xf] %vm1316, %v1272
      %1338 = vst.msk [vmem:[%s170 + $0xa4] sm:$0xf] %vm1316, %v1273
      %1339 = vst.msk [vmem:[%s170 + $0xb0] sm:$0xf] %vm1316, %v1274
      %1340 = vst.msk [vmem:[%s170 + $0xb4] sm:$0xf] %vm1316, %v1275
      %1341 = vst.msk [vmem:[%s170 + $0xc0] sm:$0xf] %vm1316, %v1276
      %1342 = vst.msk [vmem:[%s170 + $0xc4] sm:$0xf] %vm1316, %v1277
      %1343 = vst.msk [vmem:[%s170 + $0xd0] sm:$0xf] %vm1316, %v1278
      %1344 = vst.msk [vmem:[%s170 + $0xd4] sm:$0xf] %vm1316, %v1279
      %1345 = vst.msk [vmem:[%s170 + $0xe0] sm:$0xf] %vm1316, %v1280
      %1346 = vst.msk [vmem:[%s170 + $0xe4] sm:$0xf] %vm1316, %v1281
      %1347 = vst.msk [vmem:[%s170 + $0xf0] sm:$0xf] %vm1316, %v1282
      %1348 = vst.msk [vmem:[%s170 + $0xf4] sm:$0xf] %vm1316, %v1283
      %1349 = vrot.lane.b32.xlu0 %v1252, 112
      %v1350 = vpop.permute.xlu0 %1349
      %1351 = vrot.lane.b32.xlu0 %v1253, 112
      %v1352 = vpop.permute.xlu0 %1351
      %1353 = vrot.lane.b32.xlu0 %v1254, 112
      %v1354 = vpop.permute.xlu0 %1353
      %1355 = vrot.lane.b32.xlu0 %v1255, 112
      %v1356 = vpop.permute.xlu0 %1355
      %1357 = vrot.lane.b32.xlu0 %v1256, 112
      %v1358 = vpop.permute.xlu0 %1357
      %1359 = vrot.lane.b32.xlu0 %v1257, 112
      %v1360 = vpop.permute.xlu0 %1359
      %1361 = vrot.lane.b32.xlu0 %v1258, 112
      %v1362 = vpop.permute.xlu0 %1361
      %1363 = vrot.lane.b32.xlu0 %v1259, 112
      %v1364 = vpop.permute.xlu0 %1363
      %1365 = vrot.lane.b32.xlu0 %v1260, 112
      %v1366 = vpop.permute.xlu0 %1365
      %1367 = vrot.lane.b32.xlu0 %v1261, 112
      %v1368 = vpop.permute.xlu0 %1367
      %1369 = vrot.lane.b32.xlu0 %v1262, 112
      %v1370 = vpop.permute.xlu0 %1369
      %1371 = vrot.lane.b32.xlu0 %v1263, 112
      %v1372 = vpop.permute.xlu0 %1371
      %1373 = vrot.lane.b32.xlu0 %v1264, 112
      %v1374 = vpop.permute.xlu0 %1373
      %1375 = vrot.lane.b32.xlu0 %v1265, 112
      %v1376 = vpop.permute.xlu0 %1375
      %1377 = vrot.lane.b32.xlu0 %v1266, 112
      %v1378 = vpop.permute.xlu0 %1377
      %1379 = vrot.lane.b32.xlu0 %v1267, 112
      %v1380 = vpop.permute.xlu0 %1379
      %1381 = vrot.lane.b32.xlu0 %v1268, 112
      %v1382 = vpop.permute.xlu0 %1381
      %1383 = vrot.lane.b32.xlu0 %v1269, 112
      %v1384 = vpop.permute.xlu0 %1383
      %1385 = vrot.lane.b32.xlu0 %v1270, 112
      %v1386 = vpop.permute.xlu0 %1385
      %1387 = vrot.lane.b32.xlu0 %v1271, 112
      %v1388 = vpop.permute.xlu0 %1387
      %1389 = vrot.lane.b32.xlu0 %v1272, 112
      %v1390 = vpop.permute.xlu0 %1389
      %1391 = vrot.lane.b32.xlu0 %v1273, 112
      %v1392 = vpop.permute.xlu0 %1391
      %1393 = vrot.lane.b32.xlu0 %v1274, 112
      %v1394 = vpop.permute.xlu0 %1393
      %1395 = vrot.lane.b32.xlu0 %v1275, 112
      %v1396 = vpop.permute.xlu0 %1395
      %1397 = vrot.lane.b32.xlu0 %v1276, 112
      %v1398 = vpop.permute.xlu0 %1397
      %1399 = vrot.lane.b32.xlu0 %v1277, 112
      %v1400 = vpop.permute.xlu0 %1399
      %1401 = vrot.lane.b32.xlu0 %v1278, 112
      %v1402 = vpop.permute.xlu0 %1401
      %1403 = vrot.lane.b32.xlu0 %v1279, 112
      %v1404 = vpop.permute.xlu0 %1403
      %1405 = vrot.lane.b32.xlu0 %v1280, 112
      %v1406 = vpop.permute.xlu0 %1405
      %1407 = vrot.lane.b32.xlu0 %v1281, 112
      %v1408 = vpop.permute.xlu0 %1407
      %1409 = vrot.lane.b32.xlu0 %v1282, 112
      %v1410 = vpop.permute.xlu0 %1409
      %1411 = vrot.lane.b32.xlu0 %v1283, 112
      %v1412 = vpop.permute.xlu0 %1411
      %s1445 = scalar_lea.vmem %s170, 8
      %1446 = vst.msk [vmem:[%s1445] sm:$0xf] %vm1316, %v1350
      %1447 = vst.msk [vmem:[%s1445 + $0x4] sm:$0xf] %vm1316, %v1352
      %1448 = vst.msk [vmem:[%s1445 + $0x10] sm:$0xf] %vm1316, %v1354
      %1449 = vst.msk [vmem:[%s1445 + $0x14] sm:$0xf] %vm1316, %v1356
      %1450 = vst.msk [vmem:[%s1445 + $0x20] sm:$0xf] %vm1316, %v1358
      %1451 = vst.msk [vmem:[%s1445 + $0x24] sm:$0xf] %vm1316, %v1360
      %1452 = vst.msk [vmem:[%s1445 + $0x30] sm:$0xf] %vm1316, %v1362
      %1453 = vst.msk [vmem:[%s1445 + $0x34] sm:$0xf] %vm1316, %v1364
      %1454 = vst.msk [vmem:[%s1445 + $0x40] sm:$0xf] %vm1316, %v1366
      %1455 = vst.msk [vmem:[%s1445 + $0x44] sm:$0xf] %vm1316, %v1368
      %1456 = vst.msk [vmem:[%s1445 + $0x50] sm:$0xf] %vm1316, %v1370
      %1457 = vst.msk [vmem:[%s1445 + $0x54] sm:$0xf] %vm1316, %v1372
      %1458 = vst.msk [vmem:[%s1445 + $0x60] sm:$0xf] %vm1316, %v1374
      %1459 = vst.msk [vmem:[%s1445 + $0x64] sm:$0xf] %vm1316, %v1376
      %1460 = vst.msk [vmem:[%s1445 + $0x70] sm:$0xf] %vm1316, %v1378
      %1461 = vst.msk [vmem:[%s1445 + $0x74] sm:$0xf] %vm1316, %v1380
      %1462 = vst.msk [vmem:[%s1445 + $0x80] sm:$0xf] %vm1316, %v1382
      %1463 = vst.msk [vmem:[%s1445 + $0x84] sm:$0xf] %vm1316, %v1384
      %1464 = vst.msk [vmem:[%s1445 + $0x90] sm:$0xf] %vm1316, %v1386
      %1465 = vst.msk [vmem:[%s1445 + $0x94] sm:$0xf] %vm1316, %v1388
      %1466 = vst.msk [vmem:[%s1445 + $0xa0] sm:$0xf] %vm1316, %v1390
      %1467 = vst.msk [vmem:[%s1445 + $0xa4] sm:$0xf] %vm1316, %v1392
      %1468 = vst.msk [vmem:[%s1445 + $0xb0] sm:$0xf] %vm1316, %v1394
      %1469 = vst.msk [vmem:[%s1445 + $0xb4] sm:$0xf] %vm1316, %v1396
      %1470 = vst.msk [vmem:[%s1445 + $0xc0] sm:$0xf] %vm1316, %v1398
      %1471 = vst.msk [vmem:[%s1445 + $0xc4] sm:$0xf] %vm1316, %v1400
      %1472 = vst.msk [vmem:[%s1445 + $0xd0] sm:$0xf] %vm1316, %v1402
      %1473 = vst.msk [vmem:[%s1445 + $0xd4] sm:$0xf] %vm1316, %v1404
      %1474 = vst.msk [vmem:[%s1445 + $0xe0] sm:$0xf] %vm1316, %v1406
      %1475 = vst.msk [vmem:[%s1445 + $0xe4] sm:$0xf] %vm1316, %v1408
      %1476 = vst.msk [vmem:[%s1445 + $0xf0] sm:$0xf] %vm1316, %v1410
      %1477 = vst.msk [vmem:[%s1445 + $0xf4] sm:$0xf] %vm1316, %v1412
      %p1478 = scmp.lt.s32.totalorder %s14, 1
      %s1479 = scalar_select %p1478, %s14, 1
      %s1480 = smul.addr %s1479, 64
      %s1481 = smul.addr %s1480, 4
      %s1482 = scalar_lea.vmem %s3, %s1481
      // Predicated region
      $region33: #{_res_decoder_impl.4} parent=31 // pred_check
        %p1483 = pneg %p100
      $region34: #{_res_decoder_impl.4} parent=31 // pred_check_branch
        %1485 = sbr.rel (%p1483) target = $region36
      $region35: #{_res_decoder_impl.4} parent=31 // pred_region
        _
      $region36: #{_res_decoder_impl.4} parent=31 // pred_fallthru
        _
    $region32: #{_res_decoder_impl.4} parent=5 // pred_fallthru
      _
    %p1486 = scmp.le.s32.totalorder 2, %s9
    // Predicated region
    $region37: #{_res_decoder_impl.4} parent=5 // pred_check
      %p1487 = pneg %p1486
    $region38: #{_res_decoder_impl.4} parent=5 // pred_check_branch
      %1489 = sbr.rel (%p1487) target = $region40
    $region39: #{_res_decoder_impl.4} parent=5 // pred_region
      %s1490 = ssub.s32 %s9, 2
      // Predicated region
      $region41: #{_res_decoder_impl.4} parent=39 // pred_check
        %p1491 = pneg %p106
      $region42: #{_res_decoder_impl.4} parent=39 // pred_check_branch
        %1493 = sbr.rel (%p1491) target = $region44
      $region43: #{_res_decoder_impl.4} parent=39 // pred_region
        %p1494 = scmp.lt.s32.totalorder %s15, 1
        %s1495 = scalar_select %p1494, %s15, 1
        %s1496 = smul.addr %s1495, 64
        %s1497 = smul.addr %s1496, 4
        %s1498 = scalar_lea.vmem %s3, %s1497
      $region44: #{_res_decoder_impl.4} parent=39 // pred_fallthru
        _
    $region40: #{_res_decoder_impl.4} parent=5 // pred_fallthru
      _
  $region6: #{_res_decoder_impl.4} parent=0 // loop_footer
    %s13 = sadd.s32 1, %s9
  $region7: #{_res_decoder_impl.4} parent=0 // loop_footer_branch
    %8 = sbr.rel target = $region3
  $region8: #{_res_decoder_impl.4} parent=0 // loop_exit
    _

// kernel: _res_decoder_impl.5
$region0: #{_res_decoder_impl.5}
  #allocation0 [shape = 'u32[]', space=smem, size = 0x4, offset = 0x4, fixed_abs, tag = 'smem constant byte address 0x4 - core index']
  #allocation1 [shape = 'u32[144,128]{1,0:T(1,128)}', space=vmem, size = 0x12000, scoped, tag = 'internal scratch']
  %s0 = inlined_call_operand.vmem [shape: bf16[2,38,38,8], index: 0, kind: input, shape index: {}]
  %s1 = inlined_call_operand.vmem [shape: bf16[7,56,3], index: 1, kind: input, shape index: {}]
  %s2 = inlined_call_operand.vmem [shape: f32[1,3], index: 2, kind: input, shape index: {}]
  %s3 = inlined_call_operand.vmem [shape: f32[2,3,1024], index: 3, kind: output, shape index: {}]
  %s4 = sld [smem:[#allocation0]]
  $region45: #{_res_decoder_impl.5} parent=0
    _
  %s6 = ssub.s32 1, %s4
  %s7 = scalar_select 0, %s6, %s4
  loop: start=0, step=1, limit=4
  $region2: #{_res_decoder_impl.5} parent=0 // loop_pre_header
    _
  $region3: #{_res_decoder_impl.5} parent=0 // loop_header
    %s9 = sphi 0, %s13
    %p10 = scmp.ge.s32.totalorder %s9, 4
    %s16 = sphi 0, %s28
    %s17 = sphi 0, %s24
    %s18 = sphi 0, %s16
    %s19 = sphi 0, %s17
    %s20 = sphi 0, %s18
    %s21 = sphi 0, %s19
    %s31 = sphi 0, %s33
    %s34 = sphi 0, %s31
    %s35 = sphi 0, %s34
    %s51 = sphi 0, %s35
    %s55 = sphi 0, %s55
    %s57 = sphi 0, %s55
    %s58 = sphi 0, %s57
    %s72 = sphi 0, %s58
    %s76 = sphi 0, %s76
    %s78 = sphi 0, %s76
    %s79 = sphi 0, %s78
    %s93 = sphi 0, %s79
    %s101 = sphi 0, %s103
    %s104 = sphi 0, %s101
    %s105 = sphi 0, %s104
    %s121 = sphi 0, %s105
  $region4: #{_res_decoder_impl.5} parent=0 // loop_header_branch
    %12 = sbr.rel (%p10) target = $region8
  $region5: #{_res_decoder_impl.5} parent=0 // loop_body
    %s14 = ssub.s32 %s9, 1
    %s15 = ssub.s32 %s9, 2
    %s22 = sadd.s32 1, %s17
    %p23 = scmp.ge.s32.totalorder %s22, 1
    %s24 = scalar_select %p23, 0, %s22
    %s25 = sadd.s32 1, %s16
    %s26 = scalar_select %p23, %s25, %s16
    %p27 = scmp.ge.s32.totalorder %s26, 2
    %s28 = scalar_select %p27, 0, %s26
    %s29 = ssub.s32 %s16, %s28
    %p30 = scmp.eq.s32.totalorder %s29, 0
    %s32 = sadd.s32 %s31, 1
    %s33 = scalar_select %p30, %s31, %s32
    %p36 = pneg %p30
    %p37 = scmp.eq.s32.totalorder %s9, 1
    %p38 = por %p36, %p37
    %p39 = scmp.ne.s32.totalorder %s31, %s34
    %p40 = scmp.eq.s32.totalorder %s9, 0
    %p41 = por %p39, %p40
    %p42 = scmp.ne.s32.totalorder %s31, %s34
    %p43 = scmp.eq.s32.totalorder %s14, 1
    %p44 = por %p42, %p43
    %p45 = scmp.ne.s32.totalorder %s34, %s35
    %p46 = scmp.eq.s32.totalorder %s14, 0
    %p47 = por %p45, %p46
    %p48 = scmp.ne.s32.totalorder %s34, %s35
    %p49 = scmp.eq.s32.totalorder %s15, 1
    %p50 = por %p48, %p49
    %p52 = scmp.ne.s32.totalorder %s35, %s51
    %p53 = scmp.eq.s32.totalorder %s15, 0
    %p54 = por %p52, %p53
    %s56 = sadd.s32 %s55, 1
    %p59 = scmp.eq.s32.totalorder %s9, 1
    %p60 = scmp.ne.s32.totalorder %s55, %s57
    %p61 = scmp.eq.s32.totalorder %s9, 0
    %p62 = por %p60, %p61
    %p63 = scmp.ne.s32.totalorder %s55, %s57
    %p64 = scmp.eq.s32.totalorder %s14, 1
    %p65 = por %p63, %p64
    %p66 = scmp.ne.s32.totalorder %s57, %s58
    %p67 = scmp.eq.s32.totalorder %s14, 0
    %p68 = por %p66, %p67
    %p69 = scmp.ne.s32.totalorder %s57, %s58
    %p70 = scmp.eq.s32.totalorder %s15, 1
    %p71 = por %p69, %p70
    %p73 = scmp.ne.s32.totalorder %s58, %s72
    %p74 = scmp.eq.s32.totalorder %s15, 0
    %p75 = por %p73, %p74
    %s77 = sadd.s32 %s76, 1
    %p80 = scmp.eq.s32.totalorder %s9, 1
    %p81 = scmp.ne.s32.totalorder %s76, %s78
    %p82 = scmp.eq.s32.totalorder %s9, 0
    %p83 = por %p81, %p82
    %p84 = scmp.ne.s32.totalorder %s76, %s78
    %p85 = scmp.eq.s32.totalorder %s14, 1
    %p86 = por %p84, %p85
    %p87 = scmp.ne.s32.totalorder %s78, %s79
    %p88 = scmp.eq.s32.totalorder %s14, 0
    %p89 = por %p87, %p88
    %p90 = scmp.ne.s32.totalorder %s78, %s79
    %p91 = scmp.eq.s32.totalorder %s15, 1
    %p92 = por %p90, %p91
    %p94 = scmp.ne.s32.totalorder %s79, %s93
    %p95 = scmp.eq.s32.totalorder %s15, 0
    %p96 = por %p94, %p95
    %s97 = ssub.s32 %s16, %s28
    %s98 = ssub.s32 %s17, %s24
    %s99 = sor.u32 %s97, %s98
    %p100 = scmp.eq.s32.totalorder %s99, 0
    %s102 = sadd.s32 %s101, 1
    %s103 = scalar_select %p100, %s101, %s102
    %p106 = pneg %p100
    %p107 = scmp.eq.s32.totalorder %s9, 1
    %p108 = por %p106, %p107
    %p109 = scmp.ne.s32.totalorder %s101, %s104
    %p110 = scmp.eq.s32.totalorder %s9, 0
    %p111 = por %p109, %p110
    %p112 = scmp.ne.s32.totalorder %s101, %s104
    %p113 = scmp.eq.s32.totalorder %s14, 1
    %p114 = por %p112, %p113
    %p115 = scmp.ne.s32.totalorder %s104, %s105
    %p116 = scmp.eq.s32.totalorder %s14, 0
    %p117 = por %p115, %p116
    %p118 = scmp.ne.s32.totalorder %s104, %s105
    %p119 = scmp.eq.s32.totalorder %s15, 1
    %p120 = por %p118, %p119
    %p122 = scmp.ne.s32.totalorder %s105, %s121
    %p123 = scmp.eq.s32.totalorder %s15, 0
    %p124 = por %p122, %p123
    %p125 = scmp.le.s32.totalorder 1, %s9
    %p126 = scmp.lt.s32.totalorder %s9, 3
    %p127 = pnand %p125, %p126
    %p128 = pneg %p127
    // Predicated region
    $region9: #{_res_decoder_impl.5} parent=5 // pred_check
      _
    $region10: #{_res_decoder_impl.5} parent=5 // pred_check_branch
      %130 = sbr.rel (%p127) target = $region12
    $region11: #{_res_decoder_impl.5} parent=5 // pred_region
      %s131 = ssub.s32 %s9, 1
      // Predicated region
      $region13: #{_res_decoder_impl.5} parent=11 // pred_check
        %p132 = pneg %p68
      $region14: #{_res_decoder_impl.5} parent=11 // pred_check_branch
        %134 = sbr.rel (%p132) target = $region16
      $region15: #{_res_decoder_impl.5} parent=11 // pred_region
        _
      $region16: #{_res_decoder_impl.5} parent=11 // pred_fallthru
        _
      // Predicated region
      $region17: #{_res_decoder_impl.5} parent=11 // pred_check
        %p135 = pneg %p89
      $region18: #{_res_decoder_impl.5} parent=11 // pred_check_branch
        %137 = sbr.rel (%p135) target = $region20
      $region19: #{_res_decoder_impl.5} parent=11 // pred_region
        _
      $region20: #{_res_decoder_impl.5} parent=11 // pred_fallthru
        _
    $region12: #{_res_decoder_impl.5} parent=5 // pred_fallthru
      _
    %p138 = scmp.lt.s32.totalorder %s9, 2
    // Predicated region
    $region21: #{_res_decoder_impl.5} parent=5 // pred_check
      %p139 = pneg %p138
    $region22: #{_res_decoder_impl.5} parent=5 // pred_check_branch
      %141 = sbr.rel (%p139) target = $region24
    $region23: #{_res_decoder_impl.5} parent=5 // pred_region
      // Predicated region
      $region25: #{_res_decoder_impl.5} parent=23 // pred_check
        %p142 = pneg %p41
      $region26: #{_res_decoder_impl.5} parent=23 // pred_check_branch
        %144 = sbr.rel (%p142) target = $region28
      $region27: #{_res_decoder_impl.5} parent=23 // pred_region
        %p145 = scmp.lt.s32.totalorder %s16, 1
        %s146 = scalar_select %p145, %s16, 1
        %s147 = smul.addr %s146, 190
        %s148 = smul.addr %s147, 4
        %s149 = scalar_lea.vmem %s0, %s148
      $region28: #{_res_decoder_impl.5} parent=23 // pred_fallthru
        _
    $region24: #{_res_decoder_impl.5} parent=5 // pred_fallthru
      _
    %p150 = scmp.le.s32.totalorder 1, %s9
    %p151 = scmp.lt.s32.totalorder %s9, 3
    %p152 = pnand %p150, %p151
    %p153 = pneg %p152
    // Predicated region
    $region29: #{_res_decoder_impl.5} parent=5 // pred_check
      _
    $region30: #{_res_decoder_impl.5} parent=5 // pred_check_branch
      %155 = sbr.rel (%p152) target = $region32
    $region31: #{_res_decoder_impl.5} parent=5 // pred_region
      %s156 = ssub.s32 %s9, 1
      %p157 = scmp.lt.s32.totalorder %s18, 1
      %s158 = scalar_select %p157, %s18, 1
      %s159 = smul.addr %s158, 190
      %s160 = smul.addr %s159, 4
      %s161 = scalar_lea.vmem %s0, %s160
      %p162 = pneg %p47
      %p163 = pneg %p44
      %p164 = pneg %p68
      %p165 = pneg %p65
      %p166 = pneg %p89
      %p167 = pneg %p86
      %p168 = pneg %p117
      %p169 = pneg %p114
      %s170 = smul.u32 8, %s19
      %p171 = scmp.lt.s32.totalorder %s18, 1
      %s172 = scalar_select %p171, %s18, 1
      %p173 = scmp.lt.s32.totalorder %s170, 7
      %s174 = scalar_select %p173, %s170, 7
      %s175 = smul.addr %s172, 8
      %s176 = sadd.s32 %s174, %s175
      %s177 = smul.addr %s176, 4
      %s178 = scalar_lea.vmem %s3, %s177
      %p179 = scmp.lt.s32.totalorder %s18, 1
      %s180 = scalar_select %p179, %s18, 1
      %s181 = smul.addr %s180, 190
      %s182 = smul.addr %s181, 4
      %s183 = scalar_lea.vmem %s0, %s182
      %s184 = smul.u32 8, %s19
      %p185 = scmp.lt.s32.totalorder %s18, 1
      %s186 = scalar_select %p185, %s18, 1
      %p187 = scmp.lt.s32.totalorder %s184, 7
      %s188 = scalar_select %p187, %s184, 7
      %s189 = smul.addr %s186, 8
      %s190 = sadd.s32 %s188, %s189
      %s191 = smul.addr %s190, 4
      %s192 = scalar_lea.vmem %s3, %s191
      %s193 = smul.u32 8, %s19
      %s195 = smul.u32 %s19, 32
      %s196 = smul.u32 %s195, 5
      %s197 = smul.addr %s196, 4
      %s198 = scalar_lea.vmem %s183, %s197
      %v199 = vld [vmem:[%s198] sm:$0xf]
      %v200 = vld [vmem:[%s198 + $0x4] sm:$0xf]
      %v201 = vld [vmem:[%s198 + $0x8] sm:$0xf]
      %v202 = vld [vmem:[%s198 + $0xc] sm:$0xf]
      %v203 = vld [vmem:[%s198 + $0x10] sm:$0x7]
      %v204 = vld [vmem:[%s198 + $0x14] sm:$0xf]
      %v205 = vld [vmem:[%s198 + $0x18] sm:$0xf]
      %v206 = vld [vmem:[%s198 + $0x1c] sm:$0xf]
      %v207 = vld [vmem:[%s198 + $0x20] sm:$0xf]
      %v208 = vld [vmem:[%s198 + $0x24] sm:$0x7]
      %v209 = vld [vmem:[%s198 + $0x28] sm:$0xf]
      %v210 = vld [vmem:[%s198 + $0x2c] sm:$0xf]
      %v211 = vld [vmem:[%s198 + $0x30] sm:$0xf]
      %v212 = vld [vmem:[%s198 + $0x34] sm:$0xf]
      %v213 = vld [vmem:[%s198 + $0x38] sm:$0x7]
      %v214 = vld [vmem:[%s198 + $0x3c] sm:$0xf]
      %v215 = vld [vmem:[%s198 + $0x40] sm:$0xf]
      %v216 = vld [vmem:[%s198 + $0x44] sm:$0xf]
      %v217 = vld [vmem:[%s198 + $0x48] sm:$0xf]
      %v218 = vld [vmem:[%s198 + $0x4c] sm:$0x7]
      %v219 = vld [vmem:[%s198 + $0x50] sm:$0xf]
      %v220 = vld [vmem:[%s198 + $0x54] sm:$0xf]
      %v221 = vld [vmem:[%s198 + $0x58] sm:$0xf]
      %v222 = vld [vmem:[%s198 + $0x5c] sm:$0xf]
      %v223 = vld [vmem:[%s198 + $0x60] sm:$0x7]
      %v224 = vld [vmem:[%s198 + $0x64] sm:$0xf]
      %v225 = vld [vmem:[%s198 + $0x68] sm:$0xf]
      %v226 = vld [vmem:[%s198 + $0x6c] sm:$0xf]
      %v227 = vld [vmem:[%s198 + $0x70] sm:$0xf]
      %v228 = vld [vmem:[%s198 + $0x74] sm:$0x7]
      %v229 = vld [vmem:[%s198 + $0x78] sm:$0xf]
      %v230 = vld [vmem:[%s198 + $0x7c] sm:$0xf]
      %v231 = vld [vmem:[%s198 + $0x80] sm:$0xf]
      %v232 = vld [vmem:[%s198 + $0x84] sm:$0xf]
      %v233 = vld [vmem:[%s198 + $0x88] sm:$0x7]
      %v234 = vld [vmem:[%s198 + $0x8c] sm:$0xf]
      %v235 = vld [vmem:[%s198 + $0x90] sm:$0xf]
      %v236 = vld [vmem:[%s198 + $0x94] sm:$0xf]
      %v237 = vld [vmem:[%s198 + $0x98] sm:$0xf]
      %v238 = vld [vmem:[%s198 + $0x9c] sm:$0x7]
      %v239 = vld [vmem:[%s198 + $0xa0] sm:$0xf]
      %v240 = vld [vmem:[%s198 + $0xa4] sm:$0xf]
      %v241 = vld [vmem:[%s198 + $0xa8] sm:$0xf]
      %v242 = vld [vmem:[%s198 + $0xac] sm:$0xf]
      %v243 = vld [vmem:[%s198 + $0xb0] sm:$0x7]
      %v244 = vld [vmem:[%s198 + $0xb4] sm:$0xf]
      %v245 = vld [vmem:[%s198 + $0xb8] sm:$0xf]
      %v246 = vld [vmem:[%s198 + $0xbc] sm:$0xf]
      %v247 = vld [vmem:[%s198 + $0xc0] sm:$0xf]
      %v248 = vld [vmem:[%s198 + $0xc4] sm:$0x7]
      %v249 = vld [vmem:[%s198 + $0xc8] sm:$0xf]
      %v250 = vld [vmem:[%s198 + $0xcc] sm:$0xf]
      %v251 = vld [vmem:[%s198 + $0xd0] sm:$0xf]
      %v252 = vld [vmem:[%s198 + $0xd4] sm:$0xf]
      %v253 = vld [vmem:[%s198 + $0xd8] sm:$0x7]
      %v254 = vld [vmem:[%s198 + $0xdc] sm:$0xf]
      %v255 = vld [vmem:[%s198 + $0xe0] sm:$0xf]
      %v256 = vld [vmem:[%s198 + $0xe4] sm:$0xf]
      %v257 = vld [vmem:[%s198 + $0xe8] sm:$0xf]
      %v258 = vld [vmem:[%s198 + $0xec] sm:$0x7]
      %v259 = vld [vmem:[%s198 + $0xf0] sm:$0xf]
      %v260 = vld [vmem:[%s198 + $0xf4] sm:$0xf]
      %v261 = vld [vmem:[%s198 + $0xf8] sm:$0xf]
      %v262 = vld [vmem:[%s198 + $0xfc] sm:$0xf]
      %v263 = vld [vmem:[%s198 + $0x100] sm:$0x7]
      %v264 = vld [vmem:[%s198 + $0x104] sm:$0xf]
      %v265 = vld [vmem:[%s198 + $0x108] sm:$0xf]
      %v266 = vld [vmem:[%s198 + $0x10c] sm:$0xf]
      %v267 = vld [vmem:[%s198 + $0x110] sm:$0xf]
      %v268 = vld [vmem:[%s198 + $0x114] sm:$0x7]
      %v269 = vld [vmem:[%s198 + $0x118] sm:$0xf]
      %v270 = vld [vmem:[%s198 + $0x11c] sm:$0xf]
      %v271 = vld [vmem:[%s198 + $0x120] sm:$0xf]
      %v272 = vld [vmem:[%s198 + $0x124] sm:$0xf]
      %v273 = vld [vmem:[%s198 + $0x128] sm:$0x7]
      %v274 = vld [vmem:[%s198 + $0x12c] sm:$0xf]
      %v275 = vld [vmem:[%s198 + $0x130] sm:$0xf]
      %v276 = vld [vmem:[%s198 + $0x134] sm:$0xf]
      %v277 = vld [vmem:[%s198 + $0x138] sm:$0xf]
      %v278 = vld [vmem:[%s198 + $0x13c] sm:$0x7]
      %v279 = vld [vmem:[%s198 + $0x140] sm:$0xf]
      %v280 = vld [vmem:[%s198 + $0x144] sm:$0xf]
      %v281 = vld [vmem:[%s198 + $0x148] sm:$0xf]
      %v282 = vld [vmem:[%s198 + $0x14c] sm:$0xf]
      %v283 = vld [vmem:[%s198 + $0x150] sm:$0x7]
      %v284 = vld [vmem:[%s198 + $0x154] sm:$0xf]
      %v285 = vld [vmem:[%s198 + $0x158] sm:$0xf]
      %v286 = vld [vmem:[%s198 + $0x15c] sm:$0xf]
      %v287 = vld [vmem:[%s198 + $0x160] sm:$0xf]
      %v288 = vld [vmem:[%s198 + $0x164] sm:$0x7]
      %v289 = vld [vmem:[%s198 + $0x168] sm:$0xf]
      %v290 = vld [vmem:[%s198 + $0x16c] sm:$0xf]
      %v291 = vld [vmem:[%s198 + $0x170] sm:$0xf]
      %v292 = vld [vmem:[%s198 + $0x174] sm:$0xf]
      %v293 = vld [vmem:[%s198 + $0x178] sm:$0x7]
      %v294 = vld [vmem:[%s198 + $0x17c] sm:$0xf]
      %v295 = vld [vmem:[%s198 + $0x180] sm:$0xf]
      %v296 = vld [vmem:[%s198 + $0x184] sm:$0xf]
      %v297 = vld [vmem:[%s198 + $0x188] sm:$0xf]
      %v298 = vld [vmem:[%s198 + $0x18c] sm:$0x7]
      %v299 = vld [vmem:[%s198 + $0x190] sm:$0xf]
      %v300 = vld [vmem:[%s198 + $0x194] sm:$0xf]
      %v301 = vld [vmem:[%s198 + $0x198] sm:$0xf]
      %v302 = vld [vmem:[%s198 + $0x19c] sm:$0xf]
      %v303 = vld [vmem:[%s198 + $0x1a0] sm:$0x7]
      %v304 = vld [vmem:[%s198 + $0x1a4] sm:$0xf]
      %v305 = vld [vmem:[%s198 + $0x1a8] sm:$0xf]
      %v306 = vld [vmem:[%s198 + $0x1ac] sm:$0xf]
      %v307 = vld [vmem:[%s198 + $0x1b0] sm:$0xf]
      %v308 = vld [vmem:[%s198 + $0x1b4] sm:$0x7]
      %v309 = vld [vmem:[%s198 + $0x1b8] sm:$0xf]
      %v310 = vld [vmem:[%s198 + $0x1bc] sm:$0xf]
      %v311 = vld [vmem:[%s198 + $0x1c0] sm:$0xf]
      %v312 = vld [vmem:[%s198 + $0x1c4] sm:$0xf]
      %v313 = vld [vmem:[%s198 + $0x1c8] sm:$0x7]
      %v314 = vld [vmem:[%s198 + $0x1cc] sm:$0xf]
      %v315 = vld [vmem:[%s198 + $0x1d0] sm:$0xf]
      %v316 = vld [vmem:[%s198 + $0x1d4] sm:$0xf]
      %v317 = vld [vmem:[%s198 + $0x1d8] sm:$0xf]
      %v318 = vld [vmem:[%s198 + $0x1dc] sm:$0x7]
      %v319 = vld [vmem:[%s198 + $0x1e0] sm:$0xf]
      %v320 = vld [vmem:[%s198 + $0x1e4] sm:$0xf]
      %v321 = vld [vmem:[%s198 + $0x1e8] sm:$0xf]
      %v322 = vld [vmem:[%s198 + $0x1ec] sm:$0xf]
      %v323 = vld [vmem:[%s198 + $0x1f0] sm:$0x7]
      %v324 = vld [vmem:[%s198 + $0x1f4] sm:$0xf]
      %v325 = vld [vmem:[%s198 + $0x1f8] sm:$0xf]
      %v326 = vld [vmem:[%s198 + $0x1fc] sm:$0xf]
      %v327 = vld [vmem:[%s198 + $0x200] sm:$0xf]
      %v328 = vld [vmem:[%s198 + $0x204] sm:$0x7]
      %v329 = vld [vmem:[%s198 + $0x208] sm:$0xf]
      %v330 = vld [vmem:[%s198 + $0x20c] sm:$0xf]
      %v331 = vld [vmem:[%s198 + $0x210] sm:$0xf]
      %v332 = vld [vmem:[%s198 + $0x214] sm:$0xf]
      %v333 = vld [vmem:[%s198 + $0x218] sm:$0x7]
      %v334 = vld [vmem:[%s198 + $0x21c] sm:$0xf]
      %v335 = vld [vmem:[%s198 + $0x220] sm:$0xf]
      %v336 = vld [vmem:[%s198 + $0x224] sm:$0xf]
      %v337 = vld [vmem:[%s198 + $0x228] sm:$0xf]
      %v338 = vld [vmem:[%s198 + $0x22c] sm:$0x7]
      %v339 = vld [vmem:[%s198 + $0x230] sm:$0xf]
      %v340 = vld [vmem:[%s198 + $0x234] sm:$0xf]
      %v341 = vld [vmem:[%s198 + $0x238] sm:$0xf]
      %v342 = vld [vmem:[%s198 + $0x23c] sm:$0xf]
      %v343 = vld [vmem:[%s198 + $0x240] sm:$0x7]
      %v344 = vld [vmem:[%s198 + $0x244] sm:$0xf]
      %v345 = vld [vmem:[%s198 + $0x248] sm:$0xf]
      %v346 = vld [vmem:[%s198 + $0x24c] sm:$0xf]
      %v347 = vld [vmem:[%s198 + $0x250] sm:$0xf]
      %v348 = vld [vmem:[%s198 + $0x254] sm:$0x7]
      %v349 = vld [vmem:[%s198 + $0x258] sm:$0xf]
      %v350 = vld [vmem:[%s198 + $0x25c] sm:$0xf]
      %v351 = vld [vmem:[%s198 + $0x260] sm:$0xf]
      %v352 = vld [vmem:[%s198 + $0x264] sm:$0xf]
      %v353 = vld [vmem:[%s198 + $0x268] sm:$0x7]
      %v354 = vld [vmem:[%s198 + $0x26c] sm:$0xf]
      %v355 = vld [vmem:[%s198 + $0x270] sm:$0xf]
      %v356 = vld [vmem:[%s198 + $0x274] sm:$0xf]
      %v357 = vld [vmem:[%s198 + $0x278] sm:$0xf]
      %v358 = vld [vmem:[%s198 + $0x27c] sm:$0x7]
      %v359 = vld [vmem:[%s198 + $0x280] sm:$0xf]
      %v360 = vld [vmem:[%s198 + $0x284] sm:$0xf]
      %v361 = vld [vmem:[%s198 + $0x288] sm:$0xf]
      %v362 = vld [vmem:[%s198 + $0x28c] sm:$0xf]
      %v363 = vld [vmem:[%s198 + $0x290] sm:$0x7]
      %v364 = vld [vmem:[%s198 + $0x294] sm:$0xf]
      %v365 = vld [vmem:[%s198 + $0x298] sm:$0xf]
      %v366 = vld [vmem:[%s198 + $0x29c] sm:$0xf]
      %v367 = vld [vmem:[%s198 + $0x2a0] sm:$0xf]
      %v368 = vld [vmem:[%s198 + $0x2a4] sm:$0x7]
      %v369 = vld [vmem:[%s198 + $0x2a8] sm:$0xf]
      %v370 = vld [vmem:[%s198 + $0x2ac] sm:$0xf]
      %v371 = vld [vmem:[%s198 + $0x2b0] sm:$0xf]
      %v372 = vld [vmem:[%s198 + $0x2b4] sm:$0xf]
      %v373 = vld [vmem:[%s198 + $0x2b8] sm:$0x7]
      %v374 = vld [vmem:[%s198 + $0x2bc] sm:$0xf]
      %v375 = vld [vmem:[%s198 + $0x2c0] sm:$0xf]
      %v376 = vld [vmem:[%s198 + $0x2c4] sm:$0xf]
      %v377 = vld [vmem:[%s198 + $0x2c8] sm:$0xf]
      %v378 = vld [vmem:[%s198 + $0x2cc] sm:$0x7]
      %v379 = vld [vmem:[%s198 + $0x2d0] sm:$0xf]
      %v380 = vld [vmem:[%s198 + $0x2d4] sm:$0xf]
      %v381 = vld [vmem:[%s198 + $0x2d8] sm:$0xf]
      %v382 = vld [vmem:[%s198 + $0x2dc] sm:$0xf]
      %v383 = vld [vmem:[%s198 + $0x2e0] sm:$0x7]
      %v384 = vld [vmem:[%s198 + $0x2e4] sm:$0xf]
      %v385 = vld [vmem:[%s198 + $0x2e8] sm:$0xf]
      %v386 = vld [vmem:[%s198 + $0x2ec] sm:$0xf]
      %v387 = vld [vmem:[%s198 + $0x2f0] sm:$0xf]
      %v388 = vld [vmem:[%s198 + $0x2f4] sm:$0x7]
      %v541 = vunpack.c.l.b16 %v199
      %v542 = vunpack.c.l.b16 %v200
      %v543 = vunpack.c.l.b16 %v201
      %v544 = vunpack.c.l.b16 %v202
      %v545 = vunpack.c.l.b16 %v204
      %v546 = vunpack.c.l.b16 %v205
      %v547 = vunpack.c.l.b16 %v206
      %v548 = vunpack.c.l.b16 %v207
      %v549 = vunpack.c.l.b16 %v209
      %v550 = vunpack.c.l.b16 %v210
      %v551 = vunpack.c.l.b16 %v211
      %v552 = vunpack.c.l.b16 %v212
      %v553 = vunpack.c.l.b16 %v214
      %v554 = vunpack.c.l.b16 %v215
      %v555 = vunpack.c.l.b16 %v216
      %v556 = vunpack.c.l.b16 %v217
      %v557 = vunpack.c.l.b16 %v219
      %v558 = vunpack.c.l.b16 %v220
      %v559 = vunpack.c.l.b16 %v221
      %v560 = vunpack.c.l.b16 %v222
      %v561 = vunpack.c.l.b16 %v224
      %v562 = vunpack.c.l.b16 %v225
      %v563 = vunpack.c.l.b16 %v226
      %v564 = vunpack.c.l.b16 %v227
      %v565 = vunpack.c.l.b16 %v229
      %v566 = vunpack.c.l.b16 %v230
      %v567 = vunpack.c.l.b16 %v231
      %v568 = vunpack.c.l.b16 %v232
      %v569 = vunpack.c.l.b16 %v234
      %v570 = vunpack.c.l.b16 %v235
      %v571 = vunpack.c.l.b16 %v236
      %v572 = vunpack.c.l.b16 %v237
      %v573 = vunpack.c.l.b16 %v239
      %v574 = vunpack.c.l.b16 %v240
      %v575 = vunpack.c.l.b16 %v241
      %v576 = vunpack.c.l.b16 %v242
      %v577 = vunpack.c.l.b16 %v244
      %v578 = vunpack.c.l.b16 %v245
      %v579 = vunpack.c.l.b16 %v246
      %v580 = vunpack.c.l.b16 %v247
      %v581 = vunpack.c.l.b16 %v249
      %v582 = vunpack.c.l.b16 %v250
      %v583 = vunpack.c.l.b16 %v251
      %v584 = vunpack.c.l.b16 %v252
      %v585 = vunpack.c.l.b16 %v254
      %v586 = vunpack.c.l.b16 %v255
      %v587 = vunpack.c.l.b16 %v256
      %v588 = vunpack.c.l.b16 %v257
      %v589 = vunpack.c.l.b16 %v259
      %v590 = vunpack.c.l.b16 %v260
      %v591 = vunpack.c.l.b16 %v261
      %v592 = vunpack.c.l.b16 %v262
      %v593 = vunpack.c.l.b16 %v264
      %v594 = vunpack.c.l.b16 %v265
      %v595 = vunpack.c.l.b16 %v266
      %v596 = vunpack.c.l.b16 %v267
      %v597 = vunpack.c.l.b16 %v269
      %v598 = vunpack.c.l.b16 %v270
      %v599 = vunpack.c.l.b16 %v271
      %v600 = vunpack.c.l.b16 %v272
      %v601 = vunpack.c.l.b16 %v274
      %v602 = vunpack.c.l.b16 %v275
      %v603 = vunpack.c.l.b16 %v276
      %v604 = vunpack.c.l.b16 %v277
      %v605 = vunpack.c.l.b16 %v279
      %v606 = vunpack.c.l.b16 %v280
      %v607 = vunpack.c.l.b16 %v281
      %v608 = vunpack.c.l.b16 %v282
      %v609 = vunpack.c.l.b16 %v284
      %v610 = vunpack.c.l.b16 %v285
      %v611 = vunpack.c.l.b16 %v286
      %v612 = vunpack.c.l.b16 %v287
      %v613 = vunpack.c.l.b16 %v289
      %v614 = vunpack.c.l.b16 %v290
      %v615 = vunpack.c.l.b16 %v291
      %v616 = vunpack.c.l.b16 %v292
      %v617 = vunpack.c.l.b16 %v294
      %v618 = vunpack.c.l.b16 %v295
      %v619 = vunpack.c.l.b16 %v296
      %v620 = vunpack.c.l.b16 %v297
      %v621 = vunpack.c.l.b16 %v299
      %v622 = vunpack.c.l.b16 %v300
      %v623 = vunpack.c.l.b16 %v301
      %v624 = vunpack.c.l.b16 %v302
      %v625 = vunpack.c.l.b16 %v304
      %v626 = vunpack.c.l.b16 %v305
      %v627 = vunpack.c.l.b16 %v306
      %v628 = vunpack.c.l.b16 %v307
      %v629 = vunpack.c.l.b16 %v309
      %v630 = vunpack.c.l.b16 %v310
      %v631 = vunpack.c.l.b16 %v311
      %v632 = vunpack.c.l.b16 %v312
      %v633 = vunpack.c.l.b16 %v314
      %v634 = vunpack.c.l.b16 %v315
      %v635 = vunpack.c.l.b16 %v316
      %v636 = vunpack.c.l.b16 %v317
      %v637 = vunpack.c.l.b16 %v319
      %v638 = vunpack.c.l.b16 %v320
      %v639 = vunpack.c.l.b16 %v321
      %v640 = vunpack.c.l.b16 %v322
      %v641 = vunpack.c.l.b16 %v324
      %v642 = vunpack.c.l.b16 %v325
      %v643 = vunpack.c.l.b16 %v326
      %v644 = vunpack.c.l.b16 %v327
      %v645 = vunpack.c.l.b16 %v329
      %v646 = vunpack.c.l.b16 %v330
      %v647 = vunpack.c.l.b16 %v331
      %v648 = vunpack.c.l.b16 %v332
      %v649 = vunpack.c.l.b16 %v334
      %v650 = vunpack.c.l.b16 %v335
      %v651 = vunpack.c.l.b16 %v336
      %v652 = vunpack.c.l.b16 %v337
      %v653 = vunpack.c.l.b16 %v339
      %v654 = vunpack.c.l.b16 %v340
      %v655 = vunpack.c.l.b16 %v341
      %v656 = vunpack.c.l.b16 %v342
      %v657 = vunpack.c.l.b16 %v344
      %v658 = vunpack.c.l.b16 %v345
      %v659 = vunpack.c.l.b16 %v346
      %v660 = vunpack.c.l.b16 %v347
      %v661 = vunpack.c.l.b16 %v349
      %v662 = vunpack.c.l.b16 %v350
      %v663 = vunpack.c.l.b16 %v351
      %v664 = vunpack.c.l.b16 %v352
      %v665 = vunpack.c.l.b16 %v354
      %v666 = vunpack.c.l.b16 %v355
      %v667 = vunpack.c.l.b16 %v356
      %v668 = vunpack.c.l.b16 %v357
      %v669 = vunpack.c.l.b16 %v359
      %v670 = vunpack.c.l.b16 %v360
      %v671 = vunpack.c.l.b16 %v361
      %v672 = vunpack.c.l.b16 %v362
      %v673 = vunpack.c.l.b16 %v364
      %v674 = vunpack.c.l.b16 %v365
      %v675 = vunpack.c.l.b16 %v366
      %v676 = vunpack.c.l.b16 %v367
      %v677 = vunpack.c.l.b16 %v369
      %v678 = vunpack.c.l.b16 %v370
      %v679 = vunpack.c.l.b16 %v371
      %v680 = vunpack.c.l.b16 %v372
      %v681 = vunpack.c.l.b16 %v374
      %v682 = vunpack.c.l.b16 %v375
      %v683 = vunpack.c.l.b16 %v376
      %v684 = vunpack.c.l.b16 %v377
      %v685 = vunpack.c.l.b16 %v379
      %v686 = vunpack.c.l.b16 %v380
      %v687 = vunpack.c.l.b16 %v381
      %v688 = vunpack.c.l.b16 %v382
      %v689 = vunpack.c.l.b16 %v384
      %v690 = vunpack.c.l.b16 %v385
      %v691 = vunpack.c.l.b16 %v386
      %v692 = vunpack.c.l.b16 %v387
      %v693 = vpack.c.b16 %v542, %v541
      %v694 = vpack.c.b16 %v544, %v543
      %v695 = vpack.c.b16 %v546, %v545
      %v696 = vpack.c.b16 %v548, %v547
      %v697 = vpack.c.b16 %v550, %v549
      %v698 = vpack.c.b16 %v552, %v551
      %v699 = vpack.c.b16 %v554, %v553
      %v700 = vpack.c.b16 %v556, %v555
      %v701 = vpack.c.b16 %v558, %v557
      %v702 = vpack.c.b16 %v560, %v559
      %v703 = vpack.c.b16 %v562, %v561
      %v704 = vpack.c.b16 %v564, %v563
      %v705 = vpack.c.b16 %v566, %v565
      %v706 = vpack.c.b16 %v568, %v567
      %v707 = vpack.c.b16 %v570, %v569
      %v708 = vpack.c.b16 %v572, %v571
      %v709 = vpack.c.b16 %v574, %v573
      %v710 = vpack.c.b16 %v576, %v575
      %v711 = vpack.c.b16 %v578, %v577
      %v712 = vpack.c.b16 %v580, %v579
      %v713 = vpack.c.b16 %v582, %v581
      %v714 = vpack.c.b16 %v584, %v583
      %v715 = vpack.c.b16 %v586, %v585
      %v716 = vpack.c.b16 %v588, %v587
      %v717 = vpack.c.b16 %v590, %v589
      %v718 = vpack.c.b16 %v592, %v591
      %v719 = vpack.c.b16 %v594, %v593
      %v720 = vpack.c.b16 %v596, %v595
      %v721 = vpack.c.b16 %v598, %v597
      %v722 = vpack.c.b16 %v600, %v599
      %v723 = vpack.c.b16 %v602, %v601
      %v724 = vpack.c.b16 %v604, %v603
      %v725 = vpack.c.b16 %v606, %v605
      %v726 = vpack.c.b16 %v608, %v607
      %v727 = vpack.c.b16 %v610, %v609
      %v728 = vpack.c.b16 %v612, %v611
      %v729 = vpack.c.b16 %v614, %v613
      %v730 = vpack.c.b16 %v616, %v615
      %v731 = vpack.c.b16 %v618, %v617
      %v732 = vpack.c.b16 %v620, %v619
      %v733 = vpack.c.b16 %v622, %v621
      %v734 = vpack.c.b16 %v624, %v623
      %v735 = vpack.c.b16 %v626, %v625
      %v736 = vpack.c.b16 %v628, %v627
      %v737 = vpack.c.b16 %v630, %v629
      %v738 = vpack.c.b16 %v632, %v631
      %v739 = vpack.c.b16 %v634, %v633
      %v740 = vpack.c.b16 %v636, %v635
      %v741 = vpack.c.b16 %v638, %v637
      %v742 = vpack.c.b16 %v640, %v639
      %v743 = vpack.c.b16 %v642, %v641
      %v744 = vpack.c.b16 %v644, %v643
      %v745 = vpack.c.b16 %v646, %v645
      %v746 = vpack.c.b16 %v648, %v647
      %v747 = vpack.c.b16 %v650, %v649
      %v748 = vpack.c.b16 %v652, %v651
      %v749 = vpack.c.b16 %v654, %v653
      %v750 = vpack.c.b16 %v656, %v655
      %v751 = vpack.c.b16 %v658, %v657
      %v752 = vpack.c.b16 %v660, %v659
      %v753 = vpack.c.b16 %v662, %v661
      %v754 = vpack.c.b16 %v664, %v663
      %v755 = vpack.c.b16 %v666, %v665
      %v756 = vpack.c.b16 %v668, %v667
      %v757 = vpack.c.b16 %v670, %v669
      %v758 = vpack.c.b16 %v672, %v671
      %v759 = vpack.c.b16 %v674, %v673
      %v760 = vpack.c.b16 %v676, %v675
      %v761 = vpack.c.b16 %v678, %v677
      %v762 = vpack.c.b16 %v680, %v679
      %v763 = vpack.c.b16 %v682, %v681
      %v764 = vpack.c.b16 %v684, %v683
      %v765 = vpack.c.b16 %v686, %v685
      %v766 = vpack.c.b16 %v688, %v687
      %v767 = vpack.c.b16 %v690, %v689
      %v768 = vpack.c.b16 %v692, %v691
      %v807 = vunpack.c.l.b16 %v203
      %v808 = vunpack.c.l.b16 %v208
      %v809 = vunpack.c.l.b16 %v213
      %v810 = vunpack.c.l.b16 %v218
      %v811 = vunpack.c.l.b16 %v223
      %v812 = vunpack.c.l.b16 %v228
      %v813 = vunpack.c.l.b16 %v233
      %v814 = vunpack.c.l.b16 %v238
      %v815 = vunpack.c.l.b16 %v243
      %v816 = vunpack.c.l.b16 %v248
      %v817 = vunpack.c.l.b16 %v253
      %v818 = vunpack.c.l.b16 %v258
      %v819 = vunpack.c.l.b16 %v263
      %v820 = vunpack.c.l.b16 %v268
      %v821 = vunpack.c.l.b16 %v273
      %v822 = vunpack.c.l.b16 %v278
      %v823 = vunpack.c.l.b16 %v283
      %v824 = vunpack.c.l.b16 %v288
      %v825 = vunpack.c.l.b16 %v293
      %v826 = vunpack.c.l.b16 %v298
      %v827 = vunpack.c.l.b16 %v303
      %v828 = vunpack.c.l.b16 %v308
      %v829 = vunpack.c.l.b16 %v313
      %v830 = vunpack.c.l.b16 %v318
      %v831 = vunpack.c.l.b16 %v323
      %v832 = vunpack.c.l.b16 %v328
      %v833 = vunpack.c.l.b16 %v333
      %v834 = vunpack.c.l.b16 %v338
      %v835 = vunpack.c.l.b16 %v343
      %v836 = vunpack.c.l.b16 %v348
      %v837 = vunpack.c.l.b16 %v353
      %v838 = vunpack.c.l.b16 %v358
      %v839 = vunpack.c.l.b16 %v363
      %v840 = vunpack.c.l.b16 %v368
      %v841 = vunpack.c.l.b16 %v373
      %v842 = vunpack.c.l.b16 %v378
      %v843 = vunpack.c.l.b16 %v383
      %v844 = vunpack.c.l.b16 %v388
      %v845 = vpack.c.b16 %v807, %v807
      %v846 = vpack.c.b16 %v808, %v808
      %v847 = vpack.c.b16 %v809, %v809
      %v848 = vpack.c.b16 %v810, %v810
      %v849 = vpack.c.b16 %v811, %v811
      %v850 = vpack.c.b16 %v812, %v812
      %v851 = vpack.c.b16 %v813, %v813
      %v852 = vpack.c.b16 %v814, %v814
      %v853 = vpack.c.b16 %v815, %v815
      %v854 = vpack.c.b16 %v816, %v816
      %v855 = vpack.c.b16 %v817, %v817
      %v856 = vpack.c.b16 %v818, %v818
      %v857 = vpack.c.b16 %v819, %v819
      %v858 = vpack.c.b16 %v820, %v820
      %v859 = vpack.c.b16 %v821, %v821
      %v860 = vpack.c.b16 %v822, %v822
      %v861 = vpack.c.b16 %v823, %v823
      %v862 = vpack.c.b16 %v824, %v824
      %v863 = vpack.c.b16 %v825, %v825
      %v864 = vpack.c.b16 %v826, %v826
      %v865 = vpack.c.b16 %v827, %v827
      %v866 = vpack.c.b16 %v828, %v828
      %v867 = vpack.c.b16 %v829, %v829
      %v868 = vpack.c.b16 %v830, %v830
      %v869 = vpack.c.b16 %v831, %v831
      %v870 = vpack.c.b16 %v832, %v832
      %v871 = vpack.c.b16 %v833, %v833
      %v872 = vpack.c.b16 %v834, %v834
      %v873 = vpack.c.b16 %v835, %v835
      %v874 = vpack.c.b16 %v836, %v836
      %v875 = vpack.c.b16 %v837, %v837
      %v876 = vpack.c.b16 %v838, %v838
      %v877 = vpack.c.b16 %v839, %v839
      %v878 = vpack.c.b16 %v840, %v840
      %v879 = vpack.c.b16 %v841, %v841
      %v880 = vpack.c.b16 %v842, %v842
      %v881 = vpack.c.b16 %v843, %v843
      %v882 = vpack.c.b16 %v844, %v844
      %vm883 = vsmask.f32 7424
      %v885 = vshrl.u32 %v693, 16
      %v887 = vshll.u32 %v693, 16
      %v889 = vrot.slane %v887, 1
      %v890 = vor.u32 %v885, %v889
      %v892 = vshll.u32 %v694, 16
      %v894 = vrot.slane %v892, 1
      %v895 = vsel %vm883, %v890, %v894
      %v896 = vshrl.u32 %v694, 16
      %v898 = vor.u32 %v896, %v894
      %v900 = vshll.u32 %v845, 16
      %v902 = vrot.slane %v900, 1
      %v903 = vsel %vm883, %v898, %v902
      %v905 = vshrl.u32 %v695, 16
      %v907 = vshll.u32 %v695, 16
      %v909 = vrot.slane %v907, 1
      %v910 = vor.u32 %v905, %v909
      %v912 = vshll.u32 %v696, 16
      %v914 = vrot.slane %v912, 1
      %v915 = vsel %vm883, %v910, %v914
      %v916 = vshrl.u32 %v696, 16
      %v918 = vor.u32 %v916, %v914
      %v920 = vshll.u32 %v846, 16
      %v922 = vrot.slane %v920, 1
      %v923 = vsel %vm883, %v918, %v922
      %v925 = vshrl.u32 %v697, 16
      %v927 = vshll.u32 %v697, 16
      %v929 = vrot.slane %v927, 1
      %v930 = vor.u32 %v925, %v929
      %v932 = vshll.u32 %v698, 16
      %v934 = vrot.slane %v932, 1
      %v935 = vsel %vm883, %v930, %v934
      %v936 = vshrl.u32 %v698, 16
      %v938 = vor.u32 %v936, %v934
      %v940 = vshll.u32 %v847, 16
      %v942 = vrot.slane %v940, 1
      %v943 = vsel %vm883, %v938, %v942
      %v945 = vshrl.u32 %v699, 16
      %v947 = vshll.u32 %v699, 16
      %v949 = vrot.slane %v947, 1
      %v950 = vor.u32 %v945, %v949
      %v952 = vshll.u32 %v700, 16
      %v954 = vrot.slane %v952, 1
      %v955 = vsel %vm883, %v950, %v954
      %v956 = vshrl.u32 %v700, 16
      %v958 = vor.u32 %v956, %v954
      %v960 = vshll.u32 %v848, 16
      %v962 = vrot.slane %v960, 1
      %v963 = vsel %vm883, %v958, %v962
      %v965 = vshrl.u32 %v701, 16
      %v967 = vshll.u32 %v701, 16
      %v969 = vrot.slane %v967, 1
      %v970 = vor.u32 %v965, %v969
      %v972 = vshll.u32 %v702, 16
      %v974 = vrot.slane %v972, 1
      %v975 = vsel %vm883, %v970, %v974
      %v976 = vshrl.u32 %v702, 16
      %v978 = vor.u32 %v976, %v974
      %v980 = vshll.u32 %v849, 16
      %v982 = vrot.slane %v980, 1
      %v983 = vsel %vm883, %v978, %v982
      %v985 = vshrl.u32 %v703, 16
      %v987 = vshll.u32 %v703, 16
      %v989 = vrot.slane %v987, 1
      %v990 = vor.u32 %v985, %v989
      %v992 = vshll.u32 %v704, 16
      %v994 = vrot.slane %v992, 1
      %v995 = vsel %vm883, %v990, %v994
      %v996 = vshrl.u32 %v704, 16
      %v998 = vor.u32 %v996, %v994
      %v1000 = vshll.u32 %v850, 16
      %v1002 = vrot.slane %v1000, 1
      %v1003 = vsel %vm883, %v998, %v1002
      %v1005 = vshrl.u32 %v705, 16
      %v1007 = vshll.u32 %v705, 16
      %v1009 = vrot.slane %v1007, 1
      %v1010 = vor.u32 %v1005, %v1009
      %v1012 = vshll.u32 %v706, 16
      %v1014 = vrot.slane %v1012, 1
      %v1015 = vsel %vm883, %v1010, %v1014
      %v1016 = vshrl.u32 %v706, 16
      %v1018 = vor.u32 %v1016, %v1014
      %v1020 = vshll.u32 %v851, 16
      %v1022 = vrot.slane %v1020, 1
      %v1023 = vsel %vm883, %v1018, %v1022
      %v1025 = vshrl.u32 %v707, 16
      %v1027 = vshll.u32 %v707, 16
      %v1029 = vrot.slane %v1027, 1
      %v1030 = vor.u32 %v1025, %v1029
      %v1032 = vshll.u32 %v708, 16
      %v1034 = vrot.slane %v1032, 1
      %v1035 = vsel %vm883, %v1030, %v1034
      %v1036 = vshrl.u32 %v708, 16
      %v1038 = vor.u32 %v1036, %v1034
      %v1040 = vshll.u32 %v852, 16
      %v1042 = vrot.slane %v1040, 1
      %v1043 = vsel %vm883, %v1038, %v1042
      %v1045 = vshrl.u32 %v709, 16
      %v1047 = vshll.u32 %v709, 16
      %v1049 = vrot.slane %v1047, 1
      %v1050 = vor.u32 %v1045, %v1049
      %v1052 = vshll.u32 %v710, 16
      %v1054 = vrot.slane %v1052, 1
      %v1055 = vsel %vm883, %v1050, %v1054
      %v1056 = vshrl.u32 %v710, 16
      %v1058 = vor.u32 %v1056, %v1054
      %v1060 = vshll.u32 %v853, 16
      %v1062 = vrot.slane %v1060, 1
      %v1063 = vsel %vm883, %v1058, %v1062
      %v1065 = vshrl.u32 %v711, 16
      %v1067 = vshll.u32 %v711, 16
      %v1069 = vrot.slane %v1067, 1
      %v1070 = vor.u32 %v1065, %v1069
      %v1072 = vshll.u32 %v712, 16
      %v1074 = vrot.slane %v1072, 1
      %v1075 = vsel %vm883, %v1070, %v1074
      %v1076 = vshrl.u32 %v712, 16
      %v1078 = vor.u32 %v1076, %v1074
      %v1080 = vshll.u32 %v854, 16
      %v1082 = vrot.slane %v1080, 1
      %v1083 = vsel %vm883, %v1078, %v1082
      %v1085 = vshrl.u32 %v713, 16
      %v1087 = vshll.u32 %v713, 16
      %v1089 = vrot.slane %v1087, 1
      %v1090 = vor.u32 %v1085, %v1089
      %v1092 = vshll.u32 %v714, 16
      %v1094 = vrot.slane %v1092, 1
      %v1095 = vsel %vm883, %v1090, %v1094
      %v1096 = vshrl.u32 %v714, 16
      %v1098 = vor.u32 %v1096, %v1094
      %v1100 = vshll.u32 %v855, 16
      %v1102 = vrot.slane %v1100, 1
      %v1103 = vsel %vm883, %v1098, %v1102
      %v1105 = vshrl.u32 %v715, 16
      %v1107 = vshll.u32 %v715, 16
      %v1109 = vrot.slane %v1107, 1
      %v1110 = vor.u32 %v1105, %v1109
      %v1112 = vshll.u32 %v716, 16
      %v1114 = vrot.slane %v1112, 1
      %v1115 = vsel %vm883, %v1110, %v1114
      %v1116 = vshrl.u32 %v716, 16
      %v1118 = vor.u32 %v1116, %v1114
      %v1120 = vshll.u32 %v856, 16
      %v1122 = vrot.slane %v1120, 1
      %v1123 = vsel %vm883, %v1118, %v1122
      %v1125 = vshrl.u32 %v717, 16
      %v1127 = vshll.u32 %v717, 16
      %v1129 = vrot.slane %v1127, 1
      %v1130 = vor.u32 %v1125, %v1129
      %v1132 = vshll.u32 %v718, 16
      %v1134 = vrot.slane %v1132, 1
      %v1135 = vsel %vm883, %v1130, %v1134
      %v1136 = vshrl.u32 %v718, 16
      %v1138 = vor.u32 %v1136, %v1134
      %v1140 = vshll.u32 %v857, 16
      %v1142 = vrot.slane %v1140, 1
      %v1143 = vsel %vm883, %v1138, %v1142
      %v1145 = vshrl.u32 %v719, 16
      %v1147 = vshll.u32 %v719, 16
      %v1149 = vrot.slane %v1147, 1
      %v1150 = vor.u32 %v1145, %v1149
      %v1152 = vshll.u32 %v720, 16
      %v1154 = vrot.slane %v1152, 1
      %v1155 = vsel %vm883, %v1150, %v1154
      %v1156 = vshrl.u32 %v720, 16
      %v1158 = vor.u32 %v1156, %v1154
      %v1160 = vshll.u32 %v858, 16
      %v1162 = vrot.slane %v1160, 1
      %v1163 = vsel %vm883, %v1158, %v1162
      %v1165 = vshrl.u32 %v721, 16
      %v1167 = vshll.u32 %v721, 16
      %v1169 = vrot.slane %v1167, 1
      %v1170 = vor.u32 %v1165, %v1169
      %v1172 = vshll.u32 %v722, 16
      %v1174 = vrot.slane %v1172, 1
      %v1175 = vsel %vm883, %v1170, %v1174
      %v1176 = vshrl.u32 %v722, 16
      %v1178 = vor.u32 %v1176, %v1174
      %v1180 = vshll.u32 %v859, 16
      %v1182 = vrot.slane %v1180, 1
      %v1183 = vsel %vm883, %v1178, %v1182
      %v1185 = vshrl.u32 %v723, 16
      %v1187 = vshll.u32 %v723, 16
      %v1189 = vrot.slane %v1187, 1
      %v1190 = vor.u32 %v1185, %v1189
      %v1192 = vshll.u32 %v724, 16
      %v1194 = vrot.slane %v1192, 1
      %v1195 = vsel %vm883, %v1190, %v1194
      %v1196 = vshrl.u32 %v724, 16
      %v1198 = vor.u32 %v1196, %v1194
      %v1200 = vshll.u32 %v860, 16
      %v1202 = vrot.slane %v1200, 1
      %v1203 = vsel %vm883, %v1198, %v1202
      %v1205 = vshrl.u32 %v725, 16
      %v1207 = vshll.u32 %v725, 16
      %v1209 = vrot.slane %v1207, 1
      %v1210 = vor.u32 %v1205, %v1209
      %v1212 = vshll.u32 %v726, 16
      %v1214 = vrot.slane %v1212, 1
      %v1215 = vsel %vm883, %v1210, %v1214
      %v1216 = vshrl.u32 %v726, 16
      %v1218 = vor.u32 %v1216, %v1214
      %v1220 = vshll.u32 %v861, 16
      %v1222 = vrot.slane %v1220, 1
      %v1223 = vsel %vm883, %v1218, %v1222
      %v1225 = vshrl.u32 %v727, 16
      %v1227 = vshll.u32 %v727, 16
      %v1229 = vrot.slane %v1227, 1
      %v1230 = vor.u32 %v1225, %v1229
      %v1232 = vshll.u32 %v728, 16
      %v1234 = vrot.slane %v1232, 1
      %v1235 = vsel %vm883, %v1230, %v1234
      %v1236 = vshrl.u32 %v728, 16
      %v1238 = vor.u32 %v1236, %v1234
      %v1240 = vshll.u32 %v862, 16
      %v1242 = vrot.slane %v1240, 1
      %v1243 = vsel %vm883, %v1238, %v1242
      %v1245 = vshrl.u32 %v729, 16
      %v1247 = vshll.u32 %v729, 16
      %v1249 = vrot.slane %v1247, 1
      %v1250 = vor.u32 %v1245, %v1249
      %v1252 = vshll.u32 %v730, 16
      %v1254 = vrot.slane %v1252, 1
      %v1255 = vsel %vm883, %v1250, %v1254
      %v1256 = vshrl.u32 %v730, 16
      %v1258 = vor.u32 %v1256, %v1254
      %v1260 = vshll.u32 %v863, 16
      %v1262 = vrot.slane %v1260, 1
      %v1263 = vsel %vm883, %v1258, %v1262
      %v1265 = vshrl.u32 %v731, 16
      %v1267 = vshll.u32 %v731, 16
      %v1269 = vrot.slane %v1267, 1
      %v1270 = vor.u32 %v1265, %v1269
      %v1272 = vshll.u32 %v732, 16
      %v1274 = vrot.slane %v1272, 1
      %v1275 = vsel %vm883, %v1270, %v1274
      %v1276 = vshrl.u32 %v732, 16
      %v1278 = vor.u32 %v1276, %v1274
      %v1280 = vshll.u32 %v864, 16
      %v1282 = vrot.slane %v1280, 1
      %v1283 = vsel %vm883, %v1278, %v1282
      %v1285 = vshrl.u32 %v733, 16
      %v1287 = vshll.u32 %v733, 16
      %v1289 = vrot.slane %v1287, 1
      %v1290 = vor.u32 %v1285, %v1289
      %v1292 = vshll.u32 %v734, 16
      %v1294 = vrot.slane %v1292, 1
      %v1295 = vsel %vm883, %v1290, %v1294
      %v1296 = vshrl.u32 %v734, 16
      %v1298 = vor.u32 %v1296, %v1294
      %v1300 = vshll.u32 %v865, 16
      %v1302 = vrot.slane %v1300, 1
      %v1303 = vsel %vm883, %v1298, %v1302
      %v1305 = vshrl.u32 %v735, 16
      %v1307 = vshll.u32 %v735, 16
      %v1309 = vrot.slane %v1307, 1
      %v1310 = vor.u32 %v1305, %v1309
      %v1312 = vshll.u32 %v736, 16
      %v1314 = vrot.slane %v1312, 1
      %v1315 = vsel %vm883, %v1310, %v1314
      %v1316 = vshrl.u32 %v736, 16
      %v1318 = vor.u32 %v1316, %v1314
      %v1320 = vshll.u32 %v866, 16
      %v1322 = vrot.slane %v1320, 1
      %v1323 = vsel %vm883, %v1318, %v1322
      %v1325 = vshrl.u32 %v737, 16
      %v1327 = vshll.u32 %v737, 16
      %v1329 = vrot.slane %v1327, 1
      %v1330 = vor.u32 %v1325, %v1329
      %v1332 = vshll.u32 %v738, 16
      %v1334 = vrot.slane %v1332, 1
      %v1335 = vsel %vm883, %v1330, %v1334
      %v1336 = vshrl.u32 %v738, 16
      %v1338 = vor.u32 %v1336, %v1334
      %v1340 = vshll.u32 %v867, 16
      %v1342 = vrot.slane %v1340, 1
      %v1343 = vsel %vm883, %v1338, %v1342
      %v1345 = vshrl.u32 %v739, 16
      %v1347 = vshll.u32 %v739, 16
      %v1349 = vrot.slane %v1347, 1
      %v1350 = vor.u32 %v1345, %v1349
      %v1352 = vshll.u32 %v740, 16
      %v1354 = vrot.slane %v1352, 1
      %v1355 = vsel %vm883, %v1350, %v1354
      %v1356 = vshrl.u32 %v740, 16
      %v1358 = vor.u32 %v1356, %v1354
      %v1360 = vshll.u32 %v868, 16
      %v1362 = vrot.slane %v1360, 1
      %v1363 = vsel %vm883, %v1358, %v1362
      %v1365 = vshrl.u32 %v741, 16
      %v1367 = vshll.u32 %v741, 16
      %v1369 = vrot.slane %v1367, 1
      %v1370 = vor.u32 %v1365, %v1369
      %v1372 = vshll.u32 %v742, 16
      %v1374 = vrot.slane %v1372, 1
      %v1375 = vsel %vm883, %v1370, %v1374
      %v1376 = vshrl.u32 %v742, 16
      %v1378 = vor.u32 %v1376, %v1374
      %v1380 = vshll.u32 %v869, 16
      %v1382 = vrot.slane %v1380, 1
      %v1383 = vsel %vm883, %v1378, %v1382
      %v1385 = vshrl.u32 %v743, 16
      %v1387 = vshll.u32 %v743, 16
      %v1389 = vrot.slane %v1387, 1
      %v1390 = vor.u32 %v1385, %v1389
      %v1392 = vshll.u32 %v744, 16
      %v1394 = vrot.slane %v1392, 1
      %v1395 = vsel %vm883, %v1390, %v1394
      %v1396 = vshrl.u32 %v744, 16
      %v1398 = vor.u32 %v1396, %v1394
      %v1400 = vshll.u32 %v870, 16
      %v1402 = vrot.slane %v1400, 1
      %v1403 = vsel %vm883, %v1398, %v1402
      %v1405 = vshrl.u32 %v745, 16
      %v1407 = vshll.u32 %v745, 16
      %v1409 = vrot.slane %v1407, 1
      %v1410 = vor.u32 %v1405, %v1409
      %v1412 = vshll.u32 %v746, 16
      %v1414 = vrot.slane %v1412, 1
      %v1415 = vsel %vm883, %v1410, %v1414
      %v1416 = vshrl.u32 %v746, 16
      %v1418 = vor.u32 %v1416, %v1414
      %v1420 = vshll.u32 %v871, 16
      %v1422 = vrot.slane %v1420, 1
      %v1423 = vsel %vm883, %v1418, %v1422
      %v1425 = vshrl.u32 %v747, 16
      %v1427 = vshll.u32 %v747, 16
      %v1429 = vrot.slane %v1427, 1
      %v1430 = vor.u32 %v1425, %v1429
      %v1432 = vshll.u32 %v748, 16
      %v1434 = vrot.slane %v1432, 1
      %v1435 = vsel %vm883, %v1430, %v1434
      %v1436 = vshrl.u32 %v748, 16
      %v1438 = vor.u32 %v1436, %v1434
      %v1440 = vshll.u32 %v872, 16
      %v1442 = vrot.slane %v1440, 1
      %v1443 = vsel %vm883, %v1438, %v1442
      %v1445 = vshrl.u32 %v749, 16
      %v1447 = vshll.u32 %v749, 16
      %v1449 = vrot.slane %v1447, 1
      %v1450 = vor.u32 %v1445, %v1449
      %v1452 = vshll.u32 %v750, 16
      %v1454 = vrot.slane %v1452, 1
      %v1455 = vsel %vm883, %v1450, %v1454
      %v1456 = vshrl.u32 %v750, 16
      %v1458 = vor.u32 %v1456, %v1454
      %v1460 = vshll.u32 %v873, 16
      %v1462 = vrot.slane %v1460, 1
      %v1463 = vsel %vm883, %v1458, %v1462
      %v1465 = vshrl.u32 %v751, 16
      %v1467 = vshll.u32 %v751, 16
      %v1469 = vrot.slane %v1467, 1
      %v1470 = vor.u32 %v1465, %v1469
      %v1472 = vshll.u32 %v752, 16
      %v1474 = vrot.slane %v1472, 1
      %v1475 = vsel %vm883, %v1470, %v1474
      %v1476 = vshrl.u32 %v752, 16
      %v1478 = vor.u32 %v1476, %v1474
      %v1480 = vshll.u32 %v874, 16
      %v1482 = vrot.slane %v1480, 1
      %v1483 = vsel %vm883, %v1478, %v1482
      %v1485 = vshrl.u32 %v753, 16
      %v1487 = vshll.u32 %v753, 16
      %v1489 = vrot.slane %v1487, 1
      %v1490 = vor.u32 %v1485, %v1489
      %v1492 = vshll.u32 %v754, 16
      %v1494 = vrot.slane %v1492, 1
      %v1495 = vsel %vm883, %v1490, %v1494
      %v1496 = vshrl.u32 %v754, 16
      %v1498 = vor.u32 %v1496, %v1494
      %v1500 = vshll.u32 %v875, 16
      %v1502 = vrot.slane %v1500, 1
      %v1503 = vsel %vm883, %v1498, %v1502
      %v1505 = vshrl.u32 %v755, 16
      %v1507 = vshll.u32 %v755, 16
      %v1509 = vrot.slane %v1507, 1
      %v1510 = vor.u32 %v1505, %v1509
      %v1512 = vshll.u32 %v756, 16
      %v1514 = vrot.slane %v1512, 1
      %v1515 = vsel %vm883, %v1510, %v1514
      %v1516 = vshrl.u32 %v756, 16
      %v1518 = vor.u32 %v1516, %v1514
      %v1520 = vshll.u32 %v876, 16
      %v1522 = vrot.slane %v1520, 1
      %v1523 = vsel %vm883, %v1518, %v1522
      %v1525 = vshrl.u32 %v757, 16
      %v1527 = vshll.u32 %v757, 16
      %v1529 = vrot.slane %v1527, 1
      %v1530 = vor.u32 %v1525, %v1529
      %v1532 = vshll.u32 %v758, 16
      %v1534 = vrot.slane %v1532, 1
      %v1535 = vsel %vm883, %v1530, %v1534
      %v1536 = vshrl.u32 %v758, 16
      %v1538 = vor.u32 %v1536, %v1534
      %v1540 = vshll.u32 %v877, 16
      %v1542 = vrot.slane %v1540, 1
      %v1543 = vsel %vm883, %v1538, %v1542
      %v1545 = vshrl.u32 %v759, 16
      %v1547 = vshll.u32 %v759, 16
      %v1549 = vrot.slane %v1547, 1
      %v1550 = vor.u32 %v1545, %v1549
      %v1552 = vshll.u32 %v760, 16
      %v1554 = vrot.slane %v1552, 1
      %v1555 = vsel %vm883, %v1550, %v1554
      %v1556 = vshrl.u32 %v760, 16
      %v1558 = vor.u32 %v1556, %v1554
      %v1560 = vshll.u32 %v878, 16
      %v1562 = vrot.slane %v1560, 1
      %v1563 = vsel %vm883, %v1558, %v1562
      %v1565 = vshrl.u32 %v761, 16
      %v1567 = vshll.u32 %v761, 16
      %v1569 = vrot.slane %v1567, 1
      %v1570 = vor.u32 %v1565, %v1569
      %v1572 = vshll.u32 %v762, 16
      %v1574 = vrot.slane %v1572, 1
      %v1575 = vsel %vm883, %v1570, %v1574
      %v1576 = vshrl.u32 %v762, 16
      %v1578 = vor.u32 %v1576, %v1574
      %v1580 = vshll.u32 %v879, 16
      %v1582 = vrot.slane %v1580, 1
      %v1583 = vsel %vm883, %v1578, %v1582
      %v1585 = vshrl.u32 %v763, 16
      %v1587 = vshll.u32 %v763, 16
      %v1589 = vrot.slane %v1587, 1
      %v1590 = vor.u32 %v1585, %v1589
      %v1592 = vshll.u32 %v764, 16
      %v1594 = vrot.slane %v1592, 1
      %v1595 = vsel %vm883, %v1590, %v1594
      %v1596 = vshrl.u32 %v764, 16
      %v1598 = vor.u32 %v1596, %v1594
      %v1600 = vshll.u32 %v880, 16
      %v1602 = vrot.slane %v1600, 1
      %v1603 = vsel %vm883, %v1598, %v1602
      %v1605 = vshrl.u32 %v765, 16
      %v1607 = vshll.u32 %v765, 16
      %v1609 = vrot.slane %v1607, 1
      %v1610 = vor.u32 %v1605, %v1609
      %v1612 = vshll.u32 %v766, 16
      %v1614 = vrot.slane %v1612, 1
      %v1615 = vsel %vm883, %v1610, %v1614
      %v1616 = vshrl.u32 %v766, 16
      %v1618 = vor.u32 %v1616, %v1614
      %v1620 = vshll.u32 %v881, 16
      %v1622 = vrot.slane %v1620, 1
      %v1623 = vsel %vm883, %v1618, %v1622
      %v1625 = vshrl.u32 %v767, 16
      %v1627 = vshll.u32 %v767, 16
      %v1629 = vrot.slane %v1627, 1
      %v1630 = vor.u32 %v1625, %v1629
      %v1632 = vshll.u32 %v768, 16
      %v1634 = vrot.slane %v1632, 1
      %v1635 = vsel %vm883, %v1630, %v1634
      %v1636 = vshrl.u32 %v768, 16
      %v1638 = vor.u32 %v1636, %v1634
      %v1640 = vshll.u32 %v882, 16
      %v1642 = vrot.slane %v1640, 1
      %v1643 = vsel %vm883, %v1638, %v1642
      %1644 = vrot.lane.b32.xlu0 %v895, 8
      %v1645 = vpop.permute.xlu0 %1644
      %1646 = vrot.lane.b32.xlu0 %v903, 8
      %v1647 = vpop.permute.xlu0 %1646
      %1648 = vrot.lane.b32.xlu0 %v915, 8
      %v1649 = vpop.permute.xlu0 %1648
      %1650 = vrot.lane.b32.xlu0 %v923, 8
      %v1651 = vpop.permute.xlu0 %1650
      %1652 = vrot.lane.b32.xlu0 %v935, 8
      %v1653 = vpop.permute.xlu0 %1652
      %1654 = vrot.lane.b32.xlu0 %v943, 8
      %v1655 = vpop.permute.xlu0 %1654
      %1656 = vrot.lane.b32.xlu0 %v955, 8
      %v1657 = vpop.permute.xlu0 %1656
      %1658 = vrot.lane.b32.xlu0 %v963, 8
      %v1659 = vpop.permute.xlu0 %1658
      %1660 = vrot.lane.b32.xlu0 %v975, 8
      %v1661 = vpop.permute.xlu0 %1660
      %1662 = vrot.lane.b32.xlu0 %v983, 8
      %v1663 = vpop.permute.xlu0 %1662
      %1664 = vrot.lane.b32.xlu0 %v995, 8
      %v1665 = vpop.permute.xlu0 %1664
      %1666 = vrot.lane.b32.xlu0 %v1003, 8
      %v1667 = vpop.permute.xlu0 %1666
      %1668 = vrot.lane.b32.xlu0 %v1015, 8
      %v1669 = vpop.permute.xlu0 %1668
      %1670 = vrot.lane.b32.xlu0 %v1023, 8
      %v1671 = vpop.permute.xlu0 %1670
      %1672 = vrot.lane.b32.xlu0 %v1035, 8
      %v1673 = vpop.permute.xlu0 %1672
      %1674 = vrot.lane.b32.xlu0 %v1043, 8
      %v1675 = vpop.permute.xlu0 %1674
      %1676 = vrot.lane.b32.xlu0 %v1055, 8
      %v1677 = vpop.permute.xlu0 %1676
      %1678 = vrot.lane.b32.xlu0 %v1063, 8
      %v1679 = vpop.permute.xlu0 %1678
      %1680 = vrot.lane.b32.xlu0 %v1075, 8
      %v1681 = vpop.permute.xlu0 %1680
      %1682 = vrot.lane.b32.xlu0 %v1083, 8
      %v1683 = vpop.permute.xlu0 %1682
      %1684 = vrot.lane.b32.xlu0 %v1095, 8
      %v1685 = vpop.permute.xlu0 %1684
      %1686 = vrot.lane.b32.xlu0 %v1103, 8
      %v1687 = vpop.permute.xlu0 %1686
      %1688 = vrot.lane.b32.xlu0 %v1115, 8
      %v1689 = vpop.permute.xlu0 %1688
      %1690 = vrot.lane.b32.xlu0 %v1123, 8
      %v1691 = vpop.permute.xlu0 %1690
      %1692 = vrot.lane.b32.xlu0 %v1135, 8
      %v1693 = vpop.permute.xlu0 %1692
      %1694 = vrot.lane.b32.xlu0 %v1143, 8
      %v1695 = vpop.permute.xlu0 %1694
      %1696 = vrot.lane.b32.xlu0 %v1155, 8
      %v1697 = vpop.permute.xlu0 %1696
      %1698 = vrot.lane.b32.xlu0 %v1163, 8
      %v1699 = vpop.permute.xlu0 %1698
      %1700 = vrot.lane.b32.xlu0 %v1175, 8
      %v1701 = vpop.permute.xlu0 %1700
      %1702 = vrot.lane.b32.xlu0 %v1183, 8
      %v1703 = vpop.permute.xlu0 %1702
      %1704 = vrot.lane.b32.xlu0 %v1195, 8
      %v1705 = vpop.permute.xlu0 %1704
      %1706 = vrot.lane.b32.xlu0 %v1203, 8
      %v1707 = vpop.permute.xlu0 %1706
      %1708 = vrot.lane.b32.xlu0 %v1215, 8
      %v1709 = vpop.permute.xlu0 %1708
      %1710 = vrot.lane.b32.xlu0 %v1223, 8
      %v1711 = vpop.permute.xlu0 %1710
      %1712 = vrot.lane.b32.xlu0 %v1235, 8
      %v1713 = vpop.permute.xlu0 %1712
      %1714 = vrot.lane.b32.xlu0 %v1243, 8
      %v1715 = vpop.permute.xlu0 %1714
      %1716 = vrot.lane.b32.xlu0 %v1255, 8
      %v1717 = vpop.permute.xlu0 %1716
      %1718 = vrot.lane.b32.xlu0 %v1263, 8
      %v1719 = vpop.permute.xlu0 %1718
      %1720 = vrot.lane.b32.xlu0 %v1275, 8
      %v1721 = vpop.permute.xlu0 %1720
      %1722 = vrot.lane.b32.xlu0 %v1283, 8
      %v1723 = vpop.permute.xlu0 %1722
      %1724 = vrot.lane.b32.xlu0 %v1295, 8
      %v1725 = vpop.permute.xlu0 %1724
      %1726 = vrot.lane.b32.xlu0 %v1303, 8
      %v1727 = vpop.permute.xlu0 %1726
      %1728 = vrot.lane.b32.xlu0 %v1315, 8
      %v1729 = vpop.permute.xlu0 %1728
      %1730 = vrot.lane.b32.xlu0 %v1323, 8
      %v1731 = vpop.permute.xlu0 %1730
      %1732 = vrot.lane.b32.xlu0 %v1335, 8
      %v1733 = vpop.permute.xlu0 %1732
      %1734 = vrot.lane.b32.xlu0 %v1343, 8
      %v1735 = vpop.permute.xlu0 %1734
      %1736 = vrot.lane.b32.xlu0 %v1355, 8
      %v1737 = vpop.permute.xlu0 %1736
      %1738 = vrot.lane.b32.xlu0 %v1363, 8
      %v1739 = vpop.permute.xlu0 %1738
      %1740 = vrot.lane.b32.xlu0 %v1375, 8
      %v1741 = vpop.permute.xlu0 %1740
      %1742 = vrot.lane.b32.xlu0 %v1383, 8
      %v1743 = vpop.permute.xlu0 %1742
      %1744 = vrot.lane.b32.xlu0 %v1395, 8
      %v1745 = vpop.permute.xlu0 %1744
      %1746 = vrot.lane.b32.xlu0 %v1403, 8
      %v1747 = vpop.permute.xlu0 %1746
      %1748 = vrot.lane.b32.xlu0 %v1415, 8
      %v1749 = vpop.permute.xlu0 %1748
      %1750 = vrot.lane.b32.xlu0 %v1423, 8
      %v1751 = vpop.permute.xlu0 %1750
      %1752 = vrot.lane.b32.xlu0 %v1435, 8
      %v1753 = vpop.permute.xlu0 %1752
      %1754 = vrot.lane.b32.xlu0 %v1443, 8
      %v1755 = vpop.permute.xlu0 %1754
      %1756 = vrot.lane.b32.xlu0 %v1455, 8
      %v1757 = vpop.permute.xlu0 %1756
      %1758 = vrot.lane.b32.xlu0 %v1463, 8
      %v1759 = vpop.permute.xlu0 %1758
      %1760 = vrot.lane.b32.xlu0 %v1475, 8
      %v1761 = vpop.permute.xlu0 %1760
      %1762 = vrot.lane.b32.xlu0 %v1483, 8
      %v1763 = vpop.permute.xlu0 %1762
      %1764 = vrot.lane.b32.xlu0 %v1495, 8
      %v1765 = vpop.permute.xlu0 %1764
      %1766 = vrot.lane.b32.xlu0 %v1503, 8
      %v1767 = vpop.permute.xlu0 %1766
      %1768 = vrot.lane.b32.xlu0 %v1515, 8
      %v1769 = vpop.permute.xlu0 %1768
      %1770 = vrot.lane.b32.xlu0 %v1523, 8
      %v1771 = vpop.permute.xlu0 %1770
      %1772 = vrot.lane.b32.xlu0 %v1535, 8
      %v1773 = vpop.permute.xlu0 %1772
      %1774 = vrot.lane.b32.xlu0 %v1543, 8
      %v1775 = vpop.permute.xlu0 %1774
      %1776 = vrot.lane.b32.xlu0 %v1555, 8
      %v1777 = vpop.permute.xlu0 %1776
      %1778 = vrot.lane.b32.xlu0 %v1563, 8
      %v1779 = vpop.permute.xlu0 %1778
      %1780 = vrot.lane.b32.xlu0 %v1575, 8
      %v1781 = vpop.permute.xlu0 %1780
      %1782 = vrot.lane.b32.xlu0 %v1583, 8
      %v1783 = vpop.permute.xlu0 %1782
      %1784 = vrot.lane.b32.xlu0 %v1595, 8
      %v1785 = vpop.permute.xlu0 %1784
      %1786 = vrot.lane.b32.xlu0 %v1603, 8
      %v1787 = vpop.permute.xlu0 %1786
      %1788 = vrot.lane.b32.xlu0 %v1615, 8
      %v1789 = vpop.permute.xlu0 %1788
      %1790 = vrot.lane.b32.xlu0 %v1623, 8
      %v1791 = vpop.permute.xlu0 %1790
      %1792 = vrot.lane.b32.xlu0 %v1635, 8
      %v1793 = vpop.permute.xlu0 %1792
      %1794 = vrot.lane.b32.xlu0 %v1643, 8
      %v1795 = vpop.permute.xlu0 %1794
      %vm1796 = vcmask 1046528
      %v1797 = vrot.slane %v693, 1
      %v1798 = vrot.slane %v694, 1
      %v1799 = vsel %vm1796, %v1797, %v1798
      %v1800 = vrot.slane %v845, 1
      %v1801 = vsel %vm1796, %v1798, %v1800
      %v1802 = vrot.slane %v695, 1
      %v1803 = vrot.slane %v696, 1
      %v1804 = vsel %vm1796, %v1802, %v1803
      %v1805 = vrot.slane %v846, 1
      %v1806 = vsel %vm1796, %v1803, %v1805
      %v1807 = vrot.slane %v697, 1
      %v1808 = vrot.slane %v698, 1
      %v1809 = vsel %vm1796, %v1807, %v1808
      %v1810 = vrot.slane %v847, 1
      %v1811 = vsel %vm1796, %v1808, %v1810
      %v1812 = vrot.slane %v699, 1
      %v1813 = vrot.slane %v700, 1
      %v1814 = vsel %vm1796, %v1812, %v1813
      %v1815 = vrot.slane %v848, 1
      %v1816 = vsel %vm1796, %v1813, %v1815
      %v1817 = vrot.slane %v701, 1
      %v1818 = vrot.slane %v702, 1
      %v1819 = vsel %vm1796, %v1817, %v1818
      %v1820 = vrot.slane %v849, 1
      %v1821 = vsel %vm1796, %v1818, %v1820
      %v1822 = vrot.slane %v703, 1
      %v1823 = vrot.slane %v704, 1
      %v1824 = vsel %vm1796, %v1822, %v1823
      %v1825 = vrot.slane %v850, 1
      %v1826 = vsel %vm1796, %v1823, %v1825
      %v1827 = vrot.slane %v705, 1
      %v1828 = vrot.slane %v706, 1
      %v1829 = vsel %vm1796, %v1827, %v1828
      %v1830 = vrot.slane %v851, 1
      %v1831 = vsel %vm1796, %v1828, %v1830
      %v1832 = vrot.slane %v707, 1
      %v1833 = vrot.slane %v708, 1
      %v1834 = vsel %vm1796, %v1832, %v1833
      %v1835 = vrot.slane %v852, 1
      %v1836 = vsel %vm1796, %v1833, %v1835
      %v1837 = vrot.slane %v709, 1
      %v1838 = vrot.slane %v710, 1
      %v1839 = vsel %vm1796, %v1837, %v1838
      %v1840 = vrot.slane %v853, 1
      %v1841 = vsel %vm1796, %v1838, %v1840
      %v1842 = vrot.slane %v711, 1
      %v1843 = vrot.slane %v712, 1
      %v1844 = vsel %vm1796, %v1842, %v1843
      %v1845 = vrot.slane %v854, 1
      %v1846 = vsel %vm1796, %v1843, %v1845
      %v1847 = vrot.slane %v713, 1
      %v1848 = vrot.slane %v714, 1
      %v1849 = vsel %vm1796, %v1847, %v1848
      %v1850 = vrot.slane %v855, 1
      %v1851 = vsel %vm1796, %v1848, %v1850
      %v1852 = vrot.slane %v715, 1
      %v1853 = vrot.slane %v716, 1
      %v1854 = vsel %vm1796, %v1852, %v1853
      %v1855 = vrot.slane %v856, 1
      %v1856 = vsel %vm1796, %v1853, %v1855
      %v1857 = vrot.slane %v717, 1
      %v1858 = vrot.slane %v718, 1
      %v1859 = vsel %vm1796, %v1857, %v1858
      %v1860 = vrot.slane %v857, 1
      %v1861 = vsel %vm1796, %v1858, %v1860
      %v1862 = vrot.slane %v719, 1
      %v1863 = vrot.slane %v720, 1
      %v1864 = vsel %vm1796, %v1862, %v1863
      %v1865 = vrot.slane %v858, 1
      %v1866 = vsel %vm1796, %v1863, %v1865
      %v1867 = vrot.slane %v721, 1
      %v1868 = vrot.slane %v722, 1
      %v1869 = vsel %vm1796, %v1867, %v1868
      %v1870 = vrot.slane %v859, 1
      %v1871 = vsel %vm1796, %v1868, %v1870
      %v1872 = vrot.slane %v723, 1
      %v1873 = vrot.slane %v724, 1
      %v1874 = vsel %vm1796, %v1872, %v1873
      %v1875 = vrot.slane %v860, 1
      %v1876 = vsel %vm1796, %v1873, %v1875
      %v1877 = vrot.slane %v725, 1
      %v1878 = vrot.slane %v726, 1
      %v1879 = vsel %vm1796, %v1877, %v1878
      %v1880 = vrot.slane %v861, 1
      %v1881 = vsel %vm1796, %v1878, %v1880
      %v1882 = vrot.slane %v727, 1
      %v1883 = vrot.slane %v728, 1
      %v1884 = vsel %vm1796, %v1882, %v1883
      %v1885 = vrot.slane %v862, 1
      %v1886 = vsel %vm1796, %v1883, %v1885
      %v1887 = vrot.slane %v729, 1
      %v1888 = vrot.slane %v730, 1
      %v1889 = vsel %vm1796, %v1887, %v1888
      %v1890 = vrot.slane %v863, 1
      %v1891 = vsel %vm1796, %v1888, %v1890
      %v1892 = vrot.slane %v731, 1
      %v1893 = vrot.slane %v732, 1
      %v1894 = vsel %vm1796, %v1892, %v1893
      %v1895 = vrot.slane %v864, 1
      %v1896 = vsel %vm1796, %v1893, %v1895
      %v1897 = vrot.slane %v733, 1
      %v1898 = vrot.slane %v734, 1
      %v1899 = vsel %vm1796, %v1897, %v1898
      %v1900 = vrot.slane %v865, 1
      %v1901 = vsel %vm1796, %v1898, %v1900
      %v1902 = vrot.slane %v735, 1
      %v1903 = vrot.slane %v736, 1
      %v1904 = vsel %vm1796, %v1902, %v1903
      %v1905 = vrot.slane %v866, 1
      %v1906 = vsel %vm1796, %v1903, %v1905
      %v1907 = vrot.slane %v737, 1
      %v1908 = vrot.slane %v738, 1
      %v1909 = vsel %vm1796, %v1907, %v1908
      %v1910 = vrot.slane %v867, 1
      %v1911 = vsel %vm1796, %v1908, %v1910
      %v1912 = vrot.slane %v739, 1
      %v1913 = vrot.slane %v740, 1
      %v1914 = vsel %vm1796, %v1912, %v1913
      %v1915 = vrot.slane %v868, 1
      %v1916 = vsel %vm1796, %v1913, %v1915
      %v1917 = vrot.slane %v741, 1
      %v1918 = vrot.slane %v742, 1
      %v1919 = vsel %vm1796, %v1917, %v1918
      %v1920 = vrot.slane %v869, 1
      %v1921 = vsel %vm1796, %v1918, %v1920
      %v1922 = vrot.slane %v743, 1
      %v1923 = vrot.slane %v744, 1
      %v1924 = vsel %vm1796, %v1922, %v1923
      %v1925 = vrot.slane %v870, 1
      %v1926 = vsel %vm1796, %v1923, %v1925
      %v1927 = vrot.slane %v745, 1
      %v1928 = vrot.slane %v746, 1
      %v1929 = vsel %vm1796, %v1927, %v1928
      %v1930 = vrot.slane %v871, 1
      %v1931 = vsel %vm1796, %v1928, %v1930
      %v1932 = vrot.slane %v747, 1
      %v1933 = vrot.slane %v748, 1
      %v1934 = vsel %vm1796, %v1932, %v1933
      %v1935 = vrot.slane %v872, 1
      %v1936 = vsel %vm1796, %v1933, %v1935
      %v1937 = vrot.slane %v749, 1
      %v1938 = vrot.slane %v750, 1
      %v1939 = vsel %vm1796, %v1937, %v1938
      %v1940 = vrot.slane %v873, 1
      %v1941 = vsel %vm1796, %v1938, %v1940
      %v1942 = vrot.slane %v751, 1
      %v1943 = vrot.slane %v752, 1
      %v1944 = vsel %vm1796, %v1942, %v1943
      %v1945 = vrot.slane %v874, 1
      %v1946 = vsel %vm1796, %v1943, %v1945
      %v1947 = vrot.slane %v753, 1
      %v1948 = vrot.slane %v754, 1
      %v1949 = vsel %vm1796, %v1947, %v1948
      %v1950 = vrot.slane %v875, 1
      %v1951 = vsel %vm1796, %v1948, %v1950
      %v1952 = vrot.slane %v755, 1
      %v1953 = vrot.slane %v756, 1
      %v1954 = vsel %vm1796, %v1952, %v1953
      %v1955 = vrot.slane %v876, 1
      %v1956 = vsel %vm1796, %v1953, %v1955
      %v1957 = vrot.slane %v757, 1
      %v1958 = vrot.slane %v758, 1
      %v1959 = vsel %vm1796, %v1957, %v1958
      %v1960 = vrot.slane %v877, 1
      %v1961 = vsel %vm1796, %v1958, %v1960
      %v1962 = vrot.slane %v759, 1
      %v1963 = vrot.slane %v760, 1
      %v1964 = vsel %vm1796, %v1962, %v1963
      %v1965 = vrot.slane %v878, 1
      %v1966 = vsel %vm1796, %v1963, %v1965
      %v1967 = vrot.slane %v761, 1
      %v1968 = vrot.slane %v762, 1
      %v1969 = vsel %vm1796, %v1967, %v1968
      %v1970 = vrot.slane %v879, 1
      %v1971 = vsel %vm1796, %v1968, %v1970
      %v1972 = vrot.slane %v763, 1
      %v1973 = vrot.slane %v764, 1
      %v1974 = vsel %vm1796, %v1972, %v1973
      %v1975 = vrot.slane %v880, 1
      %v1976 = vsel %vm1796, %v1973, %v1975
      %v1977 = vrot.slane %v765, 1
      %v1978 = vrot.slane %v766, 1
      %v1979 = vsel %vm1796, %v1977, %v1978
      %v1980 = vrot.slane %v881, 1
      %v1981 = vsel %vm1796, %v1978, %v1980
      %v1982 = vrot.slane %v767, 1
      %v1983 = vrot.slane %v768, 1
      %v1984 = vsel %vm1796, %v1982, %v1983
      %v1985 = vrot.slane %v882, 1
      %v1986 = vsel %vm1796, %v1983, %v1985
      %1987 = vrot.lane.b32.xlu0 %v1799, 16
      %v1988 = vpop.permute.xlu0 %1987
      %1989 = vrot.lane.b32.xlu0 %v1801, 16
      %v1990 = vpop.permute.xlu0 %1989
      %1991 = vrot.lane.b32.xlu0 %v1804, 16
      %v1992 = vpop.permute.xlu0 %1991
      %1993 = vrot.lane.b32.xlu0 %v1806, 16
      %v1994 = vpop.permute.xlu0 %1993
      %1995 = vrot.lane.b32.xlu0 %v1809, 16
      %v1996 = vpop.permute.xlu0 %1995
      %1997 = vrot.lane.b32.xlu0 %v1811, 16
      %v1998 = vpop.permute.xlu0 %1997
      %1999 = vrot.lane.b32.xlu0 %v1814, 16
      %v2000 = vpop.permute.xlu0 %1999
      %2001 = vrot.lane.b32.xlu0 %v1816, 16
      %v2002 = vpop.permute.xlu0 %2001
      %2003 = vrot.lane.b32.xlu0 %v1819, 16
      %v2004 = vpop.permute.xlu0 %2003
      %2005 = vrot.lane.b32.xlu0 %v1821, 16
      %v2006 = vpop.permute.xlu0 %2005
      %2007 = vrot.lane.b32.xlu0 %v1824, 16
      %v2008 = vpop.permute.xlu0 %2007
      %2009 = vrot.lane.b32.xlu0 %v1826, 16
      %v2010 = vpop.permute.xlu0 %2009
      %2011 = vrot.lane.b32.xlu0 %v1829, 16
      %v2012 = vpop.permute.xlu0 %2011
      %2013 = vrot.lane.b32.xlu0 %v1831, 16
      %v2014 = vpop.permute.xlu0 %2013
      %2015 = vrot.lane.b32.xlu0 %v1834, 16
      %v2016 = vpop.permute.xlu0 %2015
      %2017 = vrot.lane.b32.xlu0 %v1836, 16
      %v2018 = vpop.permute.xlu0 %2017
      %2019 = vrot.lane.b32.xlu0 %v1839, 16
      %v2020 = vpop.permute.xlu0 %2019
      %2021 = vrot.lane.b32.xlu0 %v1841, 16
      %v2022 = vpop.permute.xlu0 %2021
      %2023 = vrot.lane.b32.xlu0 %v1844, 16
      %v2024 = vpop.permute.xlu0 %2023
      %2025 = vrot.lane.b32.xlu0 %v1846, 16
      %v2026 = vpop.permute.xlu0 %2025
      %2027 = vrot.lane.b32.xlu0 %v1849, 16
      %v2028 = vpop.permute.xlu0 %2027
      %2029 = vrot.lane.b32.xlu0 %v1851, 16
      %v2030 = vpop.permute.xlu0 %2029
      %2031 = vrot.lane.b32.xlu0 %v1854, 16
      %v2032 = vpop.permute.xlu0 %2031
      %2033 = vrot.lane.b32.xlu0 %v1856, 16
      %v2034 = vpop.permute.xlu0 %2033
      %2035 = vrot.lane.b32.xlu0 %v1859, 16
      %v2036 = vpop.permute.xlu0 %2035
      %2037 = vrot.lane.b32.xlu0 %v1861, 16
      %v2038 = vpop.permute.xlu0 %2037
      %2039 = vrot.lane.b32.xlu0 %v1864, 16
      %v2040 = vpop.permute.xlu0 %2039
      %2041 = vrot.lane.b32.xlu0 %v1866, 16
      %v2042 = vpop.permute.xlu0 %2041
      %2043 = vrot.lane.b32.xlu0 %v1869, 16
      %v2044 = vpop.permute.xlu0 %2043
      %2045 = vrot.lane.b32.xlu0 %v1871, 16
      %v2046 = vpop.permute.xlu0 %2045
      %2047 = vrot.lane.b32.xlu0 %v1874, 16
      %v2048 = vpop.permute.xlu0 %2047
      %2049 = vrot.lane.b32.xlu0 %v1876, 16
      %v2050 = vpop.permute.xlu0 %2049
      %2051 = vrot.lane.b32.xlu0 %v1879, 16
      %v2052 = vpop.permute.xlu0 %2051
      %2053 = vrot.lane.b32.xlu0 %v1881, 16
      %v2054 = vpop.permute.xlu0 %2053
      %2055 = vrot.lane.b32.xlu0 %v1884, 16
      %v2056 = vpop.permute.xlu0 %2055
      %2057 = vrot.lane.b32.xlu0 %v1886, 16
      %v2058 = vpop.permute.xlu0 %2057
      %2059 = vrot.lane.b32.xlu0 %v1889, 16
      %v2060 = vpop.permute.xlu0 %2059
      %2061 = vrot.lane.b32.xlu0 %v1891, 16
      %v2062 = vpop.permute.xlu0 %2061
      %2063 = vrot.lane.b32.xlu0 %v1894, 16
      %v2064 = vpop.permute.xlu0 %2063
      %2065 = vrot.lane.b32.xlu0 %v1896, 16
      %v2066 = vpop.permute.xlu0 %2065
      %2067 = vrot.lane.b32.xlu0 %v1899, 16
      %v2068 = vpop.permute.xlu0 %2067
      %2069 = vrot.lane.b32.xlu0 %v1901, 16
      %v2070 = vpop.permute.xlu0 %2069
      %2071 = vrot.lane.b32.xlu0 %v1904, 16
      %v2072 = vpop.permute.xlu0 %2071
      %2073 = vrot.lane.b32.xlu0 %v1906, 16
      %v2074 = vpop.permute.xlu0 %2073
      %2075 = vrot.lane.b32.xlu0 %v1909, 16
      %v2076 = vpop.permute.xlu0 %2075
      %2077 = vrot.lane.b32.xlu0 %v1911, 16
      %v2078 = vpop.permute.xlu0 %2077
      %2079 = vrot.lane.b32.xlu0 %v1914, 16
      %v2080 = vpop.permute.xlu0 %2079
      %2081 = vrot.lane.b32.xlu0 %v1916, 16
      %v2082 = vpop.permute.xlu0 %2081
      %2083 = vrot.lane.b32.xlu0 %v1919, 16
      %v2084 = vpop.permute.xlu0 %2083
      %2085 = vrot.lane.b32.xlu0 %v1921, 16
      %v2086 = vpop.permute.xlu0 %2085
      %2087 = vrot.lane.b32.xlu0 %v1924, 16
      %v2088 = vpop.permute.xlu0 %2087
      %2089 = vrot.lane.b32.xlu0 %v1926, 16
      %v2090 = vpop.permute.xlu0 %2089
      %2091 = vrot.lane.b32.xlu0 %v1929, 16
      %v2092 = vpop.permute.xlu0 %2091
      %2093 = vrot.lane.b32.xlu0 %v1931, 16
      %v2094 = vpop.permute.xlu0 %2093
      %2095 = vrot.lane.b32.xlu0 %v1934, 16
      %v2096 = vpop.permute.xlu0 %2095
      %2097 = vrot.lane.b32.xlu0 %v1936, 16
      %v2098 = vpop.permute.xlu0 %2097
      %2099 = vrot.lane.b32.xlu0 %v1939, 16
      %v2100 = vpop.permute.xlu0 %2099
      %2101 = vrot.lane.b32.xlu0 %v1941, 16
      %v2102 = vpop.permute.xlu0 %2101
      %2103 = vrot.lane.b32.xlu0 %v1944, 16
      %v2104 = vpop.permute.xlu0 %2103
      %2105 = vrot.lane.b32.xlu0 %v1946, 16
      %v2106 = vpop.permute.xlu0 %2105
      %2107 = vrot.lane.b32.xlu0 %v1949, 16
      %v2108 = vpop.permute.xlu0 %2107
      %2109 = vrot.lane.b32.xlu0 %v1951, 16
      %v2110 = vpop.permute.xlu0 %2109
      %2111 = vrot.lane.b32.xlu0 %v1954, 16
      %v2112 = vpop.permute.xlu0 %2111
      %2113 = vrot.lane.b32.xlu0 %v1956, 16
      %v2114 = vpop.permute.xlu0 %2113
      %2115 = vrot.lane.b32.xlu0 %v1959, 16
      %v2116 = vpop.permute.xlu0 %2115
      %2117 = vrot.lane.b32.xlu0 %v1961, 16
      %v2118 = vpop.permute.xlu0 %2117
      %2119 = vrot.lane.b32.xlu0 %v1964, 16
      %v2120 = vpop.permute.xlu0 %2119
      %2121 = vrot.lane.b32.xlu0 %v1966, 16
      %v2122 = vpop.permute.xlu0 %2121
      %2123 = vrot.lane.b32.xlu0 %v1969, 16
      %v2124 = vpop.permute.xlu0 %2123
      %2125 = vrot.lane.b32.xlu0 %v1971, 16
      %v2126 = vpop.permute.xlu0 %2125
      %2127 = vrot.lane.b32.xlu0 %v1974, 16
      %v2128 = vpop.permute.xlu0 %2127
      %2129 = vrot.lane.b32.xlu0 %v1976, 16
      %v2130 = vpop.permute.xlu0 %2129
      %2131 = vrot.lane.b32.xlu0 %v1979, 16
      %v2132 = vpop.permute.xlu0 %2131
      %2133 = vrot.lane.b32.xlu0 %v1981, 16
      %v2134 = vpop.permute.xlu0 %2133
      %2135 = vrot.lane.b32.xlu0 %v1984, 16
      %v2136 = vpop.permute.xlu0 %2135
      %2137 = vrot.lane.b32.xlu0 %v1986, 16
      %v2138 = vpop.permute.xlu0 %2137
      %vm2139 = vsmask.f32 6400
      %v2140 = vrot.slane %v885, 1
      %v2141 = vrot.slane %v887, 2
      %v2142 = vor.u32 %v2140, %v2141
      %v2143 = vrot.slane %v896, 1
      %v2144 = vrot.slane %v892, 2
      %v2145 = vor.u32 %v2143, %v2144
      %v2146 = vsel %vm2139, %v2142, %v2145
      %v2147 = vshrl.u32 %v845, 16
      %v2149 = vrot.slane %v2147, 1
      %v2150 = vrot.slane %v900, 2
      %v2151 = vor.u32 %v2149, %v2150
      %v2152 = vsel %vm2139, %v2145, %v2151
      %v2153 = vrot.slane %v905, 1
      %v2154 = vrot.slane %v907, 2
      %v2155 = vor.u32 %v2153, %v2154
      %v2156 = vrot.slane %v916, 1
      %v2157 = vrot.slane %v912, 2
      %v2158 = vor.u32 %v2156, %v2157
      %v2159 = vsel %vm2139, %v2155, %v2158
      %v2160 = vshrl.u32 %v846, 16
      %v2162 = vrot.slane %v2160, 1
      %v2163 = vrot.slane %v920, 2
      %v2164 = vor.u32 %v2162, %v2163
      %v2165 = vsel %vm2139, %v2158, %v2164
      %v2166 = vrot.slane %v925, 1
      %v2167 = vrot.slane %v927, 2
      %v2168 = vor.u32 %v2166, %v2167
      %v2169 = vrot.slane %v936, 1
      %v2170 = vrot.slane %v932, 2
      %v2171 = vor.u32 %v2169, %v2170
      %v2172 = vsel %vm2139, %v2168, %v2171
      %v2173 = vshrl.u32 %v847, 16
      %v2175 = vrot.slane %v2173, 1
      %v2176 = vrot.slane %v940, 2
      %v2177 = vor.u32 %v2175, %v2176
      %v2178 = vsel %vm2139, %v2171, %v2177
      %v2179 = vrot.slane %v945, 1
      %v2180 = vrot.slane %v947, 2
      %v2181 = vor.u32 %v2179, %v2180
      %v2182 = vrot.slane %v956, 1
      %v2183 = vrot.slane %v952, 2
      %v2184 = vor.u32 %v2182, %v2183
      %v2185 = vsel %vm2139, %v2181, %v2184
      %v2186 = vshrl.u32 %v848, 16
      %v2188 = vrot.slane %v2186, 1
      %v2189 = vrot.slane %v960, 2
      %v2190 = vor.u32 %v2188, %v2189
      %v2191 = vsel %vm2139, %v2184, %v2190
      %v2192 = vrot.slane %v965, 1
      %v2193 = vrot.slane %v967, 2
      %v2194 = vor.u32 %v2192, %v2193
      %v2195 = vrot.slane %v976, 1
      %v2196 = vrot.slane %v972, 2
      %v2197 = vor.u32 %v2195, %v2196
      %v2198 = vsel %vm2139, %v2194, %v2197
      %v2199 = vshrl.u32 %v849, 16
      %v2201 = vrot.slane %v2199, 1
      %v2202 = vrot.slane %v980, 2
      %v2203 = vor.u32 %v2201, %v2202
      %v2204 = vsel %vm2139, %v2197, %v2203
      %v2205 = vrot.slane %v985, 1
      %v2206 = vrot.slane %v987, 2
      %v2207 = vor.u32 %v2205, %v2206
      %v2208 = vrot.slane %v996, 1
      %v2209 = vrot.slane %v992, 2
      %v2210 = vor.u32 %v2208, %v2209
      %v2211 = vsel %vm2139, %v2207, %v2210
      %v2212 = vshrl.u32 %v850, 16
      %v2214 = vrot.slane %v2212, 1
      %v2215 = vrot.slane %v1000, 2
      %v2216 = vor.u32 %v2214, %v2215
      %v2217 = vsel %vm2139, %v2210, %v2216
      %v2218 = vrot.slane %v1005, 1
      %v2219 = vrot.slane %v1007, 2
      %v2220 = vor.u32 %v2218, %v2219
      %v2221 = vrot.slane %v1016, 1
      %v2222 = vrot.slane %v1012, 2
      %v2223 = vor.u32 %v2221, %v2222
      %v2224 = vsel %vm2139, %v2220, %v2223
      %v2225 = vshrl.u32 %v851, 16
      %v2227 = vrot.slane %v2225, 1
      %v2228 = vrot.slane %v1020, 2
      %v2229 = vor.u32 %v2227, %v2228
      %v2230 = vsel %vm2139, %v2223, %v2229
      %v2231 = vrot.slane %v1025, 1
      %v2232 = vrot.slane %v1027, 2
      %v2233 = vor.u32 %v2231, %v2232
      %v2234 = vrot.slane %v1036, 1
      %v2235 = vrot.slane %v1032, 2
      %v2236 = vor.u32 %v2234, %v2235
      %v2237 = vsel %vm2139, %v2233, %v2236
      %v2238 = vshrl.u32 %v852, 16
      %v2240 = vrot.slane %v2238, 1
      %v2241 = vrot.slane %v1040, 2
      %v2242 = vor.u32 %v2240, %v2241
      %v2243 = vsel %vm2139, %v2236, %v2242
      %v2244 = vrot.slane %v1045, 1
      %v2245 = vrot.slane %v1047, 2
      %v2246 = vor.u32 %v2244, %v2245
      %v2247 = vrot.slane %v1056, 1
      %v2248 = vrot.slane %v1052, 2
      %v2249 = vor.u32 %v2247, %v2248
      %v2250 = vsel %vm2139, %v2246, %v2249
      %v2251 = vshrl.u32 %v853, 16
      %v2253 = vrot.slane %v2251, 1
      %v2254 = vrot.slane %v1060, 2
      %v2255 = vor.u32 %v2253, %v2254
      %v2256 = vsel %vm2139, %v2249, %v2255
      %v2257 = vrot.slane %v1065, 1
      %v2258 = vrot.slane %v1067, 2
      %v2259 = vor.u32 %v2257, %v2258
      %v2260 = vrot.slane %v1076, 1
      %v2261 = vrot.slane %v1072, 2
      %v2262 = vor.u32 %v2260, %v2261
      %v2263 = vsel %vm2139, %v2259, %v2262
      %v2264 = vshrl.u32 %v854, 16
      %v2266 = vrot.slane %v2264, 1
      %v2267 = vrot.slane %v1080, 2
      %v2268 = vor.u32 %v2266, %v2267
      %v2269 = vsel %vm2139, %v2262, %v2268
      %v2270 = vrot.slane %v1085, 1
      %v2271 = vrot.slane %v1087, 2
      %v2272 = vor.u32 %v2270, %v2271
      %v2273 = vrot.slane %v1096, 1
      %v2274 = vrot.slane %v1092, 2
      %v2275 = vor.u32 %v2273, %v2274
      %v2276 = vsel %vm2139, %v2272, %v2275
      %v2277 = vshrl.u32 %v855, 16
      %v2279 = vrot.slane %v2277, 1
      %v2280 = vrot.slane %v1100, 2
      %v2281 = vor.u32 %v2279, %v2280
      %v2282 = vsel %vm2139, %v2275, %v2281
      %v2283 = vrot.slane %v1105, 1
      %v2284 = vrot.slane %v1107, 2
      %v2285 = vor.u32 %v2283, %v2284
      %v2286 = vrot.slane %v1116, 1
      %v2287 = vrot.slane %v1112, 2
      %v2288 = vor.u32 %v2286, %v2287
      %v2289 = vsel %vm2139, %v2285, %v2288
      %v2290 = vshrl.u32 %v856, 16
      %v2292 = vrot.slane %v2290, 1
      %v2293 = vrot.slane %v1120, 2
      %v2294 = vor.u32 %v2292, %v2293
      %v2295 = vsel %vm2139, %v2288, %v2294
      %v2296 = vrot.slane %v1125, 1
      %v2297 = vrot.slane %v1127, 2
      %v2298 = vor.u32 %v2296, %v2297
      %v2299 = vrot.slane %v1136, 1
      %v2300 = vrot.slane %v1132, 2
      %v2301 = vor.u32 %v2299, %v2300
      %v2302 = vsel %vm2139, %v2298, %v2301
      %v2303 = vshrl.u32 %v857, 16
      %v2305 = vrot.slane %v2303, 1
      %v2306 = vrot.slane %v1140, 2
      %v2307 = vor.u32 %v2305, %v2306
      %v2308 = vsel %vm2139, %v2301, %v2307
      %v2309 = vrot.slane %v1145, 1
      %v2310 = vrot.slane %v1147, 2
      %v2311 = vor.u32 %v2309, %v2310
      %v2312 = vrot.slane %v1156, 1
      %v2313 = vrot.slane %v1152, 2
      %v2314 = vor.u32 %v2312, %v2313
      %v2315 = vsel %vm2139, %v2311, %v2314
      %v2316 = vshrl.u32 %v858, 16
      %v2318 = vrot.slane %v2316, 1
      %v2319 = vrot.slane %v1160, 2
      %v2320 = vor.u32 %v2318, %v2319
      %v2321 = vsel %vm2139, %v2314, %v2320
      %v2322 = vrot.slane %v1165, 1
      %v2323 = vrot.slane %v1167, 2
      %v2324 = vor.u32 %v2322, %v2323
      %v2325 = vrot.slane %v1176, 1
      %v2326 = vrot.slane %v1172, 2
      %v2327 = vor.u32 %v2325, %v2326
      %v2328 = vsel %vm2139, %v2324, %v2327
      %v2329 = vshrl.u32 %v859, 16
      %v2331 = vrot.slane %v2329, 1
      %v2332 = vrot.slane %v1180, 2
      %v2333 = vor.u32 %v2331, %v2332
      %v2334 = vsel %vm2139, %v2327, %v2333
      %v2335 = vrot.slane %v1185, 1
      %v2336 = vrot.slane %v1187, 2
      %v2337 = vor.u32 %v2335, %v2336
      %v2338 = vrot.slane %v1196, 1
      %v2339 = vrot.slane %v1192, 2
      %v2340 = vor.u32 %v2338, %v2339
      %v2341 = vsel %vm2139, %v2337, %v2340
      %v2342 = vshrl.u32 %v860, 16
      %v2344 = vrot.slane %v2342, 1
      %v2345 = vrot.slane %v1200, 2
      %v2346 = vor.u32 %v2344, %v2345
      %v2347 = vsel %vm2139, %v2340, %v2346
      %v2348 = vrot.slane %v1205, 1
      %v2349 = vrot.slane %v1207, 2
      %v2350 = vor.u32 %v2348, %v2349
      %v2351 = vrot.slane %v1216, 1
      %v2352 = vrot.slane %v1212, 2
      %v2353 = vor.u32 %v2351, %v2352
      %v2354 = vsel %vm2139, %v2350, %v2353
      %v2355 = vshrl.u32 %v861, 16
      %v2357 = vrot.slane %v2355, 1
      %v2358 = vrot.slane %v1220, 2
      %v2359 = vor.u32 %v2357, %v2358
      %v2360 = vsel %vm2139, %v2353, %v2359
      %v2361 = vrot.slane %v1225, 1
      %v2362 = vrot.slane %v1227, 2
      %v2363 = vor.u32 %v2361, %v2362
      %v2364 = vrot.slane %v1236, 1
      %v2365 = vrot.slane %v1232, 2
      %v2366 = vor.u32 %v2364, %v2365
      %v2367 = vsel %vm2139, %v2363, %v2366
      %v2368 = vshrl.u32 %v862, 16
      %v2370 = vrot.slane %v2368, 1
      %v2371 = vrot.slane %v1240, 2
      %v2372 = vor.u32 %v2370, %v2371
      %v2373 = vsel %vm2139, %v2366, %v2372
      %v2374 = vrot.slane %v1245, 1
      %v2375 = vrot.slane %v1247, 2
      %v2376 = vor.u32 %v2374, %v2375
      %v2377 = vrot.slane %v1256, 1
      %v2378 = vrot.slane %v1252, 2
      %v2379 = vor.u32 %v2377, %v2378
      %v2380 = vsel %vm2139, %v2376, %v2379
      %v2381 = vshrl.u32 %v863, 16
      %v2383 = vrot.slane %v2381, 1
      %v2384 = vrot.slane %v1260, 2
      %v2385 = vor.u32 %v2383, %v2384
      %v2386 = vsel %vm2139, %v2379, %v2385
      %v2387 = vrot.slane %v1265, 1
      %v2388 = vrot.slane %v1267, 2
      %v2389 = vor.u32 %v2387, %v2388
      %v2390 = vrot.slane %v1276, 1
      %v2391 = vrot.slane %v1272, 2
      %v2392 = vor.u32 %v2390, %v2391
      %v2393 = vsel %vm2139, %v2389, %v2392
      %v2394 = vshrl.u32 %v864, 16
      %v2396 = vrot.slane %v2394, 1
      %v2397 = vrot.slane %v1280, 2
      %v2398 = vor.u32 %v2396, %v2397
      %v2399 = vsel %vm2139, %v2392, %v2398
      %v2400 = vrot.slane %v1285, 1
      %v2401 = vrot.slane %v1287, 2
      %v2402 = vor.u32 %v2400, %v2401
      %v2403 = vrot.slane %v1296, 1
      %v2404 = vrot.slane %v1292, 2
      %v2405 = vor.u32 %v2403, %v2404
      %v2406 = vsel %vm2139, %v2402, %v2405
      %v2407 = vshrl.u32 %v865, 16
      %v2409 = vrot.slane %v2407, 1
      %v2410 = vrot.slane %v1300, 2
      %v2411 = vor.u32 %v2409, %v2410
      %v2412 = vsel %vm2139, %v2405, %v2411
      %v2413 = vrot.slane %v1305, 1
      %v2414 = vrot.slane %v1307, 2
      %v2415 = vor.u32 %v2413, %v2414
      %v2416 = vrot.slane %v1316, 1
      %v2417 = vrot.slane %v1312, 2
      %v2418 = vor.u32 %v2416, %v2417
      %v2419 = vsel %vm2139, %v2415, %v2418
      %v2420 = vshrl.u32 %v866, 16
      %v2422 = vrot.slane %v2420, 1
      %v2423 = vrot.slane %v1320, 2
      %v2424 = vor.u32 %v2422, %v2423
      %v2425 = vsel %vm2139, %v2418, %v2424
      %v2426 = vrot.slane %v1325, 1
      %v2427 = vrot.slane %v1327, 2
      %v2428 = vor.u32 %v2426, %v2427
      %v2429 = vrot.slane %v1336, 1
      %v2430 = vrot.slane %v1332, 2
      %v2431 = vor.u32 %v2429, %v2430
      %v2432 = vsel %vm2139, %v2428, %v2431
      %v2433 = vshrl.u32 %v867, 16
      %v2435 = vrot.slane %v2433, 1
      %v2436 = vrot.slane %v1340, 2
      %v2437 = vor.u32 %v2435, %v2436
      %v2438 = vsel %vm2139, %v2431, %v2437
      %v2439 = vrot.slane %v1345, 1
      %v2440 = vrot.slane %v1347, 2
      %v2441 = vor.u32 %v2439, %v2440
      %v2442 = vrot.slane %v1356, 1
      %v2443 = vrot.slane %v1352, 2
      %v2444 = vor.u32 %v2442, %v2443
      %v2445 = vsel %vm2139, %v2441, %v2444
      %v2446 = vshrl.u32 %v868, 16
      %v2448 = vrot.slane %v2446, 1
      %v2449 = vrot.slane %v1360, 2
      %v2450 = vor.u32 %v2448, %v2449
      %v2451 = vsel %vm2139, %v2444, %v2450
      %v2452 = vrot.slane %v1365, 1
      %v2453 = vrot.slane %v1367, 2
      %v2454 = vor.u32 %v2452, %v2453
      %v2455 = vrot.slane %v1376, 1
      %v2456 = vrot.slane %v1372, 2
      %v2457 = vor.u32 %v2455, %v2456
      %v2458 = vsel %vm2139, %v2454, %v2457
      %v2459 = vshrl.u32 %v869, 16
      %v2461 = vrot.slane %v2459, 1
      %v2462 = vrot.slane %v1380, 2
      %v2463 = vor.u32 %v2461, %v2462
      %v2464 = vsel %vm2139, %v2457, %v2463
      %v2465 = vrot.slane %v1385, 1
      %v2466 = vrot.slane %v1387, 2
      %v2467 = vor.u32 %v2465, %v2466
      %v2468 = vrot.slane %v1396, 1
      %v2469 = vrot.slane %v1392, 2
      %v2470 = vor.u32 %v2468, %v2469
      %v2471 = vsel %vm2139, %v2467, %v2470
      %v2472 = vshrl.u32 %v870, 16
      %v2474 = vrot.slane %v2472, 1
      %v2475 = vrot.slane %v1400, 2
      %v2476 = vor.u32 %v2474, %v2475
      %v2477 = vsel %vm2139, %v2470, %v2476
      %v2478 = vrot.slane %v1405, 1
      %v2479 = vrot.slane %v1407, 2
      %v2480 = vor.u32 %v2478, %v2479
      %v2481 = vrot.slane %v1416, 1
      %v2482 = vrot.slane %v1412, 2
      %v2483 = vor.u32 %v2481, %v2482
      %v2484 = vsel %vm2139, %v2480, %v2483
      %v2485 = vshrl.u32 %v871, 16
      %v2487 = vrot.slane %v2485, 1
      %v2488 = vrot.slane %v1420, 2
      %v2489 = vor.u32 %v2487, %v2488
      %v2490 = vsel %vm2139, %v2483, %v2489
      %v2491 = vrot.slane %v1425, 1
      %v2492 = vrot.slane %v1427, 2
      %v2493 = vor.u32 %v2491, %v2492
      %v2494 = vrot.slane %v1436, 1
      %v2495 = vrot.slane %v1432, 2
      %v2496 = vor.u32 %v2494, %v2495
      %v2497 = vsel %vm2139, %v2493, %v2496
      %v2498 = vshrl.u32 %v872, 16
      %v2500 = vrot.slane %v2498, 1
      %v2501 = vrot.slane %v1440, 2
      %v2502 = vor.u32 %v2500, %v2501
      %v2503 = vsel %vm2139, %v2496, %v2502
      %v2504 = vrot.slane %v1445, 1
      %v2505 = vrot.slane %v1447, 2
      %v2506 = vor.u32 %v2504, %v2505
      %v2507 = vrot.slane %v1456, 1
      %v2508 = vrot.slane %v1452, 2
      %v2509 = vor.u32 %v2507, %v2508
      %v2510 = vsel %vm2139, %v2506, %v2509
      %v2511 = vshrl.u32 %v873, 16
      %v2513 = vrot.slane %v2511, 1
      %v2514 = vrot.slane %v1460, 2
      %v2515 = vor.u32 %v2513, %v2514
      %v2516 = vsel %vm2139, %v2509, %v2515
      %v2517 = vrot.slane %v1465, 1
      %v2518 = vrot.slane %v1467, 2
      %v2519 = vor.u32 %v2517, %v2518
      %v2520 = vrot.slane %v1476, 1
      %v2521 = vrot.slane %v1472, 2
      %v2522 = vor.u32 %v2520, %v2521
      %v2523 = vsel %vm2139, %v2519, %v2522
      %v2524 = vshrl.u32 %v874, 16
      %v2526 = vrot.slane %v2524, 1
      %v2527 = vrot.slane %v1480, 2
      %v2528 = vor.u32 %v2526, %v2527
      %v2529 = vsel %vm2139, %v2522, %v2528
      %v2530 = vrot.slane %v1485, 1
      %v2531 = vrot.slane %v1487, 2
      %v2532 = vor.u32 %v2530, %v2531
      %v2533 = vrot.slane %v1496, 1
      %v2534 = vrot.slane %v1492, 2
      %v2535 = vor.u32 %v2533, %v2534
      %v2536 = vsel %vm2139, %v2532, %v2535
      %v2537 = vshrl.u32 %v875, 16
      %v2539 = vrot.slane %v2537, 1
      %v2540 = vrot.slane %v1500, 2
      %v2541 = vor.u32 %v2539, %v2540
      %v2542 = vsel %vm2139, %v2535, %v2541
      %v2543 = vrot.slane %v1505, 1
      %v2544 = vrot.slane %v1507, 2
      %v2545 = vor.u32 %v2543, %v2544
      %v2546 = vrot.slane %v1516, 1
      %v2547 = vrot.slane %v1512, 2
      %v2548 = vor.u32 %v2546, %v2547
      %v2549 = vsel %vm2139, %v2545, %v2548
      %v2550 = vshrl.u32 %v876, 16
      %v2552 = vrot.slane %v2550, 1
      %v2553 = vrot.slane %v1520, 2
      %v2554 = vor.u32 %v2552, %v2553
      %v2555 = vsel %vm2139, %v2548, %v2554
      %v2556 = vrot.slane %v1525, 1
      %v2557 = vrot.slane %v1527, 2
      %v2558 = vor.u32 %v2556, %v2557
      %v2559 = vrot.slane %v1536, 1
      %v2560 = vrot.slane %v1532, 2
      %v2561 = vor.u32 %v2559, %v2560
      %v2562 = vsel %vm2139, %v2558, %v2561
      %v2563 = vshrl.u32 %v877, 16
      %v2565 = vrot.slane %v2563, 1
      %v2566 = vrot.slane %v1540, 2
      %v2567 = vor.u32 %v2565, %v2566
      %v2568 = vsel %vm2139, %v2561, %v2567
      %v2569 = vrot.slane %v1545, 1
      %v2570 = vrot.slane %v1547, 2
      %v2571 = vor.u32 %v2569, %v2570
      %v2572 = vrot.slane %v1556, 1
      %v2573 = vrot.slane %v1552, 2
      %v2574 = vor.u32 %v2572, %v2573
      %v2575 = vsel %vm2139, %v2571, %v2574
      %v2576 = vshrl.u32 %v878, 16
      %v2578 = vrot.slane %v2576, 1
      %v2579 = vrot.slane %v1560, 2
      %v2580 = vor.u32 %v2578, %v2579
      %v2581 = vsel %vm2139, %v2574, %v2580
      %v2582 = vrot.slane %v1565, 1
      %v2583 = vrot.slane %v1567, 2
      %v2584 = vor.u32 %v2582, %v2583
      %v2585 = vrot.slane %v1576, 1
      %v2586 = vrot.slane %v1572, 2
      %v2587 = vor.u32 %v2585, %v2586
      %v2588 = vsel %vm2139, %v2584, %v2587
      %v2589 = vshrl.u32 %v879, 16
      %v2591 = vrot.slane %v2589, 1
      %v2592 = vrot.slane %v1580, 2
      %v2593 = vor.u32 %v2591, %v2592
      %v2594 = vsel %vm2139, %v2587, %v2593
      %v2595 = vrot.slane %v1585, 1
      %v2596 = vrot.slane %v1587, 2
      %v2597 = vor.u32 %v2595, %v2596
      %v2598 = vrot.slane %v1596, 1
      %v2599 = vrot.slane %v1592, 2
      %v2600 = vor.u32 %v2598, %v2599
      %v2601 = vsel %vm2139, %v2597, %v2600
      %v2602 = vshrl.u32 %v880, 16
      %v2604 = vrot.slane %v2602, 1
      %v2605 = vrot.slane %v1600, 2
      %v2606 = vor.u32 %v2604, %v2605
      %v2607 = vsel %vm2139, %v2600, %v2606
      %v2608 = vrot.slane %v1605, 1
      %v2609 = vrot.slane %v1607, 2
      %v2610 = vor.u32 %v2608, %v2609
      %v2611 = vrot.slane %v1616, 1
      %v2612 = vrot.slane %v1612, 2
      %v2613 = vor.u32 %v2611, %v2612
      %v2614 = vsel %vm2139, %v2610, %v2613
      %v2615 = vshrl.u32 %v881, 16
      %v2617 = vrot.slane %v2615, 1
      %v2618 = vrot.slane %v1620, 2
      %v2619 = vor.u32 %v2617, %v2618
      %v2620 = vsel %vm2139, %v2613, %v2619
      %v2621 = vrot.slane %v1625, 1
      %v2622 = vrot.slane %v1627, 2
      %v2623 = vor.u32 %v2621, %v2622
      %v2624 = vrot.slane %v1636, 1
      %v2625 = vrot.slane %v1632, 2
      %v2626 = vor.u32 %v2624, %v2625
      %v2627 = vsel %vm2139, %v2623, %v2626
      %v2628 = vshrl.u32 %v882, 16
      %v2630 = vrot.slane %v2628, 1
      %v2631 = vrot.slane %v1640, 2
      %v2632 = vor.u32 %v2630, %v2631
      %v2633 = vsel %vm2139, %v2626, %v2632
      %2634 = vrot.lane.b32.xlu0 %v2146, 24
      %v2635 = vpop.permute.xlu0 %2634
      %2636 = vrot.lane.b32.xlu0 %v2152, 24
      %v2637 = vpop.permute.xlu0 %2636
      %2638 = vrot.lane.b32.xlu0 %v2159, 24
      %v2639 = vpop.permute.xlu0 %2638
      %2640 = vrot.lane.b32.xlu0 %v2165, 24
      %v2641 = vpop.permute.xlu0 %2640
      %2642 = vrot.lane.b32.xlu0 %v2172, 24
      %v2643 = vpop.permute.xlu0 %2642
      %2644 = vrot.lane.b32.xlu0 %v2178, 24
      %v2645 = vpop.permute.xlu0 %2644
      %2646 = vrot.lane.b32.xlu0 %v2185, 24
      %v2647 = vpop.permute.xlu0 %2646
      %2648 = vrot.lane.b32.xlu0 %v2191, 24
      %v2649 = vpop.permute.xlu0 %2648
      %2650 = vrot.lane.b32.xlu0 %v2198, 24
      %v2651 = vpop.permute.xlu0 %2650
      %2652 = vrot.lane.b32.xlu0 %v2204, 24
      %v2653 = vpop.permute.xlu0 %2652
      %2654 = vrot.lane.b32.xlu0 %v2211, 24
      %v2655 = vpop.permute.xlu0 %2654
      %2656 = vrot.lane.b32.xlu0 %v2217, 24
      %v2657 = vpop.permute.xlu0 %2656
      %2658 = vrot.lane.b32.xlu0 %v2224, 24
      %v2659 = vpop.permute.xlu0 %2658
      %2660 = vrot.lane.b32.xlu0 %v2230, 24
      %v2661 = vpop.permute.xlu0 %2660
      %2662 = vrot.lane.b32.xlu0 %v2237, 24
      %v2663 = vpop.permute.xlu0 %2662
      %2664 = vrot.lane.b32.xlu0 %v2243, 24
      %v2665 = vpop.permute.xlu0 %2664
      %2666 = vrot.lane.b32.xlu0 %v2250, 24
      %v2667 = vpop.permute.xlu0 %2666
      %2668 = vrot.lane.b32.xlu0 %v2256, 24
      %v2669 = vpop.permute.xlu0 %2668
      %2670 = vrot.lane.b32.xlu0 %v2263, 24
      %v2671 = vpop.permute.xlu0 %2670
      %2672 = vrot.lane.b32.xlu0 %v2269, 24
      %v2673 = vpop.permute.xlu0 %2672
      %2674 = vrot.lane.b32.xlu0 %v2276, 24
      %v2675 = vpop.permute.xlu0 %2674
      %2676 = vrot.lane.b32.xlu0 %v2282, 24
      %v2677 = vpop.permute.xlu0 %2676
      %2678 = vrot.lane.b32.xlu0 %v2289, 24
      %v2679 = vpop.permute.xlu0 %2678
      %2680 = vrot.lane.b32.xlu0 %v2295, 24
      %v2681 = vpop.permute.xlu0 %2680
      %2682 = vrot.lane.b32.xlu0 %v2302, 24
      %v2683 = vpop.permute.xlu0 %2682
      %2684 = vrot.lane.b32.xlu0 %v2308, 24
      %v2685 = vpop.permute.xlu0 %2684
      %2686 = vrot.lane.b32.xlu0 %v2315, 24
      %v2687 = vpop.permute.xlu0 %2686
      %2688 = vrot.lane.b32.xlu0 %v2321, 24
      %v2689 = vpop.permute.xlu0 %2688
      %2690 = vrot.lane.b32.xlu0 %v2328, 24
      %v2691 = vpop.permute.xlu0 %2690
      %2692 = vrot.lane.b32.xlu0 %v2334, 24
      %v2693 = vpop.permute.xlu0 %2692
      %2694 = vrot.lane.b32.xlu0 %v2341, 24
      %v2695 = vpop.permute.xlu0 %2694
      %2696 = vrot.lane.b32.xlu0 %v2347, 24
      %v2697 = vpop.permute.xlu0 %2696
      %2698 = vrot.lane.b32.xlu0 %v2354, 24
      %v2699 = vpop.permute.xlu0 %2698
      %2700 = vrot.lane.b32.xlu0 %v2360, 24
      %v2701 = vpop.permute.xlu0 %2700
      %2702 = vrot.lane.b32.xlu0 %v2367, 24
      %v2703 = vpop.permute.xlu0 %2702
      %2704 = vrot.lane.b32.xlu0 %v2373, 24
      %v2705 = vpop.permute.xlu0 %2704
      %2706 = vrot.lane.b32.xlu0 %v2380, 24
      %v2707 = vpop.permute.xlu0 %2706
      %2708 = vrot.lane.b32.xlu0 %v2386, 24
      %v2709 = vpop.permute.xlu0 %2708
      %2710 = vrot.lane.b32.xlu0 %v2393, 24
      %v2711 = vpop.permute.xlu0 %2710
      %2712 = vrot.lane.b32.xlu0 %v2399, 24
      %v2713 = vpop.permute.xlu0 %2712
      %2714 = vrot.lane.b32.xlu0 %v2406, 24
      %v2715 = vpop.permute.xlu0 %2714
      %2716 = vrot.lane.b32.xlu0 %v2412, 24
      %v2717 = vpop.permute.xlu0 %2716
      %2718 = vrot.lane.b32.xlu0 %v2419, 24
      %v2719 = vpop.permute.xlu0 %2718
      %2720 = vrot.lane.b32.xlu0 %v2425, 24
      %v2721 = vpop.permute.xlu0 %2720
      %2722 = vrot.lane.b32.xlu0 %v2432, 24
      %v2723 = vpop.permute.xlu0 %2722
      %2724 = vrot.lane.b32.xlu0 %v2438, 24
      %v2725 = vpop.permute.xlu0 %2724
      %2726 = vrot.lane.b32.xlu0 %v2445, 24
      %v2727 = vpop.permute.xlu0 %2726
      %2728 = vrot.lane.b32.xlu0 %v2451, 24
      %v2729 = vpop.permute.xlu0 %2728
      %2730 = vrot.lane.b32.xlu0 %v2458, 24
      %v2731 = vpop.permute.xlu0 %2730
      %2732 = vrot.lane.b32.xlu0 %v2464, 24
      %v2733 = vpop.permute.xlu0 %2732
      %2734 = vrot.lane.b32.xlu0 %v2471, 24
      %v2735 = vpop.permute.xlu0 %2734
      %2736 = vrot.lane.b32.xlu0 %v2477, 24
      %v2737 = vpop.permute.xlu0 %2736
      %2738 = vrot.lane.b32.xlu0 %v2484, 24
      %v2739 = vpop.permute.xlu0 %2738
      %2740 = vrot.lane.b32.xlu0 %v2490, 24
      %v2741 = vpop.permute.xlu0 %2740
      %2742 = vrot.lane.b32.xlu0 %v2497, 24
      %v2743 = vpop.permute.xlu0 %2742
      %2744 = vrot.lane.b32.xlu0 %v2503, 24
      %v2745 = vpop.permute.xlu0 %2744
      %2746 = vrot.lane.b32.xlu0 %v2510, 24
      %v2747 = vpop.permute.xlu0 %2746
      %2748 = vrot.lane.b32.xlu0 %v2516, 24
      %v2749 = vpop.permute.xlu0 %2748
      %2750 = vrot.lane.b32.xlu0 %v2523, 24
      %v2751 = vpop.permute.xlu0 %2750
      %2752 = vrot.lane.b32.xlu0 %v2529, 24
      %v2753 = vpop.permute.xlu0 %2752
      %2754 = vrot.lane.b32.xlu0 %v2536, 24
      %v2755 = vpop.permute.xlu0 %2754
      %2756 = vrot.lane.b32.xlu0 %v2542, 24
      %v2757 = vpop.permute.xlu0 %2756
      %2758 = vrot.lane.b32.xlu0 %v2549, 24
      %v2759 = vpop.permute.xlu0 %2758
      %2760 = vrot.lane.b32.xlu0 %v2555, 24
      %v2761 = vpop.permute.xlu0 %2760
      %2762 = vrot.lane.b32.xlu0 %v2562, 24
      %v2763 = vpop.permute.xlu0 %2762
      %2764 = vrot.lane.b32.xlu0 %v2568, 24
      %v2765 = vpop.permute.xlu0 %2764
      %2766 = vrot.lane.b32.xlu0 %v2575, 24
      %v2767 = vpop.permute.xlu0 %2766
      %2768 = vrot.lane.b32.xlu0 %v2581, 24
      %v2769 = vpop.permute.xlu0 %2768
      %2770 = vrot.lane.b32.xlu0 %v2588, 24
      %v2771 = vpop.permute.xlu0 %2770
      %2772 = vrot.lane.b32.xlu0 %v2594, 24
      %v2773 = vpop.permute.xlu0 %2772
      %2774 = vrot.lane.b32.xlu0 %v2601, 24
      %v2775 = vpop.permute.xlu0 %2774
      %2776 = vrot.lane.b32.xlu0 %v2607, 24
      %v2777 = vpop.permute.xlu0 %2776
      %2778 = vrot.lane.b32.xlu0 %v2614, 24
      %v2779 = vpop.permute.xlu0 %2778
      %2780 = vrot.lane.b32.xlu0 %v2620, 24
      %v2781 = vpop.permute.xlu0 %2780
      %2782 = vrot.lane.b32.xlu0 %v2627, 24
      %v2783 = vpop.permute.xlu0 %2782
      %2784 = vrot.lane.b32.xlu0 %v2633, 24
      %v2785 = vpop.permute.xlu0 %2784
      %vm2786 = vcmask 1045504
      %v2787 = vrot.slane %v693, 2
      %v2788 = vrot.slane %v694, 2
      %v2789 = vsel %vm2786, %v2787, %v2788
      %v2790 = vrot.slane %v845, 2
      %v2791 = vsel %vm2786, %v2788, %v2790
      %v2792 = vrot.slane %v695, 2
      %v2793 = vrot.slane %v696, 2
      %v2794 = vsel %vm2786, %v2792, %v2793
      %v2795 = vrot.slane %v846, 2
      %v2796 = vsel %vm2786, %v2793, %v2795
      %v2797 = vrot.slane %v697, 2
      %v2798 = vrot.slane %v698, 2
      %v2799 = vsel %vm2786, %v2797, %v2798
      %v2800 = vrot.slane %v847, 2
      %v2801 = vsel %vm2786, %v2798, %v2800
      %v2802 = vrot.slane %v699, 2
      %v2803 = vrot.slane %v700, 2
      %v2804 = vsel %vm2786, %v2802, %v2803
      %v2805 = vrot.slane %v848, 2
      %v2806 = vsel %vm2786, %v2803, %v2805
      %v2807 = vrot.slane %v701, 2
      %v2808 = vrot.slane %v702, 2
      %v2809 = vsel %vm2786, %v2807, %v2808
      %v2810 = vrot.slane %v849, 2
      %v2811 = vsel %vm2786, %v2808, %v2810
      %v2812 = vrot.slane %v703, 2
      %v2813 = vrot.slane %v704, 2
      %v2814 = vsel %vm2786, %v2812, %v2813
      %v2815 = vrot.slane %v850, 2
      %v2816 = vsel %vm2786, %v2813, %v2815
      %v2817 = vrot.slane %v705, 2
      %v2818 = vrot.slane %v706, 2
      %v2819 = vsel %vm2786, %v2817, %v2818
      %v2820 = vrot.slane %v851, 2
      %v2821 = vsel %vm2786, %v2818, %v2820
      %v2822 = vrot.slane %v707, 2
      %v2823 = vrot.slane %v708, 2
      %v2824 = vsel %vm2786, %v2822, %v2823
      %v2825 = vrot.slane %v852, 2
      %v2826 = vsel %vm2786, %v2823, %v2825
      %v2827 = vrot.slane %v709, 2
      %v2828 = vrot.slane %v710, 2
      %v2829 = vsel %vm2786, %v2827, %v2828
      %v2830 = vrot.slane %v853, 2
      %v2831 = vsel %vm2786, %v2828, %v2830
      %v2832 = vrot.slane %v711, 2
      %v2833 = vrot.slane %v712, 2
      %v2834 = vsel %vm2786, %v2832, %v2833
      %v2835 = vrot.slane %v854, 2
      %v2836 = vsel %vm2786, %v2833, %v2835
      %v2837 = vrot.slane %v713, 2
      %v2838 = vrot.slane %v714, 2
      %v2839 = vsel %vm2786, %v2837, %v2838
      %v2840 = vrot.slane %v855, 2
      %v2841 = vsel %vm2786, %v2838, %v2840
      %v2842 = vrot.slane %v715, 2
      %v2843 = vrot.slane %v716, 2
      %v2844 = vsel %vm2786, %v2842, %v2843
      %v2845 = vrot.slane %v856, 2
      %v2846 = vsel %vm2786, %v2843, %v2845
      %v2847 = vrot.slane %v717, 2
      %v2848 = vrot.slane %v718, 2
      %v2849 = vsel %vm2786, %v2847, %v2848
      %v2850 = vrot.slane %v857, 2
      %v2851 = vsel %vm2786, %v2848, %v2850
      %v2852 = vrot.slane %v719, 2
      %v2853 = vrot.slane %v720, 2
      %v2854 = vsel %vm2786, %v2852, %v2853
      %v2855 = vrot.slane %v858, 2
      %v2856 = vsel %vm2786, %v2853, %v2855
      %v2857 = vrot.slane %v721, 2
      %v2858 = vrot.slane %v722, 2
      %v2859 = vsel %vm2786, %v2857, %v2858
      %v2860 = vrot.slane %v859, 2
      %v2861 = vsel %vm2786, %v2858, %v2860
      %v2862 = vrot.slane %v723, 2
      %v2863 = vrot.slane %v724, 2
      %v2864 = vsel %vm2786, %v2862, %v2863
      %v2865 = vrot.slane %v860, 2
      %v2866 = vsel %vm2786, %v2863, %v2865
      %v2867 = vrot.slane %v725, 2
      %v2868 = vrot.slane %v726, 2
      %v2869 = vsel %vm2786, %v2867, %v2868
      %v2870 = vrot.slane %v861, 2
      %v2871 = vsel %vm2786, %v2868, %v2870
      %v2872 = vrot.slane %v727, 2
      %v2873 = vrot.slane %v728, 2
      %v2874 = vsel %vm2786, %v2872, %v2873
      %v2875 = vrot.slane %v862, 2
      %v2876 = vsel %vm2786, %v2873, %v2875
      %v2877 = vrot.slane %v729, 2
      %v2878 = vrot.slane %v730, 2
      %v2879 = vsel %vm2786, %v2877, %v2878
      %v2880 = vrot.slane %v863, 2
      %v2881 = vsel %vm2786, %v2878, %v2880
      %v2882 = vrot.slane %v731, 2
      %v2883 = vrot.slane %v732, 2
      %v2884 = vsel %vm2786, %v2882, %v2883
      %v2885 = vrot.slane %v864, 2
      %v2886 = vsel %vm2786, %v2883, %v2885
      %v2887 = vrot.slane %v733, 2
      %v2888 = vrot.slane %v734, 2
      %v2889 = vsel %vm2786, %v2887, %v2888
      %v2890 = vrot.slane %v865, 2
      %v2891 = vsel %vm2786, %v2888, %v2890
      %v2892 = vrot.slane %v735, 2
      %v2893 = vrot.slane %v736, 2
      %v2894 = vsel %vm2786, %v2892, %v2893
      %v2895 = vrot.slane %v866, 2
      %v2896 = vsel %vm2786, %v2893, %v2895
      %v2897 = vrot.slane %v737, 2
      %v2898 = vrot.slane %v738, 2
      %v2899 = vsel %vm2786, %v2897, %v2898
      %v2900 = vrot.slane %v867, 2
      %v2901 = vsel %vm2786, %v2898, %v2900
      %v2902 = vrot.slane %v739, 2
      %v2903 = vrot.slane %v740, 2
      %v2904 = vsel %vm2786, %v2902, %v2903
      %v2905 = vrot.slane %v868, 2
      %v2906 = vsel %vm2786, %v2903, %v2905
      %v2907 = vrot.slane %v741, 2
      %v2908 = vrot.slane %v742, 2
      %v2909 = vsel %vm2786, %v2907, %v2908
      %v2910 = vrot.slane %v869, 2
      %v2911 = vsel %vm2786, %v2908, %v2910
      %v2912 = vrot.slane %v743, 2
      %v2913 = vrot.slane %v744, 2
      %v2914 = vsel %vm2786, %v2912, %v2913
      %v2915 = vrot.slane %v870, 2
      %v2916 = vsel %vm2786, %v2913, %v2915
      %v2917 = vrot.slane %v745, 2
      %v2918 = vrot.slane %v746, 2
      %v2919 = vsel %vm2786, %v2917, %v2918
      %v2920 = vrot.slane %v871, 2
      %v2921 = vsel %vm2786, %v2918, %v2920
      %v2922 = vrot.slane %v747, 2
      %v2923 = vrot.slane %v748, 2
      %v2924 = vsel %vm2786, %v2922, %v2923
      %v2925 = vrot.slane %v872, 2
      %v2926 = vsel %vm2786, %v2923, %v2925
      %v2927 = vrot.slane %v749, 2
      %v2928 = vrot.slane %v750, 2
      %v2929 = vsel %vm2786, %v2927, %v2928
      %v2930 = vrot.slane %v873, 2
      %v2931 = vsel %vm2786, %v2928, %v2930
      %v2932 = vrot.slane %v751, 2
      %v2933 = vrot.slane %v752, 2
      %v2934 = vsel %vm2786, %v2932, %v2933
      %v2935 = vrot.slane %v874, 2
      %v2936 = vsel %vm2786, %v2933, %v2935
      %v2937 = vrot.slane %v753, 2
      %v2938 = vrot.slane %v754, 2
      %v2939 = vsel %vm2786, %v2937, %v2938
      %v2940 = vrot.slane %v875, 2
      %v2941 = vsel %vm2786, %v2938, %v2940
      %v2942 = vrot.slane %v755, 2
      %v2943 = vrot.slane %v756, 2
      %v2944 = vsel %vm2786, %v2942, %v2943
      %v2945 = vrot.slane %v876, 2
      %v2946 = vsel %vm2786, %v2943, %v2945
      %v2947 = vrot.slane %v757, 2
      %v2948 = vrot.slane %v758, 2
      %v2949 = vsel %vm2786, %v2947, %v2948
      %v2950 = vrot.slane %v877, 2
      %v2951 = vsel %vm2786, %v2948, %v2950
      %v2952 = vrot.slane %v759, 2
      %v2953 = vrot.slane %v760, 2
      %v2954 = vsel %vm2786, %v2952, %v2953
      %v2955 = vrot.slane %v878, 2
      %v2956 = vsel %vm2786, %v2953, %v2955
      %v2957 = vrot.slane %v761, 2
      %v2958 = vrot.slane %v762, 2
      %v2959 = vsel %vm2786, %v2957, %v2958
      %v2960 = vrot.slane %v879, 2
      %v2961 = vsel %vm2786, %v2958, %v2960
      %v2962 = vrot.slane %v763, 2
      %v2963 = vrot.slane %v764, 2
      %v2964 = vsel %vm2786, %v2962, %v2963
      %v2965 = vrot.slane %v880, 2
      %v2966 = vsel %vm2786, %v2963, %v2965
      %v2967 = vrot.slane %v765, 2
      %v2968 = vrot.slane %v766, 2
      %v2969 = vsel %vm2786, %v2967, %v2968
      %v2970 = vrot.slane %v881, 2
      %v2971 = vsel %vm2786, %v2968, %v2970
      %v2972 = vrot.slane %v767, 2
      %v2973 = vrot.slane %v768, 2
      %v2974 = vsel %vm2786, %v2972, %v2973
      %v2975 = vrot.slane %v882, 2
      %v2976 = vsel %vm2786, %v2973, %v2975
      %2977 = vrot.lane.b32.xlu0 %v2789, 32
      %v2978 = vpop.permute.xlu0 %2977
      %2979 = vrot.lane.b32.xlu0 %v2791, 32
      %v2980 = vpop.permute.xlu0 %2979
      %2981 = vrot.lane.b32.xlu0 %v2794, 32
      %v2982 = vpop.permute.xlu0 %2981
      %2983 = vrot.lane.b32.xlu0 %v2796, 32
      %v2984 = vpop.permute.xlu0 %2983
      %2985 = vrot.lane.b32.xlu0 %v2799, 32
      %v2986 = vpop.permute.xlu0 %2985
      %2987 = vrot.lane.b32.xlu0 %v2801, 32
      %v2988 = vpop.permute.xlu0 %2987
      %2989 = vrot.lane.b32.xlu0 %v2804, 32
      %v2990 = vpop.permute.xlu0 %2989
      %2991 = vrot.lane.b32.xlu0 %v2806, 32
      %v2992 = vpop.permute.xlu0 %2991
      %2993 = vrot.lane.b32.xlu0 %v2809, 32
      %v2994 = vpop.permute.xlu0 %2993
      %2995 = vrot.lane.b32.xlu0 %v2811, 32
      %v2996 = vpop.permute.xlu0 %2995
      %2997 = vrot.lane.b32.xlu0 %v2814, 32
      %v2998 = vpop.permute.xlu0 %2997
      %2999 = vrot.lane.b32.xlu0 %v2816, 32
      %v3000 = vpop.permute.xlu0 %2999
      %3001 = vrot.lane.b32.xlu0 %v2819, 32
      %v3002 = vpop.permute.xlu0 %3001
      %3003 = vrot.lane.b32.xlu0 %v2821, 32
      %v3004 = vpop.permute.xlu0 %3003
      %3005 = vrot.lane.b32.xlu0 %v2824, 32
      %v3006 = vpop.permute.xlu0 %3005
      %3007 = vrot.lane.b32.xlu0 %v2826, 32
      %v3008 = vpop.permute.xlu0 %3007
      %3009 = vrot.lane.b32.xlu0 %v2829, 32
      %v3010 = vpop.permute.xlu0 %3009
      %3011 = vrot.lane.b32.xlu0 %v2831, 32
      %v3012 = vpop.permute.xlu0 %3011
      %3013 = vrot.lane.b32.xlu0 %v2834, 32
      %v3014 = vpop.permute.xlu0 %3013
      %3015 = vrot.lane.b32.xlu0 %v2836, 32
      %v3016 = vpop.permute.xlu0 %3015
      %3017 = vrot.lane.b32.xlu0 %v2839, 32
      %v3018 = vpop.permute.xlu0 %3017
      %3019 = vrot.lane.b32.xlu0 %v2841, 32
      %v3020 = vpop.permute.xlu0 %3019
      %3021 = vrot.lane.b32.xlu0 %v2844, 32
      %v3022 = vpop.permute.xlu0 %3021
      %3023 = vrot.lane.b32.xlu0 %v2846, 32
      %v3024 = vpop.permute.xlu0 %3023
      %3025 = vrot.lane.b32.xlu0 %v2849, 32
      %v3026 = vpop.permute.xlu0 %3025
      %3027 = vrot.lane.b32.xlu0 %v2851, 32
      %v3028 = vpop.permute.xlu0 %3027
      %3029 = vrot.lane.b32.xlu0 %v2854, 32
      %v3030 = vpop.permute.xlu0 %3029
      %3031 = vrot.lane.b32.xlu0 %v2856, 32
      %v3032 = vpop.permute.xlu0 %3031
      %3033 = vrot.lane.b32.xlu0 %v2859, 32
      %v3034 = vpop.permute.xlu0 %3033
      %3035 = vrot.lane.b32.xlu0 %v2861, 32
      %v3036 = vpop.permute.xlu0 %3035
      %3037 = vrot.lane.b32.xlu0 %v2864, 32
      %v3038 = vpop.permute.xlu0 %3037
      %3039 = vrot.lane.b32.xlu0 %v2866, 32
      %v3040 = vpop.permute.xlu0 %3039
      %3041 = vrot.lane.b32.xlu0 %v2869, 32
      %v3042 = vpop.permute.xlu0 %3041
      %3043 = vrot.lane.b32.xlu0 %v2871, 32
      %v3044 = vpop.permute.xlu0 %3043
      %3045 = vrot.lane.b32.xlu0 %v2874, 32
      %v3046 = vpop.permute.xlu0 %3045
      %3047 = vrot.lane.b32.xlu0 %v2876, 32
      %v3048 = vpop.permute.xlu0 %3047
      %3049 = vrot.lane.b32.xlu0 %v2879, 32
      %v3050 = vpop.permute.xlu0 %3049
      %3051 = vrot.lane.b32.xlu0 %v2881, 32
      %v3052 = vpop.permute.xlu0 %3051
      %3053 = vrot.lane.b32.xlu0 %v2884, 32
      %v3054 = vpop.permute.xlu0 %3053
      %3055 = vrot.lane.b32.xlu0 %v2886, 32
      %v3056 = vpop.permute.xlu0 %3055
      %3057 = vrot.lane.b32.xlu0 %v2889, 32
      %v3058 = vpop.permute.xlu0 %3057
      %3059 = vrot.lane.b32.xlu0 %v2891, 32
      %v3060 = vpop.permute.xlu0 %3059
      %3061 = vrot.lane.b32.xlu0 %v2894, 32
      %v3062 = vpop.permute.xlu0 %3061
      %3063 = vrot.lane.b32.xlu0 %v2896, 32
      %v3064 = vpop.permute.xlu0 %3063
      %3065 = vrot.lane.b32.xlu0 %v2899, 32
      %v3066 = vpop.permute.xlu0 %3065
      %3067 = vrot.lane.b32.xlu0 %v2901, 32
      %v3068 = vpop.permute.xlu0 %3067
      %3069 = vrot.lane.b32.xlu0 %v2904, 32
      %v3070 = vpop.permute.xlu0 %3069
      %3071 = vrot.lane.b32.xlu0 %v2906, 32
      %v3072 = vpop.permute.xlu0 %3071
      %3073 = vrot.lane.b32.xlu0 %v2909, 32
      %v3074 = vpop.permute.xlu0 %3073
      %3075 = vrot.lane.b32.xlu0 %v2911, 32
      %v3076 = vpop.permute.xlu0 %3075
      %3077 = vrot.lane.b32.xlu0 %v2914, 32
      %v3078 = vpop.permute.xlu0 %3077
      %3079 = vrot.lane.b32.xlu0 %v2916, 32
      %v3080 = vpop.permute.xlu0 %3079
      %3081 = vrot.lane.b32.xlu0 %v2919, 32
      %v3082 = vpop.permute.xlu0 %3081
      %3083 = vrot.lane.b32.xlu0 %v2921, 32
      %v3084 = vpop.permute.xlu0 %3083
      %3085 = vrot.lane.b32.xlu0 %v2924, 32
      %v3086 = vpop.permute.xlu0 %3085
      %3087 = vrot.lane.b32.xlu0 %v2926, 32
      %v3088 = vpop.permute.xlu0 %3087
      %3089 = vrot.lane.b32.xlu0 %v2929, 32
      %v3090 = vpop.permute.xlu0 %3089
      %3091 = vrot.lane.b32.xlu0 %v2931, 32
      %v3092 = vpop.permute.xlu0 %3091
      %3093 = vrot.lane.b32.xlu0 %v2934, 32
      %v3094 = vpop.permute.xlu0 %3093
      %3095 = vrot.lane.b32.xlu0 %v2936, 32
      %v3096 = vpop.permute.xlu0 %3095
      %3097 = vrot.lane.b32.xlu0 %v2939, 32
      %v3098 = vpop.permute.xlu0 %3097
      %3099 = vrot.lane.b32.xlu0 %v2941, 32
      %v3100 = vpop.permute.xlu0 %3099
      %3101 = vrot.lane.b32.xlu0 %v2944, 32
      %v3102 = vpop.permute.xlu0 %3101
      %3103 = vrot.lane.b32.xlu0 %v2946, 32
      %v3104 = vpop.permute.xlu0 %3103
      %3105 = vrot.lane.b32.xlu0 %v2949, 32
      %v3106 = vpop.permute.xlu0 %3105
      %3107 = vrot.lane.b32.xlu0 %v2951, 32
      %v3108 = vpop.permute.xlu0 %3107
      %3109 = vrot.lane.b32.xlu0 %v2954, 32
      %v3110 = vpop.permute.xlu0 %3109
      %3111 = vrot.lane.b32.xlu0 %v2956, 32
      %v3112 = vpop.permute.xlu0 %3111
      %3113 = vrot.lane.b32.xlu0 %v2959, 32
      %v3114 = vpop.permute.xlu0 %3113
      %3115 = vrot.lane.b32.xlu0 %v2961, 32
      %v3116 = vpop.permute.xlu0 %3115
      %3117 = vrot.lane.b32.xlu0 %v2964, 32
      %v3118 = vpop.permute.xlu0 %3117
      %3119 = vrot.lane.b32.xlu0 %v2966, 32
      %v3120 = vpop.permute.xlu0 %3119
      %3121 = vrot.lane.b32.xlu0 %v2969, 32
      %v3122 = vpop.permute.xlu0 %3121
      %3123 = vrot.lane.b32.xlu0 %v2971, 32
      %v3124 = vpop.permute.xlu0 %3123
      %3125 = vrot.lane.b32.xlu0 %v2974, 32
      %v3126 = vpop.permute.xlu0 %3125
      %3127 = vrot.lane.b32.xlu0 %v2976, 32
      %v3128 = vpop.permute.xlu0 %3127
      %vm3129 = vsmask.f32 5376
      %v3130 = vrot.slane %v885, 2
      %v3131 = vrot.slane %v887, 3
      %v3132 = vor.u32 %v3130, %v3131
      %v3133 = vrot.slane %v896, 2
      %v3134 = vrot.slane %v892, 3
      %v3135 = vor.u32 %v3133, %v3134
      %v3136 = vsel %vm3129, %v3132, %v3135
      %v3137 = vrot.slane %v2147, 2
      %v3138 = vrot.slane %v900, 3
      %v3139 = vor.u32 %v3137, %v3138
      %v3140 = vsel %vm3129, %v3135, %v3139
      %v3141 = vrot.slane %v905, 2
      %v3142 = vrot.slane %v907, 3
      %v3143 = vor.u32 %v3141, %v3142
      %v3144 = vrot.slane %v916, 2
      %v3145 = vrot.slane %v912, 3
      %v3146 = vor.u32 %v3144, %v3145
      %v3147 = vsel %vm3129, %v3143, %v3146
      %v3148 = vrot.slane %v2160, 2
      %v3149 = vrot.slane %v920, 3
      %v3150 = vor.u32 %v3148, %v3149
      %v3151 = vsel %vm3129, %v3146, %v3150
      %v3152 = vrot.slane %v925, 2
      %v3153 = vrot.slane %v927, 3
      %v3154 = vor.u32 %v3152, %v3153
      %v3155 = vrot.slane %v936, 2
      %v3156 = vrot.slane %v932, 3
      %v3157 = vor.u32 %v3155, %v3156
      %v3158 = vsel %vm3129, %v3154, %v3157
      %v3159 = vrot.slane %v2173, 2
      %v3160 = vrot.slane %v940, 3
      %v3161 = vor.u32 %v3159, %v3160
      %v3162 = vsel %vm3129, %v3157, %v3161
      %v3163 = vrot.slane %v945, 2
      %v3164 = vrot.slane %v947, 3
      %v3165 = vor.u32 %v3163, %v3164
      %v3166 = vrot.slane %v956, 2
      %v3167 = vrot.slane %v952, 3
      %v3168 = vor.u32 %v3166, %v3167
      %v3169 = vsel %vm3129, %v3165, %v3168
      %v3170 = vrot.slane %v2186, 2
      %v3171 = vrot.slane %v960, 3
      %v3172 = vor.u32 %v3170, %v3171
      %v3173 = vsel %vm3129, %v3168, %v3172
      %v3174 = vrot.slane %v965, 2
      %v3175 = vrot.slane %v967, 3
      %v3176 = vor.u32 %v3174, %v3175
      %v3177 = vrot.slane %v976, 2
      %v3178 = vrot.slane %v972, 3
      %v3179 = vor.u32 %v3177, %v3178
      %v3180 = vsel %vm3129, %v3176, %v3179
      %v3181 = vrot.slane %v2199, 2
      %v3182 = vrot.slane %v980, 3
      %v3183 = vor.u32 %v3181, %v3182
      %v3184 = vsel %vm3129, %v3179, %v3183
      %v3185 = vrot.slane %v985, 2
      %v3186 = vrot.slane %v987, 3
      %v3187 = vor.u32 %v3185, %v3186
      %v3188 = vrot.slane %v996, 2
      %v3189 = vrot.slane %v992, 3
      %v3190 = vor.u32 %v3188, %v3189
      %v3191 = vsel %vm3129, %v3187, %v3190
      %v3192 = vrot.slane %v2212, 2
      %v3193 = vrot.slane %v1000, 3
      %v3194 = vor.u32 %v3192, %v3193
      %v3195 = vsel %vm3129, %v3190, %v3194
      %v3196 = vrot.slane %v1005, 2
      %v3197 = vrot.slane %v1007, 3
      %v3198 = vor.u32 %v3196, %v3197
      %v3199 = vrot.slane %v1016, 2
      %v3200 = vrot.slane %v1012, 3
      %v3201 = vor.u32 %v3199, %v3200
      %v3202 = vsel %vm3129, %v3198, %v3201
      %v3203 = vrot.slane %v2225, 2
      %v3204 = vrot.slane %v1020, 3
      %v3205 = vor.u32 %v3203, %v3204
      %v3206 = vsel %vm3129, %v3201, %v3205
      %v3207 = vrot.slane %v1025, 2
      %v3208 = vrot.slane %v1027, 3
      %v3209 = vor.u32 %v3207, %v3208
      %v3210 = vrot.slane %v1036, 2
      %v3211 = vrot.slane %v1032, 3
      %v3212 = vor.u32 %v3210, %v3211
      %v3213 = vsel %vm3129, %v3209, %v3212
      %v3214 = vrot.slane %v2238, 2
      %v3215 = vrot.slane %v1040, 3
      %v3216 = vor.u32 %v3214, %v3215
      %v3217 = vsel %vm3129, %v3212, %v3216
      %v3218 = vrot.slane %v1045, 2
      %v3219 = vrot.slane %v1047, 3
      %v3220 = vor.u32 %v3218, %v3219
      %v3221 = vrot.slane %v1056, 2
      %v3222 = vrot.slane %v1052, 3
      %v3223 = vor.u32 %v3221, %v3222
      %v3224 = vsel %vm3129, %v3220, %v3223
      %v3225 = vrot.slane %v2251, 2
      %v3226 = vrot.slane %v1060, 3
      %v3227 = vor.u32 %v3225, %v3226
      %v3228 = vsel %vm3129, %v3223, %v3227
      %v3229 = vrot.slane %v1065, 2
      %v3230 = vrot.slane %v1067, 3
      %v3231 = vor.u32 %v3229, %v3230
      %v3232 = vrot.slane %v1076, 2
      %v3233 = vrot.slane %v1072, 3
      %v3234 = vor.u32 %v3232, %v3233
      %v3235 = vsel %vm3129, %v3231, %v3234
      %v3236 = vrot.slane %v2264, 2
      %v3237 = vrot.slane %v1080, 3
      %v3238 = vor.u32 %v3236, %v3237
      %v3239 = vsel %vm3129, %v3234, %v3238
      %v3240 = vrot.slane %v1085, 2
      %v3241 = vrot.slane %v1087, 3
      %v3242 = vor.u32 %v3240, %v3241
      %v3243 = vrot.slane %v1096, 2
      %v3244 = vrot.slane %v1092, 3
      %v3245 = vor.u32 %v3243, %v3244
      %v3246 = vsel %vm3129, %v3242, %v3245
      %v3247 = vrot.slane %v2277, 2
      %v3248 = vrot.slane %v1100, 3
      %v3249 = vor.u32 %v3247, %v3248
      %v3250 = vsel %vm3129, %v3245, %v3249
      %v3251 = vrot.slane %v1105, 2
      %v3252 = vrot.slane %v1107, 3
      %v3253 = vor.u32 %v3251, %v3252
      %v3254 = vrot.slane %v1116, 2
      %v3255 = vrot.slane %v1112, 3
      %v3256 = vor.u32 %v3254, %v3255
      %v3257 = vsel %vm3129, %v3253, %v3256
      %v3258 = vrot.slane %v2290, 2
      %v3259 = vrot.slane %v1120, 3
      %v3260 = vor.u32 %v3258, %v3259
      %v3261 = vsel %vm3129, %v3256, %v3260
      %v3262 = vrot.slane %v1125, 2
      %v3263 = vrot.slane %v1127, 3
      %v3264 = vor.u32 %v3262, %v3263
      %v3265 = vrot.slane %v1136, 2
      %v3266 = vrot.slane %v1132, 3
      %v3267 = vor.u32 %v3265, %v3266
      %v3268 = vsel %vm3129, %v3264, %v3267
      %v3269 = vrot.slane %v2303, 2
      %v3270 = vrot.slane %v1140, 3
      %v3271 = vor.u32 %v3269, %v3270
      %v3272 = vsel %vm3129, %v3267, %v3271
      %v3273 = vrot.slane %v1145, 2
      %v3274 = vrot.slane %v1147, 3
      %v3275 = vor.u32 %v3273, %v3274
      %v3276 = vrot.slane %v1156, 2
      %v3277 = vrot.slane %v1152, 3
      %v3278 = vor.u32 %v3276, %v3277
      %v3279 = vsel %vm3129, %v3275, %v3278
      %v3280 = vrot.slane %v2316, 2
      %v3281 = vrot.slane %v1160, 3
      %v3282 = vor.u32 %v3280, %v3281
      %v3283 = vsel %vm3129, %v3278, %v3282
      %v3284 = vrot.slane %v1165, 2
      %v3285 = vrot.slane %v1167, 3
      %v3286 = vor.u32 %v3284, %v3285
      %v3287 = vrot.slane %v1176, 2
      %v3288 = vrot.slane %v1172, 3
      %v3289 = vor.u32 %v3287, %v3288
      %v3290 = vsel %vm3129, %v3286, %v3289
      %v3291 = vrot.slane %v2329, 2
      %v3292 = vrot.slane %v1180, 3
      %v3293 = vor.u32 %v3291, %v3292
      %v3294 = vsel %vm3129, %v3289, %v3293
      %v3295 = vrot.slane %v1185, 2
      %v3296 = vrot.slane %v1187, 3
      %v3297 = vor.u32 %v3295, %v3296
      %v3298 = vrot.slane %v1196, 2
      %v3299 = vrot.slane %v1192, 3
      %v3300 = vor.u32 %v3298, %v3299
      %v3301 = vsel %vm3129, %v3297, %v3300
      %v3302 = vrot.slane %v2342, 2
      %v3303 = vrot.slane %v1200, 3
      %v3304 = vor.u32 %v3302, %v3303
      %v3305 = vsel %vm3129, %v3300, %v3304
      %v3306 = vrot.slane %v1205, 2
      %v3307 = vrot.slane %v1207, 3
      %v3308 = vor.u32 %v3306, %v3307
      %v3309 = vrot.slane %v1216, 2
      %v3310 = vrot.slane %v1212, 3
      %v3311 = vor.u32 %v3309, %v3310
      %v3312 = vsel %vm3129, %v3308, %v3311
      %v3313 = vrot.slane %v2355, 2
      %v3314 = vrot.slane %v1220, 3
      %v3315 = vor.u32 %v3313, %v3314
      %v3316 = vsel %vm3129, %v3311, %v3315
      %v3317 = vrot.slane %v1225, 2
      %v3318 = vrot.slane %v1227, 3
      %v3319 = vor.u32 %v3317, %v3318
      %v3320 = vrot.slane %v1236, 2
      %v3321 = vrot.slane %v1232, 3
      %v3322 = vor.u32 %v3320, %v3321
      %v3323 = vsel %vm3129, %v3319, %v3322
      %v3324 = vrot.slane %v2368, 2
      %v3325 = vrot.slane %v1240, 3
      %v3326 = vor.u32 %v3324, %v3325
      %v3327 = vsel %vm3129, %v3322, %v3326
      %v3328 = vrot.slane %v1245, 2
      %v3329 = vrot.slane %v1247, 3
      %v3330 = vor.u32 %v3328, %v3329
      %v3331 = vrot.slane %v1256, 2
      %v3332 = vrot.slane %v1252, 3
      %v3333 = vor.u32 %v3331, %v3332
      %v3334 = vsel %vm3129, %v3330, %v3333
      %v3335 = vrot.slane %v2381, 2
      %v3336 = vrot.slane %v1260, 3
      %v3337 = vor.u32 %v3335, %v3336
      %v3338 = vsel %vm3129, %v3333, %v3337
      %v3339 = vrot.slane %v1265, 2
      %v3340 = vrot.slane %v1267, 3
      %v3341 = vor.u32 %v3339, %v3340
      %v3342 = vrot.slane %v1276, 2
      %v3343 = vrot.slane %v1272, 3
      %v3344 = vor.u32 %v3342, %v3343
      %v3345 = vsel %vm3129, %v3341, %v3344
      %v3346 = vrot.slane %v2394, 2
      %v3347 = vrot.slane %v1280, 3
      %v3348 = vor.u32 %v3346, %v3347
      %v3349 = vsel %vm3129, %v3344, %v3348
      %v3350 = vrot.slane %v1285, 2
      %v3351 = vrot.slane %v1287, 3
      %v3352 = vor.u32 %v3350, %v3351
      %v3353 = vrot.slane %v1296, 2
      %v3354 = vrot.slane %v1292, 3
      %v3355 = vor.u32 %v3353, %v3354
      %v3356 = vsel %vm3129, %v3352, %v3355
      %v3357 = vrot.slane %v2407, 2
      %v3358 = vrot.slane %v1300, 3
      %v3359 = vor.u32 %v3357, %v3358
      %v3360 = vsel %vm3129, %v3355, %v3359
      %v3361 = vrot.slane %v1305, 2
      %v3362 = vrot.slane %v1307, 3
      %v3363 = vor.u32 %v3361, %v3362
      %v3364 = vrot.slane %v1316, 2
      %v3365 = vrot.slane %v1312, 3
      %v3366 = vor.u32 %v3364, %v3365
      %v3367 = vsel %vm3129, %v3363, %v3366
      %v3368 = vrot.slane %v2420, 2
      %v3369 = vrot.slane %v1320, 3
      %v3370 = vor.u32 %v3368, %v3369
      %v3371 = vsel %vm3129, %v3366, %v3370
      %v3372 = vrot.slane %v1325, 2
      %v3373 = vrot.slane %v1327, 3
      %v3374 = vor.u32 %v3372, %v3373
      %v3375 = vrot.slane %v1336, 2
      %v3376 = vrot.slane %v1332, 3
      %v3377 = vor.u32 %v3375, %v3376
      %v3378 = vsel %vm3129, %v3374, %v3377
      %v3379 = vrot.slane %v2433, 2
      %v3380 = vrot.slane %v1340, 3
      %v3381 = vor.u32 %v3379, %v3380
      %v3382 = vsel %vm3129, %v3377, %v3381
      %v3383 = vrot.slane %v1345, 2
      %v3384 = vrot.slane %v1347, 3
      %v3385 = vor.u32 %v3383, %v3384
      %v3386 = vrot.slane %v1356, 2
      %v3387 = vrot.slane %v1352, 3
      %v3388 = vor.u32 %v3386, %v3387
      %v3389 = vsel %vm3129, %v3385, %v3388
      %v3390 = vrot.slane %v2446, 2
      %v3391 = vrot.slane %v1360, 3
      %v3392 = vor.u32 %v3390, %v3391
      %v3393 = vsel %vm3129, %v3388, %v3392
      %v3394 = vrot.slane %v1365, 2
      %v3395 = vrot.slane %v1367, 3
      %v3396 = vor.u32 %v3394, %v3395
      %v3397 = vrot.slane %v1376, 2
      %v3398 = vrot.slane %v1372, 3
      %v3399 = vor.u32 %v3397, %v3398
      %v3400 = vsel %vm3129, %v3396, %v3399
      %v3401 = vrot.slane %v2459, 2
      %v3402 = vrot.slane %v1380, 3
      %v3403 = vor.u32 %v3401, %v3402
      %v3404 = vsel %vm3129, %v3399, %v3403
      %v3405 = vrot.slane %v1385, 2
      %v3406 = vrot.slane %v1387, 3
      %v3407 = vor.u32 %v3405, %v3406
      %v3408 = vrot.slane %v1396, 2
      %v3409 = vrot.slane %v1392, 3
      %v3410 = vor.u32 %v3408, %v3409
      %v3411 = vsel %vm3129, %v3407, %v3410
      %v3412 = vrot.slane %v2472, 2
      %v3413 = vrot.slane %v1400, 3
      %v3414 = vor.u32 %v3412, %v3413
      %v3415 = vsel %vm3129, %v3410, %v3414
      %v3416 = vrot.slane %v1405, 2
      %v3417 = vrot.slane %v1407, 3
      %v3418 = vor.u32 %v3416, %v3417
      %v3419 = vrot.slane %v1416, 2
      %v3420 = vrot.slane %v1412, 3
      %v3421 = vor.u32 %v3419, %v3420
      %v3422 = vsel %vm3129, %v3418, %v3421
      %v3423 = vrot.slane %v2485, 2
      %v3424 = vrot.slane %v1420, 3
      %v3425 = vor.u32 %v3423, %v3424
      %v3426 = vsel %vm3129, %v3421, %v3425
      %v3427 = vrot.slane %v1425, 2
      %v3428 = vrot.slane %v1427, 3
      %v3429 = vor.u32 %v3427, %v3428
      %v3430 = vrot.slane %v1436, 2
      %v3431 = vrot.slane %v1432, 3
      %v3432 = vor.u32 %v3430, %v3431
      %v3433 = vsel %vm3129, %v3429, %v3432
      %v3434 = vrot.slane %v2498, 2
      %v3435 = vrot.slane %v1440, 3
      %v3436 = vor.u32 %v3434, %v3435
      %v3437 = vsel %vm3129, %v3432, %v3436
      %v3438 = vrot.slane %v1445, 2
      %v3439 = vrot.slane %v1447, 3
      %v3440 = vor.u32 %v3438, %v3439
      %v3441 = vrot.slane %v1456, 2
      %v3442 = vrot.slane %v1452, 3
      %v3443 = vor.u32 %v3441, %v3442
      %v3444 = vsel %vm3129, %v3440, %v3443
      %v3445 = vrot.slane %v2511, 2
      %v3446 = vrot.slane %v1460, 3
      %v3447 = vor.u32 %v3445, %v3446
      %v3448 = vsel %vm3129, %v3443, %v3447
      %v3449 = vrot.slane %v1465, 2
      %v3450 = vrot.slane %v1467, 3
      %v3451 = vor.u32 %v3449, %v3450
      %v3452 = vrot.slane %v1476, 2
      %v3453 = vrot.slane %v1472, 3
      %v3454 = vor.u32 %v3452, %v3453
      %v3455 = vsel %vm3129, %v3451, %v3454
      %v3456 = vrot.slane %v2524, 2
      %v3457 = vrot.slane %v1480, 3
      %v3458 = vor.u32 %v3456, %v3457
      %v3459 = vsel %vm3129, %v3454, %v3458
      %v3460 = vrot.slane %v1485, 2
      %v3461 = vrot.slane %v1487, 3
      %v3462 = vor.u32 %v3460, %v3461
      %v3463 = vrot.slane %v1496, 2
      %v3464 = vrot.slane %v1492, 3
      %v3465 = vor.u32 %v3463, %v3464
      %v3466 = vsel %vm3129, %v3462, %v3465
      %v3467 = vrot.slane %v2537, 2
      %v3468 = vrot.slane %v1500, 3
      %v3469 = vor.u32 %v3467, %v3468
      %v3470 = vsel %vm3129, %v3465, %v3469
      %v3471 = vrot.slane %v1505, 2
      %v3472 = vrot.slane %v1507, 3
      %v3473 = vor.u32 %v3471, %v3472
      %v3474 = vrot.slane %v1516, 2
      %v3475 = vrot.slane %v1512, 3
      %v3476 = vor.u32 %v3474, %v3475
      %v3477 = vsel %vm3129, %v3473, %v3476
      %v3478 = vrot.slane %v2550, 2
      %v3479 = vrot.slane %v1520, 3
      %v3480 = vor.u32 %v3478, %v3479
      %v3481 = vsel %vm3129, %v3476, %v3480
      %v3482 = vrot.slane %v1525, 2
      %v3483 = vrot.slane %v1527, 3
      %v3484 = vor.u32 %v3482, %v3483
      %v3485 = vrot.slane %v1536, 2
      %v3486 = vrot.slane %v1532, 3
      %v3487 = vor.u32 %v3485, %v3486
      %v3488 = vsel %vm3129, %v3484, %v3487
      %v3489 = vrot.slane %v2563, 2
      %v3490 = vrot.slane %v1540, 3
      %v3491 = vor.u32 %v3489, %v3490
      %v3492 = vsel %vm3129, %v3487, %v3491
      %v3493 = vrot.slane %v1545, 2
      %v3494 = vrot.slane %v1547, 3
      %v3495 = vor.u32 %v3493, %v3494
      %v3496 = vrot.slane %v1556, 2
      %v3497 = vrot.slane %v1552, 3
      %v3498 = vor.u32 %v3496, %v3497
      %v3499 = vsel %vm3129, %v3495, %v3498
      %v3500 = vrot.slane %v2576, 2
      %v3501 = vrot.slane %v1560, 3
      %v3502 = vor.u32 %v3500, %v3501
      %v3503 = vsel %vm3129, %v3498, %v3502
      %v3504 = vrot.slane %v1565, 2
      %v3505 = vrot.slane %v1567, 3
      %v3506 = vor.u32 %v3504, %v3505
      %v3507 = vrot.slane %v1576, 2
      %v3508 = vrot.slane %v1572, 3
      %v3509 = vor.u32 %v3507, %v3508
      %v3510 = vsel %vm3129, %v3506, %v3509
      %v3511 = vrot.slane %v2589, 2
      %v3512 = vrot.slane %v1580, 3
      %v3513 = vor.u32 %v3511, %v3512
      %v3514 = vsel %vm3129, %v3509, %v3513
      %v3515 = vrot.slane %v1585, 2
      %v3516 = vrot.slane %v1587, 3
      %v3517 = vor.u32 %v3515, %v3516
      %v3518 = vrot.slane %v1596, 2
      %v3519 = vrot.slane %v1592, 3
      %v3520 = vor.u32 %v3518, %v3519
      %v3521 = vsel %vm3129, %v3517, %v3520
      %v3522 = vrot.slane %v2602, 2
      %v3523 = vrot.slane %v1600, 3
      %v3524 = vor.u32 %v3522, %v3523
      %v3525 = vsel %vm3129, %v3520, %v3524
      %v3526 = vrot.slane %v1605, 2
      %v3527 = vrot.slane %v1607, 3
      %v3528 = vor.u32 %v3526, %v3527
      %v3529 = vrot.slane %v1616, 2
      %v3530 = vrot.slane %v1612, 3
      %v3531 = vor.u32 %v3529, %v3530
      %v3532 = vsel %vm3129, %v3528, %v3531
      %v3533 = vrot.slane %v2615, 2
      %v3534 = vrot.slane %v1620, 3
      %v3535 = vor.u32 %v3533, %v3534
      %v3536 = vsel %vm3129, %v3531, %v3535
      %v3537 = vrot.slane %v1625, 2
      %v3538 = vrot.slane %v1627, 3
      %v3539 = vor.u32 %v3537, %v3538
      %v3540 = vrot.slane %v1636, 2
      %v3541 = vrot.slane %v1632, 3
      %v3542 = vor.u32 %v3540, %v3541
      %v3543 = vsel %vm3129, %v3539, %v3542
      %v3544 = vrot.slane %v2628, 2
      %v3545 = vrot.slane %v1640, 3
      %v3546 = vor.u32 %v3544, %v3545
      %v3547 = vsel %vm3129, %v3542, %v3546
      %3548 = vrot.lane.b32.xlu0 %v3136, 40
      %v3549 = vpop.permute.xlu0 %3548
      %3550 = vrot.lane.b32.xlu0 %v3140, 40
      %v3551 = vpop.permute.xlu0 %3550
      %3552 = vrot.lane.b32.xlu0 %v3147, 40
      %v3553 = vpop.permute.xlu0 %3552
      %3554 = vrot.lane.b32.xlu0 %v3151, 40
      %v3555 = vpop.permute.xlu0 %3554
      %3556 = vrot.lane.b32.xlu0 %v3158, 40
      %v3557 = vpop.permute.xlu0 %3556
      %3558 = vrot.lane.b32.xlu0 %v3162, 40
      %v3559 = vpop.permute.xlu0 %3558
      %3560 = vrot.lane.b32.xlu0 %v3169, 40
      %v3561 = vpop.permute.xlu0 %3560
      %3562 = vrot.lane.b32.xlu0 %v3173, 40
      %v3563 = vpop.permute.xlu0 %3562
      %3564 = vrot.lane.b32.xlu0 %v3180, 40
      %v3565 = vpop.permute.xlu0 %3564
      %3566 = vrot.lane.b32.xlu0 %v3184, 40
      %v3567 = vpop.permute.xlu0 %3566
      %3568 = vrot.lane.b32.xlu0 %v3191, 40
      %v3569 = vpop.permute.xlu0 %3568
      %3570 = vrot.lane.b32.xlu0 %v3195, 40
      %v3571 = vpop.permute.xlu0 %3570
      %3572 = vrot.lane.b32.xlu0 %v3202, 40
      %v3573 = vpop.permute.xlu0 %3572
      %3574 = vrot.lane.b32.xlu0 %v3206, 40
      %v3575 = vpop.permute.xlu0 %3574
      %3576 = vrot.lane.b32.xlu0 %v3213, 40
      %v3577 = vpop.permute.xlu0 %3576
      %3578 = vrot.lane.b32.xlu0 %v3217, 40
      %v3579 = vpop.permute.xlu0 %3578
      %3580 = vrot.lane.b32.xlu0 %v3224, 40
      %v3581 = vpop.permute.xlu0 %3580
      %3582 = vrot.lane.b32.xlu0 %v3228, 40
      %v3583 = vpop.permute.xlu0 %3582
      %3584 = vrot.lane.b32.xlu0 %v3235, 40
      %v3585 = vpop.permute.xlu0 %3584
      %3586 = vrot.lane.b32.xlu0 %v3239, 40
      %v3587 = vpop.permute.xlu0 %3586
      %3588 = vrot.lane.b32.xlu0 %v3246, 40
      %v3589 = vpop.permute.xlu0 %3588
      %3590 = vrot.lane.b32.xlu0 %v3250, 40
      %v3591 = vpop.permute.xlu0 %3590
      %3592 = vrot.lane.b32.xlu0 %v3257, 40
      %v3593 = vpop.permute.xlu0 %3592
      %3594 = vrot.lane.b32.xlu0 %v3261, 40
      %v3595 = vpop.permute.xlu0 %3594
      %3596 = vrot.lane.b32.xlu0 %v3268, 40
      %v3597 = vpop.permute.xlu0 %3596
      %3598 = vrot.lane.b32.xlu0 %v3272, 40
      %v3599 = vpop.permute.xlu0 %3598
      %3600 = vrot.lane.b32.xlu0 %v3279, 40
      %v3601 = vpop.permute.xlu0 %3600
      %3602 = vrot.lane.b32.xlu0 %v3283, 40
      %v3603 = vpop.permute.xlu0 %3602
      %3604 = vrot.lane.b32.xlu0 %v3290, 40
      %v3605 = vpop.permute.xlu0 %3604
      %3606 = vrot.lane.b32.xlu0 %v3294, 40
      %v3607 = vpop.permute.xlu0 %3606
      %3608 = vrot.lane.b32.xlu0 %v3301, 40
      %v3609 = vpop.permute.xlu0 %3608
      %3610 = vrot.lane.b32.xlu0 %v3305, 40
      %v3611 = vpop.permute.xlu0 %3610
      %3612 = vrot.lane.b32.xlu0 %v3312, 40
      %v3613 = vpop.permute.xlu0 %3612
      %3614 = vrot.lane.b32.xlu0 %v3316, 40
      %v3615 = vpop.permute.xlu0 %3614
      %3616 = vrot.lane.b32.xlu0 %v3323, 40
      %v3617 = vpop.permute.xlu0 %3616
      %3618 = vrot.lane.b32.xlu0 %v3327, 40
      %v3619 = vpop.permute.xlu0 %3618
      %3620 = vrot.lane.b32.xlu0 %v3334, 40
      %v3621 = vpop.permute.xlu0 %3620
      %3622 = vrot.lane.b32.xlu0 %v3338, 40
      %v3623 = vpop.permute.xlu0 %3622
      %3624 = vrot.lane.b32.xlu0 %v3345, 40
      %v3625 = vpop.permute.xlu0 %3624
      %3626 = vrot.lane.b32.xlu0 %v3349, 40
      %v3627 = vpop.permute.xlu0 %3626
      %3628 = vrot.lane.b32.xlu0 %v3356, 40
      %v3629 = vpop.permute.xlu0 %3628
      %3630 = vrot.lane.b32.xlu0 %v3360, 40
      %v3631 = vpop.permute.xlu0 %3630
      %3632 = vrot.lane.b32.xlu0 %v3367, 40
      %v3633 = vpop.permute.xlu0 %3632
      %3634 = vrot.lane.b32.xlu0 %v3371, 40
      %v3635 = vpop.permute.xlu0 %3634
      %3636 = vrot.lane.b32.xlu0 %v3378, 40
      %v3637 = vpop.permute.xlu0 %3636
      %3638 = vrot.lane.b32.xlu0 %v3382, 40
      %v3639 = vpop.permute.xlu0 %3638
      %3640 = vrot.lane.b32.xlu0 %v3389, 40
      %v3641 = vpop.permute.xlu0 %3640
      %3642 = vrot.lane.b32.xlu0 %v3393, 40
      %v3643 = vpop.permute.xlu0 %3642
      %3644 = vrot.lane.b32.xlu0 %v3400, 40
      %v3645 = vpop.permute.xlu0 %3644
      %3646 = vrot.lane.b32.xlu0 %v3404, 40
      %v3647 = vpop.permute.xlu0 %3646
      %3648 = vrot.lane.b32.xlu0 %v3411, 40
      %v3649 = vpop.permute.xlu0 %3648
      %3650 = vrot.lane.b32.xlu0 %v3415, 40
      %v3651 = vpop.permute.xlu0 %3650
      %3652 = vrot.lane.b32.xlu0 %v3422, 40
      %v3653 = vpop.permute.xlu0 %3652
      %3654 = vrot.lane.b32.xlu0 %v3426, 40
      %v3655 = vpop.permute.xlu0 %3654
      %3656 = vrot.lane.b32.xlu0 %v3433, 40
      %v3657 = vpop.permute.xlu0 %3656
      %3658 = vrot.lane.b32.xlu0 %v3437, 40
      %v3659 = vpop.permute.xlu0 %3658
      %3660 = vrot.lane.b32.xlu0 %v3444, 40
      %v3661 = vpop.permute.xlu0 %3660
      %3662 = vrot.lane.b32.xlu0 %v3448, 40
      %v3663 = vpop.permute.xlu0 %3662
      %3664 = vrot.lane.b32.xlu0 %v3455, 40
      %v3665 = vpop.permute.xlu0 %3664
      %3666 = vrot.lane.b32.xlu0 %v3459, 40
      %v3667 = vpop.permute.xlu0 %3666
      %3668 = vrot.lane.b32.xlu0 %v3466, 40
      %v3669 = vpop.permute.xlu0 %3668
      %3670 = vrot.lane.b32.xlu0 %v3470, 40
      %v3671 = vpop.permute.xlu0 %3670
      %3672 = vrot.lane.b32.xlu0 %v3477, 40
      %v3673 = vpop.permute.xlu0 %3672
      %3674 = vrot.lane.b32.xlu0 %v3481, 40
      %v3675 = vpop.permute.xlu0 %3674
      %3676 = vrot.lane.b32.xlu0 %v3488, 40
      %v3677 = vpop.permute.xlu0 %3676
      %3678 = vrot.lane.b32.xlu0 %v3492, 40
      %v3679 = vpop.permute.xlu0 %3678
      %3680 = vrot.lane.b32.xlu0 %v3499, 40
      %v3681 = vpop.permute.xlu0 %3680
      %3682 = vrot.lane.b32.xlu0 %v3503, 40
      %v3683 = vpop.permute.xlu0 %3682
      %3684 = vrot.lane.b32.xlu0 %v3510, 40
      %v3685 = vpop.permute.xlu0 %3684
      %3686 = vrot.lane.b32.xlu0 %v3514, 40
      %v3687 = vpop.permute.xlu0 %3686
      %3688 = vrot.lane.b32.xlu0 %v3521, 40
      %v3689 = vpop.permute.xlu0 %3688
      %3690 = vrot.lane.b32.xlu0 %v3525, 40
      %v3691 = vpop.permute.xlu0 %3690
      %3692 = vrot.lane.b32.xlu0 %v3532, 40
      %v3693 = vpop.permute.xlu0 %3692
      %3694 = vrot.lane.b32.xlu0 %v3536, 40
      %v3695 = vpop.permute.xlu0 %3694
      %3696 = vrot.lane.b32.xlu0 %v3543, 40
      %v3697 = vpop.permute.xlu0 %3696
      %3698 = vrot.lane.b32.xlu0 %v3547, 40
      %v3699 = vpop.permute.xlu0 %3698
      %vm3700 = vcmask 1044480
      %v3701 = vrot.slane %v693, 3
      %v3702 = vrot.slane %v694, 3
      %v3703 = vsel %vm3700, %v3701, %v3702
      %v3704 = vrot.slane %v845, 3
      %v3705 = vsel %vm3700, %v3702, %v3704
      %v3706 = vrot.slane %v695, 3
      %v3707 = vrot.slane %v696, 3
      %v3708 = vsel %vm3700, %v3706, %v3707
      %v3709 = vrot.slane %v846, 3
      %v3710 = vsel %vm3700, %v3707, %v3709
      %v3711 = vrot.slane %v697, 3
      %v3712 = vrot.slane %v698, 3
      %v3713 = vsel %vm3700, %v3711, %v3712
      %v3714 = vrot.slane %v847, 3
      %v3715 = vsel %vm3700, %v3712, %v3714
      %v3716 = vrot.slane %v699, 3
      %v3717 = vrot.slane %v700, 3
      %v3718 = vsel %vm3700, %v3716, %v3717
      %v3719 = vrot.slane %v848, 3
      %v3720 = vsel %vm3700, %v3717, %v3719
      %v3721 = vrot.slane %v701, 3
      %v3722 = vrot.slane %v702, 3
      %v3723 = vsel %vm3700, %v3721, %v3722
      %v3724 = vrot.slane %v849, 3
      %v3725 = vsel %vm3700, %v3722, %v3724
      %v3726 = vrot.slane %v703, 3
      %v3727 = vrot.slane %v704, 3
      %v3728 = vsel %vm3700, %v3726, %v3727
      %v3729 = vrot.slane %v850, 3
      %v3730 = vsel %vm3700, %v3727, %v3729
      %v3731 = vrot.slane %v705, 3
      %v3732 = vrot.slane %v706, 3
      %v3733 = vsel %vm3700, %v3731, %v3732
      %v3734 = vrot.slane %v851, 3
      %v3735 = vsel %vm3700, %v3732, %v3734
      %v3736 = vrot.slane %v707, 3
      %v3737 = vrot.slane %v708, 3
      %v3738 = vsel %vm3700, %v3736, %v3737
      %v3739 = vrot.slane %v852, 3
      %v3740 = vsel %vm3700, %v3737, %v3739
      %v3741 = vrot.slane %v709, 3
      %v3742 = vrot.slane %v710, 3
      %v3743 = vsel %vm3700, %v3741, %v3742
      %v3744 = vrot.slane %v853, 3
      %v3745 = vsel %vm3700, %v3742, %v3744
      %v3746 = vrot.slane %v711, 3
      %v3747 = vrot.slane %v712, 3
      %v3748 = vsel %vm3700, %v3746, %v3747
      %v3749 = vrot.slane %v854, 3
      %v3750 = vsel %vm3700, %v3747, %v3749
      %v3751 = vrot.slane %v713, 3
      %v3752 = vrot.slane %v714, 3
      %v3753 = vsel %vm3700, %v3751, %v3752
      %v3754 = vrot.slane %v855, 3
      %v3755 = vsel %vm3700, %v3752, %v3754
      %v3756 = vrot.slane %v715, 3
      %v3757 = vrot.slane %v716, 3
      %v3758 = vsel %vm3700, %v3756, %v3757
      %v3759 = vrot.slane %v856, 3
      %v3760 = vsel %vm3700, %v3757, %v3759
      %v3761 = vrot.slane %v717, 3
      %v3762 = vrot.slane %v718, 3
      %v3763 = vsel %vm3700, %v3761, %v3762
      %v3764 = vrot.slane %v857, 3
      %v3765 = vsel %vm3700, %v3762, %v3764
      %v3766 = vrot.slane %v719, 3
      %v3767 = vrot.slane %v720, 3
      %v3768 = vsel %vm3700, %v3766, %v3767
      %v3769 = vrot.slane %v858, 3
      %v3770 = vsel %vm3700, %v3767, %v3769
      %v3771 = vrot.slane %v721, 3
      %v3772 = vrot.slane %v722, 3
      %v3773 = vsel %vm3700, %v3771, %v3772
      %v3774 = vrot.slane %v859, 3
      %v3775 = vsel %vm3700, %v3772, %v3774
      %v3776 = vrot.slane %v723, 3
      %v3777 = vrot.slane %v724, 3
      %v3778 = vsel %vm3700, %v3776, %v3777
      %v3779 = vrot.slane %v860, 3
      %v3780 = vsel %vm3700, %v3777, %v3779
      %v3781 = vrot.slane %v725, 3
      %v3782 = vrot.slane %v726, 3
      %v3783 = vsel %vm3700, %v3781, %v3782
      %v3784 = vrot.slane %v861, 3
      %v3785 = vsel %vm3700, %v3782, %v3784
      %v3786 = vrot.slane %v727, 3
      %v3787 = vrot.slane %v728, 3
      %v3788 = vsel %vm3700, %v3786, %v3787
      %v3789 = vrot.slane %v862, 3
      %v3790 = vsel %vm3700, %v3787, %v3789
      %v3791 = vrot.slane %v729, 3
      %v3792 = vrot.slane %v730, 3
      %v3793 = vsel %vm3700, %v3791, %v3792
      %v3794 = vrot.slane %v863, 3
      %v3795 = vsel %vm3700, %v3792, %v3794
      %v3796 = vrot.slane %v731, 3
      %v3797 = vrot.slane %v732, 3
      %v3798 = vsel %vm3700, %v3796, %v3797
      %v3799 = vrot.slane %v864, 3
      %v3800 = vsel %vm3700, %v3797, %v3799
      %v3801 = vrot.slane %v733, 3
      %v3802 = vrot.slane %v734, 3
      %v3803 = vsel %vm3700, %v3801, %v3802
      %v3804 = vrot.slane %v865, 3
      %v3805 = vsel %vm3700, %v3802, %v3804
      %v3806 = vrot.slane %v735, 3
      %v3807 = vrot.slane %v736, 3
      %v3808 = vsel %vm3700, %v3806, %v3807
      %v3809 = vrot.slane %v866, 3
      %v3810 = vsel %vm3700, %v3807, %v3809
      %v3811 = vrot.slane %v737, 3
      %v3812 = vrot.slane %v738, 3
      %v3813 = vsel %vm3700, %v3811, %v3812
      %v3814 = vrot.slane %v867, 3
      %v3815 = vsel %vm3700, %v3812, %v3814
      %v3816 = vrot.slane %v739, 3
      %v3817 = vrot.slane %v740, 3
      %v3818 = vsel %vm3700, %v3816, %v3817
      %v3819 = vrot.slane %v868, 3
      %v3820 = vsel %vm3700, %v3817, %v3819
      %v3821 = vrot.slane %v741, 3
      %v3822 = vrot.slane %v742, 3
      %v3823 = vsel %vm3700, %v3821, %v3822
      %v3824 = vrot.slane %v869, 3
      %v3825 = vsel %vm3700, %v3822, %v3824
      %v3826 = vrot.slane %v743, 3
      %v3827 = vrot.slane %v744, 3
      %v3828 = vsel %vm3700, %v3826, %v3827
      %v3829 = vrot.slane %v870, 3
      %v3830 = vsel %vm3700, %v3827, %v3829
      %v3831 = vrot.slane %v745, 3
      %v3832 = vrot.slane %v746, 3
      %v3833 = vsel %vm3700, %v3831, %v3832
      %v3834 = vrot.slane %v871, 3
      %v3835 = vsel %vm3700, %v3832, %v3834
      %v3836 = vrot.slane %v747, 3
      %v3837 = vrot.slane %v748, 3
      %v3838 = vsel %vm3700, %v3836, %v3837
      %v3839 = vrot.slane %v872, 3
      %v3840 = vsel %vm3700, %v3837, %v3839
      %v3841 = vrot.slane %v749, 3
      %v3842 = vrot.slane %v750, 3
      %v3843 = vsel %vm3700, %v3841, %v3842
      %v3844 = vrot.slane %v873, 3
      %v3845 = vsel %vm3700, %v3842, %v3844
      %v3846 = vrot.slane %v751, 3
      %v3847 = vrot.slane %v752, 3
      %v3848 = vsel %vm3700, %v3846, %v3847
      %v3849 = vrot.slane %v874, 3
      %v3850 = vsel %vm3700, %v3847, %v3849
      %v3851 = vrot.slane %v753, 3
      %v3852 = vrot.slane %v754, 3
      %v3853 = vsel %vm3700, %v3851, %v3852
      %v3854 = vrot.slane %v875, 3
      %v3855 = vsel %vm3700, %v3852, %v3854
      %v3856 = vrot.slane %v755, 3
      %v3857 = vrot.slane %v756, 3
      %v3858 = vsel %vm3700, %v3856, %v3857
      %v3859 = vrot.slane %v876, 3
      %v3860 = vsel %vm3700, %v3857, %v3859
      %v3861 = vrot.slane %v757, 3
      %v3862 = vrot.slane %v758, 3
      %v3863 = vsel %vm3700, %v3861, %v3862
      %v3864 = vrot.slane %v877, 3
      %v3865 = vsel %vm3700, %v3862, %v3864
      %v3866 = vrot.slane %v759, 3
      %v3867 = vrot.slane %v760, 3
      %v3868 = vsel %vm3700, %v3866, %v3867
      %v3869 = vrot.slane %v878, 3
      %v3870 = vsel %vm3700, %v3867, %v3869
      %v3871 = vrot.slane %v761, 3
      %v3872 = vrot.slane %v762, 3
      %v3873 = vsel %vm3700, %v3871, %v3872
      %v3874 = vrot.slane %v879, 3
      %v3875 = vsel %vm3700, %v3872, %v3874
      %v3876 = vrot.slane %v763, 3
      %v3877 = vrot.slane %v764, 3
      %v3878 = vsel %vm3700, %v3876, %v3877
      %v3879 = vrot.slane %v880, 3
      %v3880 = vsel %vm3700, %v3877, %v3879
      %v3881 = vrot.slane %v765, 3
      %v3882 = vrot.slane %v766, 3
      %v3883 = vsel %vm3700, %v3881, %v3882
      %v3884 = vrot.slane %v881, 3
      %v3885 = vsel %vm3700, %v3882, %v3884
      %v3886 = vrot.slane %v767, 3
      %v3887 = vrot.slane %v768, 3
      %v3888 = vsel %vm3700, %v3886, %v3887
      %v3889 = vrot.slane %v882, 3
      %v3890 = vsel %vm3700, %v3887, %v3889
      %3891 = vrot.lane.b32.xlu0 %v3703, 48
      %v3892 = vpop.permute.xlu0 %3891
      %3893 = vrot.lane.b32.xlu0 %v3705, 48
      %v3894 = vpop.permute.xlu0 %3893
      %3895 = vrot.lane.b32.xlu0 %v3708, 48
      %v3896 = vpop.permute.xlu0 %3895
      %3897 = vrot.lane.b32.xlu0 %v3710, 48
      %v3898 = vpop.permute.xlu0 %3897
      %3899 = vrot.lane.b32.xlu0 %v3713, 48
      %v3900 = vpop.permute.xlu0 %3899
      %3901 = vrot.lane.b32.xlu0 %v3715, 48
      %v3902 = vpop.permute.xlu0 %3901
      %3903 = vrot.lane.b32.xlu0 %v3718, 48
      %v3904 = vpop.permute.xlu0 %3903
      %3905 = vrot.lane.b32.xlu0 %v3720, 48
      %v3906 = vpop.permute.xlu0 %3905
      %3907 = vrot.lane.b32.xlu0 %v3723, 48
      %v3908 = vpop.permute.xlu0 %3907
      %3909 = vrot.lane.b32.xlu0 %v3725, 48
      %v3910 = vpop.permute.xlu0 %3909
      %3911 = vrot.lane.b32.xlu0 %v3728, 48
      %v3912 = vpop.permute.xlu0 %3911
      %3913 = vrot.lane.b32.xlu0 %v3730, 48
      %v3914 = vpop.permute.xlu0 %3913
      %3915 = vrot.lane.b32.xlu0 %v3733, 48
      %v3916 = vpop.permute.xlu0 %3915
      %3917 = vrot.lane.b32.xlu0 %v3735, 48
      %v3918 = vpop.permute.xlu0 %3917
      %3919 = vrot.lane.b32.xlu0 %v3738, 48
      %v3920 = vpop.permute.xlu0 %3919
      %3921 = vrot.lane.b32.xlu0 %v3740, 48
      %v3922 = vpop.permute.xlu0 %3921
      %3923 = vrot.lane.b32.xlu0 %v3743, 48
      %v3924 = vpop.permute.xlu0 %3923
      %3925 = vrot.lane.b32.xlu0 %v3745, 48
      %v3926 = vpop.permute.xlu0 %3925
      %3927 = vrot.lane.b32.xlu0 %v3748, 48
      %v3928 = vpop.permute.xlu0 %3927
      %3929 = vrot.lane.b32.xlu0 %v3750, 48
      %v3930 = vpop.permute.xlu0 %3929
      %3931 = vrot.lane.b32.xlu0 %v3753, 48
      %v3932 = vpop.permute.xlu0 %3931
      %3933 = vrot.lane.b32.xlu0 %v3755, 48
      %v3934 = vpop.permute.xlu0 %3933
      %3935 = vrot.lane.b32.xlu0 %v3758, 48
      %v3936 = vpop.permute.xlu0 %3935
      %3937 = vrot.lane.b32.xlu0 %v3760, 48
      %v3938 = vpop.permute.xlu0 %3937
      %3939 = vrot.lane.b32.xlu0 %v3763, 48
      %v3940 = vpop.permute.xlu0 %3939
      %3941 = vrot.lane.b32.xlu0 %v3765, 48
      %v3942 = vpop.permute.xlu0 %3941
      %3943 = vrot.lane.b32.xlu0 %v3768, 48
      %v3944 = vpop.permute.xlu0 %3943
      %3945 = vrot.lane.b32.xlu0 %v3770, 48
      %v3946 = vpop.permute.xlu0 %3945
      %3947 = vrot.lane.b32.xlu0 %v3773, 48
      %v3948 = vpop.permute.xlu0 %3947
      %3949 = vrot.lane.b32.xlu0 %v3775, 48
      %v3950 = vpop.permute.xlu0 %3949
      %3951 = vrot.lane.b32.xlu0 %v3778, 48
      %v3952 = vpop.permute.xlu0 %3951
      %3953 = vrot.lane.b32.xlu0 %v3780, 48
      %v3954 = vpop.permute.xlu0 %3953
      %3955 = vrot.lane.b32.xlu0 %v3783, 48
      %v3956 = vpop.permute.xlu0 %3955
      %3957 = vrot.lane.b32.xlu0 %v3785, 48
      %v3958 = vpop.permute.xlu0 %3957
      %3959 = vrot.lane.b32.xlu0 %v3788, 48
      %v3960 = vpop.permute.xlu0 %3959
      %3961 = vrot.lane.b32.xlu0 %v3790, 48
      %v3962 = vpop.permute.xlu0 %3961
      %3963 = vrot.lane.b32.xlu0 %v3793, 48
      %v3964 = vpop.permute.xlu0 %3963
      %3965 = vrot.lane.b32.xlu0 %v3795, 48
      %v3966 = vpop.permute.xlu0 %3965
      %3967 = vrot.lane.b32.xlu0 %v3798, 48
      %v3968 = vpop.permute.xlu0 %3967
      %3969 = vrot.lane.b32.xlu0 %v3800, 48
      %v3970 = vpop.permute.xlu0 %3969
      %3971 = vrot.lane.b32.xlu0 %v3803, 48
      %v3972 = vpop.permute.xlu0 %3971
      %3973 = vrot.lane.b32.xlu0 %v3805, 48
      %v3974 = vpop.permute.xlu0 %3973
      %3975 = vrot.lane.b32.xlu0 %v3808, 48
      %v3976 = vpop.permute.xlu0 %3975
      %3977 = vrot.lane.b32.xlu0 %v3810, 48
      %v3978 = vpop.permute.xlu0 %3977
      %3979 = vrot.lane.b32.xlu0 %v3813, 48
      %v3980 = vpop.permute.xlu0 %3979
      %3981 = vrot.lane.b32.xlu0 %v3815, 48
      %v3982 = vpop.permute.xlu0 %3981
      %3983 = vrot.lane.b32.xlu0 %v3818, 48
      %v3984 = vpop.permute.xlu0 %3983
      %3985 = vrot.lane.b32.xlu0 %v3820, 48
      %v3986 = vpop.permute.xlu0 %3985
      %3987 = vrot.lane.b32.xlu0 %v3823, 48
      %v3988 = vpop.permute.xlu0 %3987
      %3989 = vrot.lane.b32.xlu0 %v3825, 48
      %v3990 = vpop.permute.xlu0 %3989
      %3991 = vrot.lane.b32.xlu0 %v3828, 48
      %v3992 = vpop.permute.xlu0 %3991
      %3993 = vrot.lane.b32.xlu0 %v3830, 48
      %v3994 = vpop.permute.xlu0 %3993
      %3995 = vrot.lane.b32.xlu0 %v3833, 48
      %v3996 = vpop.permute.xlu0 %3995
      %3997 = vrot.lane.b32.xlu0 %v3835, 48
      %v3998 = vpop.permute.xlu0 %3997
      %3999 = vrot.lane.b32.xlu0 %v3838, 48
      %v4000 = vpop.permute.xlu0 %3999
      %4001 = vrot.lane.b32.xlu0 %v3840, 48
      %v4002 = vpop.permute.xlu0 %4001
      %4003 = vrot.lane.b32.xlu0 %v3843, 48
      %v4004 = vpop.permute.xlu0 %4003
      %4005 = vrot.lane.b32.xlu0 %v3845, 48
      %v4006 = vpop.permute.xlu0 %4005
      %4007 = vrot.lane.b32.xlu0 %v3848, 48
      %v4008 = vpop.permute.xlu0 %4007
      %4009 = vrot.lane.b32.xlu0 %v3850, 48
      %v4010 = vpop.permute.xlu0 %4009
      %4011 = vrot.lane.b32.xlu0 %v3853, 48
      %v4012 = vpop.permute.xlu0 %4011
      %4013 = vrot.lane.b32.xlu0 %v3855, 48
      %v4014 = vpop.permute.xlu0 %4013
      %4015 = vrot.lane.b32.xlu0 %v3858, 48
      %v4016 = vpop.permute.xlu0 %4015
      %4017 = vrot.lane.b32.xlu0 %v3860, 48
      %v4018 = vpop.permute.xlu0 %4017
      %4019 = vrot.lane.b32.xlu0 %v3863, 48
      %v4020 = vpop.permute.xlu0 %4019
      %4021 = vrot.lane.b32.xlu0 %v3865, 48
      %v4022 = vpop.permute.xlu0 %4021
      %4023 = vrot.lane.b32.xlu0 %v3868, 48
      %v4024 = vpop.permute.xlu0 %4023
      %4025 = vrot.lane.b32.xlu0 %v3870, 48
      %v4026 = vpop.permute.xlu0 %4025
      %4027 = vrot.lane.b32.xlu0 %v3873, 48
      %v4028 = vpop.permute.xlu0 %4027
      %4029 = vrot.lane.b32.xlu0 %v3875, 48
      %v4030 = vpop.permute.xlu0 %4029
      %4031 = vrot.lane.b32.xlu0 %v3878, 48
      %v4032 = vpop.permute.xlu0 %4031
      %4033 = vrot.lane.b32.xlu0 %v3880, 48
      %v4034 = vpop.permute.xlu0 %4033
      %4035 = vrot.lane.b32.xlu0 %v3883, 48
      %v4036 = vpop.permute.xlu0 %4035
      %4037 = vrot.lane.b32.xlu0 %v3885, 48
      %v4038 = vpop.permute.xlu0 %4037
      %4039 = vrot.lane.b32.xlu0 %v3888, 48
      %v4040 = vpop.permute.xlu0 %4039
      %4041 = vrot.lane.b32.xlu0 %v3890, 48
      %v4042 = vpop.permute.xlu0 %4041
      %vm4043 = vcmask 64512
      %v4045 = vsel %vm4043, %v693, %v1645
      %v4047 = vsel %vm4043, %v694, %v1647
      %v4049 = vsel %vm4043, %v695, %v1649
      %v4051 = vsel %vm4043, %v696, %v1651
      %v4053 = vsel %vm4043, %v697, %v1653
      %v4055 = vsel %vm4043, %v698, %v1655
      %v4057 = vsel %vm4043, %v699, %v1657
      %v4059 = vsel %vm4043, %v700, %v1659
      %v4061 = vsel %vm4043, %v701, %v1661
      %v4063 = vsel %vm4043, %v702, %v1663
      %v4065 = vsel %vm4043, %v703, %v1665
      %v4067 = vsel %vm4043, %v704, %v1667
      %v4069 = vsel %vm4043, %v705, %v1669
      %v4071 = vsel %vm4043, %v706, %v1671
      %v4073 = vsel %vm4043, %v707, %v1673
      %v4075 = vsel %vm4043, %v708, %v1675
      %v4077 = vsel %vm4043, %v709, %v1677
      %v4079 = vsel %vm4043, %v710, %v1679
      %v4081 = vsel %vm4043, %v711, %v1681
      %v4083 = vsel %vm4043, %v712, %v1683
      %v4085 = vsel %vm4043, %v713, %v1685
      %v4087 = vsel %vm4043, %v714, %v1687
      %v4089 = vsel %vm4043, %v715, %v1689
      %v4091 = vsel %vm4043, %v716, %v1691
      %v4093 = vsel %vm4043, %v717, %v1693
      %v4095 = vsel %vm4043, %v718, %v1695
      %v4097 = vsel %vm4043, %v719, %v1697
      %v4099 = vsel %vm4043, %v720, %v1699
      %v4101 = vsel %vm4043, %v721, %v1701
      %v4103 = vsel %vm4043, %v722, %v1703
      %v4105 = vsel %vm4043, %v723, %v1705
      %v4107 = vsel %vm4043, %v724, %v1707
      %v4109 = vsel %vm4043, %v725, %v1709
      %v4111 = vsel %vm4043, %v726, %v1711
      %v4113 = vsel %vm4043, %v727, %v1713
      %v4115 = vsel %vm4043, %v728, %v1715
      %v4117 = vsel %vm4043, %v729, %v1717
      %v4119 = vsel %vm4043, %v730, %v1719
      %v4121 = vsel %vm4043, %v731, %v1721
      %v4123 = vsel %vm4043, %v732, %v1723
      %v4125 = vsel %vm4043, %v733, %v1725
      %v4127 = vsel %vm4043, %v734, %v1727
      %v4129 = vsel %vm4043, %v735, %v1729
      %v4131 = vsel %vm4043, %v736, %v1731
      %v4133 = vsel %vm4043, %v737, %v1733
      %v4135 = vsel %vm4043, %v738, %v1735
      %v4137 = vsel %vm4043, %v739, %v1737
      %v4139 = vsel %vm4043, %v740, %v1739
      %v4141 = vsel %vm4043, %v741, %v1741
      %v4143 = vsel %vm4043, %v742, %v1743
      %v4145 = vsel %vm4043, %v743, %v1745
      %v4147 = vsel %vm4043, %v744, %v1747
      %v4149 = vsel %vm4043, %v745, %v1749
      %v4151 = vsel %vm4043, %v746, %v1751
      %v4153 = vsel %vm4043, %v747, %v1753
      %v4155 = vsel %vm4043, %v748, %v1755
      %v4157 = vsel %vm4043, %v749, %v1757
      %v4159 = vsel %vm4043, %v750, %v1759
      %v4161 = vsel %vm4043, %v751, %v1761
      %v4163 = vsel %vm4043, %v752, %v1763
      %v4165 = vsel %vm4043, %v753, %v1765
      %v4167 = vsel %vm4043, %v754, %v1767
      %v4169 = vsel %vm4043, %v755, %v1769
      %v4171 = vsel %vm4043, %v756, %v1771
      %v4173 = vsel %vm4043, %v757, %v1773
      %v4175 = vsel %vm4043, %v758, %v1775
      %v4177 = vsel %vm4043, %v759, %v1777
      %v4179 = vsel %vm4043, %v760, %v1779
      %v4181 = vsel %vm4043, %v761, %v1781
      %v4183 = vsel %vm4043, %v762, %v1783
      %v4185 = vsel %vm4043, %v763, %v1785
      %v4187 = vsel %vm4043, %v764, %v1787
      %v4189 = vsel %vm4043, %v765, %v1789
      %v4191 = vsel %vm4043, %v766, %v1791
      %v4193 = vsel %vm4043, %v767, %v1793
      %v4195 = vsel %vm4043, %v768, %v1795
      %vm4196 = vcmask 130048
      %v4198 = vsel %vm4196, %v4045, %v1988
      %v4200 = vsel %vm4196, %v4047, %v1990
      %v4202 = vsel %vm4196, %v4049, %v1992
      %v4204 = vsel %vm4196, %v4051, %v1994
      %v4206 = vsel %vm4196, %v4053, %v1996
      %v4208 = vsel %vm4196, %v4055, %v1998
      %v4210 = vsel %vm4196, %v4057, %v2000
      %v4212 = vsel %vm4196, %v4059, %v2002
      %v4214 = vsel %vm4196, %v4061, %v2004
      %v4216 = vsel %vm4196, %v4063, %v2006
      %v4218 = vsel %vm4196, %v4065, %v2008
      %v4220 = vsel %vm4196, %v4067, %v2010
      %v4222 = vsel %vm4196, %v4069, %v2012
      %v4224 = vsel %vm4196, %v4071, %v2014
      %v4226 = vsel %vm4196, %v4073, %v2016
      %v4228 = vsel %vm4196, %v4075, %v2018
      %v4230 = vsel %vm4196, %v4077, %v2020
      %v4232 = vsel %vm4196, %v4079, %v2022
      %v4234 = vsel %vm4196, %v4081, %v2024
      %v4236 = vsel %vm4196, %v4083, %v2026
      %v4238 = vsel %vm4196, %v4085, %v2028
      %v4240 = vsel %vm4196, %v4087, %v2030
      %v4242 = vsel %vm4196, %v4089, %v2032
      %v4244 = vsel %vm4196, %v4091, %v2034
      %v4246 = vsel %vm4196, %v4093, %v2036
      %v4248 = vsel %vm4196, %v4095, %v2038
      %v4250 = vsel %vm4196, %v4097, %v2040
      %v4252 = vsel %vm4196, %v4099, %v2042
      %v4254 = vsel %vm4196, %v4101, %v2044
      %v4256 = vsel %vm4196, %v4103, %v2046
      %v4258 = vsel %vm4196, %v4105, %v2048
      %v4260 = vsel %vm4196, %v4107, %v2050
      %v4262 = vsel %vm4196, %v4109, %v2052
      %v4264 = vsel %vm4196, %v4111, %v2054
      %v4266 = vsel %vm4196, %v4113, %v2056
      %v4268 = vsel %vm4196, %v4115, %v2058
      %v4270 = vsel %vm4196, %v4117, %v2060
      %v4272 = vsel %vm4196, %v4119, %v2062
      %v4274 = vsel %vm4196, %v4121, %v2064
      %v4276 = vsel %vm4196, %v4123, %v2066
      %v4278 = vsel %vm4196, %v4125, %v2068
      %v4280 = vsel %vm4196, %v4127, %v2070
      %v4282 = vsel %vm4196, %v4129, %v2072
      %v4284 = vsel %vm4196, %v4131, %v2074
      %v4286 = vsel %vm4196, %v4133, %v2076
      %v4288 = vsel %vm4196, %v4135, %v2078
      %v4290 = vsel %vm4196, %v4137, %v2080
      %v4292 = vsel %vm4196, %v4139, %v2082
      %v4294 = vsel %vm4196, %v4141, %v2084
      %v4296 = vsel %vm4196, %v4143, %v2086
      %v4298 = vsel %vm4196, %v4145, %v2088
      %v4300 = vsel %vm4196, %v4147, %v2090
      %v4302 = vsel %vm4196, %v4149, %v2092
      %v4304 = vsel %vm4196, %v4151, %v2094
      %v4306 = vsel %vm4196, %v4153, %v2096
      %v4308 = vsel %vm4196, %v4155, %v2098
      %v4310 = vsel %vm4196, %v4157, %v2100
      %v4312 = vsel %vm4196, %v4159, %v2102
      %v4314 = vsel %vm4196, %v4161, %v2104
      %v4316 = vsel %vm4196, %v4163, %v2106
      %v4318 = vsel %vm4196, %v4165, %v2108
      %v4320 = vsel %vm4196, %v4167, %v2110
      %v4322 = vsel %vm4196, %v4169, %v2112
      %v4324 = vsel %vm4196, %v4171, %v2114
      %v4326 = vsel %vm4196, %v4173, %v2116
      %v4328 = vsel %vm4196, %v4175, %v2118
      %v4330 = vsel %vm4196, %v4177, %v2120
      %v4332 = vsel %vm4196, %v4179, %v2122
      %v4334 = vsel %vm4196, %v4181, %v2124
      %v4336 = vsel %vm4196, %v4183, %v2126
      %v4338 = vsel %vm4196, %v4185, %v2128
      %v4340 = vsel %vm4196, %v4187, %v2130
      %v4342 = vsel %vm4196, %v4189, %v2132
      %v4344 = vsel %vm4196, %v4191, %v2134
      %v4346 = vsel %vm4196, %v4193, %v2136
      %v4348 = vsel %vm4196, %v4195, %v2138
      %vm4349 = vcmask 195584
      %v4351 = vsel %vm4349, %v4198, %v2635
      %v4353 = vsel %vm4349, %v4200, %v2637
      %v4355 = vsel %vm4349, %v4202, %v2639
      %v4357 = vsel %vm4349, %v4204, %v2641
      %v4359 = vsel %vm4349, %v4206, %v2643
      %v4361 = vsel %vm4349, %v4208, %v2645
      %v4363 = vsel %vm4349, %v4210, %v2647
      %v4365 = vsel %vm4349, %v4212, %v2649
      %v4367 = vsel %vm4349, %v4214, %v2651
      %v4369 = vsel %vm4349, %v4216, %v2653
      %v4371 = vsel %vm4349, %v4218, %v2655
      %v4373 = vsel %vm4349, %v4220, %v2657
      %v4375 = vsel %vm4349, %v4222, %v2659
      %v4377 = vsel %vm4349, %v4224, %v2661
      %v4379 = vsel %vm4349, %v4226, %v2663
      %v4381 = vsel %vm4349, %v4228, %v2665
      %v4383 = vsel %vm4349, %v4230, %v2667
      %v4385 = vsel %vm4349, %v4232, %v2669
      %v4387 = vsel %vm4349, %v4234, %v2671
      %v4389 = vsel %vm4349, %v4236, %v2673
      %v4391 = vsel %vm4349, %v4238, %v2675
      %v4393 = vsel %vm4349, %v4240, %v2677
      %v4395 = vsel %vm4349, %v4242, %v2679
      %v4397 = vsel %vm4349, %v4244, %v2681
      %v4399 = vsel %vm4349, %v4246, %v2683
      %v4401 = vsel %vm4349, %v4248, %v2685
      %v4403 = vsel %vm4349, %v4250, %v2687
      %v4405 = vsel %vm4349, %v4252, %v2689
      %v4407 = vsel %vm4349, %v4254, %v2691
      %v4409 = vsel %vm4349, %v4256, %v2693
      %v4411 = vsel %vm4349, %v4258, %v2695
      %v4413 = vsel %vm4349, %v4260, %v2697
      %v4415 = vsel %vm4349, %v4262, %v2699
      %v4417 = vsel %vm4349, %v4264, %v2701
      %v4419 = vsel %vm4349, %v4266, %v2703
      %v4421 = vsel %vm4349, %v4268, %v2705
      %v4423 = vsel %vm4349, %v4270, %v2707
      %v4425 = vsel %vm4349, %v4272, %v2709
      %v4427 = vsel %vm4349, %v4274, %v2711
      %v4429 = vsel %vm4349, %v4276, %v2713
      %v4431 = vsel %vm4349, %v4278, %v2715
      %v4433 = vsel %vm4349, %v4280, %v2717
      %v4435 = vsel %vm4349, %v4282, %v2719
      %v4437 = vsel %vm4349, %v4284, %v2721
      %v4439 = vsel %vm4349, %v4286, %v2723
      %v4441 = vsel %vm4349, %v4288, %v2725
      %v4443 = vsel %vm4349, %v4290, %v2727
      %v4445 = vsel %vm4349, %v4292, %v2729
      %v4447 = vsel %vm4349, %v4294, %v2731
      %v4449 = vsel %vm4349, %v4296, %v2733
      %v4451 = vsel %vm4349, %v4298, %v2735
      %v4453 = vsel %vm4349, %v4300, %v2737
      %v4455 = vsel %vm4349, %v4302, %v2739
      %v4457 = vsel %vm4349, %v4304, %v2741
      %v4459 = vsel %vm4349, %v4306, %v2743
      %v4461 = vsel %vm4349, %v4308, %v2745
      %v4463 = vsel %vm4349, %v4310, %v2747
      %v4465 = vsel %vm4349, %v4312, %v2749
      %v4467 = vsel %vm4349, %v4314, %v2751
      %v4469 = vsel %vm4349, %v4316, %v2753
      %v4471 = vsel %vm4349, %v4318, %v2755
      %v4473 = vsel %vm4349, %v4320, %v2757
      %v4475 = vsel %vm4349, %v4322, %v2759
      %v4477 = vsel %vm4349, %v4324, %v2761
      %v4479 = vsel %vm4349, %v4326, %v2763
      %v4481 = vsel %vm4349, %v4328, %v2765
      %v4483 = vsel %vm4349, %v4330, %v2767
      %v4485 = vsel %vm4349, %v4332, %v2769
      %v4487 = vsel %vm4349, %v4334, %v2771
      %v4489 = vsel %vm4349, %v4336, %v2773
      %v4491 = vsel %vm4349, %v4338, %v2775
      %v4493 = vsel %vm4349, %v4340, %v2777
      %v4495 = vsel %vm4349, %v4342, %v2779
      %v4497 = vsel %vm4349, %v4344, %v2781
      %v4499 = vsel %vm4349, %v4346, %v2783
      %v4501 = vsel %vm4349, %v4348, %v2785
      %vm4502 = vcmask 261120
      %v4504 = vsel %vm4502, %v4351, %v2978
      %v4506 = vsel %vm4502, %v4353, %v2980
      %v4508 = vsel %vm4502, %v4355, %v2982
      %v4510 = vsel %vm4502, %v4357, %v2984
      %v4512 = vsel %vm4502, %v4359, %v2986
      %v4514 = vsel %vm4502, %v4361, %v2988
      %v4516 = vsel %vm4502, %v4363, %v2990
      %v4518 = vsel %vm4502, %v4365, %v2992
      %v4520 = vsel %vm4502, %v4367, %v2994
      %v4522 = vsel %vm4502, %v4369, %v2996
      %v4524 = vsel %vm4502, %v4371, %v2998
      %v4526 = vsel %vm4502, %v4373, %v3000
      %v4528 = vsel %vm4502, %v4375, %v3002
      %v4530 = vsel %vm4502, %v4377, %v3004
      %v4532 = vsel %vm4502, %v4379, %v3006
      %v4534 = vsel %vm4502, %v4381, %v3008
      %v4536 = vsel %vm4502, %v4383, %v3010
      %v4538 = vsel %vm4502, %v4385, %v3012
      %v4540 = vsel %vm4502, %v4387, %v3014
      %v4542 = vsel %vm4502, %v4389, %v3016
      %v4544 = vsel %vm4502, %v4391, %v3018
      %v4546 = vsel %vm4502, %v4393, %v3020
      %v4548 = vsel %vm4502, %v4395, %v3022
      %v4550 = vsel %vm4502, %v4397, %v3024
      %v4552 = vsel %vm4502, %v4399, %v3026
      %v4554 = vsel %vm4502, %v4401, %v3028
      %v4556 = vsel %vm4502, %v4403, %v3030
      %v4558 = vsel %vm4502, %v4405, %v3032
      %v4560 = vsel %vm4502, %v4407, %v3034
      %v4562 = vsel %vm4502, %v4409, %v3036
      %v4564 = vsel %vm4502, %v4411, %v3038
      %v4566 = vsel %vm4502, %v4413, %v3040
      %v4568 = vsel %vm4502, %v4415, %v3042
      %v4570 = vsel %vm4502, %v4417, %v3044
      %v4572 = vsel %vm4502, %v4419, %v3046
      %v4574 = vsel %vm4502, %v4421, %v3048
      %v4576 = vsel %vm4502, %v4423, %v3050
      %v4578 = vsel %vm4502, %v4425, %v3052
      %v4580 = vsel %vm4502, %v4427, %v3054
      %v4582 = vsel %vm4502, %v4429, %v3056
      %v4584 = vsel %vm4502, %v4431, %v3058
      %v4586 = vsel %vm4502, %v4433, %v3060
      %v4588 = vsel %vm4502, %v4435, %v3062
      %v4590 = vsel %vm4502, %v4437, %v3064
      %v4592 = vsel %vm4502, %v4439, %v3066
      %v4594 = vsel %vm4502, %v4441, %v3068
      %v4596 = vsel %vm4502, %v4443, %v3070
      %v4598 = vsel %vm4502, %v4445, %v3072
      %v4600 = vsel %vm4502, %v4447, %v3074
      %v4602 = vsel %vm4502, %v4449, %v3076
      %v4604 = vsel %vm4502, %v4451, %v3078
      %v4606 = vsel %vm4502, %v4453, %v3080
      %v4608 = vsel %vm4502, %v4455, %v3082
      %v4610 = vsel %vm4502, %v4457, %v3084
      %v4612 = vsel %vm4502, %v4459, %v3086
      %v4614 = vsel %vm4502, %v4461, %v3088
      %v4616 = vsel %vm4502, %v4463, %v3090
      %v4618 = vsel %vm4502, %v4465, %v3092
      %v4620 = vsel %vm4502, %v4467, %v3094
      %v4622 = vsel %vm4502, %v4469, %v3096
      %v4624 = vsel %vm4502, %v4471, %v3098
      %v4626 = vsel %vm4502, %v4473, %v3100
      %v4628 = vsel %vm4502, %v4475, %v3102
      %v4630 = vsel %vm4502, %v4477, %v3104
      %v4632 = vsel %vm4502, %v4479, %v3106
      %v4634 = vsel %vm4502, %v4481, %v3108
      %v4636 = vsel %vm4502, %v4483, %v3110
      %v4638 = vsel %vm4502, %v4485, %v3112
      %v4640 = vsel %vm4502, %v4487, %v3114
      %v4642 = vsel %vm4502, %v4489, %v3116
      %v4644 = vsel %vm4502, %v4491, %v3118
      %v4646 = vsel %vm4502, %v4493, %v3120
      %v4648 = vsel %vm4502, %v4495, %v3122
      %v4650 = vsel %vm4502, %v4497, %v3124
      %v4652 = vsel %vm4502, %v4499, %v3126
      %v4654 = vsel %vm4502, %v4501, %v3128
      %vm4655 = vcmask 326656
      %v4657 = vsel %vm4655, %v4504, %v3549
      %v4659 = vsel %vm4655, %v4506, %v3551
      %v4661 = vsel %vm4655, %v4508, %v3553
      %v4663 = vsel %vm4655, %v4510, %v3555
      %v4665 = vsel %vm4655, %v4512, %v3557
      %v4667 = vsel %vm4655, %v4514, %v3559
      %v4669 = vsel %vm4655, %v4516, %v3561
      %v4671 = vsel %vm4655, %v4518, %v3563
      %v4673 = vsel %vm4655, %v4520, %v3565
      %v4675 = vsel %vm4655, %v4522, %v3567
      %v4677 = vsel %vm4655, %v4524, %v3569
      %v4679 = vsel %vm4655, %v4526, %v3571
      %v4681 = vsel %vm4655, %v4528, %v3573
      %v4683 = vsel %vm4655, %v4530, %v3575
      %v4685 = vsel %vm4655, %v4532, %v3577
      %v4687 = vsel %vm4655, %v4534, %v3579
      %v4689 = vsel %vm4655, %v4536, %v3581
      %v4691 = vsel %vm4655, %v4538, %v3583
      %v4693 = vsel %vm4655, %v4540, %v3585
      %v4695 = vsel %vm4655, %v4542, %v3587
      %v4697 = vsel %vm4655, %v4544, %v3589
      %v4699 = vsel %vm4655, %v4546, %v3591
      %v4701 = vsel %vm4655, %v4548, %v3593
      %v4703 = vsel %vm4655, %v4550, %v3595
      %v4705 = vsel %vm4655, %v4552, %v3597
      %v4707 = vsel %vm4655, %v4554, %v3599
      %v4709 = vsel %vm4655, %v4556, %v3601
      %v4711 = vsel %vm4655, %v4558, %v3603
      %v4713 = vsel %vm4655, %v4560, %v3605
      %v4715 = vsel %vm4655, %v4562, %v3607
      %v4717 = vsel %vm4655, %v4564, %v3609
      %v4719 = vsel %vm4655, %v4566, %v3611
      %v4721 = vsel %vm4655, %v4568, %v3613
      %v4723 = vsel %vm4655, %v4570, %v3615
      %v4725 = vsel %vm4655, %v4572, %v3617
      %v4727 = vsel %vm4655, %v4574, %v3619
      %v4729 = vsel %vm4655, %v4576, %v3621
      %v4731 = vsel %vm4655, %v4578, %v3623
      %v4733 = vsel %vm4655, %v4580, %v3625
      %v4735 = vsel %vm4655, %v4582, %v3627
      %v4737 = vsel %vm4655, %v4584, %v3629
      %v4739 = vsel %vm4655, %v4586, %v3631
      %v4741 = vsel %vm4655, %v4588, %v3633
      %v4743 = vsel %vm4655, %v4590, %v3635
      %v4745 = vsel %vm4655, %v4592, %v3637
      %v4747 = vsel %vm4655, %v4594, %v3639
      %v4749 = vsel %vm4655, %v4596, %v3641
      %v4751 = vsel %vm4655, %v4598, %v3643
      %v4753 = vsel %vm4655, %v4600, %v3645
      %v4755 = vsel %vm4655, %v4602, %v3647
      %v4757 = vsel %vm4655, %v4604, %v3649
      %v4759 = vsel %vm4655, %v4606, %v3651
      %v4761 = vsel %vm4655, %v4608, %v3653
      %v4763 = vsel %vm4655, %v4610, %v3655
      %v4765 = vsel %vm4655, %v4612, %v3657
      %v4767 = vsel %vm4655, %v4614, %v3659
      %v4769 = vsel %vm4655, %v4616, %v3661
      %v4771 = vsel %vm4655, %v4618, %v3663
      %v4773 = vsel %vm4655, %v4620, %v3665
      %v4775 = vsel %vm4655, %v4622, %v3667
      %v4777 = vsel %vm4655, %v4624, %v3669
      %v4779 = vsel %vm4655, %v4626, %v3671
      %v4781 = vsel %vm4655, %v4628, %v3673
      %v4783 = vsel %vm4655, %v4630, %v3675
      %v4785 = vsel %vm4655, %v4632, %v3677
      %v4787 = vsel %vm4655, %v4634, %v3679
      %v4789 = vsel %vm4655, %v4636, %v3681
      %v4791 = vsel %vm4655, %v4638, %v3683
      %v4793 = vsel %vm4655, %v4640, %v3685
      %v4795 = vsel %vm4655, %v4642, %v3687
      %v4797 = vsel %vm4655, %v4644, %v3689
      %v4799 = vsel %vm4655, %v4646, %v3691
      %v4801 = vsel %vm4655, %v4648, %v3693
      %v4803 = vsel %vm4655, %v4650, %v3695
      %v4805 = vsel %vm4655, %v4652, %v3697
      %v4807 = vsel %vm4655, %v4654, %v3699
      %vm4808 = vcmask 392192
      %v4810 = vsel %vm4808, %v4657, %v3892
      %v4812 = vsel %vm4808, %v4659, %v3894
      %v4814 = vsel %vm4808, %v4661, %v3896
      %v4816 = vsel %vm4808, %v4663, %v3898
      %v4818 = vsel %vm4808, %v4665, %v3900
      %v4820 = vsel %vm4808, %v4667, %v3902
      %v4822 = vsel %vm4808, %v4669, %v3904
      %v4824 = vsel %vm4808, %v4671, %v3906
      %v4826 = vsel %vm4808, %v4673, %v3908
      %v4828 = vsel %vm4808, %v4675, %v3910
      %v4830 = vsel %vm4808, %v4677, %v3912
      %v4832 = vsel %vm4808, %v4679, %v3914
      %v4834 = vsel %vm4808, %v4681, %v3916
      %v4836 = vsel %vm4808, %v4683, %v3918
      %v4838 = vsel %vm4808, %v4685, %v3920
      %v4840 = vsel %vm4808, %v4687, %v3922
      %v4842 = vsel %vm4808, %v4689, %v3924
      %v4844 = vsel %vm4808, %v4691, %v3926
      %v4846 = vsel %vm4808, %v4693, %v3928
      %v4848 = vsel %vm4808, %v4695, %v3930
      %v4850 = vsel %vm4808, %v4697, %v3932
      %v4852 = vsel %vm4808, %v4699, %v3934
      %v4854 = vsel %vm4808, %v4701, %v3936
      %v4856 = vsel %vm4808, %v4703, %v3938
      %v4858 = vsel %vm4808, %v4705, %v3940
      %v4860 = vsel %vm4808, %v4707, %v3942
      %v4862 = vsel %vm4808, %v4709, %v3944
      %v4864 = vsel %vm4808, %v4711, %v3946
      %v4866 = vsel %vm4808, %v4713, %v3948
      %v4868 = vsel %vm4808, %v4715, %v3950
      %v4870 = vsel %vm4808, %v4717, %v3952
      %v4872 = vsel %vm4808, %v4719, %v3954
      %v4874 = vsel %vm4808, %v4721, %v3956
      %v4876 = vsel %vm4808, %v4723, %v3958
      %v4878 = vsel %vm4808, %v4725, %v3960
      %v4880 = vsel %vm4808, %v4727, %v3962
      %v4882 = vsel %vm4808, %v4729, %v3964
      %v4884 = vsel %vm4808, %v4731, %v3966
      %v4886 = vsel %vm4808, %v4733, %v3968
      %v4888 = vsel %vm4808, %v4735, %v3970
      %v4890 = vsel %vm4808, %v4737, %v3972
      %v4892 = vsel %vm4808, %v4739, %v3974
      %v4894 = vsel %vm4808, %v4741, %v3976
      %v4896 = vsel %vm4808, %v4743, %v3978
      %v4898 = vsel %vm4808, %v4745, %v3980
      %v4900 = vsel %vm4808, %v4747, %v3982
      %v4902 = vsel %vm4808, %v4749, %v3984
      %v4904 = vsel %vm4808, %v4751, %v3986
      %v4906 = vsel %vm4808, %v4753, %v3988
      %v4908 = vsel %vm4808, %v4755, %v3990
      %v4910 = vsel %vm4808, %v4757, %v3992
      %v4912 = vsel %vm4808, %v4759, %v3994
      %v4914 = vsel %vm4808, %v4761, %v3996
      %v4916 = vsel %vm4808, %v4763, %v3998
      %v4918 = vsel %vm4808, %v4765, %v4000
      %v4920 = vsel %vm4808, %v4767, %v4002
      %v4922 = vsel %vm4808, %v4769, %v4004
      %v4924 = vsel %vm4808, %v4771, %v4006
      %v4926 = vsel %vm4808, %v4773, %v4008
      %v4928 = vsel %vm4808, %v4775, %v4010
      %v4930 = vsel %vm4808, %v4777, %v4012
      %v4932 = vsel %vm4808, %v4779, %v4014
      %v4934 = vsel %vm4808, %v4781, %v4016
      %v4936 = vsel %vm4808, %v4783, %v4018
      %v4938 = vsel %vm4808, %v4785, %v4020
      %v4940 = vsel %vm4808, %v4787, %v4022
      %v4942 = vsel %vm4808, %v4789, %v4024
      %v4944 = vsel %vm4808, %v4791, %v4026
      %v4946 = vsel %vm4808, %v4793, %v4028
      %v4948 = vsel %vm4808, %v4795, %v4030
      %v4950 = vsel %vm4808, %v4797, %v4032
      %v4952 = vsel %vm4808, %v4799, %v4034
      %v4954 = vsel %vm4808, %v4801, %v4036
      %v4956 = vsel %vm4808, %v4803, %v4038
      %v4958 = vsel %vm4808, %v4805, %v4040
      %v4960 = vsel %vm4808, %v4807, %v4042
      %v4961 = vld [vmem:[%s1] sm:$0xf]
      %v4962 = vld [vmem:[%s1 + $0x4] sm:$0xf]
      %v4963 = vld [vmem:[%s1 + $0x8] sm:$0xf]
      %v4964 = vld [vmem:[%s1 + $0xc] sm:$0xf]
      %v4965 = vld [vmem:[%s1 + $0x10] sm:$0xf]
      %v4966 = vld [vmem:[%s1 + $0x14] sm:$0xf]
      %v4967 = vld [vmem:[%s1 + $0x18] sm:$0xf]
      %s4968 = scalar_lea.vmem %s1, 28
      %v4969 = vld [vmem:[%s4968] sm:$0xf]
      %v4970 = vld [vmem:[%s4968 + $0x4] sm:$0xf]
      %v4971 = vld [vmem:[%s4968 + $0x8] sm:$0xf]
      %v4972 = vld [vmem:[%s4968 + $0xc] sm:$0xf]
      %v4973 = vld [vmem:[%s4968 + $0x10] sm:$0xf]
      %v4974 = vld [vmem:[%s4968 + $0x14] sm:$0xf]
      %v4975 = vld [vmem:[%s4968 + $0x18] sm:$0xf]
      %v4983 = vunpack.c.l.b16 %v4969
      %v4984 = vunpack.c.l.b16 %v4970
      %v4985 = vunpack.c.l.b16 %v4971
      %v4986 = vunpack.c.l.b16 %v4972
      %v4987 = vunpack.c.l.b16 %v4973
      %v4988 = vunpack.c.l.b16 %v4974
      %v4989 = vunpack.c.l.b16 %v4975
      %v4990 = vpack.c.b16 %v4984, %v4983
      %v4991 = vpack.c.b16 %v4986, %v4985
      %v4992 = vpack.c.b16 %v4988, %v4987
      %v4993 = vpack.c.b16 %v4989, %v4989
      %vm4997 = vcmask 457728
      %v4998 = vsel %vm4997, %v4814, 0
      %v5000 = vsel %vm4997, %v4816, 0
      %v5002 = vsel %vm4997, %v4818, 0
      %v5004 = vsel %vm4997, %v4820, 0
      %v5006 = vsel %vm4997, %v4822, 0
      %v5008 = vsel %vm4997, %v4824, 0
      %v5010 = vsel %vm4997, %v4826, 0
      %v5012 = vsel %vm4997, %v4828, 0
      %v5014 = vsel %vm4997, %v4830, 0
      %v5016 = vsel %vm4997, %v4832, 0
      %v5018 = vsel %vm4997, %v4834, 0
      %v5020 = vsel %vm4997, %v4836, 0
      %v5022 = vsel %vm4997, %v4838, 0
      %v5024 = vsel %vm4997, %v4840, 0
      %v5026 = vsel %vm4997, %v4842, 0
      %v5028 = vsel %vm4997, %v4844, 0
      %v5030 = vsel %vm4997, %v4846, 0
      %v5032 = vsel %vm4997, %v4848, 0
      %v5034 = vsel %vm4997, %v4850, 0
      %v5036 = vsel %vm4997, %v4852, 0
      %v5038 = vsel %vm4997, %v4854, 0
      %v5040 = vsel %vm4997, %v4856, 0
      %v5042 = vsel %vm4997, %v4858, 0
      %v5044 = vsel %vm4997, %v4860, 0
      %v5046 = vsel %vm4997, %v4862, 0
      %v5048 = vsel %vm4997, %v4864, 0
      %v5050 = vsel %vm4997, %v4866, 0
      %v5052 = vsel %vm4997, %v4868, 0
      %v5054 = vsel %vm4997, %v4870, 0
      %v5056 = vsel %vm4997, %v4872, 0
      %v5058 = vsel %vm4997, %v4874, 0
      %v5060 = vsel %vm4997, %v4876, 0
      %v5062 = vsel %vm4997, %v4878, 0
      %v5064 = vsel %vm4997, %v4880, 0
      %v5066 = vsel %vm4997, %v4882, 0
      %v5068 = vsel %vm4997, %v4884, 0
      %v5070 = vsel %vm4997, %v4886, 0
      %v5072 = vsel %vm4997, %v4888, 0
      %v5074 = vsel %vm4997, %v4890, 0
      %v5076 = vsel %vm4997, %v4892, 0
      %v5078 = vsel %vm4997, %v4894, 0
      %v5080 = vsel %vm4997, %v4896, 0
      %v5082 = vsel %vm4997, %v4898, 0
      %v5084 = vsel %vm4997, %v4900, 0
      %v5086 = vsel %vm4997, %v4902, 0
      %v5088 = vsel %vm4997, %v4904, 0
      %v5090 = vsel %vm4997, %v4906, 0
      %v5092 = vsel %vm4997, %v4908, 0
      %v5094 = vsel %vm4997, %v4910, 0
      %v5096 = vsel %vm4997, %v4912, 0
      %v5098 = vsel %vm4997, %v4914, 0
      %v5100 = vsel %vm4997, %v4916, 0
      %v5102 = vsel %vm4997, %v4918, 0
      %v5104 = vsel %vm4997, %v4920, 0
      %v5106 = vsel %vm4997, %v4922, 0
      %v5108 = vsel %vm4997, %v4924, 0
      %v5110 = vsel %vm4997, %v4926, 0
      %v5112 = vsel %vm4997, %v4928, 0
      %v5114 = vsel %vm4997, %v4930, 0
      %v5116 = vsel %vm4997, %v4932, 0
      %v5118 = vsel %vm4997, %v4934, 0
      %v5120 = vsel %vm4997, %v4936, 0
      %v5122 = vsel %vm4997, %v4938, 0
      %v5124 = vsel %vm4997, %v4940, 0
      %vm5126 = vcmask 1043456
      %v5128 = vsel %vm5126, %v4993, 0
      %5130 = vmatprep.subr.bf16.mxu0 0
      %5131 = vmatpush1.bf16.msra.mxu0 0
      %5132 = vmatprep.subr.bf16.mxu0 0
      %5133 = vmatpush1.bf16.msra.mxu0 0
      %5134 = vmatprep.subr.bf16.mxu0 0
      %5135 = vmatpush1.bf16.msra.mxu0 0
      %5136 = vmatprep.subr.bf16.mxu0 0
      %5137 = vmatpush1.bf16.msra.mxu0 0
      %5138 = vmatprep.subr.bf16.mxu0 0
      %5139 = vmatpush1.bf16.msra.mxu0 %v5128
      %5140 = vmatprep.subr.bf16.mxu0 0
      %5141 = vmatpush1.bf16.msra.mxu0 %v4992
      %5142 = vmatprep.subr.bf16.mxu0 0
      %5143 = vmatpush1.bf16.msra.mxu0 %v4991
      %5144 = vmatprep.subr.bf16.mxu0 0
      %5145 = vmatpush1.bf16.msra.mxu0 %v4990
      %5146 = vmatprep.subr.bf16.mxu0 0
      %5147 = vmatpush2.bf16.msra.mxu0 0
      %5148 = vmatprep.subr.bf16.mxu0 0
      %5149 = vmatpush2.bf16.msra.mxu0 0
      %5150 = vmatprep.subr.bf16.mxu0 0
      %5151 = vmatpush2.bf16.msra.mxu0 0
      %5152 = vmatprep.subr.bf16.mxu0 0
      %5153 = vmatpush2.bf16.msra.mxu0 0
      %5154 = vmatprep.subr.bf16.mxu0 0
      %5155 = vmatpush2.bf16.msra.mxu0 0
      %5156 = vmatprep.subr.bf16.mxu0 0
      %5157 = vmatpush2.bf16.msra.mxu0 0
      %5158 = vmatprep.subr.bf16.mxu0 0
      %5159 = vmatpush2.bf16.msra.mxu0 0
      %5160 = vmatprep.subr.bf16.mxu0 0
      %5161 = vmatpush2.bf16.msra.mxu0 0
      %5162 = vmatprep.mubr.bf16.mxu0 0
      %5163 = vmatmul.mubr.bf16.gmra.mxu0 %v4998
      %v5164 = vpop.f32.mrf.mxu0
      %v5165 = vadd.f32 0.0, %v5164
      %v5166 = vpop.f32.mrf.mxu0
      %v5167 = vpop.f32.mrf.mxu0
      %v5168 = vadd.f32 0.0, %v5167
      %v5169 = vpop.f32.mrf.mxu0
      %5170 = vmatprep.mubr.bf16.mxu0 0
      %5171 = vmatmul.mubr.bf16.gmra.mxu0 %v5000
      %v5172 = vpop.f32.mrf.mxu0
      %v5173 = vadd.f32 0.0, %v5172
      %v5174 = vpop.f32.mrf.mxu0
      %v5175 = vpop.f32.mrf.mxu0
      %v5176 = vadd.f32 0.0, %v5175
      %v5177 = vpop.f32.mrf.mxu0
      %5178 = vmatprep.mubr.bf16.mxu0 0
      %5179 = vmatmul.mubr.bf16.gmra.mxu0 %v5002
      %v5180 = vpop.f32.mrf.mxu0
      %v5181 = vadd.f32 0.0, %v5180
      %v5182 = vpop.f32.mrf.mxu0
      %v5183 = vpop.f32.mrf.mxu0
      %v5184 = vadd.f32 0.0, %v5183
      %v5185 = vpop.f32.mrf.mxu0
      %5186 = vmatprep.mubr.bf16.mxu0 0
      %5187 = vmatmul.mubr.bf16.gmra.mxu0 %v5004
      %v5188 = vpop.f32.mrf.mxu0
      %v5189 = vadd.f32 0.0, %v5188
      %v5190 = vpop.f32.mrf.mxu0
      %v5191 = vpop.f32.mrf.mxu0
      %v5192 = vadd.f32 0.0, %v5191
      %v5193 = vpop.f32.mrf.mxu0
      %5194 = vmatprep.mubr.bf16.mxu0 0
      %5195 = vmatmul.mubr.bf16.gmra.mxu0 %v5006
      %v5196 = vpop.f32.mrf.mxu0
      %v5197 = vadd.f32 0.0, %v5196
      %v5198 = vpop.f32.mrf.mxu0
      %v5199 = vpop.f32.mrf.mxu0
      %v5200 = vadd.f32 0.0, %v5199
      %v5201 = vpop.f32.mrf.mxu0
      %5202 = vmatprep.mubr.bf16.mxu0 0
      %5203 = vmatmul.mubr.bf16.gmra.mxu0 %v5008
      %v5204 = vpop.f32.mrf.mxu0
      %v5205 = vadd.f32 0.0, %v5204
      %v5206 = vpop.f32.mrf.mxu0
      %v5207 = vpop.f32.mrf.mxu0
      %v5208 = vadd.f32 0.0, %v5207
      %v5209 = vpop.f32.mrf.mxu0
      %5210 = vmatprep.mubr.bf16.mxu0 0
      %5211 = vmatmul.mubr.bf16.gmra.mxu0 %v5010
      %v5212 = vpop.f32.mrf.mxu0
      %v5213 = vadd.f32 0.0, %v5212
      %v5214 = vpop.f32.mrf.mxu0
      %v5215 = vpop.f32.mrf.mxu0
      %v5216 = vadd.f32 0.0, %v5215
      %v5217 = vpop.f32.mrf.mxu0
      %5218 = vmatprep.mubr.bf16.mxu0 0
      %5219 = vmatmul.mubr.bf16.gmra.mxu0 %v5012
      %v5220 = vpop.f32.mrf.mxu0
      %v5221 = vadd.f32 0.0, %v5220
      %v5222 = vpop.f32.mrf.mxu0
      %v5223 = vpop.f32.mrf.mxu0
      %v5224 = vadd.f32 0.0, %v5223
      %v5225 = vpop.f32.mrf.mxu0
      %5226 = vmatprep.mubr.bf16.mxu0 0
      %5227 = vmatmul.mubr.bf16.gmra.mxu0 %v5014
      %v5228 = vpop.f32.mrf.mxu0
      %v5229 = vadd.f32 0.0, %v5228
      %v5230 = vpop.f32.mrf.mxu0
      %v5231 = vpop.f32.mrf.mxu0
      %v5232 = vadd.f32 0.0, %v5231
      %v5233 = vpop.f32.mrf.mxu0
      %5234 = vmatprep.mubr.bf16.mxu0 0
      %5235 = vmatmul.mubr.bf16.gmra.mxu0 %v5016
      %v5236 = vpop.f32.mrf.mxu0
      %v5237 = vadd.f32 0.0, %v5236
      %v5238 = vpop.f32.mrf.mxu0
      %v5239 = vpop.f32.mrf.mxu0
      %v5240 = vadd.f32 0.0, %v5239
      %v5241 = vpop.f32.mrf.mxu0
      %5242 = vmatprep.mubr.bf16.mxu0 0
      %5243 = vmatmul.mubr.bf16.gmra.mxu0 %v5018
      %v5244 = vpop.f32.mrf.mxu0
      %v5245 = vadd.f32 0.0, %v5244
      %v5246 = vpop.f32.mrf.mxu0
      %v5247 = vpop.f32.mrf.mxu0
      %v5248 = vadd.f32 0.0, %v5247
      %v5249 = vpop.f32.mrf.mxu0
      %5250 = vmatprep.mubr.bf16.mxu0 0
      %5251 = vmatmul.mubr.bf16.gmra.mxu0 %v5020
      %v5252 = vpop.f32.mrf.mxu0
      %v5253 = vadd.f32 0.0, %v5252
      %v5254 = vpop.f32.mrf.mxu0
      %v5255 = vpop.f32.mrf.mxu0
      %v5256 = vadd.f32 0.0, %v5255
      %v5257 = vpop.f32.mrf.mxu0
      %5258 = vmatprep.mubr.bf16.mxu0 0
      %5259 = vmatmul.mubr.bf16.gmra.mxu0 %v5022
      %v5260 = vpop.f32.mrf.mxu0
      %v5261 = vadd.f32 0.0, %v5260
      %v5262 = vpop.f32.mrf.mxu0
      %v5263 = vpop.f32.mrf.mxu0
      %v5264 = vadd.f32 0.0, %v5263
      %v5265 = vpop.f32.mrf.mxu0
      %5266 = vmatprep.mubr.bf16.mxu0 0
      %5267 = vmatmul.mubr.bf16.gmra.mxu0 %v5024
      %v5268 = vpop.f32.mrf.mxu0
      %v5269 = vadd.f32 0.0, %v5268
      %v5270 = vpop.f32.mrf.mxu0
      %v5271 = vpop.f32.mrf.mxu0
      %v5272 = vadd.f32 0.0, %v5271
      %v5273 = vpop.f32.mrf.mxu0
      %5274 = vmatprep.mubr.bf16.mxu0 0
      %5275 = vmatmul.mubr.bf16.gmra.mxu0 %v5026
      %v5276 = vpop.f32.mrf.mxu0
      %v5277 = vadd.f32 0.0, %v5276
      %v5278 = vpop.f32.mrf.mxu0
      %v5279 = vpop.f32.mrf.mxu0
      %v5280 = vadd.f32 0.0, %v5279
      %v5281 = vpop.f32.mrf.mxu0
      %5282 = vmatprep.mubr.bf16.mxu0 0
      %5283 = vmatmul.mubr.bf16.gmra.mxu0 %v5028
      %v5284 = vpop.f32.mrf.mxu0
      %v5285 = vadd.f32 0.0, %v5284
      %v5286 = vpop.f32.mrf.mxu0
      %v5287 = vpop.f32.mrf.mxu0
      %v5288 = vadd.f32 0.0, %v5287
      %v5289 = vpop.f32.mrf.mxu0
      %5290 = vmatprep.mubr.bf16.mxu0 0
      %5291 = vmatmul.mubr.bf16.gmra.mxu0 %v5030
      %v5292 = vpop.f32.mrf.mxu0
      %v5293 = vadd.f32 0.0, %v5292
      %v5294 = vpop.f32.mrf.mxu0
      %v5295 = vpop.f32.mrf.mxu0
      %v5296 = vadd.f32 0.0, %v5295
      %v5297 = vpop.f32.mrf.mxu0
      %5298 = vmatprep.mubr.bf16.mxu0 0
      %5299 = vmatmul.mubr.bf16.gmra.mxu0 %v5032
      %v5300 = vpop.f32.mrf.mxu0
      %v5301 = vadd.f32 0.0, %v5300
      %v5302 = vpop.f32.mrf.mxu0
      %v5303 = vpop.f32.mrf.mxu0
      %v5304 = vadd.f32 0.0, %v5303
      %v5305 = vpop.f32.mrf.mxu0
      %5306 = vmatprep.mubr.bf16.mxu0 0
      %5307 = vmatmul.mubr.bf16.gmra.mxu0 %v5034
      %v5308 = vpop.f32.mrf.mxu0
      %v5309 = vadd.f32 0.0, %v5308
      %v5310 = vpop.f32.mrf.mxu0
      %v5311 = vpop.f32.mrf.mxu0
      %v5312 = vadd.f32 0.0, %v5311
      %v5313 = vpop.f32.mrf.mxu0
      %5314 = vmatprep.mubr.bf16.mxu0 0
      %5315 = vmatmul.mubr.bf16.gmra.mxu0 %v5036
      %v5316 = vpop.f32.mrf.mxu0
      %v5317 = vadd.f32 0.0, %v5316
      %v5318 = vpop.f32.mrf.mxu0
      %v5319 = vpop.f32.mrf.mxu0
      %v5320 = vadd.f32 0.0, %v5319
      %v5321 = vpop.f32.mrf.mxu0
      %5322 = vmatprep.mubr.bf16.mxu0 0
      %5323 = vmatmul.mubr.bf16.gmra.mxu0 %v5038
      %v5324 = vpop.f32.mrf.mxu0
      %v5325 = vadd.f32 0.0, %v5324
      %v5326 = vpop.f32.mrf.mxu0
      %v5327 = vpop.f32.mrf.mxu0
      %v5328 = vadd.f32 0.0, %v5327
      %v5329 = vpop.f32.mrf.mxu0
      %5330 = vmatprep.mubr.bf16.mxu0 0
      %5331 = vmatmul.mubr.bf16.gmra.mxu0 %v5040
      %v5332 = vpop.f32.mrf.mxu0
      %v5333 = vadd.f32 0.0, %v5332
      %v5334 = vpop.f32.mrf.mxu0
      %v5335 = vpop.f32.mrf.mxu0
      %v5336 = vadd.f32 0.0, %v5335
      %v5337 = vpop.f32.mrf.mxu0
      %5338 = vmatprep.mubr.bf16.mxu0 0
      %5339 = vmatmul.mubr.bf16.gmra.mxu0 %v5042
      %v5340 = vpop.f32.mrf.mxu0
      %v5341 = vadd.f32 0.0, %v5340
      %v5342 = vpop.f32.mrf.mxu0
      %v5343 = vpop.f32.mrf.mxu0
      %v5344 = vadd.f32 0.0, %v5343
      %v5345 = vpop.f32.mrf.mxu0
      %5346 = vmatprep.mubr.bf16.mxu0 0
      %5347 = vmatmul.mubr.bf16.gmra.mxu0 %v5044
      %v5348 = vpop.f32.mrf.mxu0
      %v5349 = vadd.f32 0.0, %v5348
      %v5350 = vpop.f32.mrf.mxu0
      %v5351 = vpop.f32.mrf.mxu0
      %v5352 = vadd.f32 0.0, %v5351
      %v5353 = vpop.f32.mrf.mxu0
      %5354 = vmatprep.mubr.bf16.mxu0 0
      %5355 = vmatmul.mubr.bf16.gmra.mxu0 %v5046
      %v5356 = vpop.f32.mrf.mxu0
      %v5357 = vadd.f32 0.0, %v5356
      %v5358 = vpop.f32.mrf.mxu0
      %v5359 = vpop.f32.mrf.mxu0
      %v5360 = vadd.f32 0.0, %v5359
      %v5361 = vpop.f32.mrf.mxu0
      %5362 = vmatprep.mubr.bf16.mxu0 0
      %5363 = vmatmul.mubr.bf16.gmra.mxu0 %v5048
      %v5364 = vpop.f32.mrf.mxu0
      %v5365 = vadd.f32 0.0, %v5364
      %v5366 = vpop.f32.mrf.mxu0
      %v5367 = vpop.f32.mrf.mxu0
      %v5368 = vadd.f32 0.0, %v5367
      %v5369 = vpop.f32.mrf.mxu0
      %5370 = vmatprep.mubr.bf16.mxu0 0
      %5371 = vmatmul.mubr.bf16.gmra.mxu0 %v5050
      %v5372 = vpop.f32.mrf.mxu0
      %v5373 = vadd.f32 0.0, %v5372
      %v5374 = vpop.f32.mrf.mxu0
      %v5375 = vpop.f32.mrf.mxu0
      %v5376 = vadd.f32 0.0, %v5375
      %v5377 = vpop.f32.mrf.mxu0
      %5378 = vmatprep.mubr.bf16.mxu0 0
      %5379 = vmatmul.mubr.bf16.gmra.mxu0 %v5052
      %v5380 = vpop.f32.mrf.mxu0
      %v5381 = vadd.f32 0.0, %v5380
      %v5382 = vpop.f32.mrf.mxu0
      %v5383 = vpop.f32.mrf.mxu0
      %v5384 = vadd.f32 0.0, %v5383
      %v5385 = vpop.f32.mrf.mxu0
      %5386 = vmatprep.mubr.bf16.mxu0 0
      %5387 = vmatmul.mubr.bf16.gmra.mxu0 %v5054
      %v5388 = vpop.f32.mrf.mxu0
      %v5389 = vadd.f32 0.0, %v5388
      %v5390 = vpop.f32.mrf.mxu0
      %v5391 = vpop.f32.mrf.mxu0
      %v5392 = vadd.f32 0.0, %v5391
      %v5393 = vpop.f32.mrf.mxu0
      %5394 = vmatprep.mubr.bf16.mxu0 0
      %5395 = vmatmul.mubr.bf16.gmra.mxu0 %v5056
      %v5396 = vpop.f32.mrf.mxu0
      %v5397 = vadd.f32 0.0, %v5396
      %v5398 = vpop.f32.mrf.mxu0
      %v5399 = vpop.f32.mrf.mxu0
      %v5400 = vadd.f32 0.0, %v5399
      %v5401 = vpop.f32.mrf.mxu0
      %5402 = vmatprep.mubr.bf16.mxu0 0
      %5403 = vmatmul.mubr.bf16.gmra.mxu0 %v5058
      %v5404 = vpop.f32.mrf.mxu0
      %v5405 = vadd.f32 0.0, %v5404
      %v5406 = vpop.f32.mrf.mxu0
      %v5407 = vpop.f32.mrf.mxu0
      %v5408 = vadd.f32 0.0, %v5407
      %v5409 = vpop.f32.mrf.mxu0
      %5410 = vmatprep.mubr.bf16.mxu0 0
      %5411 = vmatmul.mubr.bf16.gmra.mxu0 %v5060
      %v5412 = vpop.f32.mrf.mxu0
      %v5413 = vadd.f32 0.0, %v5412
      %v5414 = vpop.f32.mrf.mxu0
      %v5415 = vpop.f32.mrf.mxu0
      %v5416 = vadd.f32 0.0, %v5415
      %v5417 = vpop.f32.mrf.mxu0
      %5418 = vmatprep.mubr.bf16.mxu0 0
      %5419 = vmatmul.mubr.bf16.gmra.mxu0 %v5062
      %v5420 = vpop.f32.mrf.mxu0
      %v5421 = vadd.f32 0.0, %v5420
      %v5422 = vpop.f32.mrf.mxu0
      %v5423 = vpop.f32.mrf.mxu0
      %v5424 = vadd.f32 0.0, %v5423
      %v5425 = vpop.f32.mrf.mxu0
      %5426 = vmatprep.mubr.bf16.mxu0 0
      %5427 = vmatmul.mubr.bf16.gmra.mxu0 %v5064
      %v5428 = vpop.f32.mrf.mxu0
      %v5429 = vadd.f32 0.0, %v5428
      %v5430 = vpop.f32.mrf.mxu0
      %v5431 = vpop.f32.mrf.mxu0
      %v5432 = vadd.f32 0.0, %v5431
      %v5433 = vpop.f32.mrf.mxu0
      %5434 = vmatprep.mubr.bf16.mxu0 0
      %5435 = vmatmul.mubr.bf16.gmra.mxu0 %v5066
      %v5436 = vpop.f32.mrf.mxu0
      %v5437 = vadd.f32 0.0, %v5436
      %v5438 = vpop.f32.mrf.mxu0
      %v5439 = vpop.f32.mrf.mxu0
      %v5440 = vadd.f32 0.0, %v5439
      %v5441 = vpop.f32.mrf.mxu0
      %5442 = vmatprep.mubr.bf16.mxu0 0
      %5443 = vmatmul.mubr.bf16.gmra.mxu0 %v5068
      %v5444 = vpop.f32.mrf.mxu0
      %v5445 = vadd.f32 0.0, %v5444
      %v5446 = vpop.f32.mrf.mxu0
      %v5447 = vpop.f32.mrf.mxu0
      %v5448 = vadd.f32 0.0, %v5447
      %v5449 = vpop.f32.mrf.mxu0
      %5450 = vmatprep.mubr.bf16.mxu0 0
      %5451 = vmatmul.mubr.bf16.gmra.mxu0 %v5070
      %v5452 = vpop.f32.mrf.mxu0
      %v5453 = vadd.f32 0.0, %v5452
      %v5454 = vpop.f32.mrf.mxu0
      %v5455 = vpop.f32.mrf.mxu0
      %v5456 = vadd.f32 0.0, %v5455
      %v5457 = vpop.f32.mrf.mxu0
      %5458 = vmatprep.mubr.bf16.mxu0 0
      %5459 = vmatmul.mubr.bf16.gmra.mxu0 %v5072
      %v5460 = vpop.f32.mrf.mxu0
      %v5461 = vadd.f32 0.0, %v5460
      %v5462 = vpop.f32.mrf.mxu0
      %v5463 = vpop.f32.mrf.mxu0
      %v5464 = vadd.f32 0.0, %v5463
      %v5465 = vpop.f32.mrf.mxu0
      %5466 = vmatprep.mubr.bf16.mxu0 0
      %5467 = vmatmul.mubr.bf16.gmra.mxu0 %v5074
      %v5468 = vpop.f32.mrf.mxu0
      %v5469 = vadd.f32 0.0, %v5468
      %v5470 = vpop.f32.mrf.mxu0
      %v5471 = vpop.f32.mrf.mxu0
      %v5472 = vadd.f32 0.0, %v5471
      %v5473 = vpop.f32.mrf.mxu0
      %5474 = vmatprep.mubr.bf16.mxu0 0
      %5475 = vmatmul.mubr.bf16.gmra.mxu0 %v5076
      %v5476 = vpop.f32.mrf.mxu0
      %v5477 = vadd.f32 0.0, %v5476
      %v5478 = vpop.f32.mrf.mxu0
      %v5479 = vpop.f32.mrf.mxu0
      %v5480 = vadd.f32 0.0, %v5479
      %v5481 = vpop.f32.mrf.mxu0
      %5482 = vmatprep.mubr.bf16.mxu0 0
      %5483 = vmatmul.mubr.bf16.gmra.mxu0 %v5078
      %v5484 = vpop.f32.mrf.mxu0
      %v5485 = vadd.f32 0.0, %v5484
      %v5486 = vpop.f32.mrf.mxu0
      %v5487 = vpop.f32.mrf.mxu0
      %v5488 = vadd.f32 0.0, %v5487
      %v5489 = vpop.f32.mrf.mxu0
      %5490 = vmatprep.mubr.bf16.mxu0 0
      %5491 = vmatmul.mubr.bf16.gmra.mxu0 %v5080
      %v5492 = vpop.f32.mrf.mxu0
      %v5493 = vadd.f32 0.0, %v5492
      %v5494 = vpop.f32.mrf.mxu0
      %v5495 = vpop.f32.mrf.mxu0
      %v5496 = vadd.f32 0.0, %v5495
      %v5497 = vpop.f32.mrf.mxu0
      %5498 = vmatprep.mubr.bf16.mxu0 0
      %5499 = vmatmul.mubr.bf16.gmra.mxu0 %v5082
      %v5500 = vpop.f32.mrf.mxu0
      %v5501 = vadd.f32 0.0, %v5500
      %v5502 = vpop.f32.mrf.mxu0
      %v5503 = vpop.f32.mrf.mxu0
      %v5504 = vadd.f32 0.0, %v5503
      %v5505 = vpop.f32.mrf.mxu0
      %5506 = vmatprep.mubr.bf16.mxu0 0
      %5507 = vmatmul.mubr.bf16.gmra.mxu0 %v5084
      %v5508 = vpop.f32.mrf.mxu0
      %v5509 = vadd.f32 0.0, %v5508
      %v5510 = vpop.f32.mrf.mxu0
      %v5511 = vpop.f32.mrf.mxu0
      %v5512 = vadd.f32 0.0, %v5511
      %v5513 = vpop.f32.mrf.mxu0
      %5514 = vmatprep.mubr.bf16.mxu0 0
      %5515 = vmatmul.mubr.bf16.gmra.mxu0 %v5086
      %v5516 = vpop.f32.mrf.mxu0
      %v5517 = vadd.f32 0.0, %v5516
      %v5518 = vpop.f32.mrf.mxu0
      %v5519 = vpop.f32.mrf.mxu0
      %v5520 = vadd.f32 0.0, %v5519
      %v5521 = vpop.f32.mrf.mxu0
      %5522 = vmatprep.mubr.bf16.mxu0 0
      %5523 = vmatmul.mubr.bf16.gmra.mxu0 %v5088
      %v5524 = vpop.f32.mrf.mxu0
      %v5525 = vadd.f32 0.0, %v5524
      %v5526 = vpop.f32.mrf.mxu0
      %v5527 = vpop.f32.mrf.mxu0
      %v5528 = vadd.f32 0.0, %v5527
      %v5529 = vpop.f32.mrf.mxu0
      %5530 = vmatprep.mubr.bf16.mxu0 0
      %5531 = vmatmul.mubr.bf16.gmra.mxu0 %v5090
      %v5532 = vpop.f32.mrf.mxu0
      %v5533 = vadd.f32 0.0, %v5532
      %v5534 = vpop.f32.mrf.mxu0
      %v5535 = vpop.f32.mrf.mxu0
      %v5536 = vadd.f32 0.0, %v5535
      %v5537 = vpop.f32.mrf.mxu0
      %5538 = vmatprep.mubr.bf16.mxu0 0
      %5539 = vmatmul.mubr.bf16.gmra.mxu0 %v5092
      %v5540 = vpop.f32.mrf.mxu0
      %v5541 = vadd.f32 0.0, %v5540
      %v5542 = vpop.f32.mrf.mxu0
      %v5543 = vpop.f32.mrf.mxu0
      %v5544 = vadd.f32 0.0, %v5543
      %v5545 = vpop.f32.mrf.mxu0
      %5546 = vmatprep.mubr.bf16.mxu0 0
      %5547 = vmatmul.mubr.bf16.gmra.mxu0 %v5094
      %v5548 = vpop.f32.mrf.mxu0
      %v5549 = vadd.f32 0.0, %v5548
      %v5550 = vpop.f32.mrf.mxu0
      %v5551 = vpop.f32.mrf.mxu0
      %v5552 = vadd.f32 0.0, %v5551
      %v5553 = vpop.f32.mrf.mxu0
      %5554 = vmatprep.mubr.bf16.mxu0 0
      %5555 = vmatmul.mubr.bf16.gmra.mxu0 %v5096
      %v5556 = vpop.f32.mrf.mxu0
      %v5557 = vadd.f32 0.0, %v5556
      %v5558 = vpop.f32.mrf.mxu0
      %v5559 = vpop.f32.mrf.mxu0
      %v5560 = vadd.f32 0.0, %v5559
      %v5561 = vpop.f32.mrf.mxu0
      %5562 = vmatprep.mubr.bf16.mxu0 0
      %5563 = vmatmul.mubr.bf16.gmra.mxu0 %v5098
      %v5564 = vpop.f32.mrf.mxu0
      %v5565 = vadd.f32 0.0, %v5564
      %v5566 = vpop.f32.mrf.mxu0
      %v5567 = vpop.f32.mrf.mxu0
      %v5568 = vadd.f32 0.0, %v5567
      %v5569 = vpop.f32.mrf.mxu0
      %5570 = vmatprep.mubr.bf16.mxu0 0
      %5571 = vmatmul.mubr.bf16.gmra.mxu0 %v5100
      %v5572 = vpop.f32.mrf.mxu0
      %v5573 = vadd.f32 0.0, %v5572
      %v5574 = vpop.f32.mrf.mxu0
      %v5575 = vpop.f32.mrf.mxu0
      %v5576 = vadd.f32 0.0, %v5575
      %v5577 = vpop.f32.mrf.mxu0
      %5578 = vmatprep.mubr.bf16.mxu0 0
      %5579 = vmatmul.mubr.bf16.gmra.mxu0 %v5102
      %v5580 = vpop.f32.mrf.mxu0
      %v5581 = vadd.f32 0.0, %v5580
      %v5582 = vpop.f32.mrf.mxu0
      %v5583 = vpop.f32.mrf.mxu0
      %v5584 = vadd.f32 0.0, %v5583
      %v5585 = vpop.f32.mrf.mxu0
      %5586 = vmatprep.mubr.bf16.mxu0 0
      %5587 = vmatmul.mubr.bf16.gmra.mxu0 %v5104
      %v5588 = vpop.f32.mrf.mxu0
      %v5589 = vadd.f32 0.0, %v5588
      %v5590 = vpop.f32.mrf.mxu0
      %v5591 = vpop.f32.mrf.mxu0
      %v5592 = vadd.f32 0.0, %v5591
      %v5593 = vpop.f32.mrf.mxu0
      %5594 = vmatprep.mubr.bf16.mxu0 0
      %5595 = vmatmul.mubr.bf16.gmra.mxu0 %v5106
      %v5596 = vpop.f32.mrf.mxu0
      %v5597 = vadd.f32 0.0, %v5596
      %v5598 = vpop.f32.mrf.mxu0
      %v5599 = vpop.f32.mrf.mxu0
      %v5600 = vadd.f32 0.0, %v5599
      %v5601 = vpop.f32.mrf.mxu0
      %5602 = vmatprep.mubr.bf16.mxu0 0
      %5603 = vmatmul.mubr.bf16.gmra.mxu0 %v5108
      %v5604 = vpop.f32.mrf.mxu0
      %v5605 = vadd.f32 0.0, %v5604
      %v5606 = vpop.f32.mrf.mxu0
      %v5607 = vpop.f32.mrf.mxu0
      %v5608 = vadd.f32 0.0, %v5607
      %v5609 = vpop.f32.mrf.mxu0
      %5610 = vmatprep.mubr.bf16.mxu0 0
      %5611 = vmatmul.mubr.bf16.gmra.mxu0 %v5110
      %v5612 = vpop.f32.mrf.mxu0
      %v5613 = vadd.f32 0.0, %v5612
      %v5614 = vpop.f32.mrf.mxu0
      %v5615 = vpop.f32.mrf.mxu0
      %v5616 = vadd.f32 0.0, %v5615
      %v5617 = vpop.f32.mrf.mxu0
      %5618 = vmatprep.mubr.bf16.mxu0 0
      %5619 = vmatmul.mubr.bf16.gmra.mxu0 %v5112
      %v5620 = vpop.f32.mrf.mxu0
      %v5621 = vadd.f32 0.0, %v5620
      %v5622 = vpop.f32.mrf.mxu0
      %v5623 = vpop.f32.mrf.mxu0
      %v5624 = vadd.f32 0.0, %v5623
      %v5625 = vpop.f32.mrf.mxu0
      %5626 = vmatprep.mubr.bf16.mxu0 0
      %5627 = vmatmul.mubr.bf16.gmra.mxu0 %v5114
      %v5628 = vpop.f32.mrf.mxu0
      %v5629 = vadd.f32 0.0, %v5628
      %v5630 = vpop.f32.mrf.mxu0
      %v5631 = vpop.f32.mrf.mxu0
      %v5632 = vadd.f32 0.0, %v5631
      %v5633 = vpop.f32.mrf.mxu0
      %5634 = vmatprep.mubr.bf16.mxu0 0
      %5635 = vmatmul.mubr.bf16.gmra.mxu0 %v5116
      %v5636 = vpop.f32.mrf.mxu0
      %v5637 = vadd.f32 0.0, %v5636
      %v5638 = vpop.f32.mrf.mxu0
      %v5639 = vpop.f32.mrf.mxu0
      %v5640 = vadd.f32 0.0, %v5639
      %v5641 = vpop.f32.mrf.mxu0
      %5642 = vmatprep.mubr.bf16.mxu0 0
      %5643 = vmatmul.mubr.bf16.gmra.mxu0 %v5118
      %v5644 = vpop.f32.mrf.mxu0
      %v5645 = vadd.f32 0.0, %v5644
      %v5646 = vpop.f32.mrf.mxu0
      %v5647 = vpop.f32.mrf.mxu0
      %v5648 = vadd.f32 0.0, %v5647
      %v5649 = vpop.f32.mrf.mxu0
      %5650 = vmatprep.mubr.bf16.mxu0 0
      %5651 = vmatmul.mubr.bf16.gmra.mxu0 %v5120
      %v5652 = vpop.f32.mrf.mxu0
      %v5653 = vadd.f32 0.0, %v5652
      %v5654 = vpop.f32.mrf.mxu0
      %v5655 = vpop.f32.mrf.mxu0
      %v5656 = vadd.f32 0.0, %v5655
      %v5657 = vpop.f32.mrf.mxu0
      %5658 = vmatprep.mubr.bf16.mxu0 0
      %5659 = vmatmul.mubr.bf16.gmra.mxu0 %v5122
      %v5660 = vpop.f32.mrf.mxu0
      %v5661 = vadd.f32 0.0, %v5660
      %v5662 = vpop.f32.mrf.mxu0
      %v5663 = vpop.f32.mrf.mxu0
      %v5664 = vadd.f32 0.0, %v5663
      %v5665 = vpop.f32.mrf.mxu0
      %5666 = vmatprep.mubr.bf16.mxu0 0
      %5667 = vmatmul.mubr.bf16.gmra.mxu0 %v5124
      %v5668 = vpop.f32.mrf.mxu0
      %v5669 = vadd.f32 0.0, %v5668
      %v5670 = vpop.f32.mrf.mxu0
      %v5671 = vpop.f32.mrf.mxu0
      %v5672 = vadd.f32 0.0, %v5671
      %v5673 = vpop.f32.mrf.mxu0
      %5674 = vdwg.mxu0
      %v5682 = vunpack.c.l.b16 %v4961
      %v5683 = vunpack.c.l.b16 %v4962
      %v5684 = vunpack.c.l.b16 %v4963
      %v5685 = vunpack.c.l.b16 %v4964
      %v5686 = vunpack.c.l.b16 %v4965
      %v5687 = vunpack.c.l.b16 %v4966
      %v5688 = vunpack.c.l.b16 %v4967
      %v5689 = vpack.c.b16 %v5683, %v5682
      %v5690 = vpack.c.b16 %v5685, %v5684
      %v5691 = vpack.c.b16 %v5687, %v5686
      %v5692 = vpack.c.b16 %v5688, %v5688
      %v5696 = vsel %vm4997, %v4810, 0
      %v5698 = vsel %vm4997, %v4812, 0
      %v5701 = vsel %vm5126, %v5692, 0
      %5703 = vmatprep.subr.bf16.mxu0 0
      %5704 = vmatpush1.bf16.msra.mxu0 0
      %5705 = vmatprep.subr.bf16.mxu0 0
      %5706 = vmatpush1.bf16.msra.mxu0 0
      %5707 = vmatprep.subr.bf16.mxu0 0
      %5708 = vmatpush1.bf16.msra.mxu0 0
      %5709 = vmatprep.subr.bf16.mxu0 0
      %5710 = vmatpush1.bf16.msra.mxu0 0
      %5711 = vmatprep.subr.bf16.mxu0 0
      %5712 = vmatpush1.bf16.msra.mxu0 %v5701
      %5713 = vmatprep.subr.bf16.mxu0 0
      %5714 = vmatpush1.bf16.msra.mxu0 %v5691
      %5715 = vmatprep.subr.bf16.mxu0 0
      %5716 = vmatpush1.bf16.msra.mxu0 %v5690
      %5717 = vmatprep.subr.bf16.mxu0 0
      %5718 = vmatpush1.bf16.msra.mxu0 %v5689
      %5719 = vmatprep.subr.bf16.mxu0 0
      %5720 = vmatpush2.bf16.msra.mxu0 0
      %5721 = vmatprep.subr.bf16.mxu0 0
      %5722 = vmatpush2.bf16.msra.mxu0 0
      %5723 = vmatprep.subr.bf16.mxu0 0
      %5724 = vmatpush2.bf16.msra.mxu0 0
      %5725 = vmatprep.subr.bf16.mxu0 0
      %5726 = vmatpush2.bf16.msra.mxu0 0
      %5727 = vmatprep.subr.bf16.mxu0 0
      %5728 = vmatpush2.bf16.msra.mxu0 0
      %5729 = vmatprep.subr.bf16.mxu0 0
      %5730 = vmatpush2.bf16.msra.mxu0 0
      %5731 = vmatprep.subr.bf16.mxu0 0
      %5732 = vmatpush2.bf16.msra.mxu0 0
      %5733 = vmatprep.subr.bf16.mxu0 0
      %5734 = vmatpush2.bf16.msra.mxu0 0
      %5735 = vmatprep.mubr.bf16.mxu0 0
      %5736 = vmatmul.mubr.bf16.gmra.mxu0 %v5696
      %v5737 = vpop.f32.mrf.mxu0
      %v5738 = vadd.f32 %v5165, %v5737
      %v5739 = vpop.f32.mrf.mxu0
      %v5740 = vpop.f32.mrf.mxu0
      %v5741 = vadd.f32 %v5168, %v5740
      %v5742 = vpop.f32.mrf.mxu0
      %5743 = vmatprep.mubr.bf16.mxu0 0
      %5744 = vmatmul.mubr.bf16.gmra.mxu0 %v5698
      %v5745 = vpop.f32.mrf.mxu0
      %v5746 = vadd.f32 %v5173, %v5745
      %v5747 = vpop.f32.mrf.mxu0
      %v5748 = vpop.f32.mrf.mxu0
      %v5749 = vadd.f32 %v5176, %v5748
      %v5750 = vpop.f32.mrf.mxu0
      %5751 = vmatprep.mubr.bf16.mxu0 0
      %5752 = vmatmul.mubr.bf16.gmra.mxu0 %v4998
      %v5753 = vpop.f32.mrf.mxu0
      %v5754 = vadd.f32 %v5181, %v5753
      %v5755 = vpop.f32.mrf.mxu0
      %v5756 = vpop.f32.mrf.mxu0
      %v5757 = vadd.f32 %v5184, %v5756
      %v5758 = vpop.f32.mrf.mxu0
      %5759 = vmatprep.mubr.bf16.mxu0 0
      %5760 = vmatmul.mubr.bf16.gmra.mxu0 %v5000
      %v5761 = vpop.f32.mrf.mxu0
      %v5762 = vadd.f32 %v5189, %v5761
      %v5763 = vpop.f32.mrf.mxu0
      %v5764 = vpop.f32.mrf.mxu0
      %v5765 = vadd.f32 %v5192, %v5764
      %v5766 = vpop.f32.mrf.mxu0
      %5767 = vmatprep.mubr.bf16.mxu0 0
      %5768 = vmatmul.mubr.bf16.gmra.mxu0 %v5002
      %v5769 = vpop.f32.mrf.mxu0
      %v5770 = vadd.f32 %v5197, %v5769
      %v5771 = vpop.f32.mrf.mxu0
      %v5772 = vpop.f32.mrf.mxu0
      %v5773 = vadd.f32 %v5200, %v5772
      %v5774 = vpop.f32.mrf.mxu0
      %5775 = vmatprep.mubr.bf16.mxu0 0
      %5776 = vmatmul.mubr.bf16.gmra.mxu0 %v5004
      %v5777 = vpop.f32.mrf.mxu0
      %v5778 = vadd.f32 %v5205, %v5777
      %v5779 = vpop.f32.mrf.mxu0
      %v5780 = vpop.f32.mrf.mxu0
      %v5781 = vadd.f32 %v5208, %v5780
      %v5782 = vpop.f32.mrf.mxu0
      %5783 = vmatprep.mubr.bf16.mxu0 0
      %5784 = vmatmul.mubr.bf16.gmra.mxu0 %v5006
      %v5785 = vpop.f32.mrf.mxu0
      %v5786 = vadd.f32 %v5213, %v5785
      %v5787 = vpop.f32.mrf.mxu0
      %v5788 = vpop.f32.mrf.mxu0
      %v5789 = vadd.f32 %v5216, %v5788
      %v5790 = vpop.f32.mrf.mxu0
      %5791 = vmatprep.mubr.bf16.mxu0 0
      %5792 = vmatmul.mubr.bf16.gmra.mxu0 %v5008
      %v5793 = vpop.f32.mrf.mxu0
      %v5794 = vadd.f32 %v5221, %v5793
      %v5795 = vpop.f32.mrf.mxu0
      %v5796 = vpop.f32.mrf.mxu0
      %v5797 = vadd.f32 %v5224, %v5796
      %v5798 = vpop.f32.mrf.mxu0
      %5799 = vmatprep.mubr.bf16.mxu0 0
      %5800 = vmatmul.mubr.bf16.gmra.mxu0 %v5010
      %v5801 = vpop.f32.mrf.mxu0
      %v5802 = vadd.f32 %v5229, %v5801
      %v5803 = vpop.f32.mrf.mxu0
      %v5804 = vpop.f32.mrf.mxu0
      %v5805 = vadd.f32 %v5232, %v5804
      %v5806 = vpop.f32.mrf.mxu0
      %5807 = vmatprep.mubr.bf16.mxu0 0
      %5808 = vmatmul.mubr.bf16.gmra.mxu0 %v5012
      %v5809 = vpop.f32.mrf.mxu0
      %v5810 = vadd.f32 %v5237, %v5809
      %v5811 = vpop.f32.mrf.mxu0
      %v5812 = vpop.f32.mrf.mxu0
      %v5813 = vadd.f32 %v5240, %v5812
      %v5814 = vpop.f32.mrf.mxu0
      %5815 = vmatprep.mubr.bf16.mxu0 0
      %5816 = vmatmul.mubr.bf16.gmra.mxu0 %v5014
      %v5817 = vpop.f32.mrf.mxu0
      %v5818 = vadd.f32 %v5245, %v5817
      %v5819 = vpop.f32.mrf.mxu0
      %v5820 = vpop.f32.mrf.mxu0
      %v5821 = vadd.f32 %v5248, %v5820
      %v5822 = vpop.f32.mrf.mxu0
      %5823 = vmatprep.mubr.bf16.mxu0 0
      %5824 = vmatmul.mubr.bf16.gmra.mxu0 %v5016
      %v5825 = vpop.f32.mrf.mxu0
      %v5826 = vadd.f32 %v5253, %v5825
      %v5827 = vpop.f32.mrf.mxu0
      %v5828 = vpop.f32.mrf.mxu0
      %v5829 = vadd.f32 %v5256, %v5828
      %v5830 = vpop.f32.mrf.mxu0
      %5831 = vmatprep.mubr.bf16.mxu0 0
      %5832 = vmatmul.mubr.bf16.gmra.mxu0 %v5018
      %v5833 = vpop.f32.mrf.mxu0
      %v5834 = vadd.f32 %v5261, %v5833
      %v5835 = vpop.f32.mrf.mxu0
      %v5836 = vpop.f32.mrf.mxu0
      %v5837 = vadd.f32 %v5264, %v5836
      %v5838 = vpop.f32.mrf.mxu0
      %5839 = vmatprep.mubr.bf16.mxu0 0
      %5840 = vmatmul.mubr.bf16.gmra.mxu0 %v5020
      %v5841 = vpop.f32.mrf.mxu0
      %v5842 = vadd.f32 %v5269, %v5841
      %v5843 = vpop.f32.mrf.mxu0
      %v5844 = vpop.f32.mrf.mxu0
      %v5845 = vadd.f32 %v5272, %v5844
      %v5846 = vpop.f32.mrf.mxu0
      %5847 = vmatprep.mubr.bf16.mxu0 0
      %5848 = vmatmul.mubr.bf16.gmra.mxu0 %v5022
      %v5849 = vpop.f32.mrf.mxu0
      %v5850 = vadd.f32 %v5277, %v5849
      %v5851 = vpop.f32.mrf.mxu0
      %v5852 = vpop.f32.mrf.mxu0
      %v5853 = vadd.f32 %v5280, %v5852
      %v5854 = vpop.f32.mrf.mxu0
      %5855 = vmatprep.mubr.bf16.mxu0 0
      %5856 = vmatmul.mubr.bf16.gmra.mxu0 %v5024
      %v5857 = vpop.f32.mrf.mxu0
      %v5858 = vadd.f32 %v5285, %v5857
      %v5859 = vpop.f32.mrf.mxu0
      %v5860 = vpop.f32.mrf.mxu0
      %v5861 = vadd.f32 %v5288, %v5860
      %v5862 = vpop.f32.mrf.mxu0
      %5863 = vmatprep.mubr.bf16.mxu0 0
      %5864 = vmatmul.mubr.bf16.gmra.mxu0 %v5026
      %v5865 = vpop.f32.mrf.mxu0
      %v5866 = vadd.f32 %v5293, %v5865
      %v5867 = vpop.f32.mrf.mxu0
      %v5868 = vpop.f32.mrf.mxu0
      %v5869 = vadd.f32 %v5296, %v5868
      %v5870 = vpop.f32.mrf.mxu0
      %5871 = vmatprep.mubr.bf16.mxu0 0
      %5872 = vmatmul.mubr.bf16.gmra.mxu0 %v5028
      %v5873 = vpop.f32.mrf.mxu0
      %v5874 = vadd.f32 %v5301, %v5873
      %v5875 = vpop.f32.mrf.mxu0
      %v5876 = vpop.f32.mrf.mxu0
      %v5877 = vadd.f32 %v5304, %v5876
      %v5878 = vpop.f32.mrf.mxu0
      %5879 = vmatprep.mubr.bf16.mxu0 0
      %5880 = vmatmul.mubr.bf16.gmra.mxu0 %v5030
      %v5881 = vpop.f32.mrf.mxu0
      %v5882 = vadd.f32 %v5309, %v5881
      %v5883 = vpop.f32.mrf.mxu0
      %v5884 = vpop.f32.mrf.mxu0
      %v5885 = vadd.f32 %v5312, %v5884
      %v5886 = vpop.f32.mrf.mxu0
      %5887 = vmatprep.mubr.bf16.mxu0 0
      %5888 = vmatmul.mubr.bf16.gmra.mxu0 %v5032
      %v5889 = vpop.f32.mrf.mxu0
      %v5890 = vadd.f32 %v5317, %v5889
      %v5891 = vpop.f32.mrf.mxu0
      %v5892 = vpop.f32.mrf.mxu0
      %v5893 = vadd.f32 %v5320, %v5892
      %v5894 = vpop.f32.mrf.mxu0
      %5895 = vmatprep.mubr.bf16.mxu0 0
      %5896 = vmatmul.mubr.bf16.gmra.mxu0 %v5034
      %v5897 = vpop.f32.mrf.mxu0
      %v5898 = vadd.f32 %v5325, %v5897
      %v5899 = vpop.f32.mrf.mxu0
      %v5900 = vpop.f32.mrf.mxu0
      %v5901 = vadd.f32 %v5328, %v5900
      %v5902 = vpop.f32.mrf.mxu0
      %5903 = vmatprep.mubr.bf16.mxu0 0
      %5904 = vmatmul.mubr.bf16.gmra.mxu0 %v5036
      %v5905 = vpop.f32.mrf.mxu0
      %v5906 = vadd.f32 %v5333, %v5905
      %v5907 = vpop.f32.mrf.mxu0
      %v5908 = vpop.f32.mrf.mxu0
      %v5909 = vadd.f32 %v5336, %v5908
      %v5910 = vpop.f32.mrf.mxu0
      %5911 = vmatprep.mubr.bf16.mxu0 0
      %5912 = vmatmul.mubr.bf16.gmra.mxu0 %v5038
      %v5913 = vpop.f32.mrf.mxu0
      %v5914 = vadd.f32 %v5341, %v5913
      %v5915 = vpop.f32.mrf.mxu0
      %v5916 = vpop.f32.mrf.mxu0
      %v5917 = vadd.f32 %v5344, %v5916
      %v5918 = vpop.f32.mrf.mxu0
      %5919 = vmatprep.mubr.bf16.mxu0 0
      %5920 = vmatmul.mubr.bf16.gmra.mxu0 %v5040
      %v5921 = vpop.f32.mrf.mxu0
      %v5922 = vadd.f32 %v5349, %v5921
      %v5923 = vpop.f32.mrf.mxu0
      %v5924 = vpop.f32.mrf.mxu0
      %v5925 = vadd.f32 %v5352, %v5924
      %v5926 = vpop.f32.mrf.mxu0
      %5927 = vmatprep.mubr.bf16.mxu0 0
      %5928 = vmatmul.mubr.bf16.gmra.mxu0 %v5042
      %v5929 = vpop.f32.mrf.mxu0
      %v5930 = vadd.f32 %v5357, %v5929
      %v5931 = vpop.f32.mrf.mxu0
      %v5932 = vpop.f32.mrf.mxu0
      %v5933 = vadd.f32 %v5360, %v5932
      %v5934 = vpop.f32.mrf.mxu0
      %5935 = vmatprep.mubr.bf16.mxu0 0
      %5936 = vmatmul.mubr.bf16.gmra.mxu0 %v5044
      %v5937 = vpop.f32.mrf.mxu0
      %v5938 = vadd.f32 %v5365, %v5937
      %v5939 = vpop.f32.mrf.mxu0
      %v5940 = vpop.f32.mrf.mxu0
      %v5941 = vadd.f32 %v5368, %v5940
      %v5942 = vpop.f32.mrf.mxu0
      %5943 = vmatprep.mubr.bf16.mxu0 0
      %5944 = vmatmul.mubr.bf16.gmra.mxu0 %v5046
      %v5945 = vpop.f32.mrf.mxu0
      %v5946 = vadd.f32 %v5373, %v5945
      %v5947 = vpop.f32.mrf.mxu0
      %v5948 = vpop.f32.mrf.mxu0
      %v5949 = vadd.f32 %v5376, %v5948
      %v5950 = vpop.f32.mrf.mxu0
      %5951 = vmatprep.mubr.bf16.mxu0 0
      %5952 = vmatmul.mubr.bf16.gmra.mxu0 %v5048
      %v5953 = vpop.f32.mrf.mxu0
      %v5954 = vadd.f32 %v5381, %v5953
      %v5955 = vpop.f32.mrf.mxu0
      %v5956 = vpop.f32.mrf.mxu0
      %v5957 = vadd.f32 %v5384, %v5956
      %v5958 = vpop.f32.mrf.mxu0
      %5959 = vmatprep.mubr.bf16.mxu0 0
      %5960 = vmatmul.mubr.bf16.gmra.mxu0 %v5050
      %v5961 = vpop.f32.mrf.mxu0
      %v5962 = vadd.f32 %v5389, %v5961
      %v5963 = vpop.f32.mrf.mxu0
      %v5964 = vpop.f32.mrf.mxu0
      %v5965 = vadd.f32 %v5392, %v5964
      %v5966 = vpop.f32.mrf.mxu0
      %5967 = vmatprep.mubr.bf16.mxu0 0
      %5968 = vmatmul.mubr.bf16.gmra.mxu0 %v5052
      %v5969 = vpop.f32.mrf.mxu0
      %v5970 = vadd.f32 %v5397, %v5969
      %v5971 = vpop.f32.mrf.mxu0
      %v5972 = vpop.f32.mrf.mxu0
      %v5973 = vadd.f32 %v5400, %v5972
      %v5974 = vpop.f32.mrf.mxu0
      %5975 = vmatprep.mubr.bf16.mxu0 0
      %5976 = vmatmul.mubr.bf16.gmra.mxu0 %v5054
      %v5977 = vpop.f32.mrf.mxu0
      %v5978 = vadd.f32 %v5405, %v5977
      %v5979 = vpop.f32.mrf.mxu0
      %v5980 = vpop.f32.mrf.mxu0
      %v5981 = vadd.f32 %v5408, %v5980
      %v5982 = vpop.f32.mrf.mxu0
      %5983 = vmatprep.mubr.bf16.mxu0 0
      %5984 = vmatmul.mubr.bf16.gmra.mxu0 %v5056
      %v5985 = vpop.f32.mrf.mxu0
      %v5986 = vadd.f32 %v5413, %v5985
      %v5987 = vpop.f32.mrf.mxu0
      %v5988 = vpop.f32.mrf.mxu0
      %v5989 = vadd.f32 %v5416, %v5988
      %v5990 = vpop.f32.mrf.mxu0
      %5991 = vmatprep.mubr.bf16.mxu0 0
      %5992 = vmatmul.mubr.bf16.gmra.mxu0 %v5058
      %v5993 = vpop.f32.mrf.mxu0
      %v5994 = vadd.f32 %v5421, %v5993
      %v5995 = vpop.f32.mrf.mxu0
      %v5996 = vpop.f32.mrf.mxu0
      %v5997 = vadd.f32 %v5424, %v5996
      %v5998 = vpop.f32.mrf.mxu0
      %5999 = vmatprep.mubr.bf16.mxu0 0
      %6000 = vmatmul.mubr.bf16.gmra.mxu0 %v5060
      %v6001 = vpop.f32.mrf.mxu0
      %v6002 = vadd.f32 %v5429, %v6001
      %v6003 = vpop.f32.mrf.mxu0
      %v6004 = vpop.f32.mrf.mxu0
      %v6005 = vadd.f32 %v5432, %v6004
      %v6006 = vpop.f32.mrf.mxu0
      %6007 = vmatprep.mubr.bf16.mxu0 0
      %6008 = vmatmul.mubr.bf16.gmra.mxu0 %v5062
      %v6009 = vpop.f32.mrf.mxu0
      %v6010 = vadd.f32 %v5437, %v6009
      %v6011 = vpop.f32.mrf.mxu0
      %v6012 = vpop.f32.mrf.mxu0
      %v6013 = vadd.f32 %v5440, %v6012
      %v6014 = vpop.f32.mrf.mxu0
      %6015 = vmatprep.mubr.bf16.mxu0 0
      %6016 = vmatmul.mubr.bf16.gmra.mxu0 %v5064
      %v6017 = vpop.f32.mrf.mxu0
      %v6018 = vadd.f32 %v5445, %v6017
      %v6019 = vpop.f32.mrf.mxu0
      %v6020 = vpop.f32.mrf.mxu0
      %v6021 = vadd.f32 %v5448, %v6020
      %v6022 = vpop.f32.mrf.mxu0
      %6023 = vmatprep.mubr.bf16.mxu0 0
      %6024 = vmatmul.mubr.bf16.gmra.mxu0 %v5066
      %v6025 = vpop.f32.mrf.mxu0
      %v6026 = vadd.f32 %v5453, %v6025
      %v6027 = vpop.f32.mrf.mxu0
      %v6028 = vpop.f32.mrf.mxu0
      %v6029 = vadd.f32 %v5456, %v6028
      %v6030 = vpop.f32.mrf.mxu0
      %6031 = vmatprep.mubr.bf16.mxu0 0
      %6032 = vmatmul.mubr.bf16.gmra.mxu0 %v5068
      %v6033 = vpop.f32.mrf.mxu0
      %v6034 = vadd.f32 %v5461, %v6033
      %v6035 = vpop.f32.mrf.mxu0
      %v6036 = vpop.f32.mrf.mxu0
      %v6037 = vadd.f32 %v5464, %v6036
      %v6038 = vpop.f32.mrf.mxu0
      %6039 = vmatprep.mubr.bf16.mxu0 0
      %6040 = vmatmul.mubr.bf16.gmra.mxu0 %v5070
      %v6041 = vpop.f32.mrf.mxu0
      %v6042 = vadd.f32 %v5469, %v6041
      %v6043 = vpop.f32.mrf.mxu0
      %v6044 = vpop.f32.mrf.mxu0
      %v6045 = vadd.f32 %v5472, %v6044
      %v6046 = vpop.f32.mrf.mxu0
      %6047 = vmatprep.mubr.bf16.mxu0 0
      %6048 = vmatmul.mubr.bf16.gmra.mxu0 %v5072
      %v6049 = vpop.f32.mrf.mxu0
      %v6050 = vadd.f32 %v5477, %v6049
      %v6051 = vpop.f32.mrf.mxu0
      %v6052 = vpop.f32.mrf.mxu0
      %v6053 = vadd.f32 %v5480, %v6052
      %v6054 = vpop.f32.mrf.mxu0
      %6055 = vmatprep.mubr.bf16.mxu0 0
      %6056 = vmatmul.mubr.bf16.gmra.mxu0 %v5074
      %v6057 = vpop.f32.mrf.mxu0
      %v6058 = vadd.f32 %v5485, %v6057
      %v6059 = vpop.f32.mrf.mxu0
      %v6060 = vpop.f32.mrf.mxu0
      %v6061 = vadd.f32 %v5488, %v6060
      %v6062 = vpop.f32.mrf.mxu0
      %6063 = vmatprep.mubr.bf16.mxu0 0
      %6064 = vmatmul.mubr.bf16.gmra.mxu0 %v5076
      %v6065 = vpop.f32.mrf.mxu0
      %v6066 = vadd.f32 %v5493, %v6065
      %v6067 = vpop.f32.mrf.mxu0
      %v6068 = vpop.f32.mrf.mxu0
      %v6069 = vadd.f32 %v5496, %v6068
      %v6070 = vpop.f32.mrf.mxu0
      %6071 = vmatprep.mubr.bf16.mxu0 0
      %6072 = vmatmul.mubr.bf16.gmra.mxu0 %v5078
      %v6073 = vpop.f32.mrf.mxu0
      %v6074 = vadd.f32 %v5501, %v6073
      %v6075 = vpop.f32.mrf.mxu0
      %v6076 = vpop.f32.mrf.mxu0
      %v6077 = vadd.f32 %v5504, %v6076
      %v6078 = vpop.f32.mrf.mxu0
      %6079 = vmatprep.mubr.bf16.mxu0 0
      %6080 = vmatmul.mubr.bf16.gmra.mxu0 %v5080
      %v6081 = vpop.f32.mrf.mxu0
      %v6082 = vadd.f32 %v5509, %v6081
      %v6083 = vpop.f32.mrf.mxu0
      %v6084 = vpop.f32.mrf.mxu0
      %v6085 = vadd.f32 %v5512, %v6084
      %v6086 = vpop.f32.mrf.mxu0
      %6087 = vmatprep.mubr.bf16.mxu0 0
      %6088 = vmatmul.mubr.bf16.gmra.mxu0 %v5082
      %v6089 = vpop.f32.mrf.mxu0
      %v6090 = vadd.f32 %v5517, %v6089
      %v6091 = vpop.f32.mrf.mxu0
      %v6092 = vpop.f32.mrf.mxu0
      %v6093 = vadd.f32 %v5520, %v6092
      %v6094 = vpop.f32.mrf.mxu0
      %6095 = vmatprep.mubr.bf16.mxu0 0
      %6096 = vmatmul.mubr.bf16.gmra.mxu0 %v5084
      %v6097 = vpop.f32.mrf.mxu0
      %v6098 = vadd.f32 %v5525, %v6097
      %v6099 = vpop.f32.mrf.mxu0
      %v6100 = vpop.f32.mrf.mxu0
      %v6101 = vadd.f32 %v5528, %v6100
      %v6102 = vpop.f32.mrf.mxu0
      %6103 = vmatprep.mubr.bf16.mxu0 0
      %6104 = vmatmul.mubr.bf16.gmra.mxu0 %v5086
      %v6105 = vpop.f32.mrf.mxu0
      %v6106 = vadd.f32 %v5533, %v6105
      %v6107 = vpop.f32.mrf.mxu0
      %v6108 = vpop.f32.mrf.mxu0
      %v6109 = vadd.f32 %v5536, %v6108
      %v6110 = vpop.f32.mrf.mxu0
      %6111 = vmatprep.mubr.bf16.mxu0 0
      %6112 = vmatmul.mubr.bf16.gmra.mxu0 %v5088
      %v6113 = vpop.f32.mrf.mxu0
      %v6114 = vadd.f32 %v5541, %v6113
      %v6115 = vpop.f32.mrf.mxu0
      %v6116 = vpop.f32.mrf.mxu0
      %v6117 = vadd.f32 %v5544, %v6116
      %v6118 = vpop.f32.mrf.mxu0
      %6119 = vmatprep.mubr.bf16.mxu0 0
      %6120 = vmatmul.mubr.bf16.gmra.mxu0 %v5090
      %v6121 = vpop.f32.mrf.mxu0
      %v6122 = vadd.f32 %v5549, %v6121
      %v6123 = vpop.f32.mrf.mxu0
      %v6124 = vpop.f32.mrf.mxu0
      %v6125 = vadd.f32 %v5552, %v6124
      %v6126 = vpop.f32.mrf.mxu0
      %6127 = vmatprep.mubr.bf16.mxu0 0
      %6128 = vmatmul.mubr.bf16.gmra.mxu0 %v5092
      %v6129 = vpop.f32.mrf.mxu0
      %v6130 = vadd.f32 %v5557, %v6129
      %v6131 = vpop.f32.mrf.mxu0
      %v6132 = vpop.f32.mrf.mxu0
      %v6133 = vadd.f32 %v5560, %v6132
      %v6134 = vpop.f32.mrf.mxu0
      %6135 = vmatprep.mubr.bf16.mxu0 0
      %6136 = vmatmul.mubr.bf16.gmra.mxu0 %v5094
      %v6137 = vpop.f32.mrf.mxu0
      %v6138 = vadd.f32 %v5565, %v6137
      %v6139 = vpop.f32.mrf.mxu0
      %v6140 = vpop.f32.mrf.mxu0
      %v6141 = vadd.f32 %v5568, %v6140
      %v6142 = vpop.f32.mrf.mxu0
      %6143 = vmatprep.mubr.bf16.mxu0 0
      %6144 = vmatmul.mubr.bf16.gmra.mxu0 %v5096
      %v6145 = vpop.f32.mrf.mxu0
      %v6146 = vadd.f32 %v5573, %v6145
      %v6147 = vpop.f32.mrf.mxu0
      %v6148 = vpop.f32.mrf.mxu0
      %v6149 = vadd.f32 %v5576, %v6148
      %v6150 = vpop.f32.mrf.mxu0
      %6151 = vmatprep.mubr.bf16.mxu0 0
      %6152 = vmatmul.mubr.bf16.gmra.mxu0 %v5098
      %v6153 = vpop.f32.mrf.mxu0
      %v6154 = vadd.f32 %v5581, %v6153
      %v6155 = vpop.f32.mrf.mxu0
      %v6156 = vpop.f32.mrf.mxu0
      %v6157 = vadd.f32 %v5584, %v6156
      %v6158 = vpop.f32.mrf.mxu0
      %6159 = vmatprep.mubr.bf16.mxu0 0
      %6160 = vmatmul.mubr.bf16.gmra.mxu0 %v5100
      %v6161 = vpop.f32.mrf.mxu0
      %v6162 = vadd.f32 %v5589, %v6161
      %v6163 = vpop.f32.mrf.mxu0
      %v6164 = vpop.f32.mrf.mxu0
      %v6165 = vadd.f32 %v5592, %v6164
      %v6166 = vpop.f32.mrf.mxu0
      %6167 = vmatprep.mubr.bf16.mxu0 0
      %6168 = vmatmul.mubr.bf16.gmra.mxu0 %v5102
      %v6169 = vpop.f32.mrf.mxu0
      %v6170 = vadd.f32 %v5597, %v6169
      %v6171 = vpop.f32.mrf.mxu0
      %v6172 = vpop.f32.mrf.mxu0
      %v6173 = vadd.f32 %v5600, %v6172
      %v6174 = vpop.f32.mrf.mxu0
      %6175 = vmatprep.mubr.bf16.mxu0 0
      %6176 = vmatmul.mubr.bf16.gmra.mxu0 %v5104
      %v6177 = vpop.f32.mrf.mxu0
      %v6178 = vadd.f32 %v5605, %v6177
      %v6179 = vpop.f32.mrf.mxu0
      %v6180 = vpop.f32.mrf.mxu0
      %v6181 = vadd.f32 %v5608, %v6180
      %v6182 = vpop.f32.mrf.mxu0
      %6183 = vmatprep.mubr.bf16.mxu0 0
      %6184 = vmatmul.mubr.bf16.gmra.mxu0 %v5106
      %v6185 = vpop.f32.mrf.mxu0
      %v6186 = vadd.f32 %v5613, %v6185
      %v6187 = vpop.f32.mrf.mxu0
      %v6188 = vpop.f32.mrf.mxu0
      %v6189 = vadd.f32 %v5616, %v6188
      %v6190 = vpop.f32.mrf.mxu0
      %6191 = vmatprep.mubr.bf16.mxu0 0
      %6192 = vmatmul.mubr.bf16.gmra.mxu0 %v5108
      %v6193 = vpop.f32.mrf.mxu0
      %v6194 = vadd.f32 %v5621, %v6193
      %v6195 = vpop.f32.mrf.mxu0
      %v6196 = vpop.f32.mrf.mxu0
      %v6197 = vadd.f32 %v5624, %v6196
      %v6198 = vpop.f32.mrf.mxu0
      %6199 = vmatprep.mubr.bf16.mxu0 0
      %6200 = vmatmul.mubr.bf16.gmra.mxu0 %v5110
      %v6201 = vpop.f32.mrf.mxu0
      %v6202 = vadd.f32 %v5629, %v6201
      %v6203 = vpop.f32.mrf.mxu0
      %v6204 = vpop.f32.mrf.mxu0
      %v6205 = vadd.f32 %v5632, %v6204
      %v6206 = vpop.f32.mrf.mxu0
      %6207 = vmatprep.mubr.bf16.mxu0 0
      %6208 = vmatmul.mubr.bf16.gmra.mxu0 %v5112
      %v6209 = vpop.f32.mrf.mxu0
      %v6210 = vadd.f32 %v5637, %v6209
      %v6211 = vpop.f32.mrf.mxu0
      %v6212 = vpop.f32.mrf.mxu0
      %v6213 = vadd.f32 %v5640, %v6212
      %v6214 = vpop.f32.mrf.mxu0
      %6215 = vmatprep.mubr.bf16.mxu0 0
      %6216 = vmatmul.mubr.bf16.gmra.mxu0 %v5114
      %v6217 = vpop.f32.mrf.mxu0
      %v6218 = vadd.f32 %v5645, %v6217
      %v6219 = vpop.f32.mrf.mxu0
      %v6220 = vpop.f32.mrf.mxu0
      %v6221 = vadd.f32 %v5648, %v6220
      %v6222 = vpop.f32.mrf.mxu0
      %6223 = vmatprep.mubr.bf16.mxu0 0
      %6224 = vmatmul.mubr.bf16.gmra.mxu0 %v5116
      %v6225 = vpop.f32.mrf.mxu0
      %v6226 = vadd.f32 %v5653, %v6225
      %v6227 = vpop.f32.mrf.mxu0
      %v6228 = vpop.f32.mrf.mxu0
      %v6229 = vadd.f32 %v5656, %v6228
      %v6230 = vpop.f32.mrf.mxu0
      %6231 = vmatprep.mubr.bf16.mxu0 0
      %6232 = vmatmul.mubr.bf16.gmra.mxu0 %v5118
      %v6233 = vpop.f32.mrf.mxu0
      %v6234 = vadd.f32 %v5661, %v6233
      %v6235 = vpop.f32.mrf.mxu0
      %v6236 = vpop.f32.mrf.mxu0
      %v6237 = vadd.f32 %v5664, %v6236
      %v6238 = vpop.f32.mrf.mxu0
      %6239 = vmatprep.mubr.bf16.mxu0 0
      %6240 = vmatmul.mubr.bf16.gmra.mxu0 %v5120
      %v6241 = vpop.f32.mrf.mxu0
      %v6242 = vadd.f32 %v5669, %v6241
      %v6243 = vpop.f32.mrf.mxu0
      %v6244 = vpop.f32.mrf.mxu0
      %v6245 = vadd.f32 %v5672, %v6244
      %v6246 = vpop.f32.mrf.mxu0
      %6247 = vdwg.mxu0
      %s6248 = scalar_lea.vmem %s1, 56
      %v6249 = vld [vmem:[%s6248] sm:$0xf]
      %v6250 = vld [vmem:[%s6248 + $0x4] sm:$0xf]
      %v6251 = vld [vmem:[%s6248 + $0x8] sm:$0xf]
      %v6252 = vld [vmem:[%s6248 + $0xc] sm:$0xf]
      %v6253 = vld [vmem:[%s6248 + $0x10] sm:$0xf]
      %v6254 = vld [vmem:[%s6248 + $0x14] sm:$0xf]
      %v6255 = vld [vmem:[%s6248 + $0x18] sm:$0xf]
      %v6263 = vunpack.c.l.b16 %v6249
      %v6264 = vunpack.c.l.b16 %v6250
      %v6265 = vunpack.c.l.b16 %v6251
      %v6266 = vunpack.c.l.b16 %v6252
      %v6267 = vunpack.c.l.b16 %v6253
      %v6268 = vunpack.c.l.b16 %v6254
      %v6269 = vunpack.c.l.b16 %v6255
      %v6270 = vpack.c.b16 %v6264, %v6263
      %v6271 = vpack.c.b16 %v6266, %v6265
      %v6272 = vpack.c.b16 %v6268, %v6267
      %v6273 = vpack.c.b16 %v6269, %v6269
      %v6277 = vsel %vm4997, %v4942, 0
      %v6279 = vsel %vm4997, %v4944, 0
      %v6282 = vsel %vm5126, %v6273, 0
      %6284 = vmatprep.subr.bf16.mxu0 0
      %6285 = vmatpush1.bf16.msra.mxu0 0
      %6286 = vmatprep.subr.bf16.mxu0 0
      %6287 = vmatpush1.bf16.msra.mxu0 0
      %6288 = vmatprep.subr.bf16.mxu0 0
      %6289 = vmatpush1.bf16.msra.mxu0 0
      %6290 = vmatprep.subr.bf16.mxu0 0
      %6291 = vmatpush1.bf16.msra.mxu0 0
      %6292 = vmatprep.subr.bf16.mxu0 0
      %6293 = vmatpush1.bf16.msra.mxu0 %v6282
      %6294 = vmatprep.subr.bf16.mxu0 0
      %6295 = vmatpush1.bf16.msra.mxu0 %v6272
      %6296 = vmatprep.subr.bf16.mxu0 0
      %6297 = vmatpush1.bf16.msra.mxu0 %v6271
      %6298 = vmatprep.subr.bf16.mxu0 0
      %6299 = vmatpush1.bf16.msra.mxu0 %v6270
      %6300 = vmatprep.subr.bf16.mxu0 0
      %6301 = vmatpush2.bf16.msra.mxu0 0
      %6302 = vmatprep.subr.bf16.mxu0 0
      %6303 = vmatpush2.bf16.msra.mxu0 0
      %6304 = vmatprep.subr.bf16.mxu0 0
      %6305 = vmatpush2.bf16.msra.mxu0 0
      %6306 = vmatprep.subr.bf16.mxu0 0
      %6307 = vmatpush2.bf16.msra.mxu0 0
      %6308 = vmatprep.subr.bf16.mxu0 0
      %6309 = vmatpush2.bf16.msra.mxu0 0
      %6310 = vmatprep.subr.bf16.mxu0 0
      %6311 = vmatpush2.bf16.msra.mxu0 0
      %6312 = vmatprep.subr.bf16.mxu0 0
      %6313 = vmatpush2.bf16.msra.mxu0 0
      %6314 = vmatprep.subr.bf16.mxu0 0
      %6315 = vmatpush2.bf16.msra.mxu0 0
      %6316 = vmatprep.mubr.bf16.mxu0 0
      %6317 = vmatmul.mubr.bf16.gmra.mxu0 %v5002
      %v6318 = vpop.f32.mrf.mxu0
      %v6319 = vadd.f32 0.0, %v6318
      %v6320 = vpop.f32.mrf.mxu0
      %v6321 = vpop.f32.mrf.mxu0
      %v6322 = vadd.f32 0.0, %v6321
      %v6323 = vpop.f32.mrf.mxu0
      %6324 = vmatprep.mubr.bf16.mxu0 0
      %6325 = vmatmul.mubr.bf16.gmra.mxu0 %v5004
      %v6326 = vpop.f32.mrf.mxu0
      %v6327 = vadd.f32 0.0, %v6326
      %v6328 = vpop.f32.mrf.mxu0
      %v6329 = vpop.f32.mrf.mxu0
      %v6330 = vadd.f32 0.0, %v6329
      %v6331 = vpop.f32.mrf.mxu0
      %6332 = vmatprep.mubr.bf16.mxu0 0
      %6333 = vmatmul.mubr.bf16.gmra.mxu0 %v5006
      %v6334 = vpop.f32.mrf.mxu0
      %v6335 = vadd.f32 0.0, %v6334
      %v6336 = vpop.f32.mrf.mxu0
      %v6337 = vpop.f32.mrf.mxu0
      %v6338 = vadd.f32 0.0, %v6337
      %v6339 = vpop.f32.mrf.mxu0
      %6340 = vmatprep.mubr.bf16.mxu0 0
      %6341 = vmatmul.mubr.bf16.gmra.mxu0 %v5008
      %v6342 = vpop.f32.mrf.mxu0
      %v6343 = vadd.f32 0.0, %v6342
      %v6344 = vpop.f32.mrf.mxu0
      %v6345 = vpop.f32.mrf.mxu0
      %v6346 = vadd.f32 0.0, %v6345
      %v6347 = vpop.f32.mrf.mxu0
      %6348 = vmatprep.mubr.bf16.mxu0 0
      %6349 = vmatmul.mubr.bf16.gmra.mxu0 %v5010
      %v6350 = vpop.f32.mrf.mxu0
      %v6351 = vadd.f32 0.0, %v6350
      %v6352 = vpop.f32.mrf.mxu0
      %v6353 = vpop.f32.mrf.mxu0
      %v6354 = vadd.f32 0.0, %v6353
      %v6355 = vpop.f32.mrf.mxu0
      %6356 = vmatprep.mubr.bf16.mxu0 0
      %6357 = vmatmul.mubr.bf16.gmra.mxu0 %v5012
      %v6358 = vpop.f32.mrf.mxu0
      %v6359 = vadd.f32 0.0, %v6358
      %v6360 = vpop.f32.mrf.mxu0
      %v6361 = vpop.f32.mrf.mxu0
      %v6362 = vadd.f32 0.0, %v6361
      %v6363 = vpop.f32.mrf.mxu0
      %6364 = vmatprep.mubr.bf16.mxu0 0
      %6365 = vmatmul.mubr.bf16.gmra.mxu0 %v5014
      %v6366 = vpop.f32.mrf.mxu0
      %v6367 = vadd.f32 0.0, %v6366
      %v6368 = vpop.f32.mrf.mxu0
      %v6369 = vpop.f32.mrf.mxu0
      %v6370 = vadd.f32 0.0, %v6369
      %v6371 = vpop.f32.mrf.mxu0
      %6372 = vmatprep.mubr.bf16.mxu0 0
      %6373 = vmatmul.mubr.bf16.gmra.mxu0 %v5016
      %v6374 = vpop.f32.mrf.mxu0
      %v6375 = vadd.f32 0.0, %v6374
      %v6376 = vpop.f32.mrf.mxu0
      %v6377 = vpop.f32.mrf.mxu0
      %v6378 = vadd.f32 0.0, %v6377
      %v6379 = vpop.f32.mrf.mxu0
      %6380 = vmatprep.mubr.bf16.mxu0 0
      %6381 = vmatmul.mubr.bf16.gmra.mxu0 %v5018
      %v6382 = vpop.f32.mrf.mxu0
      %v6383 = vadd.f32 0.0, %v6382
      %v6384 = vpop.f32.mrf.mxu0
      %v6385 = vpop.f32.mrf.mxu0
      %v6386 = vadd.f32 0.0, %v6385
      %v6387 = vpop.f32.mrf.mxu0
      %6388 = vmatprep.mubr.bf16.mxu0 0
      %6389 = vmatmul.mubr.bf16.gmra.mxu0 %v5020
      %v6390 = vpop.f32.mrf.mxu0
      %v6391 = vadd.f32 0.0, %v6390
      %v6392 = vpop.f32.mrf.mxu0
      %v6393 = vpop.f32.mrf.mxu0
      %v6394 = vadd.f32 0.0, %v6393
      %v6395 = vpop.f32.mrf.mxu0
      %6396 = vmatprep.mubr.bf16.mxu0 0
      %6397 = vmatmul.mubr.bf16.gmra.mxu0 %v5022
      %v6398 = vpop.f32.mrf.mxu0
      %v6399 = vadd.f32 0.0, %v6398
      %v6400 = vpop.f32.mrf.mxu0
      %v6401 = vpop.f32.mrf.mxu0
      %v6402 = vadd.f32 0.0, %v6401
      %v6403 = vpop.f32.mrf.mxu0
      %6404 = vmatprep.mubr.bf16.mxu0 0
      %6405 = vmatmul.mubr.bf16.gmra.mxu0 %v5024
      %v6406 = vpop.f32.mrf.mxu0
      %v6407 = vadd.f32 0.0, %v6406
      %v6408 = vpop.f32.mrf.mxu0
      %v6409 = vpop.f32.mrf.mxu0
      %v6410 = vadd.f32 0.0, %v6409
      %v6411 = vpop.f32.mrf.mxu0
      %6412 = vmatprep.mubr.bf16.mxu0 0
      %6413 = vmatmul.mubr.bf16.gmra.mxu0 %v5026
      %v6414 = vpop.f32.mrf.mxu0
      %v6415 = vadd.f32 0.0, %v6414
      %v6416 = vpop.f32.mrf.mxu0
      %v6417 = vpop.f32.mrf.mxu0
      %v6418 = vadd.f32 0.0, %v6417
      %v6419 = vpop.f32.mrf.mxu0
      %6420 = vmatprep.mubr.bf16.mxu0 0
      %6421 = vmatmul.mubr.bf16.gmra.mxu0 %v5028
      %v6422 = vpop.f32.mrf.mxu0
      %v6423 = vadd.f32 0.0, %v6422
      %v6424 = vpop.f32.mrf.mxu0
      %v6425 = vpop.f32.mrf.mxu0
      %v6426 = vadd.f32 0.0, %v6425
      %v6427 = vpop.f32.mrf.mxu0
      %6428 = vmatprep.mubr.bf16.mxu0 0
      %6429 = vmatmul.mubr.bf16.gmra.mxu0 %v5030
      %v6430 = vpop.f32.mrf.mxu0
      %v6431 = vadd.f32 0.0, %v6430
      %v6432 = vpop.f32.mrf.mxu0
      %v6433 = vpop.f32.mrf.mxu0
      %v6434 = vadd.f32 0.0, %v6433
      %v6435 = vpop.f32.mrf.mxu0
      %6436 = vmatprep.mubr.bf16.mxu0 0
      %6437 = vmatmul.mubr.bf16.gmra.mxu0 %v5032
      %v6438 = vpop.f32.mrf.mxu0
      %v6439 = vadd.f32 0.0, %v6438
      %v6440 = vpop.f32.mrf.mxu0
      %v6441 = vpop.f32.mrf.mxu0
      %v6442 = vadd.f32 0.0, %v6441
      %v6443 = vpop.f32.mrf.mxu0
      %6444 = vmatprep.mubr.bf16.mxu0 0
      %6445 = vmatmul.mubr.bf16.gmra.mxu0 %v5034
      %v6446 = vpop.f32.mrf.mxu0
      %v6447 = vadd.f32 0.0, %v6446
      %v6448 = vpop.f32.mrf.mxu0
      %v6449 = vpop.f32.mrf.mxu0
      %v6450 = vadd.f32 0.0, %v6449
      %v6451 = vpop.f32.mrf.mxu0
      %6452 = vmatprep.mubr.bf16.mxu0 0
      %6453 = vmatmul.mubr.bf16.gmra.mxu0 %v5036
      %v6454 = vpop.f32.mrf.mxu0
      %v6455 = vadd.f32 0.0, %v6454
      %v6456 = vpop.f32.mrf.mxu0
      %v6457 = vpop.f32.mrf.mxu0
      %v6458 = vadd.f32 0.0, %v6457
      %v6459 = vpop.f32.mrf.mxu0
      %6460 = vmatprep.mubr.bf16.mxu0 0
      %6461 = vmatmul.mubr.bf16.gmra.mxu0 %v5038
      %v6462 = vpop.f32.mrf.mxu0
      %v6463 = vadd.f32 0.0, %v6462
      %v6464 = vpop.f32.mrf.mxu0
      %v6465 = vpop.f32.mrf.mxu0
      %v6466 = vadd.f32 0.0, %v6465
      %v6467 = vpop.f32.mrf.mxu0
      %6468 = vmatprep.mubr.bf16.mxu0 0
      %6469 = vmatmul.mubr.bf16.gmra.mxu0 %v5040
      %v6470 = vpop.f32.mrf.mxu0
      %v6471 = vadd.f32 0.0, %v6470
      %v6472 = vpop.f32.mrf.mxu0
      %v6473 = vpop.f32.mrf.mxu0
      %v6474 = vadd.f32 0.0, %v6473
      %v6475 = vpop.f32.mrf.mxu0
      %6476 = vmatprep.mubr.bf16.mxu0 0
      %6477 = vmatmul.mubr.bf16.gmra.mxu0 %v5042
      %v6478 = vpop.f32.mrf.mxu0
      %v6479 = vadd.f32 0.0, %v6478
      %v6480 = vpop.f32.mrf.mxu0
      %v6481 = vpop.f32.mrf.mxu0
      %v6482 = vadd.f32 0.0, %v6481
      %v6483 = vpop.f32.mrf.mxu0
      %6484 = vmatprep.mubr.bf16.mxu0 0
      %6485 = vmatmul.mubr.bf16.gmra.mxu0 %v5044
      %v6486 = vpop.f32.mrf.mxu0
      %v6487 = vadd.f32 0.0, %v6486
      %v6488 = vpop.f32.mrf.mxu0
      %v6489 = vpop.f32.mrf.mxu0
      %v6490 = vadd.f32 0.0, %v6489
      %v6491 = vpop.f32.mrf.mxu0
      %6492 = vmatprep.mubr.bf16.mxu0 0
      %6493 = vmatmul.mubr.bf16.gmra.mxu0 %v5046
      %v6494 = vpop.f32.mrf.mxu0
      %v6495 = vadd.f32 0.0, %v6494
      %v6496 = vpop.f32.mrf.mxu0
      %v6497 = vpop.f32.mrf.mxu0
      %v6498 = vadd.f32 0.0, %v6497
      %v6499 = vpop.f32.mrf.mxu0
      %6500 = vmatprep.mubr.bf16.mxu0 0
      %6501 = vmatmul.mubr.bf16.gmra.mxu0 %v5048
      %v6502 = vpop.f32.mrf.mxu0
      %v6503 = vadd.f32 0.0, %v6502
      %v6504 = vpop.f32.mrf.mxu0
      %v6505 = vpop.f32.mrf.mxu0
      %v6506 = vadd.f32 0.0, %v6505
      %v6507 = vpop.f32.mrf.mxu0
      %6508 = vmatprep.mubr.bf16.mxu0 0
      %6509 = vmatmul.mubr.bf16.gmra.mxu0 %v5050
      %v6510 = vpop.f32.mrf.mxu0
      %v6511 = vadd.f32 0.0, %v6510
      %v6512 = vpop.f32.mrf.mxu0
      %v6513 = vpop.f32.mrf.mxu0
      %v6514 = vadd.f32 0.0, %v6513
      %v6515 = vpop.f32.mrf.mxu0
      %6516 = vmatprep.mubr.bf16.mxu0 0
      %6517 = vmatmul.mubr.bf16.gmra.mxu0 %v5052
      %v6518 = vpop.f32.mrf.mxu0
      %v6519 = vadd.f32 0.0, %v6518
      %v6520 = vpop.f32.mrf.mxu0
      %v6521 = vpop.f32.mrf.mxu0
      %v6522 = vadd.f32 0.0, %v6521
      %v6523 = vpop.f32.mrf.mxu0
      %6524 = vmatprep.mubr.bf16.mxu0 0
      %6525 = vmatmul.mubr.bf16.gmra.mxu0 %v5054
      %v6526 = vpop.f32.mrf.mxu0
      %v6527 = vadd.f32 0.0, %v6526
      %v6528 = vpop.f32.mrf.mxu0
      %v6529 = vpop.f32.mrf.mxu0
      %v6530 = vadd.f32 0.0, %v6529
      %v6531 = vpop.f32.mrf.mxu0
      %6532 = vmatprep.mubr.bf16.mxu0 0
      %6533 = vmatmul.mubr.bf16.gmra.mxu0 %v5056
      %v6534 = vpop.f32.mrf.mxu0
      %v6535 = vadd.f32 0.0, %v6534
      %v6536 = vpop.f32.mrf.mxu0
      %v6537 = vpop.f32.mrf.mxu0
      %v6538 = vadd.f32 0.0, %v6537
      %v6539 = vpop.f32.mrf.mxu0
      %6540 = vmatprep.mubr.bf16.mxu0 0
      %6541 = vmatmul.mubr.bf16.gmra.mxu0 %v5058
      %v6542 = vpop.f32.mrf.mxu0
      %v6543 = vadd.f32 0.0, %v6542
      %v6544 = vpop.f32.mrf.mxu0
      %v6545 = vpop.f32.mrf.mxu0
      %v6546 = vadd.f32 0.0, %v6545
      %v6547 = vpop.f32.mrf.mxu0
      %6548 = vmatprep.mubr.bf16.mxu0 0
      %6549 = vmatmul.mubr.bf16.gmra.mxu0 %v5060
      %v6550 = vpop.f32.mrf.mxu0
      %v6551 = vadd.f32 0.0, %v6550
      %v6552 = vpop.f32.mrf.mxu0
      %v6553 = vpop.f32.mrf.mxu0
      %v6554 = vadd.f32 0.0, %v6553
      %v6555 = vpop.f32.mrf.mxu0
      %6556 = vmatprep.mubr.bf16.mxu0 0
      %6557 = vmatmul.mubr.bf16.gmra.mxu0 %v5062
      %v6558 = vpop.f32.mrf.mxu0
      %v6559 = vadd.f32 0.0, %v6558
      %v6560 = vpop.f32.mrf.mxu0
      %v6561 = vpop.f32.mrf.mxu0
      %v6562 = vadd.f32 0.0, %v6561
      %v6563 = vpop.f32.mrf.mxu0
      %6564 = vmatprep.mubr.bf16.mxu0 0
      %6565 = vmatmul.mubr.bf16.gmra.mxu0 %v5064
      %v6566 = vpop.f32.mrf.mxu0
      %v6567 = vadd.f32 0.0, %v6566
      %v6568 = vpop.f32.mrf.mxu0
      %v6569 = vpop.f32.mrf.mxu0
      %v6570 = vadd.f32 0.0, %v6569
      %v6571 = vpop.f32.mrf.mxu0
      %6572 = vmatprep.mubr.bf16.mxu0 0
      %6573 = vmatmul.mubr.bf16.gmra.mxu0 %v5066
      %v6574 = vpop.f32.mrf.mxu0
      %v6575 = vadd.f32 0.0, %v6574
      %v6576 = vpop.f32.mrf.mxu0
      %v6577 = vpop.f32.mrf.mxu0
      %v6578 = vadd.f32 0.0, %v6577
      %v6579 = vpop.f32.mrf.mxu0
      %6580 = vmatprep.mubr.bf16.mxu0 0
      %6581 = vmatmul.mubr.bf16.gmra.mxu0 %v5068
      %v6582 = vpop.f32.mrf.mxu0
      %v6583 = vadd.f32 0.0, %v6582
      %v6584 = vpop.f32.mrf.mxu0
      %v6585 = vpop.f32.mrf.mxu0
      %v6586 = vadd.f32 0.0, %v6585
      %v6587 = vpop.f32.mrf.mxu0
      %6588 = vmatprep.mubr.bf16.mxu0 0
      %6589 = vmatmul.mubr.bf16.gmra.mxu0 %v5070
      %v6590 = vpop.f32.mrf.mxu0
      %v6591 = vadd.f32 0.0, %v6590
      %v6592 = vpop.f32.mrf.mxu0
      %v6593 = vpop.f32.mrf.mxu0
      %v6594 = vadd.f32 0.0, %v6593
      %v6595 = vpop.f32.mrf.mxu0
      %6596 = vmatprep.mubr.bf16.mxu0 0
      %6597 = vmatmul.mubr.bf16.gmra.mxu0 %v5072
      %v6598 = vpop.f32.mrf.mxu0
      %v6599 = vadd.f32 0.0, %v6598
      %v6600 = vpop.f32.mrf.mxu0
      %v6601 = vpop.f32.mrf.mxu0
      %v6602 = vadd.f32 0.0, %v6601
      %v6603 = vpop.f32.mrf.mxu0
      %6604 = vmatprep.mubr.bf16.mxu0 0
      %6605 = vmatmul.mubr.bf16.gmra.mxu0 %v5074
      %v6606 = vpop.f32.mrf.mxu0
      %v6607 = vadd.f32 0.0, %v6606
      %v6608 = vpop.f32.mrf.mxu0
      %v6609 = vpop.f32.mrf.mxu0
      %v6610 = vadd.f32 0.0, %v6609
      %v6611 = vpop.f32.mrf.mxu0
      %6612 = vmatprep.mubr.bf16.mxu0 0
      %6613 = vmatmul.mubr.bf16.gmra.mxu0 %v5076
      %v6614 = vpop.f32.mrf.mxu0
      %v6615 = vadd.f32 0.0, %v6614
      %v6616 = vpop.f32.mrf.mxu0
      %v6617 = vpop.f32.mrf.mxu0
      %v6618 = vadd.f32 0.0, %v6617
      %v6619 = vpop.f32.mrf.mxu0
      %6620 = vmatprep.mubr.bf16.mxu0 0
      %6621 = vmatmul.mubr.bf16.gmra.mxu0 %v5078
      %v6622 = vpop.f32.mrf.mxu0
      %v6623 = vadd.f32 0.0, %v6622
      %v6624 = vpop.f32.mrf.mxu0
      %v6625 = vpop.f32.mrf.mxu0
      %v6626 = vadd.f32 0.0, %v6625
      %v6627 = vpop.f32.mrf.mxu0
      %6628 = vmatprep.mubr.bf16.mxu0 0
      %6629 = vmatmul.mubr.bf16.gmra.mxu0 %v5080
      %v6630 = vpop.f32.mrf.mxu0
      %v6631 = vadd.f32 0.0, %v6630
      %v6632 = vpop.f32.mrf.mxu0
      %v6633 = vpop.f32.mrf.mxu0
      %v6634 = vadd.f32 0.0, %v6633
      %v6635 = vpop.f32.mrf.mxu0
      %6636 = vmatprep.mubr.bf16.mxu0 0
      %6637 = vmatmul.mubr.bf16.gmra.mxu0 %v5082
      %v6638 = vpop.f32.mrf.mxu0
      %v6639 = vadd.f32 0.0, %v6638
      %v6640 = vpop.f32.mrf.mxu0
      %v6641 = vpop.f32.mrf.mxu0
      %v6642 = vadd.f32 0.0, %v6641
      %v6643 = vpop.f32.mrf.mxu0
      %6644 = vmatprep.mubr.bf16.mxu0 0
      %6645 = vmatmul.mubr.bf16.gmra.mxu0 %v5084
      %v6646 = vpop.f32.mrf.mxu0
      %v6647 = vadd.f32 0.0, %v6646
      %v6648 = vpop.f32.mrf.mxu0
      %v6649 = vpop.f32.mrf.mxu0
      %v6650 = vadd.f32 0.0, %v6649
      %v6651 = vpop.f32.mrf.mxu0
      %6652 = vmatprep.mubr.bf16.mxu0 0
      %6653 = vmatmul.mubr.bf16.gmra.mxu0 %v5086
      %v6654 = vpop.f32.mrf.mxu0
      %v6655 = vadd.f32 0.0, %v6654
      %v6656 = vpop.f32.mrf.mxu0
      %v6657 = vpop.f32.mrf.mxu0
      %v6658 = vadd.f32 0.0, %v6657
      %v6659 = vpop.f32.mrf.mxu0
      %6660 = vmatprep.mubr.bf16.mxu0 0
      %6661 = vmatmul.mubr.bf16.gmra.mxu0 %v5088
      %v6662 = vpop.f32.mrf.mxu0
      %v6663 = vadd.f32 0.0, %v6662
      %v6664 = vpop.f32.mrf.mxu0
      %v6665 = vpop.f32.mrf.mxu0
      %v6666 = vadd.f32 0.0, %v6665
      %v6667 = vpop.f32.mrf.mxu0
      %6668 = vmatprep.mubr.bf16.mxu0 0
      %6669 = vmatmul.mubr.bf16.gmra.mxu0 %v5090
      %v6670 = vpop.f32.mrf.mxu0
      %v6671 = vadd.f32 0.0, %v6670
      %v6672 = vpop.f32.mrf.mxu0
      %v6673 = vpop.f32.mrf.mxu0
      %v6674 = vadd.f32 0.0, %v6673
      %v6675 = vpop.f32.mrf.mxu0
      %6676 = vmatprep.mubr.bf16.mxu0 0
      %6677 = vmatmul.mubr.bf16.gmra.mxu0 %v5092
      %v6678 = vpop.f32.mrf.mxu0
      %v6679 = vadd.f32 0.0, %v6678
      %v6680 = vpop.f32.mrf.mxu0
      %v6681 = vpop.f32.mrf.mxu0
      %v6682 = vadd.f32 0.0, %v6681
      %v6683 = vpop.f32.mrf.mxu0
      %6684 = vmatprep.mubr.bf16.mxu0 0
      %6685 = vmatmul.mubr.bf16.gmra.mxu0 %v5094
      %v6686 = vpop.f32.mrf.mxu0
      %v6687 = vadd.f32 0.0, %v6686
      %v6688 = vpop.f32.mrf.mxu0
      %v6689 = vpop.f32.mrf.mxu0
      %v6690 = vadd.f32 0.0, %v6689
      %v6691 = vpop.f32.mrf.mxu0
      %6692 = vmatprep.mubr.bf16.mxu0 0
      %6693 = vmatmul.mubr.bf16.gmra.mxu0 %v5096
      %v6694 = vpop.f32.mrf.mxu0
      %v6695 = vadd.f32 0.0, %v6694
      %v6696 = vpop.f32.mrf.mxu0
      %v6697 = vpop.f32.mrf.mxu0
      %v6698 = vadd.f32 0.0, %v6697
      %v6699 = vpop.f32.mrf.mxu0
      %6700 = vmatprep.mubr.bf16.mxu0 0
      %6701 = vmatmul.mubr.bf16.gmra.mxu0 %v5098
      %v6702 = vpop.f32.mrf.mxu0
      %v6703 = vadd.f32 0.0, %v6702
      %v6704 = vpop.f32.mrf.mxu0
      %v6705 = vpop.f32.mrf.mxu0
      %v6706 = vadd.f32 0.0, %v6705
      %v6707 = vpop.f32.mrf.mxu0
      %6708 = vmatprep.mubr.bf16.mxu0 0
      %6709 = vmatmul.mubr.bf16.gmra.mxu0 %v5100
      %v6710 = vpop.f32.mrf.mxu0
      %v6711 = vadd.f32 0.0, %v6710
      %v6712 = vpop.f32.mrf.mxu0
      %v6713 = vpop.f32.mrf.mxu0
      %v6714 = vadd.f32 0.0, %v6713
      %v6715 = vpop.f32.mrf.mxu0
      %6716 = vmatprep.mubr.bf16.mxu0 0
      %6717 = vmatmul.mubr.bf16.gmra.mxu0 %v5102
      %v6718 = vpop.f32.mrf.mxu0
      %v6719 = vadd.f32 0.0, %v6718
      %v6720 = vpop.f32.mrf.mxu0
      %v6721 = vpop.f32.mrf.mxu0
      %v6722 = vadd.f32 0.0, %v6721
      %v6723 = vpop.f32.mrf.mxu0
      %6724 = vmatprep.mubr.bf16.mxu0 0
      %6725 = vmatmul.mubr.bf16.gmra.mxu0 %v5104
      %v6726 = vpop.f32.mrf.mxu0
      %v6727 = vadd.f32 0.0, %v6726
      %v6728 = vpop.f32.mrf.mxu0
      %v6729 = vpop.f32.mrf.mxu0
      %v6730 = vadd.f32 0.0, %v6729
      %v6731 = vpop.f32.mrf.mxu0
      %6732 = vmatprep.mubr.bf16.mxu0 0
      %6733 = vmatmul.mubr.bf16.gmra.mxu0 %v5106
      %v6734 = vpop.f32.mrf.mxu0
      %v6735 = vadd.f32 0.0, %v6734
      %v6736 = vpop.f32.mrf.mxu0
      %v6737 = vpop.f32.mrf.mxu0
      %v6738 = vadd.f32 0.0, %v6737
      %v6739 = vpop.f32.mrf.mxu0
      %6740 = vmatprep.mubr.bf16.mxu0 0
      %6741 = vmatmul.mubr.bf16.gmra.mxu0 %v5108
      %v6742 = vpop.f32.mrf.mxu0
      %v6743 = vadd.f32 0.0, %v6742
      %v6744 = vpop.f32.mrf.mxu0
      %v6745 = vpop.f32.mrf.mxu0
      %v6746 = vadd.f32 0.0, %v6745
      %v6747 = vpop.f32.mrf.mxu0
      %6748 = vmatprep.mubr.bf16.mxu0 0
      %6749 = vmatmul.mubr.bf16.gmra.mxu0 %v5110
      %v6750 = vpop.f32.mrf.mxu0
      %v6751 = vadd.f32 0.0, %v6750
      %v6752 = vpop.f32.mrf.mxu0
      %v6753 = vpop.f32.mrf.mxu0
      %v6754 = vadd.f32 0.0, %v6753
      %v6755 = vpop.f32.mrf.mxu0
      %6756 = vmatprep.mubr.bf16.mxu0 0
      %6757 = vmatmul.mubr.bf16.gmra.mxu0 %v5112
      %v6758 = vpop.f32.mrf.mxu0
      %v6759 = vadd.f32 0.0, %v6758
      %v6760 = vpop.f32.mrf.mxu0
      %v6761 = vpop.f32.mrf.mxu0
      %v6762 = vadd.f32 0.0, %v6761
      %v6763 = vpop.f32.mrf.mxu0
      %6764 = vmatprep.mubr.bf16.mxu0 0
      %6765 = vmatmul.mubr.bf16.gmra.mxu0 %v5114
      %v6766 = vpop.f32.mrf.mxu0
      %v6767 = vadd.f32 0.0, %v6766
      %v6768 = vpop.f32.mrf.mxu0
      %v6769 = vpop.f32.mrf.mxu0
      %v6770 = vadd.f32 0.0, %v6769
      %v6771 = vpop.f32.mrf.mxu0
      %6772 = vmatprep.mubr.bf16.mxu0 0
      %6773 = vmatmul.mubr.bf16.gmra.mxu0 %v5116
      %v6774 = vpop.f32.mrf.mxu0
      %v6775 = vadd.f32 0.0, %v6774
      %v6776 = vpop.f32.mrf.mxu0
      %v6777 = vpop.f32.mrf.mxu0
      %v6778 = vadd.f32 0.0, %v6777
      %v6779 = vpop.f32.mrf.mxu0
      %6780 = vmatprep.mubr.bf16.mxu0 0
      %6781 = vmatmul.mubr.bf16.gmra.mxu0 %v5118
      %v6782 = vpop.f32.mrf.mxu0
      %v6783 = vadd.f32 0.0, %v6782
      %v6784 = vpop.f32.mrf.mxu0
      %v6785 = vpop.f32.mrf.mxu0
      %v6786 = vadd.f32 0.0, %v6785
      %v6787 = vpop.f32.mrf.mxu0
      %6788 = vmatprep.mubr.bf16.mxu0 0
      %6789 = vmatmul.mubr.bf16.gmra.mxu0 %v5120
      %v6790 = vpop.f32.mrf.mxu0
      %v6791 = vadd.f32 0.0, %v6790
      %v6792 = vpop.f32.mrf.mxu0
      %v6793 = vpop.f32.mrf.mxu0
      %v6794 = vadd.f32 0.0, %v6793
      %v6795 = vpop.f32.mrf.mxu0
      %6796 = vmatprep.mubr.bf16.mxu0 0
      %6797 = vmatmul.mubr.bf16.gmra.mxu0 %v5122
      %v6798 = vpop.f32.mrf.mxu0
      %v6799 = vadd.f32 0.0, %v6798
      %v6800 = vpop.f32.mrf.mxu0
      %v6801 = vpop.f32.mrf.mxu0
      %v6802 = vadd.f32 0.0, %v6801
      %v6803 = vpop.f32.mrf.mxu0
      %6804 = vmatprep.mubr.bf16.mxu0 0
      %6805 = vmatmul.mubr.bf16.gmra.mxu0 %v5124
      %v6806 = vpop.f32.mrf.mxu0
      %v6807 = vadd.f32 0.0, %v6806
      %v6808 = vpop.f32.mrf.mxu0
      %v6809 = vpop.f32.mrf.mxu0
      %v6810 = vadd.f32 0.0, %v6809
      %v6811 = vpop.f32.mrf.mxu0
      %6812 = vmatprep.mubr.bf16.mxu0 0
      %6813 = vmatmul.mubr.bf16.gmra.mxu0 %v6277
      %v6814 = vpop.f32.mrf.mxu0
      %v6815 = vadd.f32 0.0, %v6814
      %v6816 = vpop.f32.mrf.mxu0
      %v6817 = vpop.f32.mrf.mxu0
      %v6818 = vadd.f32 0.0, %v6817
      %v6819 = vpop.f32.mrf.mxu0
      %6820 = vmatprep.mubr.bf16.mxu0 0
      %6821 = vmatmul.mubr.bf16.gmra.mxu0 %v6279
      %v6822 = vpop.f32.mrf.mxu0
      %v6823 = vadd.f32 0.0, %v6822
      %v6824 = vpop.f32.mrf.mxu0
      %v6825 = vpop.f32.mrf.mxu0
      %v6826 = vadd.f32 0.0, %v6825
      %v6827 = vpop.f32.mrf.mxu0
      %6828 = vdwg.mxu0
      %v6829 = vadd.f32 %v5738, %v6319
      %v6830 = vadd.f32 %v5741, %v6322
      %v6831 = vadd.f32 %v5746, %v6327
      %v6832 = vadd.f32 %v5749, %v6330
      %v6833 = vadd.f32 %v5754, %v6335
      %v6834 = vadd.f32 %v5757, %v6338
      %v6835 = vadd.f32 %v5762, %v6343
      %v6836 = vadd.f32 %v5765, %v6346
      %v6837 = vadd.f32 %v5770, %v6351
      %v6838 = vadd.f32 %v5773, %v6354
      %v6839 = vadd.f32 %v5778, %v6359
      %v6840 = vadd.f32 %v5781, %v6362
      %v6841 = vadd.f32 %v5786, %v6367
      %v6842 = vadd.f32 %v5789, %v6370
      %v6843 = vadd.f32 %v5794, %v6375
      %v6844 = vadd.f32 %v5797, %v6378
      %v6845 = vadd.f32 %v5802, %v6383
      %v6846 = vadd.f32 %v5805, %v6386
      %v6847 = vadd.f32 %v5810, %v6391
      %v6848 = vadd.f32 %v5813, %v6394
      %v6849 = vadd.f32 %v5818, %v6399
      %v6850 = vadd.f32 %v5821, %v6402
      %v6851 = vadd.f32 %v5826, %v6407
      %v6852 = vadd.f32 %v5829, %v6410
      %v6853 = vadd.f32 %v5834, %v6415
      %v6854 = vadd.f32 %v5837, %v6418
      %v6855 = vadd.f32 %v5842, %v6423
      %v6856 = vadd.f32 %v5845, %v6426
      %v6857 = vadd.f32 %v5850, %v6431
      %v6858 = vadd.f32 %v5853, %v6434
      %v6859 = vadd.f32 %v5858, %v6439
      %v6860 = vadd.f32 %v5861, %v6442
      %v6861 = vadd.f32 %v5866, %v6447
      %v6862 = vadd.f32 %v5869, %v6450
      %v6863 = vadd.f32 %v5874, %v6455
      %v6864 = vadd.f32 %v5877, %v6458
      %v6865 = vadd.f32 %v5882, %v6463
      %v6866 = vadd.f32 %v5885, %v6466
      %v6867 = vadd.f32 %v5890, %v6471
      %v6868 = vadd.f32 %v5893, %v6474
      %v6869 = vadd.f32 %v5898, %v6479
      %v6870 = vadd.f32 %v5901, %v6482
      %v6871 = vadd.f32 %v5906, %v6487
      %v6872 = vadd.f32 %v5909, %v6490
      %v6873 = vadd.f32 %v5914, %v6495
      %v6874 = vadd.f32 %v5917, %v6498
      %v6875 = vadd.f32 %v5922, %v6503
      %v6876 = vadd.f32 %v5925, %v6506
      %v6877 = vadd.f32 %v5930, %v6511
      %v6878 = vadd.f32 %v5933, %v6514
      %v6879 = vadd.f32 %v5938, %v6519
      %v6880 = vadd.f32 %v5941, %v6522
      %v6881 = vadd.f32 %v5946, %v6527
      %v6882 = vadd.f32 %v5949, %v6530
      %v6883 = vadd.f32 %v5954, %v6535
      %v6884 = vadd.f32 %v5957, %v6538
      %v6885 = vadd.f32 %v5962, %v6543
      %v6886 = vadd.f32 %v5965, %v6546
      %v6887 = vadd.f32 %v5970, %v6551
      %v6888 = vadd.f32 %v5973, %v6554
      %v6889 = vadd.f32 %v5978, %v6559
      %v6890 = vadd.f32 %v5981, %v6562
      %v6891 = vadd.f32 %v5986, %v6567
      %v6892 = vadd.f32 %v5989, %v6570
      %v6893 = vadd.f32 %v5994, %v6575
      %v6894 = vadd.f32 %v5997, %v6578
      %v6895 = vadd.f32 %v6002, %v6583
      %v6896 = vadd.f32 %v6005, %v6586
      %v6897 = vadd.f32 %v6010, %v6591
      %v6898 = vadd.f32 %v6013, %v6594
      %v6899 = vadd.f32 %v6018, %v6599
      %v6900 = vadd.f32 %v6021, %v6602
      %v6901 = vadd.f32 %v6026, %v6607
      %v6902 = vadd.f32 %v6029, %v6610
      %v6903 = vadd.f32 %v6034, %v6615
      %v6904 = vadd.f32 %v6037, %v6618
      %v6905 = vadd.f32 %v6042, %v6623
      %v6906 = vadd.f32 %v6045, %v6626
      %v6907 = vadd.f32 %v6050, %v6631
      %v6908 = vadd.f32 %v6053, %v6634
      %v6909 = vadd.f32 %v6058, %v6639
      %v6910 = vadd.f32 %v6061, %v6642
      %v6911 = vadd.f32 %v6066, %v6647
      %v6912 = vadd.f32 %v6069, %v6650
      %v6913 = vadd.f32 %v6074, %v6655
      %v6914 = vadd.f32 %v6077, %v6658
      %v6915 = vadd.f32 %v6082, %v6663
      %v6916 = vadd.f32 %v6085, %v6666
      %v6917 = vadd.f32 %v6090, %v6671
      %v6918 = vadd.f32 %v6093, %v6674
      %v6919 = vadd.f32 %v6098, %v6679
      %v6920 = vadd.f32 %v6101, %v6682
      %v6921 = vadd.f32 %v6106, %v6687
      %v6922 = vadd.f32 %v6109, %v6690
      %v6923 = vadd.f32 %v6114, %v6695
      %v6924 = vadd.f32 %v6117, %v6698
      %v6925 = vadd.f32 %v6122, %v6703
      %v6926 = vadd.f32 %v6125, %v6706
      %v6927 = vadd.f32 %v6130, %v6711
      %v6928 = vadd.f32 %v6133, %v6714
      %v6929 = vadd.f32 %v6138, %v6719
      %v6930 = vadd.f32 %v6141, %v6722
      %v6931 = vadd.f32 %v6146, %v6727
      %v6932 = vadd.f32 %v6149, %v6730
      %v6933 = vadd.f32 %v6154, %v6735
      %v6934 = vadd.f32 %v6157, %v6738
      %v6935 = vadd.f32 %v6162, %v6743
      %v6936 = vadd.f32 %v6165, %v6746
      %v6937 = vadd.f32 %v6170, %v6751
      %v6938 = vadd.f32 %v6173, %v6754
      %v6939 = vadd.f32 %v6178, %v6759
      %v6940 = vadd.f32 %v6181, %v6762
      %v6941 = vadd.f32 %v6186, %v6767
      %v6942 = vadd.f32 %v6189, %v6770
      %v6943 = vadd.f32 %v6194, %v6775
      %v6944 = vadd.f32 %v6197, %v6778
      %v6945 = vadd.f32 %v6202, %v6783
      %v6946 = vadd.f32 %v6205, %v6786
      %v6947 = vadd.f32 %v6210, %v6791
      %v6948 = vadd.f32 %v6213, %v6794
      %v6949 = vadd.f32 %v6218, %v6799
      %v6950 = vadd.f32 %v6221, %v6802
      %v6951 = vadd.f32 %v6226, %v6807
      %v6952 = vadd.f32 %v6229, %v6810
      %v6953 = vadd.f32 %v6234, %v6815
      %v6954 = vadd.f32 %v6237, %v6818
      %v6955 = vadd.f32 %v6242, %v6823
      %v6956 = vadd.f32 %v6245, %v6826
      %s6957 = scalar_lea.vmem %s1, 84
      %v6958 = vld [vmem:[%s6957] sm:$0xf]
      %v6959 = vld [vmem:[%s6957 + $0x4] sm:$0xf]
      %v6960 = vld [vmem:[%s6957 + $0x8] sm:$0xf]
      %v6961 = vld [vmem:[%s6957 + $0xc] sm:$0xf]
      %v6962 = vld [vmem:[%s6957 + $0x10] sm:$0xf]
      %v6963 = vld [vmem:[%s6957 + $0x14] sm:$0xf]
      %v6964 = vld [vmem:[%s6957 + $0x18] sm:$0xf]
      %v6972 = vunpack.c.l.b16 %v6958
      %v6973 = vunpack.c.l.b16 %v6959
      %v6974 = vunpack.c.l.b16 %v6960
      %v6975 = vunpack.c.l.b16 %v6961
      %v6976 = vunpack.c.l.b16 %v6962
      %v6977 = vunpack.c.l.b16 %v6963
      %v6978 = vunpack.c.l.b16 %v6964
      %v6979 = vpack.c.b16 %v6973, %v6972
      %v6980 = vpack.c.b16 %v6975, %v6974
      %v6981 = vpack.c.b16 %v6977, %v6976
      %v6982 = vpack.c.b16 %v6978, %v6978
      %v6986 = vsel %vm4997, %v4946, 0
      %v6988 = vsel %vm4997, %v4948, 0
      %v6991 = vsel %vm5126, %v6982, 0
      %6993 = vmatprep.subr.bf16.mxu0 0
      %6994 = vmatpush1.bf16.msra.mxu0 0
      %6995 = vmatprep.subr.bf16.mxu0 0
      %6996 = vmatpush1.bf16.msra.mxu0 0
      %6997 = vmatprep.subr.bf16.mxu0 0
      %6998 = vmatpush1.bf16.msra.mxu0 0
      %6999 = vmatprep.subr.bf16.mxu0 0
      %7000 = vmatpush1.bf16.msra.mxu0 0
      %7001 = vmatprep.subr.bf16.mxu0 0
      %7002 = vmatpush1.bf16.msra.mxu0 %v6991
      %7003 = vmatprep.subr.bf16.mxu0 0
      %7004 = vmatpush1.bf16.msra.mxu0 %v6981
      %7005 = vmatprep.subr.bf16.mxu0 0
      %7006 = vmatpush1.bf16.msra.mxu0 %v6980
      %7007 = vmatprep.subr.bf16.mxu0 0
      %7008 = vmatpush1.bf16.msra.mxu0 %v6979
      %7009 = vmatprep.subr.bf16.mxu0 0
      %7010 = vmatpush2.bf16.msra.mxu0 0
      %7011 = vmatprep.subr.bf16.mxu0 0
      %7012 = vmatpush2.bf16.msra.mxu0 0
      %7013 = vmatprep.subr.bf16.mxu0 0
      %7014 = vmatpush2.bf16.msra.mxu0 0
      %7015 = vmatprep.subr.bf16.mxu0 0
      %7016 = vmatpush2.bf16.msra.mxu0 0
      %7017 = vmatprep.subr.bf16.mxu0 0
      %7018 = vmatpush2.bf16.msra.mxu0 0
      %7019 = vmatprep.subr.bf16.mxu0 0
      %7020 = vmatpush2.bf16.msra.mxu0 0
      %7021 = vmatprep.subr.bf16.mxu0 0
      %7022 = vmatpush2.bf16.msra.mxu0 0
      %7023 = vmatprep.subr.bf16.mxu0 0
      %7024 = vmatpush2.bf16.msra.mxu0 0
      %7025 = vmatprep.mubr.bf16.mxu0 0
      %7026 = vmatmul.mubr.bf16.gmra.mxu0 %v5006
      %v7027 = vpop.f32.mrf.mxu0
      %v7028 = vadd.f32 0.0, %v7027
      %v7029 = vpop.f32.mrf.mxu0
      %v7030 = vpop.f32.mrf.mxu0
      %v7031 = vadd.f32 0.0, %v7030
      %v7032 = vpop.f32.mrf.mxu0
      %7033 = vmatprep.mubr.bf16.mxu0 0
      %7034 = vmatmul.mubr.bf16.gmra.mxu0 %v5008
      %v7035 = vpop.f32.mrf.mxu0
      %v7036 = vadd.f32 0.0, %v7035
      %v7037 = vpop.f32.mrf.mxu0
      %v7038 = vpop.f32.mrf.mxu0
      %v7039 = vadd.f32 0.0, %v7038
      %v7040 = vpop.f32.mrf.mxu0
      %7041 = vmatprep.mubr.bf16.mxu0 0
      %7042 = vmatmul.mubr.bf16.gmra.mxu0 %v5010
      %v7043 = vpop.f32.mrf.mxu0
      %v7044 = vadd.f32 0.0, %v7043
      %v7045 = vpop.f32.mrf.mxu0
      %v7046 = vpop.f32.mrf.mxu0
      %v7047 = vadd.f32 0.0, %v7046
      %v7048 = vpop.f32.mrf.mxu0
      %7049 = vmatprep.mubr.bf16.mxu0 0
      %7050 = vmatmul.mubr.bf16.gmra.mxu0 %v5012
      %v7051 = vpop.f32.mrf.mxu0
      %v7052 = vadd.f32 0.0, %v7051
      %v7053 = vpop.f32.mrf.mxu0
      %v7054 = vpop.f32.mrf.mxu0
      %v7055 = vadd.f32 0.0, %v7054
      %v7056 = vpop.f32.mrf.mxu0
      %7057 = vmatprep.mubr.bf16.mxu0 0
      %7058 = vmatmul.mubr.bf16.gmra.mxu0 %v5014
      %v7059 = vpop.f32.mrf.mxu0
      %v7060 = vadd.f32 0.0, %v7059
      %v7061 = vpop.f32.mrf.mxu0
      %v7062 = vpop.f32.mrf.mxu0
      %v7063 = vadd.f32 0.0, %v7062
      %v7064 = vpop.f32.mrf.mxu0
      %7065 = vmatprep.mubr.bf16.mxu0 0
      %7066 = vmatmul.mubr.bf16.gmra.mxu0 %v5016
      %v7067 = vpop.f32.mrf.mxu0
      %v7068 = vadd.f32 0.0, %v7067
      %v7069 = vpop.f32.mrf.mxu0
      %v7070 = vpop.f32.mrf.mxu0
      %v7071 = vadd.f32 0.0, %v7070
      %v7072 = vpop.f32.mrf.mxu0
      %7073 = vmatprep.mubr.bf16.mxu0 0
      %7074 = vmatmul.mubr.bf16.gmra.mxu0 %v5018
      %v7075 = vpop.f32.mrf.mxu0
      %v7076 = vadd.f32 0.0, %v7075
      %v7077 = vpop.f32.mrf.mxu0
      %v7078 = vpop.f32.mrf.mxu0
      %v7079 = vadd.f32 0.0, %v7078
      %v7080 = vpop.f32.mrf.mxu0
      %7081 = vmatprep.mubr.bf16.mxu0 0
      %7082 = vmatmul.mubr.bf16.gmra.mxu0 %v5020
      %v7083 = vpop.f32.mrf.mxu0
      %v7084 = vadd.f32 0.0, %v7083
      %v7085 = vpop.f32.mrf.mxu0
      %v7086 = vpop.f32.mrf.mxu0
      %v7087 = vadd.f32 0.0, %v7086
      %v7088 = vpop.f32.mrf.mxu0
      %7089 = vmatprep.mubr.bf16.mxu0 0
      %7090 = vmatmul.mubr.bf16.gmra.mxu0 %v5022
      %v7091 = vpop.f32.mrf.mxu0
      %v7092 = vadd.f32 0.0, %v7091
      %v7093 = vpop.f32.mrf.mxu0
      %v7094 = vpop.f32.mrf.mxu0
      %v7095 = vadd.f32 0.0, %v7094
      %v7096 = vpop.f32.mrf.mxu0
      %7097 = vmatprep.mubr.bf16.mxu0 0
      %7098 = vmatmul.mubr.bf16.gmra.mxu0 %v5024
      %v7099 = vpop.f32.mrf.mxu0
      %v7100 = vadd.f32 0.0, %v7099
      %v7101 = vpop.f32.mrf.mxu0
      %v7102 = vpop.f32.mrf.mxu0
      %v7103 = vadd.f32 0.0, %v7102
      %v7104 = vpop.f32.mrf.mxu0
      %7105 = vmatprep.mubr.bf16.mxu0 0
      %7106 = vmatmul.mubr.bf16.gmra.mxu0 %v5026
      %v7107 = vpop.f32.mrf.mxu0
      %v7108 = vadd.f32 0.0, %v7107
      %v7109 = vpop.f32.mrf.mxu0
      %v7110 = vpop.f32.mrf.mxu0
      %v7111 = vadd.f32 0.0, %v7110
      %v7112 = vpop.f32.mrf.mxu0
      %7113 = vmatprep.mubr.bf16.mxu0 0
      %7114 = vmatmul.mubr.bf16.gmra.mxu0 %v5028
      %v7115 = vpop.f32.mrf.mxu0
      %v7116 = vadd.f32 0.0, %v7115
      %v7117 = vpop.f32.mrf.mxu0
      %v7118 = vpop.f32.mrf.mxu0
      %v7119 = vadd.f32 0.0, %v7118
      %v7120 = vpop.f32.mrf.mxu0
      %7121 = vmatprep.mubr.bf16.mxu0 0
      %7122 = vmatmul.mubr.bf16.gmra.mxu0 %v5030
      %v7123 = vpop.f32.mrf.mxu0
      %v7124 = vadd.f32 0.0, %v7123
      %v7125 = vpop.f32.mrf.mxu0
      %v7126 = vpop.f32.mrf.mxu0
      %v7127 = vadd.f32 0.0, %v7126
      %v7128 = vpop.f32.mrf.mxu0
      %7129 = vmatprep.mubr.bf16.mxu0 0
      %7130 = vmatmul.mubr.bf16.gmra.mxu0 %v5032
      %v7131 = vpop.f32.mrf.mxu0
      %v7132 = vadd.f32 0.0, %v7131
      %v7133 = vpop.f32.mrf.mxu0
      %v7134 = vpop.f32.mrf.mxu0
      %v7135 = vadd.f32 0.0, %v7134
      %v7136 = vpop.f32.mrf.mxu0
      %7137 = vmatprep.mubr.bf16.mxu0 0
      %7138 = vmatmul.mubr.bf16.gmra.mxu0 %v5034
      %v7139 = vpop.f32.mrf.mxu0
      %v7140 = vadd.f32 0.0, %v7139
      %v7141 = vpop.f32.mrf.mxu0
      %v7142 = vpop.f32.mrf.mxu0
      %v7143 = vadd.f32 0.0, %v7142
      %v7144 = vpop.f32.mrf.mxu0
      %7145 = vmatprep.mubr.bf16.mxu0 0
      %7146 = vmatmul.mubr.bf16.gmra.mxu0 %v5036
      %v7147 = vpop.f32.mrf.mxu0
      %v7148 = vadd.f32 0.0, %v7147
      %v7149 = vpop.f32.mrf.mxu0
      %v7150 = vpop.f32.mrf.mxu0
      %v7151 = vadd.f32 0.0, %v7150
      %v7152 = vpop.f32.mrf.mxu0
      %7153 = vmatprep.mubr.bf16.mxu0 0
      %7154 = vmatmul.mubr.bf16.gmra.mxu0 %v5038
      %v7155 = vpop.f32.mrf.mxu0
      %v7156 = vadd.f32 0.0, %v7155
      %v7157 = vpop.f32.mrf.mxu0
      %v7158 = vpop.f32.mrf.mxu0
      %v7159 = vadd.f32 0.0, %v7158
      %v7160 = vpop.f32.mrf.mxu0
      %7161 = vmatprep.mubr.bf16.mxu0 0
      %7162 = vmatmul.mubr.bf16.gmra.mxu0 %v5040
      %v7163 = vpop.f32.mrf.mxu0
      %v7164 = vadd.f32 0.0, %v7163
      %v7165 = vpop.f32.mrf.mxu0
      %v7166 = vpop.f32.mrf.mxu0
      %v7167 = vadd.f32 0.0, %v7166
      %v7168 = vpop.f32.mrf.mxu0
      %7169 = vmatprep.mubr.bf16.mxu0 0
      %7170 = vmatmul.mubr.bf16.gmra.mxu0 %v5042
      %v7171 = vpop.f32.mrf.mxu0
      %v7172 = vadd.f32 0.0, %v7171
      %v7173 = vpop.f32.mrf.mxu0
      %v7174 = vpop.f32.mrf.mxu0
      %v7175 = vadd.f32 0.0, %v7174
      %v7176 = vpop.f32.mrf.mxu0
      %7177 = vmatprep.mubr.bf16.mxu0 0
      %7178 = vmatmul.mubr.bf16.gmra.mxu0 %v5044
      %v7179 = vpop.f32.mrf.mxu0
      %v7180 = vadd.f32 0.0, %v7179
      %v7181 = vpop.f32.mrf.mxu0
      %v7182 = vpop.f32.mrf.mxu0
      %v7183 = vadd.f32 0.0, %v7182
      %v7184 = vpop.f32.mrf.mxu0
      %7185 = vmatprep.mubr.bf16.mxu0 0
      %7186 = vmatmul.mubr.bf16.gmra.mxu0 %v5046
      %v7187 = vpop.f32.mrf.mxu0
      %v7188 = vadd.f32 0.0, %v7187
      %v7189 = vpop.f32.mrf.mxu0
      %v7190 = vpop.f32.mrf.mxu0
      %v7191 = vadd.f32 0.0, %v7190
      %v7192 = vpop.f32.mrf.mxu0
      %7193 = vmatprep.mubr.bf16.mxu0 0
      %7194 = vmatmul.mubr.bf16.gmra.mxu0 %v5048
      %v7195 = vpop.f32.mrf.mxu0
      %v7196 = vadd.f32 0.0, %v7195
      %v7197 = vpop.f32.mrf.mxu0
      %v7198 = vpop.f32.mrf.mxu0
      %v7199 = vadd.f32 0.0, %v7198
      %v7200 = vpop.f32.mrf.mxu0
      %7201 = vmatprep.mubr.bf16.mxu0 0
      %7202 = vmatmul.mubr.bf16.gmra.mxu0 %v5050
      %v7203 = vpop.f32.mrf.mxu0
      %v7204 = vadd.f32 0.0, %v7203
      %v7205 = vpop.f32.mrf.mxu0
      %v7206 = vpop.f32.mrf.mxu0
      %v7207 = vadd.f32 0.0, %v7206
      %v7208 = vpop.f32.mrf.mxu0
      %7209 = vmatprep.mubr.bf16.mxu0 0
      %7210 = vmatmul.mubr.bf16.gmra.mxu0 %v5052
      %v7211 = vpop.f32.mrf.mxu0
      %v7212 = vadd.f32 0.0, %v7211
      %v7213 = vpop.f32.mrf.mxu0
      %v7214 = vpop.f32.mrf.mxu0
      %v7215 = vadd.f32 0.0, %v7214
      %v7216 = vpop.f32.mrf.mxu0
      %7217 = vmatprep.mubr.bf16.mxu0 0
      %7218 = vmatmul.mubr.bf16.gmra.mxu0 %v5054
      %v7219 = vpop.f32.mrf.mxu0
      %v7220 = vadd.f32 0.0, %v7219
      %v7221 = vpop.f32.mrf.mxu0
      %v7222 = vpop.f32.mrf.mxu0
      %v7223 = vadd.f32 0.0, %v7222
      %v7224 = vpop.f32.mrf.mxu0
      %7225 = vmatprep.mubr.bf16.mxu0 0
      %7226 = vmatmul.mubr.bf16.gmra.mxu0 %v5056
      %v7227 = vpop.f32.mrf.mxu0
      %v7228 = vadd.f32 0.0, %v7227
      %v7229 = vpop.f32.mrf.mxu0
      %v7230 = vpop.f32.mrf.mxu0
      %v7231 = vadd.f32 0.0, %v7230
      %v7232 = vpop.f32.mrf.mxu0
      %7233 = vmatprep.mubr.bf16.mxu0 0
      %7234 = vmatmul.mubr.bf16.gmra.mxu0 %v5058
      %v7235 = vpop.f32.mrf.mxu0
      %v7236 = vadd.f32 0.0, %v7235
      %v7237 = vpop.f32.mrf.mxu0
      %v7238 = vpop.f32.mrf.mxu0
      %v7239 = vadd.f32 0.0, %v7238
      %v7240 = vpop.f32.mrf.mxu0
      %7241 = vmatprep.mubr.bf16.mxu0 0
      %7242 = vmatmul.mubr.bf16.gmra.mxu0 %v5060
      %v7243 = vpop.f32.mrf.mxu0
      %v7244 = vadd.f32 0.0, %v7243
      %v7245 = vpop.f32.mrf.mxu0
      %v7246 = vpop.f32.mrf.mxu0
      %v7247 = vadd.f32 0.0, %v7246
      %v7248 = vpop.f32.mrf.mxu0
      %7249 = vmatprep.mubr.bf16.mxu0 0
      %7250 = vmatmul.mubr.bf16.gmra.mxu0 %v5062
      %v7251 = vpop.f32.mrf.mxu0
      %v7252 = vadd.f32 0.0, %v7251
      %v7253 = vpop.f32.mrf.mxu0
      %v7254 = vpop.f32.mrf.mxu0
      %v7255 = vadd.f32 0.0, %v7254
      %v7256 = vpop.f32.mrf.mxu0
      %7257 = vmatprep.mubr.bf16.mxu0 0
      %7258 = vmatmul.mubr.bf16.gmra.mxu0 %v5064
      %v7259 = vpop.f32.mrf.mxu0
      %v7260 = vadd.f32 0.0, %v7259
      %v7261 = vpop.f32.mrf.mxu0
      %v7262 = vpop.f32.mrf.mxu0
      %v7263 = vadd.f32 0.0, %v7262
      %v7264 = vpop.f32.mrf.mxu0
      %7265 = vmatprep.mubr.bf16.mxu0 0
      %7266 = vmatmul.mubr.bf16.gmra.mxu0 %v5066
      %v7267 = vpop.f32.mrf.mxu0
      %v7268 = vadd.f32 0.0, %v7267
      %v7269 = vpop.f32.mrf.mxu0
      %v7270 = vpop.f32.mrf.mxu0
      %v7271 = vadd.f32 0.0, %v7270
      %v7272 = vpop.f32.mrf.mxu0
      %7273 = vmatprep.mubr.bf16.mxu0 0
      %7274 = vmatmul.mubr.bf16.gmra.mxu0 %v5068
      %v7275 = vpop.f32.mrf.mxu0
      %v7276 = vadd.f32 0.0, %v7275
      %v7277 = vpop.f32.mrf.mxu0
      %v7278 = vpop.f32.mrf.mxu0
      %v7279 = vadd.f32 0.0, %v7278
      %v7280 = vpop.f32.mrf.mxu0
      %7281 = vmatprep.mubr.bf16.mxu0 0
      %7282 = vmatmul.mubr.bf16.gmra.mxu0 %v5070
      %v7283 = vpop.f32.mrf.mxu0
      %v7284 = vadd.f32 0.0, %v7283
      %v7285 = vpop.f32.mrf.mxu0
      %v7286 = vpop.f32.mrf.mxu0
      %v7287 = vadd.f32 0.0, %v7286
      %v7288 = vpop.f32.mrf.mxu0
      %7289 = vmatprep.mubr.bf16.mxu0 0
      %7290 = vmatmul.mubr.bf16.gmra.mxu0 %v5072
      %v7291 = vpop.f32.mrf.mxu0
      %v7292 = vadd.f32 0.0, %v7291
      %v7293 = vpop.f32.mrf.mxu0
      %v7294 = vpop.f32.mrf.mxu0
      %v7295 = vadd.f32 0.0, %v7294
      %v7296 = vpop.f32.mrf.mxu0
      %7297 = vmatprep.mubr.bf16.mxu0 0
      %7298 = vmatmul.mubr.bf16.gmra.mxu0 %v5074
      %v7299 = vpop.f32.mrf.mxu0
      %v7300 = vadd.f32 0.0, %v7299
      %v7301 = vpop.f32.mrf.mxu0
      %v7302 = vpop.f32.mrf.mxu0
      %v7303 = vadd.f32 0.0, %v7302
      %v7304 = vpop.f32.mrf.mxu0
      %7305 = vmatprep.mubr.bf16.mxu0 0
      %7306 = vmatmul.mubr.bf16.gmra.mxu0 %v5076
      %v7307 = vpop.f32.mrf.mxu0
      %v7308 = vadd.f32 0.0, %v7307
      %v7309 = vpop.f32.mrf.mxu0
      %v7310 = vpop.f32.mrf.mxu0
      %v7311 = vadd.f32 0.0, %v7310
      %v7312 = vpop.f32.mrf.mxu0
      %7313 = vmatprep.mubr.bf16.mxu0 0
      %7314 = vmatmul.mubr.bf16.gmra.mxu0 %v5078
      %v7315 = vpop.f32.mrf.mxu0
      %v7316 = vadd.f32 0.0, %v7315
      %v7317 = vpop.f32.mrf.mxu0
      %v7318 = vpop.f32.mrf.mxu0
      %v7319 = vadd.f32 0.0, %v7318
      %v7320 = vpop.f32.mrf.mxu0
      %7321 = vmatprep.mubr.bf16.mxu0 0
      %7322 = vmatmul.mubr.bf16.gmra.mxu0 %v5080
      %v7323 = vpop.f32.mrf.mxu0
      %v7324 = vadd.f32 0.0, %v7323
      %v7325 = vpop.f32.mrf.mxu0
      %v7326 = vpop.f32.mrf.mxu0
      %v7327 = vadd.f32 0.0, %v7326
      %v7328 = vpop.f32.mrf.mxu0
      %7329 = vmatprep.mubr.bf16.mxu0 0
      %7330 = vmatmul.mubr.bf16.gmra.mxu0 %v5082
      %v7331 = vpop.f32.mrf.mxu0
      %v7332 = vadd.f32 0.0, %v7331
      %v7333 = vpop.f32.mrf.mxu0
      %v7334 = vpop.f32.mrf.mxu0
      %v7335 = vadd.f32 0.0, %v7334
      %v7336 = vpop.f32.mrf.mxu0
      %7337 = vmatprep.mubr.bf16.mxu0 0
      %7338 = vmatmul.mubr.bf16.gmra.mxu0 %v5084
      %v7339 = vpop.f32.mrf.mxu0
      %v7340 = vadd.f32 0.0, %v7339
      %v7341 = vpop.f32.mrf.mxu0
      %v7342 = vpop.f32.mrf.mxu0
      %v7343 = vadd.f32 0.0, %v7342
      %v7344 = vpop.f32.mrf.mxu0
      %7345 = vmatprep.mubr.bf16.mxu0 0
      %7346 = vmatmul.mubr.bf16.gmra.mxu0 %v5086
      %v7347 = vpop.f32.mrf.mxu0
      %v7348 = vadd.f32 0.0, %v7347
      %v7349 = vpop.f32.mrf.mxu0
      %v7350 = vpop.f32.mrf.mxu0
      %v7351 = vadd.f32 0.0, %v7350
      %v7352 = vpop.f32.mrf.mxu0
      %7353 = vmatprep.mubr.bf16.mxu0 0
      %7354 = vmatmul.mubr.bf16.gmra.mxu0 %v5088
      %v7355 = vpop.f32.mrf.mxu0
      %v7356 = vadd.f32 0.0, %v7355
      %v7357 = vpop.f32.mrf.mxu0
      %v7358 = vpop.f32.mrf.mxu0
      %v7359 = vadd.f32 0.0, %v7358
      %v7360 = vpop.f32.mrf.mxu0
      %7361 = vmatprep.mubr.bf16.mxu0 0
      %7362 = vmatmul.mubr.bf16.gmra.mxu0 %v5090
      %v7363 = vpop.f32.mrf.mxu0
      %v7364 = vadd.f32 0.0, %v7363
      %v7365 = vpop.f32.mrf.mxu0
      %v7366 = vpop.f32.mrf.mxu0
      %v7367 = vadd.f32 0.0, %v7366
      %v7368 = vpop.f32.mrf.mxu0
      %7369 = vmatprep.mubr.bf16.mxu0 0
      %7370 = vmatmul.mubr.bf16.gmra.mxu0 %v5092
      %v7371 = vpop.f32.mrf.mxu0
      %v7372 = vadd.f32 0.0, %v7371
      %v7373 = vpop.f32.mrf.mxu0
      %v7374 = vpop.f32.mrf.mxu0
      %v7375 = vadd.f32 0.0, %v7374
      %v7376 = vpop.f32.mrf.mxu0
      %7377 = vmatprep.mubr.bf16.mxu0 0
      %7378 = vmatmul.mubr.bf16.gmra.mxu0 %v5094
      %v7379 = vpop.f32.mrf.mxu0
      %v7380 = vadd.f32 0.0, %v7379
      %v7381 = vpop.f32.mrf.mxu0
      %v7382 = vpop.f32.mrf.mxu0
      %v7383 = vadd.f32 0.0, %v7382
      %v7384 = vpop.f32.mrf.mxu0
      %7385 = vmatprep.mubr.bf16.mxu0 0
      %7386 = vmatmul.mubr.bf16.gmra.mxu0 %v5096
      %v7387 = vpop.f32.mrf.mxu0
      %v7388 = vadd.f32 0.0, %v7387
      %v7389 = vpop.f32.mrf.mxu0
      %v7390 = vpop.f32.mrf.mxu0
      %v7391 = vadd.f32 0.0, %v7390
      %v7392 = vpop.f32.mrf.mxu0
      %7393 = vmatprep.mubr.bf16.mxu0 0
      %7394 = vmatmul.mubr.bf16.gmra.mxu0 %v5098
      %v7395 = vpop.f32.mrf.mxu0
      %v7396 = vadd.f32 0.0, %v7395
      %v7397 = vpop.f32.mrf.mxu0
      %v7398 = vpop.f32.mrf.mxu0
      %v7399 = vadd.f32 0.0, %v7398
      %v7400 = vpop.f32.mrf.mxu0
      %7401 = vmatprep.mubr.bf16.mxu0 0
      %7402 = vmatmul.mubr.bf16.gmra.mxu0 %v5100
      %v7403 = vpop.f32.mrf.mxu0
      %v7404 = vadd.f32 0.0, %v7403
      %v7405 = vpop.f32.mrf.mxu0
      %v7406 = vpop.f32.mrf.mxu0
      %v7407 = vadd.f32 0.0, %v7406
      %v7408 = vpop.f32.mrf.mxu0
      %7409 = vmatprep.mubr.bf16.mxu0 0
      %7410 = vmatmul.mubr.bf16.gmra.mxu0 %v5102
      %v7411 = vpop.f32.mrf.mxu0
      %v7412 = vadd.f32 0.0, %v7411
      %v7413 = vpop.f32.mrf.mxu0
      %v7414 = vpop.f32.mrf.mxu0
      %v7415 = vadd.f32 0.0, %v7414
      %v7416 = vpop.f32.mrf.mxu0
      %7417 = vmatprep.mubr.bf16.mxu0 0
      %7418 = vmatmul.mubr.bf16.gmra.mxu0 %v5104
      %v7419 = vpop.f32.mrf.mxu0
      %v7420 = vadd.f32 0.0, %v7419
      %v7421 = vpop.f32.mrf.mxu0
      %v7422 = vpop.f32.mrf.mxu0
      %v7423 = vadd.f32 0.0, %v7422
      %v7424 = vpop.f32.mrf.mxu0
      %7425 = vmatprep.mubr.bf16.mxu0 0
      %7426 = vmatmul.mubr.bf16.gmra.mxu0 %v5106
      %v7427 = vpop.f32.mrf.mxu0
      %v7428 = vadd.f32 0.0, %v7427
      %v7429 = vpop.f32.mrf.mxu0
      %v7430 = vpop.f32.mrf.mxu0
      %v7431 = vadd.f32 0.0, %v7430
      %v7432 = vpop.f32.mrf.mxu0
      %7433 = vmatprep.mubr.bf16.mxu0 0
      %7434 = vmatmul.mubr.bf16.gmra.mxu0 %v5108
      %v7435 = vpop.f32.mrf.mxu0
      %v7436 = vadd.f32 0.0, %v7435
      %v7437 = vpop.f32.mrf.mxu0
      %v7438 = vpop.f32.mrf.mxu0
      %v7439 = vadd.f32 0.0, %v7438
      %v7440 = vpop.f32.mrf.mxu0
      %7441 = vmatprep.mubr.bf16.mxu0 0
      %7442 = vmatmul.mubr.bf16.gmra.mxu0 %v5110
      %v7443 = vpop.f32.mrf.mxu0
      %v7444 = vadd.f32 0.0, %v7443
      %v7445 = vpop.f32.mrf.mxu0
      %v7446 = vpop.f32.mrf.mxu0
      %v7447 = vadd.f32 0.0, %v7446
      %v7448 = vpop.f32.mrf.mxu0
      %7449 = vmatprep.mubr.bf16.mxu0 0
      %7450 = vmatmul.mubr.bf16.gmra.mxu0 %v5112
      %v7451 = vpop.f32.mrf.mxu0
      %v7452 = vadd.f32 0.0, %v7451
      %v7453 = vpop.f32.mrf.mxu0
      %v7454 = vpop.f32.mrf.mxu0
      %v7455 = vadd.f32 0.0, %v7454
      %v7456 = vpop.f32.mrf.mxu0
      %7457 = vmatprep.mubr.bf16.mxu0 0
      %7458 = vmatmul.mubr.bf16.gmra.mxu0 %v5114
      %v7459 = vpop.f32.mrf.mxu0
      %v7460 = vadd.f32 0.0, %v7459
      %v7461 = vpop.f32.mrf.mxu0
      %v7462 = vpop.f32.mrf.mxu0
      %v7463 = vadd.f32 0.0, %v7462
      %v7464 = vpop.f32.mrf.mxu0
      %7465 = vmatprep.mubr.bf16.mxu0 0
      %7466 = vmatmul.mubr.bf16.gmra.mxu0 %v5116
      %v7467 = vpop.f32.mrf.mxu0
      %v7468 = vadd.f32 0.0, %v7467
      %v7469 = vpop.f32.mrf.mxu0
      %v7470 = vpop.f32.mrf.mxu0
      %v7471 = vadd.f32 0.0, %v7470
      %v7472 = vpop.f32.mrf.mxu0
      %7473 = vmatprep.mubr.bf16.mxu0 0
      %7474 = vmatmul.mubr.bf16.gmra.mxu0 %v5118
      %v7475 = vpop.f32.mrf.mxu0
      %v7476 = vadd.f32 0.0, %v7475
      %v7477 = vpop.f32.mrf.mxu0
      %v7478 = vpop.f32.mrf.mxu0
      %v7479 = vadd.f32 0.0, %v7478
      %v7480 = vpop.f32.mrf.mxu0
      %7481 = vmatprep.mubr.bf16.mxu0 0
      %7482 = vmatmul.mubr.bf16.gmra.mxu0 %v5120
      %v7483 = vpop.f32.mrf.mxu0
      %v7484 = vadd.f32 0.0, %v7483
      %v7485 = vpop.f32.mrf.mxu0
      %v7486 = vpop.f32.mrf.mxu0
      %v7487 = vadd.f32 0.0, %v7486
      %v7488 = vpop.f32.mrf.mxu0
      %7489 = vmatprep.mubr.bf16.mxu0 0
      %7490 = vmatmul.mubr.bf16.gmra.mxu0 %v5122
      %v7491 = vpop.f32.mrf.mxu0
      %v7492 = vadd.f32 0.0, %v7491
      %v7493 = vpop.f32.mrf.mxu0
      %v7494 = vpop.f32.mrf.mxu0
      %v7495 = vadd.f32 0.0, %v7494
      %v7496 = vpop.f32.mrf.mxu0
      %7497 = vmatprep.mubr.bf16.mxu0 0
      %7498 = vmatmul.mubr.bf16.gmra.mxu0 %v5124
      %v7499 = vpop.f32.mrf.mxu0
      %v7500 = vadd.f32 0.0, %v7499
      %v7501 = vpop.f32.mrf.mxu0
      %v7502 = vpop.f32.mrf.mxu0
      %v7503 = vadd.f32 0.0, %v7502
      %v7504 = vpop.f32.mrf.mxu0
      %7505 = vmatprep.mubr.bf16.mxu0 0
      %7506 = vmatmul.mubr.bf16.gmra.mxu0 %v6277
      %v7507 = vpop.f32.mrf.mxu0
      %v7508 = vadd.f32 0.0, %v7507
      %v7509 = vpop.f32.mrf.mxu0
      %v7510 = vpop.f32.mrf.mxu0
      %v7511 = vadd.f32 0.0, %v7510
      %v7512 = vpop.f32.mrf.mxu0
      %7513 = vmatprep.mubr.bf16.mxu0 0
      %7514 = vmatmul.mubr.bf16.gmra.mxu0 %v6279
      %v7515 = vpop.f32.mrf.mxu0
      %v7516 = vadd.f32 0.0, %v7515
      %v7517 = vpop.f32.mrf.mxu0
      %v7518 = vpop.f32.mrf.mxu0
      %v7519 = vadd.f32 0.0, %v7518
      %v7520 = vpop.f32.mrf.mxu0
      %7521 = vmatprep.mubr.bf16.mxu0 0
      %7522 = vmatmul.mubr.bf16.gmra.mxu0 %v6986
      %v7523 = vpop.f32.mrf.mxu0
      %v7524 = vadd.f32 0.0, %v7523
      %v7525 = vpop.f32.mrf.mxu0
      %v7526 = vpop.f32.mrf.mxu0
      %v7527 = vadd.f32 0.0, %v7526
      %v7528 = vpop.f32.mrf.mxu0
      %7529 = vmatprep.mubr.bf16.mxu0 0
      %7530 = vmatmul.mubr.bf16.gmra.mxu0 %v6988
      %v7531 = vpop.f32.mrf.mxu0
      %v7532 = vadd.f32 0.0, %v7531
      %v7533 = vpop.f32.mrf.mxu0
      %v7534 = vpop.f32.mrf.mxu0
      %v7535 = vadd.f32 0.0, %v7534
      %v7536 = vpop.f32.mrf.mxu0
      %7537 = vdwg.mxu0
      %v7538 = vadd.f32 %v6829, %v7028
      %v7539 = vadd.f32 %v6830, %v7031
      %v7540 = vadd.f32 %v6831, %v7036
      %v7541 = vadd.f32 %v6832, %v7039
      %v7542 = vadd.f32 %v6833, %v7044
      %v7543 = vadd.f32 %v6834, %v7047
      %v7544 = vadd.f32 %v6835, %v7052
      %v7545 = vadd.f32 %v6836, %v7055
      %v7546 = vadd.f32 %v6837, %v7060
      %v7547 = vadd.f32 %v6838, %v7063
      %v7548 = vadd.f32 %v6839, %v7068
      %v7549 = vadd.f32 %v6840, %v7071
      %v7550 = vadd.f32 %v6841, %v7076
      %v7551 = vadd.f32 %v6842, %v7079
      %v7552 = vadd.f32 %v6843, %v7084
      %v7553 = vadd.f32 %v6844, %v7087
      %v7554 = vadd.f32 %v6845, %v7092
      %v7555 = vadd.f32 %v6846, %v7095
      %v7556 = vadd.f32 %v6847, %v7100
      %v7557 = vadd.f32 %v6848, %v7103
      %v7558 = vadd.f32 %v6849, %v7108
      %v7559 = vadd.f32 %v6850, %v7111
      %v7560 = vadd.f32 %v6851, %v7116
      %v7561 = vadd.f32 %v6852, %v7119
      %v7562 = vadd.f32 %v6853, %v7124
      %v7563 = vadd.f32 %v6854, %v7127
      %v7564 = vadd.f32 %v6855, %v7132
      %v7565 = vadd.f32 %v6856, %v7135
      %v7566 = vadd.f32 %v6857, %v7140
      %v7567 = vadd.f32 %v6858, %v7143
      %v7568 = vadd.f32 %v6859, %v7148
      %v7569 = vadd.f32 %v6860, %v7151
      %v7570 = vadd.f32 %v6861, %v7156
      %v7571 = vadd.f32 %v6862, %v7159
      %v7572 = vadd.f32 %v6863, %v7164
      %v7573 = vadd.f32 %v6864, %v7167
      %v7574 = vadd.f32 %v6865, %v7172
      %v7575 = vadd.f32 %v6866, %v7175
      %v7576 = vadd.f32 %v6867, %v7180
      %v7577 = vadd.f32 %v6868, %v7183
      %v7578 = vadd.f32 %v6869, %v7188
      %v7579 = vadd.f32 %v6870, %v7191
      %v7580 = vadd.f32 %v6871, %v7196
      %v7581 = vadd.f32 %v6872, %v7199
      %v7582 = vadd.f32 %v6873, %v7204
      %v7583 = vadd.f32 %v6874, %v7207
      %v7584 = vadd.f32 %v6875, %v7212
      %v7585 = vadd.f32 %v6876, %v7215
      %v7586 = vadd.f32 %v6877, %v7220
      %v7587 = vadd.f32 %v6878, %v7223
      %v7588 = vadd.f32 %v6879, %v7228
      %v7589 = vadd.f32 %v6880, %v7231
      %v7590 = vadd.f32 %v6881, %v7236
      %v7591 = vadd.f32 %v6882, %v7239
      %v7592 = vadd.f32 %v6883, %v7244
      %v7593 = vadd.f32 %v6884, %v7247
      %v7594 = vadd.f32 %v6885, %v7252
      %v7595 = vadd.f32 %v6886, %v7255
      %v7596 = vadd.f32 %v6887, %v7260
      %v7597 = vadd.f32 %v6888, %v7263
      %v7598 = vadd.f32 %v6889, %v7268
      %v7599 = vadd.f32 %v6890, %v7271
      %v7600 = vadd.f32 %v6891, %v7276
      %v7601 = vadd.f32 %v6892, %v7279
      %v7602 = vadd.f32 %v6893, %v7284
      %v7603 = vadd.f32 %v6894, %v7287
      %v7604 = vadd.f32 %v6895, %v7292
      %v7605 = vadd.f32 %v6896, %v7295
      %v7606 = vadd.f32 %v6897, %v7300
      %v7607 = vadd.f32 %v6898, %v7303
      %v7608 = vadd.f32 %v6899, %v7308
      %v7609 = vadd.f32 %v6900, %v7311
      %v7610 = vadd.f32 %v6901, %v7316
      %v7611 = vadd.f32 %v6902, %v7319
      %v7612 = vadd.f32 %v6903, %v7324
      %v7613 = vadd.f32 %v6904, %v7327
      %v7614 = vadd.f32 %v6905, %v7332
      %v7615 = vadd.f32 %v6906, %v7335
      %v7616 = vadd.f32 %v6907, %v7340
      %v7617 = vadd.f32 %v6908, %v7343
      %v7618 = vadd.f32 %v6909, %v7348
      %v7619 = vadd.f32 %v6910, %v7351
      %v7620 = vadd.f32 %v6911, %v7356
      %v7621 = vadd.f32 %v6912, %v7359
      %v7622 = vadd.f32 %v6913, %v7364
      %v7623 = vadd.f32 %v6914, %v7367
      %v7624 = vadd.f32 %v6915, %v7372
      %v7625 = vadd.f32 %v6916, %v7375
      %v7626 = vadd.f32 %v6917, %v7380
      %v7627 = vadd.f32 %v6918, %v7383
      %v7628 = vadd.f32 %v6919, %v7388
      %v7629 = vadd.f32 %v6920, %v7391
      %v7630 = vadd.f32 %v6921, %v7396
      %v7631 = vadd.f32 %v6922, %v7399
      %v7632 = vadd.f32 %v6923, %v7404
      %v7633 = vadd.f32 %v6924, %v7407
      %v7634 = vadd.f32 %v6925, %v7412
      %v7635 = vadd.f32 %v6926, %v7415
      %v7636 = vadd.f32 %v6927, %v7420
      %v7637 = vadd.f32 %v6928, %v7423
      %v7638 = vadd.f32 %v6929, %v7428
      %v7639 = vadd.f32 %v6930, %v7431
      %v7640 = vadd.f32 %v6931, %v7436
      %v7641 = vadd.f32 %v6932, %v7439
      %v7642 = vadd.f32 %v6933, %v7444
      %v7643 = vadd.f32 %v6934, %v7447
      %v7644 = vadd.f32 %v6935, %v7452
      %v7645 = vadd.f32 %v6936, %v7455
      %v7646 = vadd.f32 %v6937, %v7460
      %v7647 = vadd.f32 %v6938, %v7463
      %v7648 = vadd.f32 %v6939, %v7468
      %v7649 = vadd.f32 %v6940, %v7471
      %v7650 = vadd.f32 %v6941, %v7476
      %v7651 = vadd.f32 %v6942, %v7479
      %v7652 = vadd.f32 %v6943, %v7484
      %v7653 = vadd.f32 %v6944, %v7487
      %v7654 = vadd.f32 %v6945, %v7492
      %v7655 = vadd.f32 %v6946, %v7495
      %v7656 = vadd.f32 %v6947, %v7500
      %v7657 = vadd.f32 %v6948, %v7503
      %v7658 = vadd.f32 %v6949, %v7508
      %v7659 = vadd.f32 %v6950, %v7511
      %v7660 = vadd.f32 %v6951, %v7516
      %v7661 = vadd.f32 %v6952, %v7519
      %v7662 = vadd.f32 %v6953, %v7524
      %v7663 = vadd.f32 %v6954, %v7527
      %v7664 = vadd.f32 %v6955, %v7532
      %v7665 = vadd.f32 %v6956, %v7535
      %s7666 = scalar_lea.vmem %s1, 112
      %v7667 = vld [vmem:[%s7666] sm:$0xf]
      %v7668 = vld [vmem:[%s7666 + $0x4] sm:$0xf]
      %v7669 = vld [vmem:[%s7666 + $0x8] sm:$0xf]
      %v7670 = vld [vmem:[%s7666 + $0xc] sm:$0xf]
      %v7671 = vld [vmem:[%s7666 + $0x10] sm:$0xf]
      %v7672 = vld [vmem:[%s7666 + $0x14] sm:$0xf]
      %v7673 = vld [vmem:[%s7666 + $0x18] sm:$0xf]
      %v7681 = vunpack.c.l.b16 %v7667
      %v7682 = vunpack.c.l.b16 %v7668
      %v7683 = vunpack.c.l.b16 %v7669
      %v7684 = vunpack.c.l.b16 %v7670
      %v7685 = vunpack.c.l.b16 %v7671
      %v7686 = vunpack.c.l.b16 %v7672
      %v7687 = vunpack.c.l.b16 %v7673
      %v7688 = vpack.c.b16 %v7682, %v7681
      %v7689 = vpack.c.b16 %v7684, %v7683
      %v7690 = vpack.c.b16 %v7686, %v7685
      %v7691 = vpack.c.b16 %v7687, %v7687
      %v7695 = vsel %vm4997, %v4950, 0
      %v7697 = vsel %vm4997, %v4952, 0
      %v7700 = vsel %vm5126, %v7691, 0
      %7702 = vmatprep.subr.bf16.mxu0 0
      %7703 = vmatpush1.bf16.msra.mxu0 0
      %7704 = vmatprep.subr.bf16.mxu0 0
      %7705 = vmatpush1.bf16.msra.mxu0 0
      %7706 = vmatprep.subr.bf16.mxu0 0
      %7707 = vmatpush1.bf16.msra.mxu0 0
      %7708 = vmatprep.subr.bf16.mxu0 0
      %7709 = vmatpush1.bf16.msra.mxu0 0
      %7710 = vmatprep.subr.bf16.mxu0 0
      %7711 = vmatpush1.bf16.msra.mxu0 %v7700
      %7712 = vmatprep.subr.bf16.mxu0 0
      %7713 = vmatpush1.bf16.msra.mxu0 %v7690
      %7714 = vmatprep.subr.bf16.mxu0 0
      %7715 = vmatpush1.bf16.msra.mxu0 %v7689
      %7716 = vmatprep.subr.bf16.mxu0 0
      %7717 = vmatpush1.bf16.msra.mxu0 %v7688
      %7718 = vmatprep.subr.bf16.mxu0 0
      %7719 = vmatpush2.bf16.msra.mxu0 0
      %7720 = vmatprep.subr.bf16.mxu0 0
      %7721 = vmatpush2.bf16.msra.mxu0 0
      %7722 = vmatprep.subr.bf16.mxu0 0
      %7723 = vmatpush2.bf16.msra.mxu0 0
      %7724 = vmatprep.subr.bf16.mxu0 0
      %7725 = vmatpush2.bf16.msra.mxu0 0
      %7726 = vmatprep.subr.bf16.mxu0 0
      %7727 = vmatpush2.bf16.msra.mxu0 0
      %7728 = vmatprep.subr.bf16.mxu0 0
      %7729 = vmatpush2.bf16.msra.mxu0 0
      %7730 = vmatprep.subr.bf16.mxu0 0
      %7731 = vmatpush2.bf16.msra.mxu0 0
      %7732 = vmatprep.subr.bf16.mxu0 0
      %7733 = vmatpush2.bf16.msra.mxu0 0
      %7734 = vmatprep.mubr.bf16.mxu0 0
      %7735 = vmatmul.mubr.bf16.gmra.mxu0 %v5010
      %v7736 = vpop.f32.mrf.mxu0
      %v7737 = vadd.f32 0.0, %v7736
      %v7738 = vpop.f32.mrf.mxu0
      %v7739 = vpop.f32.mrf.mxu0
      %v7740 = vadd.f32 0.0, %v7739
      %v7741 = vpop.f32.mrf.mxu0
      %7742 = vmatprep.mubr.bf16.mxu0 0
      %7743 = vmatmul.mubr.bf16.gmra.mxu0 %v5012
      %v7744 = vpop.f32.mrf.mxu0
      %v7745 = vadd.f32 0.0, %v7744
      %v7746 = vpop.f32.mrf.mxu0
      %v7747 = vpop.f32.mrf.mxu0
      %v7748 = vadd.f32 0.0, %v7747
      %v7749 = vpop.f32.mrf.mxu0
      %7750 = vmatprep.mubr.bf16.mxu0 0
      %7751 = vmatmul.mubr.bf16.gmra.mxu0 %v5014
      %v7752 = vpop.f32.mrf.mxu0
      %v7753 = vadd.f32 0.0, %v7752
      %v7754 = vpop.f32.mrf.mxu0
      %v7755 = vpop.f32.mrf.mxu0
      %v7756 = vadd.f32 0.0, %v7755
      %v7757 = vpop.f32.mrf.mxu0
      %7758 = vmatprep.mubr.bf16.mxu0 0
      %7759 = vmatmul.mubr.bf16.gmra.mxu0 %v5016
      %v7760 = vpop.f32.mrf.mxu0
      %v7761 = vadd.f32 0.0, %v7760
      %v7762 = vpop.f32.mrf.mxu0
      %v7763 = vpop.f32.mrf.mxu0
      %v7764 = vadd.f32 0.0, %v7763
      %v7765 = vpop.f32.mrf.mxu0
      %7766 = vmatprep.mubr.bf16.mxu0 0
      %7767 = vmatmul.mubr.bf16.gmra.mxu0 %v5018
      %v7768 = vpop.f32.mrf.mxu0
      %v7769 = vadd.f32 0.0, %v7768
      %v7770 = vpop.f32.mrf.mxu0
      %v7771 = vpop.f32.mrf.mxu0
      %v7772 = vadd.f32 0.0, %v7771
      %v7773 = vpop.f32.mrf.mxu0
      %7774 = vmatprep.mubr.bf16.mxu0 0
      %7775 = vmatmul.mubr.bf16.gmra.mxu0 %v5020
      %v7776 = vpop.f32.mrf.mxu0
      %v7777 = vadd.f32 0.0, %v7776
      %v7778 = vpop.f32.mrf.mxu0
      %v7779 = vpop.f32.mrf.mxu0
      %v7780 = vadd.f32 0.0, %v7779
      %v7781 = vpop.f32.mrf.mxu0
      %7782 = vmatprep.mubr.bf16.mxu0 0
      %7783 = vmatmul.mubr.bf16.gmra.mxu0 %v5022
      %v7784 = vpop.f32.mrf.mxu0
      %v7785 = vadd.f32 0.0, %v7784
      %v7786 = vpop.f32.mrf.mxu0
      %v7787 = vpop.f32.mrf.mxu0
      %v7788 = vadd.f32 0.0, %v7787
      %v7789 = vpop.f32.mrf.mxu0
      %7790 = vmatprep.mubr.bf16.mxu0 0
      %7791 = vmatmul.mubr.bf16.gmra.mxu0 %v5024
      %v7792 = vpop.f32.mrf.mxu0
      %v7793 = vadd.f32 0.0, %v7792
      %v7794 = vpop.f32.mrf.mxu0
      %v7795 = vpop.f32.mrf.mxu0
      %v7796 = vadd.f32 0.0, %v7795
      %v7797 = vpop.f32.mrf.mxu0
      %7798 = vmatprep.mubr.bf16.mxu0 0
      %7799 = vmatmul.mubr.bf16.gmra.mxu0 %v5026
      %v7800 = vpop.f32.mrf.mxu0
      %v7801 = vadd.f32 0.0, %v7800
      %v7802 = vpop.f32.mrf.mxu0
      %v7803 = vpop.f32.mrf.mxu0
      %v7804 = vadd.f32 0.0, %v7803
      %v7805 = vpop.f32.mrf.mxu0
      %7806 = vmatprep.mubr.bf16.mxu0 0
      %7807 = vmatmul.mubr.bf16.gmra.mxu0 %v5028
      %v7808 = vpop.f32.mrf.mxu0
      %v7809 = vadd.f32 0.0, %v7808
      %v7810 = vpop.f32.mrf.mxu0
      %v7811 = vpop.f32.mrf.mxu0
      %v7812 = vadd.f32 0.0, %v7811
      %v7813 = vpop.f32.mrf.mxu0
      %7814 = vmatprep.mubr.bf16.mxu0 0
      %7815 = vmatmul.mubr.bf16.gmra.mxu0 %v5030
      %v7816 = vpop.f32.mrf.mxu0
      %v7817 = vadd.f32 0.0, %v7816
      %v7818 = vpop.f32.mrf.mxu0
      %v7819 = vpop.f32.mrf.mxu0
      %v7820 = vadd.f32 0.0, %v7819
      %v7821 = vpop.f32.mrf.mxu0
      %7822 = vmatprep.mubr.bf16.mxu0 0
      %7823 = vmatmul.mubr.bf16.gmra.mxu0 %v5032
      %v7824 = vpop.f32.mrf.mxu0
      %v7825 = vadd.f32 0.0, %v7824
      %v7826 = vpop.f32.mrf.mxu0
      %v7827 = vpop.f32.mrf.mxu0
      %v7828 = vadd.f32 0.0, %v7827
      %v7829 = vpop.f32.mrf.mxu0
      %7830 = vmatprep.mubr.bf16.mxu0 0
      %7831 = vmatmul.mubr.bf16.gmra.mxu0 %v5034
      %v7832 = vpop.f32.mrf.mxu0
      %v7833 = vadd.f32 0.0, %v7832
      %v7834 = vpop.f32.mrf.mxu0
      %v7835 = vpop.f32.mrf.mxu0
      %v7836 = vadd.f32 0.0, %v7835
      %v7837 = vpop.f32.mrf.mxu0
      %7838 = vmatprep.mubr.bf16.mxu0 0
      %7839 = vmatmul.mubr.bf16.gmra.mxu0 %v5036
      %v7840 = vpop.f32.mrf.mxu0
      %v7841 = vadd.f32 0.0, %v7840
      %v7842 = vpop.f32.mrf.mxu0
      %v7843 = vpop.f32.mrf.mxu0
      %v7844 = vadd.f32 0.0, %v7843
      %v7845 = vpop.f32.mrf.mxu0
      %7846 = vmatprep.mubr.bf16.mxu0 0
      %7847 = vmatmul.mubr.bf16.gmra.mxu0 %v5038
      %v7848 = vpop.f32.mrf.mxu0
      %v7849 = vadd.f32 0.0, %v7848
      %v7850 = vpop.f32.mrf.mxu0
      %v7851 = vpop.f32.mrf.mxu0
      %v7852 = vadd.f32 0.0, %v7851
      %v7853 = vpop.f32.mrf.mxu0
      %7854 = vmatprep.mubr.bf16.mxu0 0
      %7855 = vmatmul.mubr.bf16.gmra.mxu0 %v5040
      %v7856 = vpop.f32.mrf.mxu0
      %v7857 = vadd.f32 0.0, %v7856
      %v7858 = vpop.f32.mrf.mxu0
      %v7859 = vpop.f32.mrf.mxu0
      %v7860 = vadd.f32 0.0, %v7859
      %v7861 = vpop.f32.mrf.mxu0
      %7862 = vmatprep.mubr.bf16.mxu0 0
      %7863 = vmatmul.mubr.bf16.gmra.mxu0 %v5042
      %v7864 = vpop.f32.mrf.mxu0
      %v7865 = vadd.f32 0.0, %v7864
      %v7866 = vpop.f32.mrf.mxu0
      %v7867 = vpop.f32.mrf.mxu0
      %v7868 = vadd.f32 0.0, %v7867
      %v7869 = vpop.f32.mrf.mxu0
      %7870 = vmatprep.mubr.bf16.mxu0 0
      %7871 = vmatmul.mubr.bf16.gmra.mxu0 %v5044
      %v7872 = vpop.f32.mrf.mxu0
      %v7873 = vadd.f32 0.0, %v7872
      %v7874 = vpop.f32.mrf.mxu0
      %v7875 = vpop.f32.mrf.mxu0
      %v7876 = vadd.f32 0.0, %v7875
      %v7877 = vpop.f32.mrf.mxu0
      %7878 = vmatprep.mubr.bf16.mxu0 0
      %7879 = vmatmul.mubr.bf16.gmra.mxu0 %v5046
      %v7880 = vpop.f32.mrf.mxu0
      %v7881 = vadd.f32 0.0, %v7880
      %v7882 = vpop.f32.mrf.mxu0
      %v7883 = vpop.f32.mrf.mxu0
      %v7884 = vadd.f32 0.0, %v7883
      %v7885 = vpop.f32.mrf.mxu0
      %7886 = vmatprep.mubr.bf16.mxu0 0
      %7887 = vmatmul.mubr.bf16.gmra.mxu0 %v5048
      %v7888 = vpop.f32.mrf.mxu0
      %v7889 = vadd.f32 0.0, %v7888
      %v7890 = vpop.f32.mrf.mxu0
      %v7891 = vpop.f32.mrf.mxu0
      %v7892 = vadd.f32 0.0, %v7891
      %v7893 = vpop.f32.mrf.mxu0
      %7894 = vmatprep.mubr.bf16.mxu0 0
      %7895 = vmatmul.mubr.bf16.gmra.mxu0 %v5050
      %v7896 = vpop.f32.mrf.mxu0
      %v7897 = vadd.f32 0.0, %v7896
      %v7898 = vpop.f32.mrf.mxu0
      %v7899 = vpop.f32.mrf.mxu0
      %v7900 = vadd.f32 0.0, %v7899
      %v7901 = vpop.f32.mrf.mxu0
      %7902 = vmatprep.mubr.bf16.mxu0 0
      %7903 = vmatmul.mubr.bf16.gmra.mxu0 %v5052
      %v7904 = vpop.f32.mrf.mxu0
      %v7905 = vadd.f32 0.0, %v7904
      %v7906 = vpop.f32.mrf.mxu0
      %v7907 = vpop.f32.mrf.mxu0
      %v7908 = vadd.f32 0.0, %v7907
      %v7909 = vpop.f32.mrf.mxu0
      %7910 = vmatprep.mubr.bf16.mxu0 0
      %7911 = vmatmul.mubr.bf16.gmra.mxu0 %v5054
      %v7912 = vpop.f32.mrf.mxu0
      %v7913 = vadd.f32 0.0, %v7912
      %v7914 = vpop.f32.mrf.mxu0
      %v7915 = vpop.f32.mrf.mxu0
      %v7916 = vadd.f32 0.0, %v7915
      %v7917 = vpop.f32.mrf.mxu0
      %7918 = vmatprep.mubr.bf16.mxu0 0
      %7919 = vmatmul.mubr.bf16.gmra.mxu0 %v5056
      %v7920 = vpop.f32.mrf.mxu0
      %v7921 = vadd.f32 0.0, %v7920
      %v7922 = vpop.f32.mrf.mxu0
      %v7923 = vpop.f32.mrf.mxu0
      %v7924 = vadd.f32 0.0, %v7923
      %v7925 = vpop.f32.mrf.mxu0
      %7926 = vmatprep.mubr.bf16.mxu0 0
      %7927 = vmatmul.mubr.bf16.gmra.mxu0 %v5058
      %v7928 = vpop.f32.mrf.mxu0
      %v7929 = vadd.f32 0.0, %v7928
      %v7930 = vpop.f32.mrf.mxu0
      %v7931 = vpop.f32.mrf.mxu0
      %v7932 = vadd.f32 0.0, %v7931
      %v7933 = vpop.f32.mrf.mxu0
      %7934 = vmatprep.mubr.bf16.mxu0 0
      %7935 = vmatmul.mubr.bf16.gmra.mxu0 %v5060
      %v7936 = vpop.f32.mrf.mxu0
      %v7937 = vadd.f32 0.0, %v7936
      %v7938 = vpop.f32.mrf.mxu0
      %v7939 = vpop.f32.mrf.mxu0
      %v7940 = vadd.f32 0.0, %v7939
      %v7941 = vpop.f32.mrf.mxu0
      %7942 = vmatprep.mubr.bf16.mxu0 0
      %7943 = vmatmul.mubr.bf16.gmra.mxu0 %v5062
      %v7944 = vpop.f32.mrf.mxu0
      %v7945 = vadd.f32 0.0, %v7944
      %v7946 = vpop.f32.mrf.mxu0
      %v7947 = vpop.f32.mrf.mxu0
      %v7948 = vadd.f32 0.0, %v7947
      %v7949 = vpop.f32.mrf.mxu0
      %7950 = vmatprep.mubr.bf16.mxu0 0
      %7951 = vmatmul.mubr.bf16.gmra.mxu0 %v5064
      %v7952 = vpop.f32.mrf.mxu0
      %v7953 = vadd.f32 0.0, %v7952
      %v7954 = vpop.f32.mrf.mxu0
      %v7955 = vpop.f32.mrf.mxu0
      %v7956 = vadd.f32 0.0, %v7955
      %v7957 = vpop.f32.mrf.mxu0
      %7958 = vmatprep.mubr.bf16.mxu0 0
      %7959 = vmatmul.mubr.bf16.gmra.mxu0 %v5066
      %v7960 = vpop.f32.mrf.mxu0
      %v7961 = vadd.f32 0.0, %v7960
      %v7962 = vpop.f32.mrf.mxu0
      %v7963 = vpop.f32.mrf.mxu0
      %v7964 = vadd.f32 0.0, %v7963
      %v7965 = vpop.f32.mrf.mxu0
      %7966 = vmatprep.mubr.bf16.mxu0 0
      %7967 = vmatmul.mubr.bf16.gmra.mxu0 %v5068
      %v7968 = vpop.f32.mrf.mxu0
      %v7969 = vadd.f32 0.0, %v7968
      %v7970 = vpop.f32.mrf.mxu0
      %v7971 = vpop.f32.mrf.mxu0
      %v7972 = vadd.f32 0.0, %v7971
      %v7973 = vpop.f32.mrf.mxu0
      %7974 = vmatprep.mubr.bf16.mxu0 0
      %7975 = vmatmul.mubr.bf16.gmra.mxu0 %v5070
      %v7976 = vpop.f32.mrf.mxu0
      %v7977 = vadd.f32 0.0, %v7976
      %v7978 = vpop.f32.mrf.mxu0
      %v7979 = vpop.f32.mrf.mxu0
      %v7980 = vadd.f32 0.0, %v7979
      %v7981 = vpop.f32.mrf.mxu0
      %7982 = vmatprep.mubr.bf16.mxu0 0
      %7983 = vmatmul.mubr.bf16.gmra.mxu0 %v5072
      %v7984 = vpop.f32.mrf.mxu0
      %v7985 = vadd.f32 0.0, %v7984
      %v7986 = vpop.f32.mrf.mxu0
      %v7987 = vpop.f32.mrf.mxu0
      %v7988 = vadd.f32 0.0, %v7987
      %v7989 = vpop.f32.mrf.mxu0
      %7990 = vmatprep.mubr.bf16.mxu0 0
      %7991 = vmatmul.mubr.bf16.gmra.mxu0 %v5074
      %v7992 = vpop.f32.mrf.mxu0
      %v7993 = vadd.f32 0.0, %v7992
      %v7994 = vpop.f32.mrf.mxu0
      %v7995 = vpop.f32.mrf.mxu0
      %v7996 = vadd.f32 0.0, %v7995
      %v7997 = vpop.f32.mrf.mxu0
      %7998 = vmatprep.mubr.bf16.mxu0 0
      %7999 = vmatmul.mubr.bf16.gmra.mxu0 %v5076
      %v8000 = vpop.f32.mrf.mxu0
      %v8001 = vadd.f32 0.0, %v8000
      %v8002 = vpop.f32.mrf.mxu0
      %v8003 = vpop.f32.mrf.mxu0
      %v8004 = vadd.f32 0.0, %v8003
      %v8005 = vpop.f32.mrf.mxu0
      %8006 = vmatprep.mubr.bf16.mxu0 0
      %8007 = vmatmul.mubr.bf16.gmra.mxu0 %v5078
      %v8008 = vpop.f32.mrf.mxu0
      %v8009 = vadd.f32 0.0, %v8008
      %v8010 = vpop.f32.mrf.mxu0
      %v8011 = vpop.f32.mrf.mxu0
      %v8012 = vadd.f32 0.0, %v8011
      %v8013 = vpop.f32.mrf.mxu0
      %8014 = vmatprep.mubr.bf16.mxu0 0
      %8015 = vmatmul.mubr.bf16.gmra.mxu0 %v5080
      %v8016 = vpop.f32.mrf.mxu0
      %v8017 = vadd.f32 0.0, %v8016
      %v8018 = vpop.f32.mrf.mxu0
      %v8019 = vpop.f32.mrf.mxu0
      %v8020 = vadd.f32 0.0, %v8019
      %v8021 = vpop.f32.mrf.mxu0
      %8022 = vmatprep.mubr.bf16.mxu0 0
      %8023 = vmatmul.mubr.bf16.gmra.mxu0 %v5082
      %v8024 = vpop.f32.mrf.mxu0
      %v8025 = vadd.f32 0.0, %v8024
      %v8026 = vpop.f32.mrf.mxu0
      %v8027 = vpop.f32.mrf.mxu0
      %v8028 = vadd.f32 0.0, %v8027
      %v8029 = vpop.f32.mrf.mxu0
      %8030 = vmatprep.mubr.bf16.mxu0 0
      %8031 = vmatmul.mubr.bf16.gmra.mxu0 %v5084
      %v8032 = vpop.f32.mrf.mxu0
      %v8033 = vadd.f32 0.0, %v8032
      %v8034 = vpop.f32.mrf.mxu0
      %v8035 = vpop.f32.mrf.mxu0
      %v8036 = vadd.f32 0.0, %v8035
      %v8037 = vpop.f32.mrf.mxu0
      %8038 = vmatprep.mubr.bf16.mxu0 0
      %8039 = vmatmul.mubr.bf16.gmra.mxu0 %v5086
      %v8040 = vpop.f32.mrf.mxu0
      %v8041 = vadd.f32 0.0, %v8040
      %v8042 = vpop.f32.mrf.mxu0
      %v8043 = vpop.f32.mrf.mxu0
      %v8044 = vadd.f32 0.0, %v8043
      %v8045 = vpop.f32.mrf.mxu0
      %8046 = vmatprep.mubr.bf16.mxu0 0
      %8047 = vmatmul.mubr.bf16.gmra.mxu0 %v5088
      %v8048 = vpop.f32.mrf.mxu0
      %v8049 = vadd.f32 0.0, %v8048
      %v8050 = vpop.f32.mrf.mxu0
      %v8051 = vpop.f32.mrf.mxu0
      %v8052 = vadd.f32 0.0, %v8051
      %v8053 = vpop.f32.mrf.mxu0
      %8054 = vmatprep.mubr.bf16.mxu0 0
      %8055 = vmatmul.mubr.bf16.gmra.mxu0 %v5090
      %v8056 = vpop.f32.mrf.mxu0
      %v8057 = vadd.f32 0.0, %v8056
      %v8058 = vpop.f32.mrf.mxu0
      %v8059 = vpop.f32.mrf.mxu0
      %v8060 = vadd.f32 0.0, %v8059
      %v8061 = vpop.f32.mrf.mxu0
      %8062 = vmatprep.mubr.bf16.mxu0 0
      %8063 = vmatmul.mubr.bf16.gmra.mxu0 %v5092
      %v8064 = vpop.f32.mrf.mxu0
      %v8065 = vadd.f32 0.0, %v8064
      %v8066 = vpop.f32.mrf.mxu0
      %v8067 = vpop.f32.mrf.mxu0
      %v8068 = vadd.f32 0.0, %v8067
      %v8069 = vpop.f32.mrf.mxu0
      %8070 = vmatprep.mubr.bf16.mxu0 0
      %8071 = vmatmul.mubr.bf16.gmra.mxu0 %v5094
      %v8072 = vpop.f32.mrf.mxu0
      %v8073 = vadd.f32 0.0, %v8072
      %v8074 = vpop.f32.mrf.mxu0
      %v8075 = vpop.f32.mrf.mxu0
      %v8076 = vadd.f32 0.0, %v8075
      %v8077 = vpop.f32.mrf.mxu0
      %8078 = vmatprep.mubr.bf16.mxu0 0
      %8079 = vmatmul.mubr.bf16.gmra.mxu0 %v5096
      %v8080 = vpop.f32.mrf.mxu0
      %v8081 = vadd.f32 0.0, %v8080
      %v8082 = vpop.f32.mrf.mxu0
      %v8083 = vpop.f32.mrf.mxu0
      %v8084 = vadd.f32 0.0, %v8083
      %v8085 = vpop.f32.mrf.mxu0
      %8086 = vmatprep.mubr.bf16.mxu0 0
      %8087 = vmatmul.mubr.bf16.gmra.mxu0 %v5098
      %v8088 = vpop.f32.mrf.mxu0
      %v8089 = vadd.f32 0.0, %v8088
      %v8090 = vpop.f32.mrf.mxu0
      %v8091 = vpop.f32.mrf.mxu0
      %v8092 = vadd.f32 0.0, %v8091
      %v8093 = vpop.f32.mrf.mxu0
      %8094 = vmatprep.mubr.bf16.mxu0 0
      %8095 = vmatmul.mubr.bf16.gmra.mxu0 %v5100
      %v8096 = vpop.f32.mrf.mxu0
      %v8097 = vadd.f32 0.0, %v8096
      %v8098 = vpop.f32.mrf.mxu0
      %v8099 = vpop.f32.mrf.mxu0
      %v8100 = vadd.f32 0.0, %v8099
      %v8101 = vpop.f32.mrf.mxu0
      %8102 = vmatprep.mubr.bf16.mxu0 0
      %8103 = vmatmul.mubr.bf16.gmra.mxu0 %v5102
      %v8104 = vpop.f32.mrf.mxu0
      %v8105 = vadd.f32 0.0, %v8104
      %v8106 = vpop.f32.mrf.mxu0
      %v8107 = vpop.f32.mrf.mxu0
      %v8108 = vadd.f32 0.0, %v8107
      %v8109 = vpop.f32.mrf.mxu0
      %8110 = vmatprep.mubr.bf16.mxu0 0
      %8111 = vmatmul.mubr.bf16.gmra.mxu0 %v5104
      %v8112 = vpop.f32.mrf.mxu0
      %v8113 = vadd.f32 0.0, %v8112
      %v8114 = vpop.f32.mrf.mxu0
      %v8115 = vpop.f32.mrf.mxu0
      %v8116 = vadd.f32 0.0, %v8115
      %v8117 = vpop.f32.mrf.mxu0
      %8118 = vmatprep.mubr.bf16.mxu0 0
      %8119 = vmatmul.mubr.bf16.gmra.mxu0 %v5106
      %v8120 = vpop.f32.mrf.mxu0
      %v8121 = vadd.f32 0.0, %v8120
      %v8122 = vpop.f32.mrf.mxu0
      %v8123 = vpop.f32.mrf.mxu0
      %v8124 = vadd.f32 0.0, %v8123
      %v8125 = vpop.f32.mrf.mxu0
      %8126 = vmatprep.mubr.bf16.mxu0 0
      %8127 = vmatmul.mubr.bf16.gmra.mxu0 %v5108
      %v8128 = vpop.f32.mrf.mxu0
      %v8129 = vadd.f32 0.0, %v8128
      %v8130 = vpop.f32.mrf.mxu0
      %v8131 = vpop.f32.mrf.mxu0
      %v8132 = vadd.f32 0.0, %v8131
      %v8133 = vpop.f32.mrf.mxu0
      %8134 = vmatprep.mubr.bf16.mxu0 0
      %8135 = vmatmul.mubr.bf16.gmra.mxu0 %v5110
      %v8136 = vpop.f32.mrf.mxu0
      %v8137 = vadd.f32 0.0, %v8136
      %v8138 = vpop.f32.mrf.mxu0
      %v8139 = vpop.f32.mrf.mxu0
      %v8140 = vadd.f32 0.0, %v8139
      %v8141 = vpop.f32.mrf.mxu0
      %8142 = vmatprep.mubr.bf16.mxu0 0
      %8143 = vmatmul.mubr.bf16.gmra.mxu0 %v5112
      %v8144 = vpop.f32.mrf.mxu0
      %v8145 = vadd.f32 0.0, %v8144
      %v8146 = vpop.f32.mrf.mxu0
      %v8147 = vpop.f32.mrf.mxu0
      %v8148 = vadd.f32 0.0, %v8147
      %v8149 = vpop.f32.mrf.mxu0
      %8150 = vmatprep.mubr.bf16.mxu0 0
      %8151 = vmatmul.mubr.bf16.gmra.mxu0 %v5114
      %v8152 = vpop.f32.mrf.mxu0
      %v8153 = vadd.f32 0.0, %v8152
      %v8154 = vpop.f32.mrf.mxu0
      %v8155 = vpop.f32.mrf.mxu0
      %v8156 = vadd.f32 0.0, %v8155
      %v8157 = vpop.f32.mrf.mxu0
      %8158 = vmatprep.mubr.bf16.mxu0 0
      %8159 = vmatmul.mubr.bf16.gmra.mxu0 %v5116
      %v8160 = vpop.f32.mrf.mxu0
      %v8161 = vadd.f32 0.0, %v8160
      %v8162 = vpop.f32.mrf.mxu0
      %v8163 = vpop.f32.mrf.mxu0
      %v8164 = vadd.f32 0.0, %v8163
      %v8165 = vpop.f32.mrf.mxu0
      %8166 = vmatprep.mubr.bf16.mxu0 0
      %8167 = vmatmul.mubr.bf16.gmra.mxu0 %v5118
      %v8168 = vpop.f32.mrf.mxu0
      %v8169 = vadd.f32 0.0, %v8168
      %v8170 = vpop.f32.mrf.mxu0
      %v8171 = vpop.f32.mrf.mxu0
      %v8172 = vadd.f32 0.0, %v8171
      %v8173 = vpop.f32.mrf.mxu0
      %8174 = vmatprep.mubr.bf16.mxu0 0
      %8175 = vmatmul.mubr.bf16.gmra.mxu0 %v5120
      %v8176 = vpop.f32.mrf.mxu0
      %v8177 = vadd.f32 0.0, %v8176
      %v8178 = vpop.f32.mrf.mxu0
      %v8179 = vpop.f32.mrf.mxu0
      %v8180 = vadd.f32 0.0, %v8179
      %v8181 = vpop.f32.mrf.mxu0
      %8182 = vmatprep.mubr.bf16.mxu0 0
      %8183 = vmatmul.mubr.bf16.gmra.mxu0 %v5122
      %v8184 = vpop.f32.mrf.mxu0
      %v8185 = vadd.f32 0.0, %v8184
      %v8186 = vpop.f32.mrf.mxu0
      %v8187 = vpop.f32.mrf.mxu0
      %v8188 = vadd.f32 0.0, %v8187
      %v8189 = vpop.f32.mrf.mxu0
      %8190 = vmatprep.mubr.bf16.mxu0 0
      %8191 = vmatmul.mubr.bf16.gmra.mxu0 %v5124
      %v8192 = vpop.f32.mrf.mxu0
      %v8193 = vadd.f32 0.0, %v8192
      %v8194 = vpop.f32.mrf.mxu0
      %v8195 = vpop.f32.mrf.mxu0
      %v8196 = vadd.f32 0.0, %v8195
      %v8197 = vpop.f32.mrf.mxu0
      %8198 = vmatprep.mubr.bf16.mxu0 0
      %8199 = vmatmul.mubr.bf16.gmra.mxu0 %v6277
      %v8200 = vpop.f32.mrf.mxu0
      %v8201 = vadd.f32 0.0, %v8200
      %v8202 = vpop.f32.mrf.mxu0
      %v8203 = vpop.f32.mrf.mxu0
      %v8204 = vadd.f32 0.0, %v8203
      %v8205 = vpop.f32.mrf.mxu0
      %8206 = vmatprep.mubr.bf16.mxu0 0
      %8207 = vmatmul.mubr.bf16.gmra.mxu0 %v6279
      %v8208 = vpop.f32.mrf.mxu0
      %v8209 = vadd.f32 0.0, %v8208
      %v8210 = vpop.f32.mrf.mxu0
      %v8211 = vpop.f32.mrf.mxu0
      %v8212 = vadd.f32 0.0, %v8211
      %v8213 = vpop.f32.mrf.mxu0
      %8214 = vmatprep.mubr.bf16.mxu0 0
      %8215 = vmatmul.mubr.bf16.gmra.mxu0 %v6986
      %v8216 = vpop.f32.mrf.mxu0
      %v8217 = vadd.f32 0.0, %v8216
      %v8218 = vpop.f32.mrf.mxu0
      %v8219 = vpop.f32.mrf.mxu0
      %v8220 = vadd.f32 0.0, %v8219
      %v8221 = vpop.f32.mrf.mxu0
      %8222 = vmatprep.mubr.bf16.mxu0 0
      %8223 = vmatmul.mubr.bf16.gmra.mxu0 %v6988
      %v8224 = vpop.f32.mrf.mxu0
      %v8225 = vadd.f32 0.0, %v8224
      %v8226 = vpop.f32.mrf.mxu0
      %v8227 = vpop.f32.mrf.mxu0
      %v8228 = vadd.f32 0.0, %v8227
      %v8229 = vpop.f32.mrf.mxu0
      %8230 = vmatprep.mubr.bf16.mxu0 0
      %8231 = vmatmul.mubr.bf16.gmra.mxu0 %v7695
      %v8232 = vpop.f32.mrf.mxu0
      %v8233 = vadd.f32 0.0, %v8232
      %v8234 = vpop.f32.mrf.mxu0
      %v8235 = vpop.f32.mrf.mxu0
      %v8236 = vadd.f32 0.0, %v8235
      %v8237 = vpop.f32.mrf.mxu0
      %8238 = vmatprep.mubr.bf16.mxu0 0
      %8239 = vmatmul.mubr.bf16.gmra.mxu0 %v7697
      %v8240 = vpop.f32.mrf.mxu0
      %v8241 = vadd.f32 0.0, %v8240
      %v8242 = vpop.f32.mrf.mxu0
      %v8243 = vpop.f32.mrf.mxu0
      %v8244 = vadd.f32 0.0, %v8243
      %v8245 = vpop.f32.mrf.mxu0
      %8246 = vdwg.mxu0
      %v8247 = vadd.f32 %v7538, %v7737
      %v8248 = vadd.f32 %v7539, %v7740
      %v8249 = vadd.f32 %v7540, %v7745
      %v8250 = vadd.f32 %v7541, %v7748
      %v8251 = vadd.f32 %v7542, %v7753
      %v8252 = vadd.f32 %v7543, %v7756
      %v8253 = vadd.f32 %v7544, %v7761
      %v8254 = vadd.f32 %v7545, %v7764
      %v8255 = vadd.f32 %v7546, %v7769
      %v8256 = vadd.f32 %v7547, %v7772
      %v8257 = vadd.f32 %v7548, %v7777
      %v8258 = vadd.f32 %v7549, %v7780
      %v8259 = vadd.f32 %v7550, %v7785
      %v8260 = vadd.f32 %v7551, %v7788
      %v8261 = vadd.f32 %v7552, %v7793
      %v8262 = vadd.f32 %v7553, %v7796
      %v8263 = vadd.f32 %v7554, %v7801
      %v8264 = vadd.f32 %v7555, %v7804
      %v8265 = vadd.f32 %v7556, %v7809
      %v8266 = vadd.f32 %v7557, %v7812
      %v8267 = vadd.f32 %v7558, %v7817
      %v8268 = vadd.f32 %v7559, %v7820
      %v8269 = vadd.f32 %v7560, %v7825
      %v8270 = vadd.f32 %v7561, %v7828
      %v8271 = vadd.f32 %v7562, %v7833
      %v8272 = vadd.f32 %v7563, %v7836
      %v8273 = vadd.f32 %v7564, %v7841
      %v8274 = vadd.f32 %v7565, %v7844
      %v8275 = vadd.f32 %v7566, %v7849
      %v8276 = vadd.f32 %v7567, %v7852
      %v8277 = vadd.f32 %v7568, %v7857
      %v8278 = vadd.f32 %v7569, %v7860
      %v8279 = vadd.f32 %v7570, %v7865
      %v8280 = vadd.f32 %v7571, %v7868
      %v8281 = vadd.f32 %v7572, %v7873
      %v8282 = vadd.f32 %v7573, %v7876
      %v8283 = vadd.f32 %v7574, %v7881
      %v8284 = vadd.f32 %v7575, %v7884
      %v8285 = vadd.f32 %v7576, %v7889
      %v8286 = vadd.f32 %v7577, %v7892
      %v8287 = vadd.f32 %v7578, %v7897
      %v8288 = vadd.f32 %v7579, %v7900
      %v8289 = vadd.f32 %v7580, %v7905
      %v8290 = vadd.f32 %v7581, %v7908
      %v8291 = vadd.f32 %v7582, %v7913
      %v8292 = vadd.f32 %v7583, %v7916
      %v8293 = vadd.f32 %v7584, %v7921
      %v8294 = vadd.f32 %v7585, %v7924
      %v8295 = vadd.f32 %v7586, %v7929
      %v8296 = vadd.f32 %v7587, %v7932
      %v8297 = vadd.f32 %v7588, %v7937
      %v8298 = vadd.f32 %v7589, %v7940
      %v8299 = vadd.f32 %v7590, %v7945
      %v8300 = vadd.f32 %v7591, %v7948
      %v8301 = vadd.f32 %v7592, %v7953
      %v8302 = vadd.f32 %v7593, %v7956
      %v8303 = vadd.f32 %v7594, %v7961
      %v8304 = vadd.f32 %v7595, %v7964
      %v8305 = vadd.f32 %v7596, %v7969
      %v8306 = vadd.f32 %v7597, %v7972
      %v8307 = vadd.f32 %v7598, %v7977
      %v8308 = vadd.f32 %v7599, %v7980
      %v8309 = vadd.f32 %v7600, %v7985
      %v8310 = vadd.f32 %v7601, %v7988
      %v8311 = vadd.f32 %v7602, %v7993
      %v8312 = vadd.f32 %v7603, %v7996
      %v8313 = vadd.f32 %v7604, %v8001
      %v8314 = vadd.f32 %v7605, %v8004
      %v8315 = vadd.f32 %v7606, %v8009
      %v8316 = vadd.f32 %v7607, %v8012
      %v8317 = vadd.f32 %v7608, %v8017
      %v8318 = vadd.f32 %v7609, %v8020
      %v8319 = vadd.f32 %v7610, %v8025
      %v8320 = vadd.f32 %v7611, %v8028
      %v8321 = vadd.f32 %v7612, %v8033
      %v8322 = vadd.f32 %v7613, %v8036
      %v8323 = vadd.f32 %v7614, %v8041
      %v8324 = vadd.f32 %v7615, %v8044
      %v8325 = vadd.f32 %v7616, %v8049
      %v8326 = vadd.f32 %v7617, %v8052
      %v8327 = vadd.f32 %v7618, %v8057
      %v8328 = vadd.f32 %v7619, %v8060
      %v8329 = vadd.f32 %v7620, %v8065
      %v8330 = vadd.f32 %v7621, %v8068
      %v8331 = vadd.f32 %v7622, %v8073
      %v8332 = vadd.f32 %v7623, %v8076
      %v8333 = vadd.f32 %v7624, %v8081
      %v8334 = vadd.f32 %v7625, %v8084
      %v8335 = vadd.f32 %v7626, %v8089
      %v8336 = vadd.f32 %v7627, %v8092
      %v8337 = vadd.f32 %v7628, %v8097
      %v8338 = vadd.f32 %v7629, %v8100
      %v8339 = vadd.f32 %v7630, %v8105
      %v8340 = vadd.f32 %v7631, %v8108
      %v8341 = vadd.f32 %v7632, %v8113
      %v8342 = vadd.f32 %v7633, %v8116
      %v8343 = vadd.f32 %v7634, %v8121
      %v8344 = vadd.f32 %v7635, %v8124
      %v8345 = vadd.f32 %v7636, %v8129
      %v8346 = vadd.f32 %v7637, %v8132
      %v8347 = vadd.f32 %v7638, %v8137
      %v8348 = vadd.f32 %v7639, %v8140
      %v8349 = vadd.f32 %v7640, %v8145
      %v8350 = vadd.f32 %v7641, %v8148
      %v8351 = vadd.f32 %v7642, %v8153
      %v8352 = vadd.f32 %v7643, %v8156
      %v8353 = vadd.f32 %v7644, %v8161
      %v8354 = vadd.f32 %v7645, %v8164
      %v8355 = vadd.f32 %v7646, %v8169
      %v8356 = vadd.f32 %v7647, %v8172
      %v8357 = vadd.f32 %v7648, %v8177
      %v8358 = vadd.f32 %v7649, %v8180
      %v8359 = vadd.f32 %v7650, %v8185
      %v8360 = vadd.f32 %v7651, %v8188
      %v8361 = vadd.f32 %v7652, %v8193
      %v8362 = vadd.f32 %v7653, %v8196
      %v8363 = vadd.f32 %v7654, %v8201
      %v8364 = vadd.f32 %v7655, %v8204
      %v8365 = vadd.f32 %v7656, %v8209
      %v8366 = vadd.f32 %v7657, %v8212
      %v8367 = vadd.f32 %v7658, %v8217
      %v8368 = vadd.f32 %v7659, %v8220
      %v8369 = vadd.f32 %v7660, %v8225
      %v8370 = vadd.f32 %v7661, %v8228
      %v8371 = vadd.f32 %v7662, %v8233
      %v8372 = vadd.f32 %v7663, %v8236
      %v8373 = vadd.f32 %v7664, %v8241
      %v8374 = vadd.f32 %v7665, %v8244
      %s8375 = scalar_lea.vmem %s1, 140
      %v8376 = vld [vmem:[%s8375] sm:$0xf]
      %v8377 = vld [vmem:[%s8375 + $0x4] sm:$0xf]
      %v8378 = vld [vmem:[%s8375 + $0x8] sm:$0xf]
      %v8379 = vld [vmem:[%s8375 + $0xc] sm:$0xf]
      %v8380 = vld [vmem:[%s8375 + $0x10] sm:$0xf]
      %v8381 = vld [vmem:[%s8375 + $0x14] sm:$0xf]
      %v8382 = vld [vmem:[%s8375 + $0x18] sm:$0xf]
      %v8390 = vunpack.c.l.b16 %v8376
      %v8391 = vunpack.c.l.b16 %v8377
      %v8392 = vunpack.c.l.b16 %v8378
      %v8393 = vunpack.c.l.b16 %v8379
      %v8394 = vunpack.c.l.b16 %v8380
      %v8395 = vunpack.c.l.b16 %v8381
      %v8396 = vunpack.c.l.b16 %v8382
      %v8397 = vpack.c.b16 %v8391, %v8390
      %v8398 = vpack.c.b16 %v8393, %v8392
      %v8399 = vpack.c.b16 %v8395, %v8394
      %v8400 = vpack.c.b16 %v8396, %v8396
      %v8404 = vsel %vm4997, %v4954, 0
      %v8406 = vsel %vm4997, %v4956, 0
      %v8409 = vsel %vm5126, %v8400, 0
      %8411 = vmatprep.subr.bf16.mxu0 0
      %8412 = vmatpush1.bf16.msra.mxu0 0
      %8413 = vmatprep.subr.bf16.mxu0 0
      %8414 = vmatpush1.bf16.msra.mxu0 0
      %8415 = vmatprep.subr.bf16.mxu0 0
      %8416 = vmatpush1.bf16.msra.mxu0 0
      %8417 = vmatprep.subr.bf16.mxu0 0
      %8418 = vmatpush1.bf16.msra.mxu0 0
      %8419 = vmatprep.subr.bf16.mxu0 0
      %8420 = vmatpush1.bf16.msra.mxu0 %v8409
      %8421 = vmatprep.subr.bf16.mxu0 0
      %8422 = vmatpush1.bf16.msra.mxu0 %v8399
      %8423 = vmatprep.subr.bf16.mxu0 0
      %8424 = vmatpush1.bf16.msra.mxu0 %v8398
      %8425 = vmatprep.subr.bf16.mxu0 0
      %8426 = vmatpush1.bf16.msra.mxu0 %v8397
      %8427 = vmatprep.subr.bf16.mxu0 0
      %8428 = vmatpush2.bf16.msra.mxu0 0
      %8429 = vmatprep.subr.bf16.mxu0 0
      %8430 = vmatpush2.bf16.msra.mxu0 0
      %8431 = vmatprep.subr.bf16.mxu0 0
      %8432 = vmatpush2.bf16.msra.mxu0 0
      %8433 = vmatprep.subr.bf16.mxu0 0
      %8434 = vmatpush2.bf16.msra.mxu0 0
      %8435 = vmatprep.subr.bf16.mxu0 0
      %8436 = vmatpush2.bf16.msra.mxu0 0
      %8437 = vmatprep.subr.bf16.mxu0 0
      %8438 = vmatpush2.bf16.msra.mxu0 0
      %8439 = vmatprep.subr.bf16.mxu0 0
      %8440 = vmatpush2.bf16.msra.mxu0 0
      %8441 = vmatprep.subr.bf16.mxu0 0
      %8442 = vmatpush2.bf16.msra.mxu0 0
      %8443 = vmatprep.mubr.bf16.mxu0 0
      %8444 = vmatmul.mubr.bf16.gmra.mxu0 %v5014
      %v8445 = vpop.f32.mrf.mxu0
      %v8446 = vadd.f32 0.0, %v8445
      %v8447 = vpop.f32.mrf.mxu0
      %v8448 = vpop.f32.mrf.mxu0
      %v8449 = vadd.f32 0.0, %v8448
      %v8450 = vpop.f32.mrf.mxu0
      %8451 = vmatprep.mubr.bf16.mxu0 0
      %8452 = vmatmul.mubr.bf16.gmra.mxu0 %v5016
      %v8453 = vpop.f32.mrf.mxu0
      %v8454 = vadd.f32 0.0, %v8453
      %v8455 = vpop.f32.mrf.mxu0
      %v8456 = vpop.f32.mrf.mxu0
      %v8457 = vadd.f32 0.0, %v8456
      %v8458 = vpop.f32.mrf.mxu0
      %8459 = vmatprep.mubr.bf16.mxu0 0
      %8460 = vmatmul.mubr.bf16.gmra.mxu0 %v5018
      %v8461 = vpop.f32.mrf.mxu0
      %v8462 = vadd.f32 0.0, %v8461
      %v8463 = vpop.f32.mrf.mxu0
      %v8464 = vpop.f32.mrf.mxu0
      %v8465 = vadd.f32 0.0, %v8464
      %v8466 = vpop.f32.mrf.mxu0
      %8467 = vmatprep.mubr.bf16.mxu0 0
      %8468 = vmatmul.mubr.bf16.gmra.mxu0 %v5020
      %v8469 = vpop.f32.mrf.mxu0
      %v8470 = vadd.f32 0.0, %v8469
      %v8471 = vpop.f32.mrf.mxu0
      %v8472 = vpop.f32.mrf.mxu0
      %v8473 = vadd.f32 0.0, %v8472
      %v8474 = vpop.f32.mrf.mxu0
      %8475 = vmatprep.mubr.bf16.mxu0 0
      %8476 = vmatmul.mubr.bf16.gmra.mxu0 %v5022
      %v8477 = vpop.f32.mrf.mxu0
      %v8478 = vadd.f32 0.0, %v8477
      %v8479 = vpop.f32.mrf.mxu0
      %v8480 = vpop.f32.mrf.mxu0
      %v8481 = vadd.f32 0.0, %v8480
      %v8482 = vpop.f32.mrf.mxu0
      %8483 = vmatprep.mubr.bf16.mxu0 0
      %8484 = vmatmul.mubr.bf16.gmra.mxu0 %v5024
      %v8485 = vpop.f32.mrf.mxu0
      %v8486 = vadd.f32 0.0, %v8485
      %v8487 = vpop.f32.mrf.mxu0
      %v8488 = vpop.f32.mrf.mxu0
      %v8489 = vadd.f32 0.0, %v8488
      %v8490 = vpop.f32.mrf.mxu0
      %8491 = vmatprep.mubr.bf16.mxu0 0
      %8492 = vmatmul.mubr.bf16.gmra.mxu0 %v5026
      %v8493 = vpop.f32.mrf.mxu0
      %v8494 = vadd.f32 0.0, %v8493
      %v8495 = vpop.f32.mrf.mxu0
      %v8496 = vpop.f32.mrf.mxu0
      %v8497 = vadd.f32 0.0, %v8496
      %v8498 = vpop.f32.mrf.mxu0
      %8499 = vmatprep.mubr.bf16.mxu0 0
      %8500 = vmatmul.mubr.bf16.gmra.mxu0 %v5028
      %v8501 = vpop.f32.mrf.mxu0
      %v8502 = vadd.f32 0.0, %v8501
      %v8503 = vpop.f32.mrf.mxu0
      %v8504 = vpop.f32.mrf.mxu0
      %v8505 = vadd.f32 0.0, %v8504
      %v8506 = vpop.f32.mrf.mxu0
      %8507 = vmatprep.mubr.bf16.mxu0 0
      %8508 = vmatmul.mubr.bf16.gmra.mxu0 %v5030
      %v8509 = vpop.f32.mrf.mxu0
      %v8510 = vadd.f32 0.0, %v8509
      %v8511 = vpop.f32.mrf.mxu0
      %v8512 = vpop.f32.mrf.mxu0
      %v8513 = vadd.f32 0.0, %v8512
      %v8514 = vpop.f32.mrf.mxu0
      %8515 = vmatprep.mubr.bf16.mxu0 0
      %8516 = vmatmul.mubr.bf16.gmra.mxu0 %v5032
      %v8517 = vpop.f32.mrf.mxu0
      %v8518 = vadd.f32 0.0, %v8517
      %v8519 = vpop.f32.mrf.mxu0
      %v8520 = vpop.f32.mrf.mxu0
      %v8521 = vadd.f32 0.0, %v8520
      %v8522 = vpop.f32.mrf.mxu0
      %8523 = vmatprep.mubr.bf16.mxu0 0
      %8524 = vmatmul.mubr.bf16.gmra.mxu0 %v5034
      %v8525 = vpop.f32.mrf.mxu0
      %v8526 = vadd.f32 0.0, %v8525
      %v8527 = vpop.f32.mrf.mxu0
      %v8528 = vpop.f32.mrf.mxu0
      %v8529 = vadd.f32 0.0, %v8528
      %v8530 = vpop.f32.mrf.mxu0
      %8531 = vmatprep.mubr.bf16.mxu0 0
      %8532 = vmatmul.mubr.bf16.gmra.mxu0 %v5036
      %v8533 = vpop.f32.mrf.mxu0
      %v8534 = vadd.f32 0.0, %v8533
      %v8535 = vpop.f32.mrf.mxu0
      %v8536 = vpop.f32.mrf.mxu0
      %v8537 = vadd.f32 0.0, %v8536
      %v8538 = vpop.f32.mrf.mxu0
      %8539 = vmatprep.mubr.bf16.mxu0 0
      %8540 = vmatmul.mubr.bf16.gmra.mxu0 %v5038
      %v8541 = vpop.f32.mrf.mxu0
      %v8542 = vadd.f32 0.0, %v8541
      %v8543 = vpop.f32.mrf.mxu0
      %v8544 = vpop.f32.mrf.mxu0
      %v8545 = vadd.f32 0.0, %v8544
      %v8546 = vpop.f32.mrf.mxu0
      %8547 = vmatprep.mubr.bf16.mxu0 0
      %8548 = vmatmul.mubr.bf16.gmra.mxu0 %v5040
      %v8549 = vpop.f32.mrf.mxu0
      %v8550 = vadd.f32 0.0, %v8549
      %v8551 = vpop.f32.mrf.mxu0
      %v8552 = vpop.f32.mrf.mxu0
      %v8553 = vadd.f32 0.0, %v8552
      %v8554 = vpop.f32.mrf.mxu0
      %8555 = vmatprep.mubr.bf16.mxu0 0
      %8556 = vmatmul.mubr.bf16.gmra.mxu0 %v5042
      %v8557 = vpop.f32.mrf.mxu0
      %v8558 = vadd.f32 0.0, %v8557
      %v8559 = vpop.f32.mrf.mxu0
      %v8560 = vpop.f32.mrf.mxu0
      %v8561 = vadd.f32 0.0, %v8560
      %v8562 = vpop.f32.mrf.mxu0
      %8563 = vmatprep.mubr.bf16.mxu0 0
      %8564 = vmatmul.mubr.bf16.gmra.mxu0 %v5044
      %v8565 = vpop.f32.mrf.mxu0
      %v8566 = vadd.f32 0.0, %v8565
      %v8567 = vpop.f32.mrf.mxu0
      %v8568 = vpop.f32.mrf.mxu0
      %v8569 = vadd.f32 0.0, %v8568
      %v8570 = vpop.f32.mrf.mxu0
      %8571 = vmatprep.mubr.bf16.mxu0 0
      %8572 = vmatmul.mubr.bf16.gmra.mxu0 %v5046
      %v8573 = vpop.f32.mrf.mxu0
      %v8574 = vadd.f32 0.0, %v8573
      %v8575 = vpop.f32.mrf.mxu0
      %v8576 = vpop.f32.mrf.mxu0
      %v8577 = vadd.f32 0.0, %v8576
      %v8578 = vpop.f32.mrf.mxu0
      %8579 = vmatprep.mubr.bf16.mxu0 0
      %8580 = vmatmul.mubr.bf16.gmra.mxu0 %v5048
      %v8581 = vpop.f32.mrf.mxu0
      %v8582 = vadd.f32 0.0, %v8581
      %v8583 = vpop.f32.mrf.mxu0
      %v8584 = vpop.f32.mrf.mxu0
      %v8585 = vadd.f32 0.0, %v8584
      %v8586 = vpop.f32.mrf.mxu0
      %8587 = vmatprep.mubr.bf16.mxu0 0
      %8588 = vmatmul.mubr.bf16.gmra.mxu0 %v5050
      %v8589 = vpop.f32.mrf.mxu0
      %v8590 = vadd.f32 0.0, %v8589
      %v8591 = vpop.f32.mrf.mxu0
      %v8592 = vpop.f32.mrf.mxu0
      %v8593 = vadd.f32 0.0, %v8592
      %v8594 = vpop.f32.mrf.mxu0
      %8595 = vmatprep.mubr.bf16.mxu0 0
      %8596 = vmatmul.mubr.bf16.gmra.mxu0 %v5052
      %v8597 = vpop.f32.mrf.mxu0
      %v8598 = vadd.f32 0.0, %v8597
      %v8599 = vpop.f32.mrf.mxu0
      %v8600 = vpop.f32.mrf.mxu0
      %v8601 = vadd.f32 0.0, %v8600
      %v8602 = vpop.f32.mrf.mxu0
      %8603 = vmatprep.mubr.bf16.mxu0 0
      %8604 = vmatmul.mubr.bf16.gmra.mxu0 %v5054
      %v8605 = vpop.f32.mrf.mxu0
      %v8606 = vadd.f32 0.0, %v8605
      %v8607 = vpop.f32.mrf.mxu0
      %v8608 = vpop.f32.mrf.mxu0
      %v8609 = vadd.f32 0.0, %v8608
      %v8610 = vpop.f32.mrf.mxu0
      %8611 = vmatprep.mubr.bf16.mxu0 0
      %8612 = vmatmul.mubr.bf16.gmra.mxu0 %v5056
      %v8613 = vpop.f32.mrf.mxu0
      %v8614 = vadd.f32 0.0, %v8613
      %v8615 = vpop.f32.mrf.mxu0
      %v8616 = vpop.f32.mrf.mxu0
      %v8617 = vadd.f32 0.0, %v8616
      %v8618 = vpop.f32.mrf.mxu0
      %8619 = vmatprep.mubr.bf16.mxu0 0
      %8620 = vmatmul.mubr.bf16.gmra.mxu0 %v5058
      %v8621 = vpop.f32.mrf.mxu0
      %v8622 = vadd.f32 0.0, %v8621
      %v8623 = vpop.f32.mrf.mxu0
      %v8624 = vpop.f32.mrf.mxu0
      %v8625 = vadd.f32 0.0, %v8624
      %v8626 = vpop.f32.mrf.mxu0
      %8627 = vmatprep.mubr.bf16.mxu0 0
      %8628 = vmatmul.mubr.bf16.gmra.mxu0 %v5060
      %v8629 = vpop.f32.mrf.mxu0
      %v8630 = vadd.f32 0.0, %v8629
      %v8631 = vpop.f32.mrf.mxu0
      %v8632 = vpop.f32.mrf.mxu0
      %v8633 = vadd.f32 0.0, %v8632
      %v8634 = vpop.f32.mrf.mxu0
      %8635 = vmatprep.mubr.bf16.mxu0 0
      %8636 = vmatmul.mubr.bf16.gmra.mxu0 %v5062
      %v8637 = vpop.f32.mrf.mxu0
      %v8638 = vadd.f32 0.0, %v8637
      %v8639 = vpop.f32.mrf.mxu0
      %v8640 = vpop.f32.mrf.mxu0
      %v8641 = vadd.f32 0.0, %v8640
      %v8642 = vpop.f32.mrf.mxu0
      %8643 = vmatprep.mubr.bf16.mxu0 0
      %8644 = vmatmul.mubr.bf16.gmra.mxu0 %v5064
      %v8645 = vpop.f32.mrf.mxu0
      %v8646 = vadd.f32 0.0, %v8645
      %v8647 = vpop.f32.mrf.mxu0
      %v8648 = vpop.f32.mrf.mxu0
      %v8649 = vadd.f32 0.0, %v8648
      %v8650 = vpop.f32.mrf.mxu0
      %8651 = vmatprep.mubr.bf16.mxu0 0
      %8652 = vmatmul.mubr.bf16.gmra.mxu0 %v5066
      %v8653 = vpop.f32.mrf.mxu0
      %v8654 = vadd.f32 0.0, %v8653
      %v8655 = vpop.f32.mrf.mxu0
      %v8656 = vpop.f32.mrf.mxu0
      %v8657 = vadd.f32 0.0, %v8656
      %v8658 = vpop.f32.mrf.mxu0
      %8659 = vmatprep.mubr.bf16.mxu0 0
      %8660 = vmatmul.mubr.bf16.gmra.mxu0 %v5068
      %v8661 = vpop.f32.mrf.mxu0
      %v8662 = vadd.f32 0.0, %v8661
      %v8663 = vpop.f32.mrf.mxu0
      %v8664 = vpop.f32.mrf.mxu0
      %v8665 = vadd.f32 0.0, %v8664
      %v8666 = vpop.f32.mrf.mxu0
      %8667 = vmatprep.mubr.bf16.mxu0 0
      %8668 = vmatmul.mubr.bf16.gmra.mxu0 %v5070
      %v8669 = vpop.f32.mrf.mxu0
      %v8670 = vadd.f32 0.0, %v8669
      %v8671 = vpop.f32.mrf.mxu0
      %v8672 = vpop.f32.mrf.mxu0
      %v8673 = vadd.f32 0.0, %v8672
      %v8674 = vpop.f32.mrf.mxu0
      %8675 = vmatprep.mubr.bf16.mxu0 0
      %8676 = vmatmul.mubr.bf16.gmra.mxu0 %v5072
      %v8677 = vpop.f32.mrf.mxu0
      %v8678 = vadd.f32 0.0, %v8677
      %v8679 = vpop.f32.mrf.mxu0
      %v8680 = vpop.f32.mrf.mxu0
      %v8681 = vadd.f32 0.0, %v8680
      %v8682 = vpop.f32.mrf.mxu0
      %8683 = vmatprep.mubr.bf16.mxu0 0
      %8684 = vmatmul.mubr.bf16.gmra.mxu0 %v5074
      %v8685 = vpop.f32.mrf.mxu0
      %v8686 = vadd.f32 0.0, %v8685
      %v8687 = vpop.f32.mrf.mxu0
      %v8688 = vpop.f32.mrf.mxu0
      %v8689 = vadd.f32 0.0, %v8688
      %v8690 = vpop.f32.mrf.mxu0
      %8691 = vmatprep.mubr.bf16.mxu0 0
      %8692 = vmatmul.mubr.bf16.gmra.mxu0 %v5076
      %v8693 = vpop.f32.mrf.mxu0
      %v8694 = vadd.f32 0.0, %v8693
      %v8695 = vpop.f32.mrf.mxu0
      %v8696 = vpop.f32.mrf.mxu0
      %v8697 = vadd.f32 0.0, %v8696
      %v8698 = vpop.f32.mrf.mxu0
      %8699 = vmatprep.mubr.bf16.mxu0 0
      %8700 = vmatmul.mubr.bf16.gmra.mxu0 %v5078
      %v8701 = vpop.f32.mrf.mxu0
      %v8702 = vadd.f32 0.0, %v8701
      %v8703 = vpop.f32.mrf.mxu0
      %v8704 = vpop.f32.mrf.mxu0
      %v8705 = vadd.f32 0.0, %v8704
      %v8706 = vpop.f32.mrf.mxu0
      %8707 = vmatprep.mubr.bf16.mxu0 0
      %8708 = vmatmul.mubr.bf16.gmra.mxu0 %v5080
      %v8709 = vpop.f32.mrf.mxu0
      %v8710 = vadd.f32 0.0, %v8709
      %v8711 = vpop.f32.mrf.mxu0
      %v8712 = vpop.f32.mrf.mxu0
      %v8713 = vadd.f32 0.0, %v8712
      %v8714 = vpop.f32.mrf.mxu0
      %8715 = vmatprep.mubr.bf16.mxu0 0
      %8716 = vmatmul.mubr.bf16.gmra.mxu0 %v5082
      %v8717 = vpop.f32.mrf.mxu0
      %v8718 = vadd.f32 0.0, %v8717
      %v8719 = vpop.f32.mrf.mxu0
      %v8720 = vpop.f32.mrf.mxu0
      %v8721 = vadd.f32 0.0, %v8720
      %v8722 = vpop.f32.mrf.mxu0
      %8723 = vmatprep.mubr.bf16.mxu0 0
      %8724 = vmatmul.mubr.bf16.gmra.mxu0 %v5084
      %v8725 = vpop.f32.mrf.mxu0
      %v8726 = vadd.f32 0.0, %v8725
      %v8727 = vpop.f32.mrf.mxu0
      %v8728 = vpop.f32.mrf.mxu0
      %v8729 = vadd.f32 0.0, %v8728
      %v8730 = vpop.f32.mrf.mxu0
      %8731 = vmatprep.mubr.bf16.mxu0 0
      %8732 = vmatmul.mubr.bf16.gmra.mxu0 %v5086
      %v8733 = vpop.f32.mrf.mxu0
      %v8734 = vadd.f32 0.0, %v8733
      %v8735 = vpop.f32.mrf.mxu0
      %v8736 = vpop.f32.mrf.mxu0
      %v8737 = vadd.f32 0.0, %v8736
      %v8738 = vpop.f32.mrf.mxu0
      %8739 = vmatprep.mubr.bf16.mxu0 0
      %8740 = vmatmul.mubr.bf16.gmra.mxu0 %v5088
      %v8741 = vpop.f32.mrf.mxu0
      %v8742 = vadd.f32 0.0, %v8741
      %v8743 = vpop.f32.mrf.mxu0
      %v8744 = vpop.f32.mrf.mxu0
      %v8745 = vadd.f32 0.0, %v8744
      %v8746 = vpop.f32.mrf.mxu0
      %8747 = vmatprep.mubr.bf16.mxu0 0
      %8748 = vmatmul.mubr.bf16.gmra.mxu0 %v5090
      %v8749 = vpop.f32.mrf.mxu0
      %v8750 = vadd.f32 0.0, %v8749
      %v8751 = vpop.f32.mrf.mxu0
      %v8752 = vpop.f32.mrf.mxu0
      %v8753 = vadd.f32 0.0, %v8752
      %v8754 = vpop.f32.mrf.mxu0
      %8755 = vmatprep.mubr.bf16.mxu0 0
      %8756 = vmatmul.mubr.bf16.gmra.mxu0 %v5092
      %v8757 = vpop.f32.mrf.mxu0
      %v8758 = vadd.f32 0.0, %v8757
      %v8759 = vpop.f32.mrf.mxu0
      %v8760 = vpop.f32.mrf.mxu0
      %v8761 = vadd.f32 0.0, %v8760
      %v8762 = vpop.f32.mrf.mxu0
      %8763 = vmatprep.mubr.bf16.mxu0 0
      %8764 = vmatmul.mubr.bf16.gmra.mxu0 %v5094
      %v8765 = vpop.f32.mrf.mxu0
      %v8766 = vadd.f32 0.0, %v8765
      %v8767 = vpop.f32.mrf.mxu0
      %v8768 = vpop.f32.mrf.mxu0
      %v8769 = vadd.f32 0.0, %v8768
      %v8770 = vpop.f32.mrf.mxu0
      %8771 = vmatprep.mubr.bf16.mxu0 0
      %8772 = vmatmul.mubr.bf16.gmra.mxu0 %v5096
      %v8773 = vpop.f32.mrf.mxu0
      %v8774 = vadd.f32 0.0, %v8773
      %v8775 = vpop.f32.mrf.mxu0
      %v8776 = vpop.f32.mrf.mxu0
      %v8777 = vadd.f32 0.0, %v8776
      %v8778 = vpop.f32.mrf.mxu0
      %8779 = vmatprep.mubr.bf16.mxu0 0
      %8780 = vmatmul.mubr.bf16.gmra.mxu0 %v5098
      %v8781 = vpop.f32.mrf.mxu0
      %v8782 = vadd.f32 0.0, %v8781
      %v8783 = vpop.f32.mrf.mxu0
      %v8784 = vpop.f32.mrf.mxu0
      %v8785 = vadd.f32 0.0, %v8784
      %v8786 = vpop.f32.mrf.mxu0
      %8787 = vmatprep.mubr.bf16.mxu0 0
      %8788 = vmatmul.mubr.bf16.gmra.mxu0 %v5100
      %v8789 = vpop.f32.mrf.mxu0
      %v8790 = vadd.f32 0.0, %v8789
      %v8791 = vpop.f32.mrf.mxu0
      %v8792 = vpop.f32.mrf.mxu0
      %v8793 = vadd.f32 0.0, %v8792
      %v8794 = vpop.f32.mrf.mxu0
      %8795 = vmatprep.mubr.bf16.mxu0 0
      %8796 = vmatmul.mubr.bf16.gmra.mxu0 %v5102
      %v8797 = vpop.f32.mrf.mxu0
      %v8798 = vadd.f32 0.0, %v8797
      %v8799 = vpop.f32.mrf.mxu0
      %v8800 = vpop.f32.mrf.mxu0
      %v8801 = vadd.f32 0.0, %v8800
      %v8802 = vpop.f32.mrf.mxu0
      %8803 = vmatprep.mubr.bf16.mxu0 0
      %8804 = vmatmul.mubr.bf16.gmra.mxu0 %v5104
      %v8805 = vpop.f32.mrf.mxu0
      %v8806 = vadd.f32 0.0, %v8805
      %v8807 = vpop.f32.mrf.mxu0
      %v8808 = vpop.f32.mrf.mxu0
      %v8809 = vadd.f32 0.0, %v8808
      %v8810 = vpop.f32.mrf.mxu0
      %8811 = vmatprep.mubr.bf16.mxu0 0
      %8812 = vmatmul.mubr.bf16.gmra.mxu0 %v5106
      %v8813 = vpop.f32.mrf.mxu0
      %v8814 = vadd.f32 0.0, %v8813
      %v8815 = vpop.f32.mrf.mxu0
      %v8816 = vpop.f32.mrf.mxu0
      %v8817 = vadd.f32 0.0, %v8816
      %v8818 = vpop.f32.mrf.mxu0
      %8819 = vmatprep.mubr.bf16.mxu0 0
      %8820 = vmatmul.mubr.bf16.gmra.mxu0 %v5108
      %v8821 = vpop.f32.mrf.mxu0
      %v8822 = vadd.f32 0.0, %v8821
      %v8823 = vpop.f32.mrf.mxu0
      %v8824 = vpop.f32.mrf.mxu0
      %v8825 = vadd.f32 0.0, %v8824
      %v8826 = vpop.f32.mrf.mxu0
      %8827 = vmatprep.mubr.bf16.mxu0 0
      %8828 = vmatmul.mubr.bf16.gmra.mxu0 %v5110
      %v8829 = vpop.f32.mrf.mxu0
      %v8830 = vadd.f32 0.0, %v8829
      %v8831 = vpop.f32.mrf.mxu0
      %v8832 = vpop.f32.mrf.mxu0
      %v8833 = vadd.f32 0.0, %v8832
      %v8834 = vpop.f32.mrf.mxu0
      %8835 = vmatprep.mubr.bf16.mxu0 0
      %8836 = vmatmul.mubr.bf16.gmra.mxu0 %v5112
      %v8837 = vpop.f32.mrf.mxu0
      %v8838 = vadd.f32 0.0, %v8837
      %v8839 = vpop.f32.mrf.mxu0
      %v8840 = vpop.f32.mrf.mxu0
      %v8841 = vadd.f32 0.0, %v8840
      %v8842 = vpop.f32.mrf.mxu0
      %8843 = vmatprep.mubr.bf16.mxu0 0
      %8844 = vmatmul.mubr.bf16.gmra.mxu0 %v5114
      %v8845 = vpop.f32.mrf.mxu0
      %v8846 = vadd.f32 0.0, %v8845
      %v8847 = vpop.f32.mrf.mxu0
      %v8848 = vpop.f32.mrf.mxu0
      %v8849 = vadd.f32 0.0, %v8848
      %v8850 = vpop.f32.mrf.mxu0
      %8851 = vmatprep.mubr.bf16.mxu0 0
      %8852 = vmatmul.mubr.bf16.gmra.mxu0 %v5116
      %v8853 = vpop.f32.mrf.mxu0
      %v8854 = vadd.f32 0.0, %v8853
      %v8855 = vpop.f32.mrf.mxu0
      %v8856 = vpop.f32.mrf.mxu0
      %v8857 = vadd.f32 0.0, %v8856
      %v8858 = vpop.f32.mrf.mxu0
      %8859 = vmatprep.mubr.bf16.mxu0 0
      %8860 = vmatmul.mubr.bf16.gmra.mxu0 %v5118
      %v8861 = vpop.f32.mrf.mxu0
      %v8862 = vadd.f32 0.0, %v8861
      %v8863 = vpop.f32.mrf.mxu0
      %v8864 = vpop.f32.mrf.mxu0
      %v8865 = vadd.f32 0.0, %v8864
      %v8866 = vpop.f32.mrf.mxu0
      %8867 = vmatprep.mubr.bf16.mxu0 0
      %8868 = vmatmul.mubr.bf16.gmra.mxu0 %v5120
      %v8869 = vpop.f32.mrf.mxu0
      %v8870 = vadd.f32 0.0, %v8869
      %v8871 = vpop.f32.mrf.mxu0
      %v8872 = vpop.f32.mrf.mxu0
      %v8873 = vadd.f32 0.0, %v8872
      %v8874 = vpop.f32.mrf.mxu0
      %8875 = vmatprep.mubr.bf16.mxu0 0
      %8876 = vmatmul.mubr.bf16.gmra.mxu0 %v5122
      %v8877 = vpop.f32.mrf.mxu0
      %v8878 = vadd.f32 0.0, %v8877
      %v8879 = vpop.f32.mrf.mxu0
      %v8880 = vpop.f32.mrf.mxu0
      %v8881 = vadd.f32 0.0, %v8880
      %v8882 = vpop.f32.mrf.mxu0
      %8883 = vmatprep.mubr.bf16.mxu0 0
      %8884 = vmatmul.mubr.bf16.gmra.mxu0 %v5124
      %v8885 = vpop.f32.mrf.mxu0
      %v8886 = vadd.f32 0.0, %v8885
      %v8887 = vpop.f32.mrf.mxu0
      %v8888 = vpop.f32.mrf.mxu0
      %v8889 = vadd.f32 0.0, %v8888
      %v8890 = vpop.f32.mrf.mxu0
      %8891 = vmatprep.mubr.bf16.mxu0 0
      %8892 = vmatmul.mubr.bf16.gmra.mxu0 %v6277
      %v8893 = vpop.f32.mrf.mxu0
      %v8894 = vadd.f32 0.0, %v8893
      %v8895 = vpop.f32.mrf.mxu0
      %v8896 = vpop.f32.mrf.mxu0
      %v8897 = vadd.f32 0.0, %v8896
      %v8898 = vpop.f32.mrf.mxu0
      %8899 = vmatprep.mubr.bf16.mxu0 0
      %8900 = vmatmul.mubr.bf16.gmra.mxu0 %v6279
      %v8901 = vpop.f32.mrf.mxu0
      %v8902 = vadd.f32 0.0, %v8901
      %v8903 = vpop.f32.mrf.mxu0
      %v8904 = vpop.f32.mrf.mxu0
      %v8905 = vadd.f32 0.0, %v8904
      %v8906 = vpop.f32.mrf.mxu0
      %8907 = vmatprep.mubr.bf16.mxu0 0
      %8908 = vmatmul.mubr.bf16.gmra.mxu0 %v6986
      %v8909 = vpop.f32.mrf.mxu0
      %v8910 = vadd.f32 0.0, %v8909
      %v8911 = vpop.f32.mrf.mxu0
      %v8912 = vpop.f32.mrf.mxu0
      %v8913 = vadd.f32 0.0, %v8912
      %v8914 = vpop.f32.mrf.mxu0
      %8915 = vmatprep.mubr.bf16.mxu0 0
      %8916 = vmatmul.mubr.bf16.gmra.mxu0 %v6988
      %v8917 = vpop.f32.mrf.mxu0
      %v8918 = vadd.f32 0.0, %v8917
      %v8919 = vpop.f32.mrf.mxu0
      %v8920 = vpop.f32.mrf.mxu0
      %v8921 = vadd.f32 0.0, %v8920
      %v8922 = vpop.f32.mrf.mxu0
      %8923 = vmatprep.mubr.bf16.mxu0 0
      %8924 = vmatmul.mubr.bf16.gmra.mxu0 %v7695
      %v8925 = vpop.f32.mrf.mxu0
      %v8926 = vadd.f32 0.0, %v8925
      %v8927 = vpop.f32.mrf.mxu0
      %v8928 = vpop.f32.mrf.mxu0
      %v8929 = vadd.f32 0.0, %v8928
      %v8930 = vpop.f32.mrf.mxu0
      %8931 = vmatprep.mubr.bf16.mxu0 0
      %8932 = vmatmul.mubr.bf16.gmra.mxu0 %v7697
      %v8933 = vpop.f32.mrf.mxu0
      %v8934 = vadd.f32 0.0, %v8933
      %v8935 = vpop.f32.mrf.mxu0
      %v8936 = vpop.f32.mrf.mxu0
      %v8937 = vadd.f32 0.0, %v8936
      %v8938 = vpop.f32.mrf.mxu0
      %8939 = vmatprep.mubr.bf16.mxu0 0
      %8940 = vmatmul.mubr.bf16.gmra.mxu0 %v8404
      %v8941 = vpop.f32.mrf.mxu0
      %v8942 = vadd.f32 0.0, %v8941
      %v8943 = vpop.f32.mrf.mxu0
      %v8944 = vpop.f32.mrf.mxu0
      %v8945 = vadd.f32 0.0, %v8944
      %v8946 = vpop.f32.mrf.mxu0
      %8947 = vmatprep.mubr.bf16.mxu0 0
      %8948 = vmatmul.mubr.bf16.gmra.mxu0 %v8406
      %v8949 = vpop.f32.mrf.mxu0
      %v8950 = vadd.f32 0.0, %v8949
      %v8951 = vpop.f32.mrf.mxu0
      %v8952 = vpop.f32.mrf.mxu0
      %v8953 = vadd.f32 0.0, %v8952
      %v8954 = vpop.f32.mrf.mxu0
      %8955 = vdwg.mxu0
      %v8956 = vadd.f32 %v8247, %v8446
      %v8957 = vadd.f32 %v8248, %v8449
      %v8958 = vadd.f32 %v8249, %v8454
      %v8959 = vadd.f32 %v8250, %v8457
      %v8960 = vadd.f32 %v8251, %v8462
      %v8961 = vadd.f32 %v8252, %v8465
      %v8962 = vadd.f32 %v8253, %v8470
      %v8963 = vadd.f32 %v8254, %v8473
      %v8964 = vadd.f32 %v8255, %v8478
      %v8965 = vadd.f32 %v8256, %v8481
      %v8966 = vadd.f32 %v8257, %v8486
      %v8967 = vadd.f32 %v8258, %v8489
      %v8968 = vadd.f32 %v8259, %v8494
      %v8969 = vadd.f32 %v8260, %v8497
      %v8970 = vadd.f32 %v8261, %v8502
      %v8971 = vadd.f32 %v8262, %v8505
      %v8972 = vadd.f32 %v8263, %v8510
      %v8973 = vadd.f32 %v8264, %v8513
      %v8974 = vadd.f32 %v8265, %v8518
      %v8975 = vadd.f32 %v8266, %v8521
      %v8976 = vadd.f32 %v8267, %v8526
      %v8977 = vadd.f32 %v8268, %v8529
      %v8978 = vadd.f32 %v8269, %v8534
      %v8979 = vadd.f32 %v8270, %v8537
      %v8980 = vadd.f32 %v8271, %v8542
      %v8981 = vadd.f32 %v8272, %v8545
      %v8982 = vadd.f32 %v8273, %v8550
      %v8983 = vadd.f32 %v8274, %v8553
      %v8984 = vadd.f32 %v8275, %v8558
      %v8985 = vadd.f32 %v8276, %v8561
      %v8986 = vadd.f32 %v8277, %v8566
      %v8987 = vadd.f32 %v8278, %v8569
      %v8988 = vadd.f32 %v8279, %v8574
      %v8989 = vadd.f32 %v8280, %v8577
      %v8990 = vadd.f32 %v8281, %v8582
      %v8991 = vadd.f32 %v8282, %v8585
      %v8992 = vadd.f32 %v8283, %v8590
      %v8993 = vadd.f32 %v8284, %v8593
      %v8994 = vadd.f32 %v8285, %v8598
      %v8995 = vadd.f32 %v8286, %v8601
      %v8996 = vadd.f32 %v8287, %v8606
      %v8997 = vadd.f32 %v8288, %v8609
      %v8998 = vadd.f32 %v8289, %v8614
      %v8999 = vadd.f32 %v8290, %v8617
      %v9000 = vadd.f32 %v8291, %v8622
      %v9001 = vadd.f32 %v8292, %v8625
      %v9002 = vadd.f32 %v8293, %v8630
      %v9003 = vadd.f32 %v8294, %v8633
      %v9004 = vadd.f32 %v8295, %v8638
      %v9005 = vadd.f32 %v8296, %v8641
      %v9006 = vadd.f32 %v8297, %v8646
      %v9007 = vadd.f32 %v8298, %v8649
      %v9008 = vadd.f32 %v8299, %v8654
      %v9009 = vadd.f32 %v8300, %v8657
      %v9010 = vadd.f32 %v8301, %v8662
      %v9011 = vadd.f32 %v8302, %v8665
      %v9012 = vadd.f32 %v8303, %v8670
      %v9013 = vadd.f32 %v8304, %v8673
      %v9014 = vadd.f32 %v8305, %v8678
      %v9015 = vadd.f32 %v8306, %v8681
      %v9016 = vadd.f32 %v8307, %v8686
      %v9017 = vadd.f32 %v8308, %v8689
      %v9018 = vadd.f32 %v8309, %v8694
      %v9019 = vadd.f32 %v8310, %v8697
      %v9020 = vadd.f32 %v8311, %v8702
      %v9021 = vadd.f32 %v8312, %v8705
      %v9022 = vadd.f32 %v8313, %v8710
      %v9023 = vadd.f32 %v8314, %v8713
      %v9024 = vadd.f32 %v8315, %v8718
      %v9025 = vadd.f32 %v8316, %v8721
      %v9026 = vadd.f32 %v8317, %v8726
      %v9027 = vadd.f32 %v8318, %v8729
      %v9028 = vadd.f32 %v8319, %v8734
      %v9029 = vadd.f32 %v8320, %v8737
      %v9030 = vadd.f32 %v8321, %v8742
      %v9031 = vadd.f32 %v8322, %v8745
      %v9032 = vadd.f32 %v8323, %v8750
      %v9033 = vadd.f32 %v8324, %v8753
      %v9034 = vadd.f32 %v8325, %v8758
      %v9035 = vadd.f32 %v8326, %v8761
      %v9036 = vadd.f32 %v8327, %v8766
      %v9037 = vadd.f32 %v8328, %v8769
      %v9038 = vadd.f32 %v8329, %v8774
      %v9039 = vadd.f32 %v8330, %v8777
      %v9040 = vadd.f32 %v8331, %v8782
      %v9041 = vadd.f32 %v8332, %v8785
      %v9042 = vadd.f32 %v8333, %v8790
      %v9043 = vadd.f32 %v8334, %v8793
      %v9044 = vadd.f32 %v8335, %v8798
      %v9045 = vadd.f32 %v8336, %v8801
      %v9046 = vadd.f32 %v8337, %v8806
      %v9047 = vadd.f32 %v8338, %v8809
      %v9048 = vadd.f32 %v8339, %v8814
      %v9049 = vadd.f32 %v8340, %v8817
      %v9050 = vadd.f32 %v8341, %v8822
      %v9051 = vadd.f32 %v8342, %v8825
      %v9052 = vadd.f32 %v8343, %v8830
      %v9053 = vadd.f32 %v8344, %v8833
      %v9054 = vadd.f32 %v8345, %v8838
      %v9055 = vadd.f32 %v8346, %v8841
      %v9056 = vadd.f32 %v8347, %v8846
      %v9057 = vadd.f32 %v8348, %v8849
      %v9058 = vadd.f32 %v8349, %v8854
      %v9059 = vadd.f32 %v8350, %v8857
      %v9060 = vadd.f32 %v8351, %v8862
      %v9061 = vadd.f32 %v8352, %v8865
      %v9062 = vadd.f32 %v8353, %v8870
      %v9063 = vadd.f32 %v8354, %v8873
      %v9064 = vadd.f32 %v8355, %v8878
      %v9065 = vadd.f32 %v8356, %v8881
      %v9066 = vadd.f32 %v8357, %v8886
      %v9067 = vadd.f32 %v8358, %v8889
      %v9068 = vadd.f32 %v8359, %v8894
      %v9069 = vadd.f32 %v8360, %v8897
      %v9070 = vadd.f32 %v8361, %v8902
      %v9071 = vadd.f32 %v8362, %v8905
      %v9072 = vadd.f32 %v8363, %v8910
      %v9073 = vadd.f32 %v8364, %v8913
      %v9074 = vadd.f32 %v8365, %v8918
      %v9075 = vadd.f32 %v8366, %v8921
      %v9076 = vadd.f32 %v8367, %v8926
      %v9077 = vadd.f32 %v8368, %v8929
      %v9078 = vadd.f32 %v8369, %v8934
      %v9079 = vadd.f32 %v8370, %v8937
      %v9080 = vadd.f32 %v8371, %v8942
      %v9081 = vadd.f32 %v8372, %v8945
      %v9082 = vadd.f32 %v8373, %v8950
      %v9083 = vadd.f32 %v8374, %v8953
      %s9084 = scalar_lea.vmem %s1, 168
      %v9085 = vld [vmem:[%s9084] sm:$0xf]
      %v9086 = vld [vmem:[%s9084 + $0x4] sm:$0xf]
      %v9087 = vld [vmem:[%s9084 + $0x8] sm:$0xf]
      %v9088 = vld [vmem:[%s9084 + $0xc] sm:$0xf]
      %v9089 = vld [vmem:[%s9084 + $0x10] sm:$0xf]
      %v9090 = vld [vmem:[%s9084 + $0x14] sm:$0xf]
      %v9091 = vld [vmem:[%s9084 + $0x18] sm:$0xf]
      %v9099 = vunpack.c.l.b16 %v9085
      %v9100 = vunpack.c.l.b16 %v9086
      %v9101 = vunpack.c.l.b16 %v9087
      %v9102 = vunpack.c.l.b16 %v9088
      %v9103 = vunpack.c.l.b16 %v9089
      %v9104 = vunpack.c.l.b16 %v9090
      %v9105 = vunpack.c.l.b16 %v9091
      %v9106 = vpack.c.b16 %v9100, %v9099
      %v9107 = vpack.c.b16 %v9102, %v9101
      %v9108 = vpack.c.b16 %v9104, %v9103
      %v9109 = vpack.c.b16 %v9105, %v9105
      %v9113 = vsel %vm4997, %v4958, 0
      %v9115 = vsel %vm4997, %v4960, 0
      %v9118 = vsel %vm5126, %v9109, 0
      %9120 = vmatprep.subr.bf16.mxu0 0
      %9121 = vmatpush1.bf16.msra.mxu0 0
      %9122 = vmatprep.subr.bf16.mxu0 0
      %9123 = vmatpush1.bf16.msra.mxu0 0
      %9124 = vmatprep.subr.bf16.mxu0 0
      %9125 = vmatpush1.bf16.msra.mxu0 0
      %9126 = vmatprep.subr.bf16.mxu0 0
      %9127 = vmatpush1.bf16.msra.mxu0 0
      %9128 = vmatprep.subr.bf16.mxu0 0
      %9129 = vmatpush1.bf16.msra.mxu0 %v9118
      %9130 = vmatprep.subr.bf16.mxu0 0
      %9131 = vmatpush1.bf16.msra.mxu0 %v9108
      %9132 = vmatprep.subr.bf16.mxu0 0
      %9133 = vmatpush1.bf16.msra.mxu0 %v9107
      %9134 = vmatprep.subr.bf16.mxu0 0
      %9135 = vmatpush1.bf16.msra.mxu0 %v9106
      %9136 = vmatprep.subr.bf16.mxu0 0
      %9137 = vmatpush2.bf16.msra.mxu0 0
      %9138 = vmatprep.subr.bf16.mxu0 0
      %9139 = vmatpush2.bf16.msra.mxu0 0
      %9140 = vmatprep.subr.bf16.mxu0 0
      %9141 = vmatpush2.bf16.msra.mxu0 0
      %9142 = vmatprep.subr.bf16.mxu0 0
      %9143 = vmatpush2.bf16.msra.mxu0 0
      %9144 = vmatprep.subr.bf16.mxu0 0
      %9145 = vmatpush2.bf16.msra.mxu0 0
      %9146 = vmatprep.subr.bf16.mxu0 0
      %9147 = vmatpush2.bf16.msra.mxu0 0
      %9148 = vmatprep.subr.bf16.mxu0 0
      %9149 = vmatpush2.bf16.msra.mxu0 0
      %9150 = vmatprep.subr.bf16.mxu0 0
      %9151 = vmatpush2.bf16.msra.mxu0 0
      %9152 = vmatprep.mubr.bf16.mxu0 0
      %9153 = vmatmul.mubr.bf16.gmra.mxu0 %v5018
      %v9154 = vpop.f32.mrf.mxu0
      %v9155 = vadd.f32 0.0, %v9154
      %v9156 = vpop.f32.mrf.mxu0
      %v9157 = vpop.f32.mrf.mxu0
      %v9158 = vadd.f32 0.0, %v9157
      %v9159 = vpop.f32.mrf.mxu0
      %9160 = vmatprep.mubr.bf16.mxu0 0
      %9161 = vmatmul.mubr.bf16.gmra.mxu0 %v5020
      %v9162 = vpop.f32.mrf.mxu0
      %v9163 = vadd.f32 0.0, %v9162
      %v9164 = vpop.f32.mrf.mxu0
      %v9165 = vpop.f32.mrf.mxu0
      %v9166 = vadd.f32 0.0, %v9165
      %v9167 = vpop.f32.mrf.mxu0
      %9168 = vmatprep.mubr.bf16.mxu0 0
      %9169 = vmatmul.mubr.bf16.gmra.mxu0 %v5022
      %v9170 = vpop.f32.mrf.mxu0
      %v9171 = vadd.f32 0.0, %v9170
      %v9172 = vpop.f32.mrf.mxu0
      %v9173 = vpop.f32.mrf.mxu0
      %v9174 = vadd.f32 0.0, %v9173
      %v9175 = vpop.f32.mrf.mxu0
      %9176 = vmatprep.mubr.bf16.mxu0 0
      %9177 = vmatmul.mubr.bf16.gmra.mxu0 %v5024
      %v9178 = vpop.f32.mrf.mxu0
      %v9179 = vadd.f32 0.0, %v9178
      %v9180 = vpop.f32.mrf.mxu0
      %v9181 = vpop.f32.mrf.mxu0
      %v9182 = vadd.f32 0.0, %v9181
      %v9183 = vpop.f32.mrf.mxu0
      %9184 = vmatprep.mubr.bf16.mxu0 0
      %9185 = vmatmul.mubr.bf16.gmra.mxu0 %v5026
      %v9186 = vpop.f32.mrf.mxu0
      %v9187 = vadd.f32 0.0, %v9186
      %v9188 = vpop.f32.mrf.mxu0
      %v9189 = vpop.f32.mrf.mxu0
      %v9190 = vadd.f32 0.0, %v9189
      %v9191 = vpop.f32.mrf.mxu0
      %9192 = vmatprep.mubr.bf16.mxu0 0
      %9193 = vmatmul.mubr.bf16.gmra.mxu0 %v5028
      %v9194 = vpop.f32.mrf.mxu0
      %v9195 = vadd.f32 0.0, %v9194
      %v9196 = vpop.f32.mrf.mxu0
      %v9197 = vpop.f32.mrf.mxu0
      %v9198 = vadd.f32 0.0, %v9197
      %v9199 = vpop.f32.mrf.mxu0
      %9200 = vmatprep.mubr.bf16.mxu0 0
      %9201 = vmatmul.mubr.bf16.gmra.mxu0 %v5030
      %v9202 = vpop.f32.mrf.mxu0
      %v9203 = vadd.f32 0.0, %v9202
      %v9204 = vpop.f32.mrf.mxu0
      %v9205 = vpop.f32.mrf.mxu0
      %v9206 = vadd.f32 0.0, %v9205
      %v9207 = vpop.f32.mrf.mxu0
      %9208 = vmatprep.mubr.bf16.mxu0 0
      %9209 = vmatmul.mubr.bf16.gmra.mxu0 %v5032
      %v9210 = vpop.f32.mrf.mxu0
      %v9211 = vadd.f32 0.0, %v9210
      %v9212 = vpop.f32.mrf.mxu0
      %v9213 = vpop.f32.mrf.mxu0
      %v9214 = vadd.f32 0.0, %v9213
      %v9215 = vpop.f32.mrf.mxu0
      %9216 = vmatprep.mubr.bf16.mxu0 0
      %9217 = vmatmul.mubr.bf16.gmra.mxu0 %v5034
      %v9218 = vpop.f32.mrf.mxu0
      %v9219 = vadd.f32 0.0, %v9218
      %v9220 = vpop.f32.mrf.mxu0
      %v9221 = vpop.f32.mrf.mxu0
      %v9222 = vadd.f32 0.0, %v9221
      %v9223 = vpop.f32.mrf.mxu0
      %9224 = vmatprep.mubr.bf16.mxu0 0
      %9225 = vmatmul.mubr.bf16.gmra.mxu0 %v5036
      %v9226 = vpop.f32.mrf.mxu0
      %v9227 = vadd.f32 0.0, %v9226
      %v9228 = vpop.f32.mrf.mxu0
      %v9229 = vpop.f32.mrf.mxu0
      %v9230 = vadd.f32 0.0, %v9229
      %v9231 = vpop.f32.mrf.mxu0
      %9232 = vmatprep.mubr.bf16.mxu0 0
      %9233 = vmatmul.mubr.bf16.gmra.mxu0 %v5038
      %v9234 = vpop.f32.mrf.mxu0
      %v9235 = vadd.f32 0.0, %v9234
      %v9236 = vpop.f32.mrf.mxu0
      %v9237 = vpop.f32.mrf.mxu0
      %v9238 = vadd.f32 0.0, %v9237
      %v9239 = vpop.f32.mrf.mxu0
      %9240 = vmatprep.mubr.bf16.mxu0 0
      %9241 = vmatmul.mubr.bf16.gmra.mxu0 %v5040
      %v9242 = vpop.f32.mrf.mxu0
      %v9243 = vadd.f32 0.0, %v9242
      %v9244 = vpop.f32.mrf.mxu0
      %v9245 = vpop.f32.mrf.mxu0
      %v9246 = vadd.f32 0.0, %v9245
      %v9247 = vpop.f32.mrf.mxu0
      %9248 = vmatprep.mubr.bf16.mxu0 0
      %9249 = vmatmul.mubr.bf16.gmra.mxu0 %v5042
      %v9250 = vpop.f32.mrf.mxu0
      %v9251 = vadd.f32 0.0, %v9250
      %v9252 = vpop.f32.mrf.mxu0
      %v9253 = vpop.f32.mrf.mxu0
      %v9254 = vadd.f32 0.0, %v9253
      %v9255 = vpop.f32.mrf.mxu0
      %9256 = vmatprep.mubr.bf16.mxu0 0
      %9257 = vmatmul.mubr.bf16.gmra.mxu0 %v5044
      %v9258 = vpop.f32.mrf.mxu0
      %v9259 = vadd.f32 0.0, %v9258
      %v9260 = vpop.f32.mrf.mxu0
      %v9261 = vpop.f32.mrf.mxu0
      %v9262 = vadd.f32 0.0, %v9261
      %v9263 = vpop.f32.mrf.mxu0
      %9264 = vmatprep.mubr.bf16.mxu0 0
      %9265 = vmatmul.mubr.bf16.gmra.mxu0 %v5046
      %v9266 = vpop.f32.mrf.mxu0
      %v9267 = vadd.f32 0.0, %v9266
      %v9268 = vpop.f32.mrf.mxu0
      %v9269 = vpop.f32.mrf.mxu0
      %v9270 = vadd.f32 0.0, %v9269
      %v9271 = vpop.f32.mrf.mxu0
      %9272 = vmatprep.mubr.bf16.mxu0 0
      %9273 = vmatmul.mubr.bf16.gmra.mxu0 %v5048
      %v9274 = vpop.f32.mrf.mxu0
      %v9275 = vadd.f32 0.0, %v9274
      %v9276 = vpop.f32.mrf.mxu0
      %v9277 = vpop.f32.mrf.mxu0
      %v9278 = vadd.f32 0.0, %v9277
      %v9279 = vpop.f32.mrf.mxu0
      %9280 = vmatprep.mubr.bf16.mxu0 0
      %9281 = vmatmul.mubr.bf16.gmra.mxu0 %v5050
      %v9282 = vpop.f32.mrf.mxu0
      %v9283 = vadd.f32 0.0, %v9282
      %v9284 = vpop.f32.mrf.mxu0
      %v9285 = vpop.f32.mrf.mxu0
      %v9286 = vadd.f32 0.0, %v9285
      %v9287 = vpop.f32.mrf.mxu0
      %9288 = vmatprep.mubr.bf16.mxu0 0
      %9289 = vmatmul.mubr.bf16.gmra.mxu0 %v5052
      %v9290 = vpop.f32.mrf.mxu0
      %v9291 = vadd.f32 0.0, %v9290
      %v9292 = vpop.f32.mrf.mxu0
      %v9293 = vpop.f32.mrf.mxu0
      %v9294 = vadd.f32 0.0, %v9293
      %v9295 = vpop.f32.mrf.mxu0
      %9296 = vmatprep.mubr.bf16.mxu0 0
      %9297 = vmatmul.mubr.bf16.gmra.mxu0 %v5054
      %v9298 = vpop.f32.mrf.mxu0
      %v9299 = vadd.f32 0.0, %v9298
      %v9300 = vpop.f32.mrf.mxu0
      %v9301 = vpop.f32.mrf.mxu0
      %v9302 = vadd.f32 0.0, %v9301
      %v9303 = vpop.f32.mrf.mxu0
      %9304 = vmatprep.mubr.bf16.mxu0 0
      %9305 = vmatmul.mubr.bf16.gmra.mxu0 %v5056
      %v9306 = vpop.f32.mrf.mxu0
      %v9307 = vadd.f32 0.0, %v9306
      %v9308 = vpop.f32.mrf.mxu0
      %v9309 = vpop.f32.mrf.mxu0
      %v9310 = vadd.f32 0.0, %v9309
      %v9311 = vpop.f32.mrf.mxu0
      %9312 = vmatprep.mubr.bf16.mxu0 0
      %9313 = vmatmul.mubr.bf16.gmra.mxu0 %v5058
      %v9314 = vpop.f32.mrf.mxu0
      %v9315 = vadd.f32 0.0, %v9314
      %v9316 = vpop.f32.mrf.mxu0
      %v9317 = vpop.f32.mrf.mxu0
      %v9318 = vadd.f32 0.0, %v9317
      %v9319 = vpop.f32.mrf.mxu0
      %9320 = vmatprep.mubr.bf16.mxu0 0
      %9321 = vmatmul.mubr.bf16.gmra.mxu0 %v5060
      %v9322 = vpop.f32.mrf.mxu0
      %v9323 = vadd.f32 0.0, %v9322
      %v9324 = vpop.f32.mrf.mxu0
      %v9325 = vpop.f32.mrf.mxu0
      %v9326 = vadd.f32 0.0, %v9325
      %v9327 = vpop.f32.mrf.mxu0
      %9328 = vmatprep.mubr.bf16.mxu0 0
      %9329 = vmatmul.mubr.bf16.gmra.mxu0 %v5062
      %v9330 = vpop.f32.mrf.mxu0
      %v9331 = vadd.f32 0.0, %v9330
      %v9332 = vpop.f32.mrf.mxu0
      %v9333 = vpop.f32.mrf.mxu0
      %v9334 = vadd.f32 0.0, %v9333
      %v9335 = vpop.f32.mrf.mxu0
      %9336 = vmatprep.mubr.bf16.mxu0 0
      %9337 = vmatmul.mubr.bf16.gmra.mxu0 %v5064
      %v9338 = vpop.f32.mrf.mxu0
      %v9339 = vadd.f32 0.0, %v9338
      %v9340 = vpop.f32.mrf.mxu0
      %v9341 = vpop.f32.mrf.mxu0
      %v9342 = vadd.f32 0.0, %v9341
      %v9343 = vpop.f32.mrf.mxu0
      %9344 = vmatprep.mubr.bf16.mxu0 0
      %9345 = vmatmul.mubr.bf16.gmra.mxu0 %v5066
      %v9346 = vpop.f32.mrf.mxu0
      %v9347 = vadd.f32 0.0, %v9346
      %v9348 = vpop.f32.mrf.mxu0
      %v9349 = vpop.f32.mrf.mxu0
      %v9350 = vadd.f32 0.0, %v9349
      %v9351 = vpop.f32.mrf.mxu0
      %9352 = vmatprep.mubr.bf16.mxu0 0
      %9353 = vmatmul.mubr.bf16.gmra.mxu0 %v5068
      %v9354 = vpop.f32.mrf.mxu0
      %v9355 = vadd.f32 0.0, %v9354
      %v9356 = vpop.f32.mrf.mxu0
      %v9357 = vpop.f32.mrf.mxu0
      %v9358 = vadd.f32 0.0, %v9357
      %v9359 = vpop.f32.mrf.mxu0
      %9360 = vmatprep.mubr.bf16.mxu0 0
      %9361 = vmatmul.mubr.bf16.gmra.mxu0 %v5070
      %v9362 = vpop.f32.mrf.mxu0
      %v9363 = vadd.f32 0.0, %v9362
      %v9364 = vpop.f32.mrf.mxu0
      %v9365 = vpop.f32.mrf.mxu0
      %v9366 = vadd.f32 0.0, %v9365
      %v9367 = vpop.f32.mrf.mxu0
      %9368 = vmatprep.mubr.bf16.mxu0 0
      %9369 = vmatmul.mubr.bf16.gmra.mxu0 %v5072
      %v9370 = vpop.f32.mrf.mxu0
      %v9371 = vadd.f32 0.0, %v9370
      %v9372 = vpop.f32.mrf.mxu0
      %v9373 = vpop.f32.mrf.mxu0
      %v9374 = vadd.f32 0.0, %v9373
      %v9375 = vpop.f32.mrf.mxu0
      %9376 = vmatprep.mubr.bf16.mxu0 0
      %9377 = vmatmul.mubr.bf16.gmra.mxu0 %v5074
      %v9378 = vpop.f32.mrf.mxu0
      %v9379 = vadd.f32 0.0, %v9378
      %v9380 = vpop.f32.mrf.mxu0
      %v9381 = vpop.f32.mrf.mxu0
      %v9382 = vadd.f32 0.0, %v9381
      %v9383 = vpop.f32.mrf.mxu0
      %9384 = vmatprep.mubr.bf16.mxu0 0
      %9385 = vmatmul.mubr.bf16.gmra.mxu0 %v5076
      %v9386 = vpop.f32.mrf.mxu0
      %v9387 = vadd.f32 0.0, %v9386
      %v9388 = vpop.f32.mrf.mxu0
      %v9389 = vpop.f32.mrf.mxu0
      %v9390 = vadd.f32 0.0, %v9389
      %v9391 = vpop.f32.mrf.mxu0
      %9392 = vmatprep.mubr.bf16.mxu0 0
      %9393 = vmatmul.mubr.bf16.gmra.mxu0 %v5078
      %v9394 = vpop.f32.mrf.mxu0
      %v9395 = vadd.f32 0.0, %v9394
      %v9396 = vpop.f32.mrf.mxu0
      %v9397 = vpop.f32.mrf.mxu0
      %v9398 = vadd.f32 0.0, %v9397
      %v9399 = vpop.f32.mrf.mxu0
      %9400 = vmatprep.mubr.bf16.mxu0 0
      %9401 = vmatmul.mubr.bf16.gmra.mxu0 %v5080
      %v9402 = vpop.f32.mrf.mxu0
      %v9403 = vadd.f32 0.0, %v9402
      %v9404 = vpop.f32.mrf.mxu0
      %v9405 = vpop.f32.mrf.mxu0
      %v9406 = vadd.f32 0.0, %v9405
      %v9407 = vpop.f32.mrf.mxu0
      %9408 = vmatprep.mubr.bf16.mxu0 0
      %9409 = vmatmul.mubr.bf16.gmra.mxu0 %v5082
      %v9410 = vpop.f32.mrf.mxu0
      %v9411 = vadd.f32 0.0, %v9410
      %v9412 = vpop.f32.mrf.mxu0
      %v9413 = vpop.f32.mrf.mxu0
      %v9414 = vadd.f32 0.0, %v9413
      %v9415 = vpop.f32.mrf.mxu0
      %9416 = vmatprep.mubr.bf16.mxu0 0
      %9417 = vmatmul.mubr.bf16.gmra.mxu0 %v5084
      %v9418 = vpop.f32.mrf.mxu0
      %v9419 = vadd.f32 0.0, %v9418
      %v9420 = vpop.f32.mrf.mxu0
      %v9421 = vpop.f32.mrf.mxu0
      %v9422 = vadd.f32 0.0, %v9421
      %v9423 = vpop.f32.mrf.mxu0
      %9424 = vmatprep.mubr.bf16.mxu0 0
      %9425 = vmatmul.mubr.bf16.gmra.mxu0 %v5086
      %v9426 = vpop.f32.mrf.mxu0
      %v9427 = vadd.f32 0.0, %v9426
      %v9428 = vpop.f32.mrf.mxu0
      %v9429 = vpop.f32.mrf.mxu0
      %v9430 = vadd.f32 0.0, %v9429
      %v9431 = vpop.f32.mrf.mxu0
      %9432 = vmatprep.mubr.bf16.mxu0 0
      %9433 = vmatmul.mubr.bf16.gmra.mxu0 %v5088
      %v9434 = vpop.f32.mrf.mxu0
      %v9435 = vadd.f32 0.0, %v9434
      %v9436 = vpop.f32.mrf.mxu0
      %v9437 = vpop.f32.mrf.mxu0
      %v9438 = vadd.f32 0.0, %v9437
      %v9439 = vpop.f32.mrf.mxu0
      %9440 = vmatprep.mubr.bf16.mxu0 0
      %9441 = vmatmul.mubr.bf16.gmra.mxu0 %v5090
      %v9442 = vpop.f32.mrf.mxu0
      %v9443 = vadd.f32 0.0, %v9442
      %v9444 = vpop.f32.mrf.mxu0
      %v9445 = vpop.f32.mrf.mxu0
      %v9446 = vadd.f32 0.0, %v9445
      %v9447 = vpop.f32.mrf.mxu0
      %9448 = vmatprep.mubr.bf16.mxu0 0
      %9449 = vmatmul.mubr.bf16.gmra.mxu0 %v5092
      %v9450 = vpop.f32.mrf.mxu0
      %v9451 = vadd.f32 0.0, %v9450
      %v9452 = vpop.f32.mrf.mxu0
      %v9453 = vpop.f32.mrf.mxu0
      %v9454 = vadd.f32 0.0, %v9453
      %v9455 = vpop.f32.mrf.mxu0
      %9456 = vmatprep.mubr.bf16.mxu0 0
      %9457 = vmatmul.mubr.bf16.gmra.mxu0 %v5094
      %v9458 = vpop.f32.mrf.mxu0
      %v9459 = vadd.f32 0.0, %v9458
      %v9460 = vpop.f32.mrf.mxu0
      %v9461 = vpop.f32.mrf.mxu0
      %v9462 = vadd.f32 0.0, %v9461
      %v9463 = vpop.f32.mrf.mxu0
      %9464 = vmatprep.mubr.bf16.mxu0 0
      %9465 = vmatmul.mubr.bf16.gmra.mxu0 %v5096
      %v9466 = vpop.f32.mrf.mxu0
      %v9467 = vadd.f32 0.0, %v9466
      %v9468 = vpop.f32.mrf.mxu0
      %v9469 = vpop.f32.mrf.mxu0
      %v9470 = vadd.f32 0.0, %v9469
      %v9471 = vpop.f32.mrf.mxu0
      %9472 = vmatprep.mubr.bf16.mxu0 0
      %9473 = vmatmul.mubr.bf16.gmra.mxu0 %v5098
      %v9474 = vpop.f32.mrf.mxu0
      %v9475 = vadd.f32 0.0, %v9474
      %v9476 = vpop.f32.mrf.mxu0
      %v9477 = vpop.f32.mrf.mxu0
      %v9478 = vadd.f32 0.0, %v9477
      %v9479 = vpop.f32.mrf.mxu0
      %9480 = vmatprep.mubr.bf16.mxu0 0
      %9481 = vmatmul.mubr.bf16.gmra.mxu0 %v5100
      %v9482 = vpop.f32.mrf.mxu0
      %v9483 = vadd.f32 0.0, %v9482
      %v9484 = vpop.f32.mrf.mxu0
      %v9485 = vpop.f32.mrf.mxu0
      %v9486 = vadd.f32 0.0, %v9485
      %v9487 = vpop.f32.mrf.mxu0
      %9488 = vmatprep.mubr.bf16.mxu0 0
      %9489 = vmatmul.mubr.bf16.gmra.mxu0 %v5102
      %v9490 = vpop.f32.mrf.mxu0
      %v9491 = vadd.f32 0.0, %v9490
      %v9492 = vpop.f32.mrf.mxu0
      %v9493 = vpop.f32.mrf.mxu0
      %v9494 = vadd.f32 0.0, %v9493
      %v9495 = vpop.f32.mrf.mxu0
      %9496 = vmatprep.mubr.bf16.mxu0 0
      %9497 = vmatmul.mubr.bf16.gmra.mxu0 %v5104
      %v9498 = vpop.f32.mrf.mxu0
      %v9499 = vadd.f32 0.0, %v9498
      %v9500 = vpop.f32.mrf.mxu0
      %v9501 = vpop.f32.mrf.mxu0
      %v9502 = vadd.f32 0.0, %v9501
      %v9503 = vpop.f32.mrf.mxu0
      %9504 = vmatprep.mubr.bf16.mxu0 0
      %9505 = vmatmul.mubr.bf16.gmra.mxu0 %v5106
      %v9506 = vpop.f32.mrf.mxu0
      %v9507 = vadd.f32 0.0, %v9506
      %v9508 = vpop.f32.mrf.mxu0
      %v9509 = vpop.f32.mrf.mxu0
      %v9510 = vadd.f32 0.0, %v9509
      %v9511 = vpop.f32.mrf.mxu0
      %9512 = vmatprep.mubr.bf16.mxu0 0
      %9513 = vmatmul.mubr.bf16.gmra.mxu0 %v5108
      %v9514 = vpop.f32.mrf.mxu0
      %v9515 = vadd.f32 0.0, %v9514
      %v9516 = vpop.f32.mrf.mxu0
      %v9517 = vpop.f32.mrf.mxu0
      %v9518 = vadd.f32 0.0, %v9517
      %v9519 = vpop.f32.mrf.mxu0
      %9520 = vmatprep.mubr.bf16.mxu0 0
      %9521 = vmatmul.mubr.bf16.gmra.mxu0 %v5110
      %v9522 = vpop.f32.mrf.mxu0
      %v9523 = vadd.f32 0.0, %v9522
      %v9524 = vpop.f32.mrf.mxu0
      %v9525 = vpop.f32.mrf.mxu0
      %v9526 = vadd.f32 0.0, %v9525
      %v9527 = vpop.f32.mrf.mxu0
      %9528 = vmatprep.mubr.bf16.mxu0 0
      %9529 = vmatmul.mubr.bf16.gmra.mxu0 %v5112
      %v9530 = vpop.f32.mrf.mxu0
      %v9531 = vadd.f32 0.0, %v9530
      %v9532 = vpop.f32.mrf.mxu0
      %v9533 = vpop.f32.mrf.mxu0
      %v9534 = vadd.f32 0.0, %v9533
      %v9535 = vpop.f32.mrf.mxu0
      %9536 = vmatprep.mubr.bf16.mxu0 0
      %9537 = vmatmul.mubr.bf16.gmra.mxu0 %v5114
      %v9538 = vpop.f32.mrf.mxu0
      %v9539 = vadd.f32 0.0, %v9538
      %v9540 = vpop.f32.mrf.mxu0
      %v9541 = vpop.f32.mrf.mxu0
      %v9542 = vadd.f32 0.0, %v9541
      %v9543 = vpop.f32.mrf.mxu0
      %9544 = vmatprep.mubr.bf16.mxu0 0
      %9545 = vmatmul.mubr.bf16.gmra.mxu0 %v5116
      %v9546 = vpop.f32.mrf.mxu0
      %v9547 = vadd.f32 0.0, %v9546
      %v9548 = vpop.f32.mrf.mxu0
      %v9549 = vpop.f32.mrf.mxu0
      %v9550 = vadd.f32 0.0, %v9549
      %v9551 = vpop.f32.mrf.mxu0
      %9552 = vmatprep.mubr.bf16.mxu0 0
      %9553 = vmatmul.mubr.bf16.gmra.mxu0 %v5118
      %v9554 = vpop.f32.mrf.mxu0
      %v9555 = vadd.f32 0.0, %v9554
      %v9556 = vpop.f32.mrf.mxu0
      %v9557 = vpop.f32.mrf.mxu0
      %v9558 = vadd.f32 0.0, %v9557
      %v9559 = vpop.f32.mrf.mxu0
      %9560 = vmatprep.mubr.bf16.mxu0 0
      %9561 = vmatmul.mubr.bf16.gmra.mxu0 %v5120
      %v9562 = vpop.f32.mrf.mxu0
      %v9563 = vadd.f32 0.0, %v9562
      %v9564 = vpop.f32.mrf.mxu0
      %v9565 = vpop.f32.mrf.mxu0
      %v9566 = vadd.f32 0.0, %v9565
      %v9567 = vpop.f32.mrf.mxu0
      %9568 = vmatprep.mubr.bf16.mxu0 0
      %9569 = vmatmul.mubr.bf16.gmra.mxu0 %v5122
      %v9570 = vpop.f32.mrf.mxu0
      %v9571 = vadd.f32 0.0, %v9570
      %v9572 = vpop.f32.mrf.mxu0
      %v9573 = vpop.f32.mrf.mxu0
      %v9574 = vadd.f32 0.0, %v9573
      %v9575 = vpop.f32.mrf.mxu0
      %9576 = vmatprep.mubr.bf16.mxu0 0
      %9577 = vmatmul.mubr.bf16.gmra.mxu0 %v5124
      %v9578 = vpop.f32.mrf.mxu0
      %v9579 = vadd.f32 0.0, %v9578
      %v9580 = vpop.f32.mrf.mxu0
      %v9581 = vpop.f32.mrf.mxu0
      %v9582 = vadd.f32 0.0, %v9581
      %v9583 = vpop.f32.mrf.mxu0
      %9584 = vmatprep.mubr.bf16.mxu0 0
      %9585 = vmatmul.mubr.bf16.gmra.mxu0 %v6277
      %v9586 = vpop.f32.mrf.mxu0
      %v9587 = vadd.f32 0.0, %v9586
      %v9588 = vpop.f32.mrf.mxu0
      %v9589 = vpop.f32.mrf.mxu0
      %v9590 = vadd.f32 0.0, %v9589
      %v9591 = vpop.f32.mrf.mxu0
      %9592 = vmatprep.mubr.bf16.mxu0 0
      %9593 = vmatmul.mubr.bf16.gmra.mxu0 %v6279
      %v9594 = vpop.f32.mrf.mxu0
      %v9595 = vadd.f32 0.0, %v9594
      %v9596 = vpop.f32.mrf.mxu0
      %v9597 = vpop.f32.mrf.mxu0
      %v9598 = vadd.f32 0.0, %v9597
      %v9599 = vpop.f32.mrf.mxu0
      %9600 = vmatprep.mubr.bf16.mxu0 0
      %9601 = vmatmul.mubr.bf16.gmra.mxu0 %v6986
      %v9602 = vpop.f32.mrf.mxu0
      %v9603 = vadd.f32 0.0, %v9602
      %v9604 = vpop.f32.mrf.mxu0
      %v9605 = vpop.f32.mrf.mxu0
      %v9606 = vadd.f32 0.0, %v9605
      %v9607 = vpop.f32.mrf.mxu0
      %9608 = vmatprep.mubr.bf16.mxu0 0
      %9609 = vmatmul.mubr.bf16.gmra.mxu0 %v6988
      %v9610 = vpop.f32.mrf.mxu0
      %v9611 = vadd.f32 0.0, %v9610
      %v9612 = vpop.f32.mrf.mxu0
      %v9613 = vpop.f32.mrf.mxu0
      %v9614 = vadd.f32 0.0, %v9613
      %v9615 = vpop.f32.mrf.mxu0
      %9616 = vmatprep.mubr.bf16.mxu0 0
      %9617 = vmatmul.mubr.bf16.gmra.mxu0 %v7695
      %v9618 = vpop.f32.mrf.mxu0
      %v9619 = vadd.f32 0.0, %v9618
      %v9620 = vpop.f32.mrf.mxu0
      %v9621 = vpop.f32.mrf.mxu0
      %v9622 = vadd.f32 0.0, %v9621
      %v9623 = vpop.f32.mrf.mxu0
      %9624 = vmatprep.mubr.bf16.mxu0 0
      %9625 = vmatmul.mubr.bf16.gmra.mxu0 %v7697
      %v9626 = vpop.f32.mrf.mxu0
      %v9627 = vadd.f32 0.0, %v9626
      %v9628 = vpop.f32.mrf.mxu0
      %v9629 = vpop.f32.mrf.mxu0
      %v9630 = vadd.f32 0.0, %v9629
      %v9631 = vpop.f32.mrf.mxu0
      %9632 = vmatprep.mubr.bf16.mxu0 0
      %9633 = vmatmul.mubr.bf16.gmra.mxu0 %v8404
      %v9634 = vpop.f32.mrf.mxu0
      %v9635 = vadd.f32 0.0, %v9634
      %v9636 = vpop.f32.mrf.mxu0
      %v9637 = vpop.f32.mrf.mxu0
      %v9638 = vadd.f32 0.0, %v9637
      %v9639 = vpop.f32.mrf.mxu0
      %9640 = vmatprep.mubr.bf16.mxu0 0
      %9641 = vmatmul.mubr.bf16.gmra.mxu0 %v8406
      %v9642 = vpop.f32.mrf.mxu0
      %v9643 = vadd.f32 0.0, %v9642
      %v9644 = vpop.f32.mrf.mxu0
      %v9645 = vpop.f32.mrf.mxu0
      %v9646 = vadd.f32 0.0, %v9645
      %v9647 = vpop.f32.mrf.mxu0
      %9648 = vmatprep.mubr.bf16.mxu0 0
      %9649 = vmatmul.mubr.bf16.gmra.mxu0 %v9113
      %v9650 = vpop.f32.mrf.mxu0
      %v9651 = vadd.f32 0.0, %v9650
      %v9652 = vpop.f32.mrf.mxu0
      %v9653 = vpop.f32.mrf.mxu0
      %v9654 = vadd.f32 0.0, %v9653
      %v9655 = vpop.f32.mrf.mxu0
      %9656 = vmatprep.mubr.bf16.mxu0 0
      %9657 = vmatmul.mubr.bf16.gmra.mxu0 %v9115
      %v9658 = vpop.f32.mrf.mxu0
      %v9659 = vadd.f32 0.0, %v9658
      %v9660 = vpop.f32.mrf.mxu0
      %v9661 = vpop.f32.mrf.mxu0
      %v9662 = vadd.f32 0.0, %v9661
      %v9663 = vpop.f32.mrf.mxu0
      %9664 = vdwg.mxu0
      %v9665 = vadd.f32 %v8956, %v9155
      %v9666 = vadd.f32 %v8957, %v9158
      %v9667 = vadd.f32 %v8958, %v9163
      %v9668 = vadd.f32 %v8959, %v9166
      %v9669 = vadd.f32 %v8960, %v9171
      %v9670 = vadd.f32 %v8961, %v9174
      %v9671 = vadd.f32 %v8962, %v9179
      %v9672 = vadd.f32 %v8963, %v9182
      %v9673 = vadd.f32 %v8964, %v9187
      %v9674 = vadd.f32 %v8965, %v9190
      %v9675 = vadd.f32 %v8966, %v9195
      %v9676 = vadd.f32 %v8967, %v9198
      %v9677 = vadd.f32 %v8968, %v9203
      %v9678 = vadd.f32 %v8969, %v9206
      %v9679 = vadd.f32 %v8970, %v9211
      %v9680 = vadd.f32 %v8971, %v9214
      %v9681 = vadd.f32 %v8972, %v9219
      %v9682 = vadd.f32 %v8973, %v9222
      %v9683 = vadd.f32 %v8974, %v9227
      %v9684 = vadd.f32 %v8975, %v9230
      %v9685 = vadd.f32 %v8976, %v9235
      %v9686 = vadd.f32 %v8977, %v9238
      %v9687 = vadd.f32 %v8978, %v9243
      %v9688 = vadd.f32 %v8979, %v9246
      %v9689 = vadd.f32 %v8980, %v9251
      %v9690 = vadd.f32 %v8981, %v9254
      %v9691 = vadd.f32 %v8982, %v9259
      %v9692 = vadd.f32 %v8983, %v9262
      %v9693 = vadd.f32 %v8984, %v9267
      %v9694 = vadd.f32 %v8985, %v9270
      %v9695 = vadd.f32 %v8986, %v9275
      %v9696 = vadd.f32 %v8987, %v9278
      %v9697 = vadd.f32 %v8988, %v9283
      %v9698 = vadd.f32 %v8989, %v9286
      %v9699 = vadd.f32 %v8990, %v9291
      %v9700 = vadd.f32 %v8991, %v9294
      %v9701 = vadd.f32 %v8992, %v9299
      %v9702 = vadd.f32 %v8993, %v9302
      %v9703 = vadd.f32 %v8994, %v9307
      %v9704 = vadd.f32 %v8995, %v9310
      %v9705 = vadd.f32 %v8996, %v9315
      %v9706 = vadd.f32 %v8997, %v9318
      %v9707 = vadd.f32 %v8998, %v9323
      %v9708 = vadd.f32 %v8999, %v9326
      %v9709 = vadd.f32 %v9000, %v9331
      %v9710 = vadd.f32 %v9001, %v9334
      %v9711 = vadd.f32 %v9002, %v9339
      %v9712 = vadd.f32 %v9003, %v9342
      %v9713 = vadd.f32 %v9004, %v9347
      %v9714 = vadd.f32 %v9005, %v9350
      %v9715 = vadd.f32 %v9006, %v9355
      %v9716 = vadd.f32 %v9007, %v9358
      %v9717 = vadd.f32 %v9008, %v9363
      %v9718 = vadd.f32 %v9009, %v9366
      %v9719 = vadd.f32 %v9010, %v9371
      %v9720 = vadd.f32 %v9011, %v9374
      %v9721 = vadd.f32 %v9012, %v9379
      %v9722 = vadd.f32 %v9013, %v9382
      %v9723 = vadd.f32 %v9014, %v9387
      %v9724 = vadd.f32 %v9015, %v9390
      %v9725 = vadd.f32 %v9016, %v9395
      %v9726 = vadd.f32 %v9017, %v9398
      %v9727 = vadd.f32 %v9018, %v9403
      %v9728 = vadd.f32 %v9019, %v9406
      %v9729 = vadd.f32 %v9020, %v9411
      %v9730 = vadd.f32 %v9021, %v9414
      %v9731 = vadd.f32 %v9022, %v9419
      %v9732 = vadd.f32 %v9023, %v9422
      %v9733 = vadd.f32 %v9024, %v9427
      %v9734 = vadd.f32 %v9025, %v9430
      %v9735 = vadd.f32 %v9026, %v9435
      %v9736 = vadd.f32 %v9027, %v9438
      %v9737 = vadd.f32 %v9028, %v9443
      %v9738 = vadd.f32 %v9029, %v9446
      %v9739 = vadd.f32 %v9030, %v9451
      %v9740 = vadd.f32 %v9031, %v9454
      %v9741 = vadd.f32 %v9032, %v9459
      %v9742 = vadd.f32 %v9033, %v9462
      %v9743 = vadd.f32 %v9034, %v9467
      %v9744 = vadd.f32 %v9035, %v9470
      %v9745 = vadd.f32 %v9036, %v9475
      %v9746 = vadd.f32 %v9037, %v9478
      %v9747 = vadd.f32 %v9038, %v9483
      %v9748 = vadd.f32 %v9039, %v9486
      %v9749 = vadd.f32 %v9040, %v9491
      %v9750 = vadd.f32 %v9041, %v9494
      %v9751 = vadd.f32 %v9042, %v9499
      %v9752 = vadd.f32 %v9043, %v9502
      %v9753 = vadd.f32 %v9044, %v9507
      %v9754 = vadd.f32 %v9045, %v9510
      %v9755 = vadd.f32 %v9046, %v9515
      %v9756 = vadd.f32 %v9047, %v9518
      %v9757 = vadd.f32 %v9048, %v9523
      %v9758 = vadd.f32 %v9049, %v9526
      %v9759 = vadd.f32 %v9050, %v9531
      %v9760 = vadd.f32 %v9051, %v9534
      %v9761 = vadd.f32 %v9052, %v9539
      %v9762 = vadd.f32 %v9053, %v9542
      %v9763 = vadd.f32 %v9054, %v9547
      %v9764 = vadd.f32 %v9055, %v9550
      %v9765 = vadd.f32 %v9056, %v9555
      %v9766 = vadd.f32 %v9057, %v9558
      %v9767 = vadd.f32 %v9058, %v9563
      %v9768 = vadd.f32 %v9059, %v9566
      %v9769 = vadd.f32 %v9060, %v9571
      %v9770 = vadd.f32 %v9061, %v9574
      %v9771 = vadd.f32 %v9062, %v9579
      %v9772 = vadd.f32 %v9063, %v9582
      %v9773 = vadd.f32 %v9064, %v9587
      %v9774 = vadd.f32 %v9065, %v9590
      %v9775 = vadd.f32 %v9066, %v9595
      %v9776 = vadd.f32 %v9067, %v9598
      %v9777 = vadd.f32 %v9068, %v9603
      %v9778 = vadd.f32 %v9069, %v9606
      %v9779 = vadd.f32 %v9070, %v9611
      %v9780 = vadd.f32 %v9071, %v9614
      %v9781 = vadd.f32 %v9072, %v9619
      %v9782 = vadd.f32 %v9073, %v9622
      %v9783 = vadd.f32 %v9074, %v9627
      %v9784 = vadd.f32 %v9075, %v9630
      %v9785 = vadd.f32 %v9076, %v9635
      %v9786 = vadd.f32 %v9077, %v9638
      %v9787 = vadd.f32 %v9078, %v9643
      %v9788 = vadd.f32 %v9079, %v9646
      %v9789 = vadd.f32 %v9080, %v9651
      %v9790 = vadd.f32 %v9081, %v9654
      %v9791 = vadd.f32 %v9082, %v9659
      %v9792 = vadd.f32 %v9083, %v9662
      %v9793 = vld [vmem:[%s2] sm:$0x1]
      %v9795 = vlaneseq
      %v9796 = vshrl.u32 %v9795, 7
      %v9797 = vsub.s32 0, %v9796
      %v9798 = vrot.slane %v9793, %v9797
      %v9800 = vadd.f32 %v9665, %v9798
      %v9801 = vadd.f32 %v9666, %v9798
      %v9802 = vadd.f32 %v9667, %v9798
      %v9803 = vadd.f32 %v9668, %v9798
      %v9804 = vadd.f32 %v9669, %v9798
      %v9805 = vadd.f32 %v9670, %v9798
      %v9806 = vadd.f32 %v9671, %v9798
      %v9807 = vadd.f32 %v9672, %v9798
      %v9808 = vadd.f32 %v9673, %v9798
      %v9809 = vadd.f32 %v9674, %v9798
      %v9810 = vadd.f32 %v9675, %v9798
      %v9811 = vadd.f32 %v9676, %v9798
      %v9812 = vadd.f32 %v9677, %v9798
      %v9813 = vadd.f32 %v9678, %v9798
      %v9814 = vadd.f32 %v9679, %v9798
      %v9815 = vadd.f32 %v9680, %v9798
      %v9816 = vadd.f32 %v9681, %v9798
      %v9817 = vadd.f32 %v9682, %v9798
      %v9818 = vadd.f32 %v9683, %v9798
      %v9819 = vadd.f32 %v9684, %v9798
      %v9820 = vadd.f32 %v9685, %v9798
      %v9821 = vadd.f32 %v9686, %v9798
      %v9822 = vadd.f32 %v9687, %v9798
      %v9823 = vadd.f32 %v9688, %v9798
      %v9824 = vadd.f32 %v9689, %v9798
      %v9825 = vadd.f32 %v9690, %v9798
      %v9826 = vadd.f32 %v9691, %v9798
      %v9827 = vadd.f32 %v9692, %v9798
      %v9828 = vadd.f32 %v9693, %v9798
      %v9829 = vadd.f32 %v9694, %v9798
      %v9830 = vadd.f32 %v9695, %v9798
      %v9831 = vadd.f32 %v9696, %v9798
      %v9832 = vadd.f32 %v9697, %v9798
      %v9833 = vadd.f32 %v9698, %v9798
      %v9834 = vadd.f32 %v9699, %v9798
      %v9835 = vadd.f32 %v9700, %v9798
      %v9836 = vadd.f32 %v9701, %v9798
      %v9837 = vadd.f32 %v9702, %v9798
      %v9838 = vadd.f32 %v9703, %v9798
      %v9839 = vadd.f32 %v9704, %v9798
      %v9840 = vadd.f32 %v9705, %v9798
      %v9841 = vadd.f32 %v9706, %v9798
      %v9842 = vadd.f32 %v9707, %v9798
      %v9843 = vadd.f32 %v9708, %v9798
      %v9844 = vadd.f32 %v9709, %v9798
      %v9845 = vadd.f32 %v9710, %v9798
      %v9846 = vadd.f32 %v9711, %v9798
      %v9847 = vadd.f32 %v9712, %v9798
      %v9848 = vadd.f32 %v9713, %v9798
      %v9849 = vadd.f32 %v9714, %v9798
      %v9850 = vadd.f32 %v9715, %v9798
      %v9851 = vadd.f32 %v9716, %v9798
      %v9852 = vadd.f32 %v9717, %v9798
      %v9853 = vadd.f32 %v9718, %v9798
      %v9854 = vadd.f32 %v9719, %v9798
      %v9855 = vadd.f32 %v9720, %v9798
      %v9856 = vadd.f32 %v9721, %v9798
      %v9857 = vadd.f32 %v9722, %v9798
      %v9858 = vadd.f32 %v9723, %v9798
      %v9859 = vadd.f32 %v9724, %v9798
      %v9860 = vadd.f32 %v9725, %v9798
      %v9861 = vadd.f32 %v9726, %v9798
      %v9862 = vadd.f32 %v9727, %v9798
      %v9863 = vadd.f32 %v9728, %v9798
      %v9864 = vadd.f32 %v9729, %v9798
      %v9865 = vadd.f32 %v9730, %v9798
      %v9866 = vadd.f32 %v9731, %v9798
      %v9867 = vadd.f32 %v9732, %v9798
      %v9868 = vadd.f32 %v9733, %v9798
      %v9869 = vadd.f32 %v9734, %v9798
      %v9870 = vadd.f32 %v9735, %v9798
      %v9871 = vadd.f32 %v9736, %v9798
      %v9872 = vadd.f32 %v9737, %v9798
      %v9873 = vadd.f32 %v9738, %v9798
      %v9874 = vadd.f32 %v9739, %v9798
      %v9875 = vadd.f32 %v9740, %v9798
      %v9876 = vadd.f32 %v9741, %v9798
      %v9877 = vadd.f32 %v9742, %v9798
      %v9878 = vadd.f32 %v9743, %v9798
      %v9879 = vadd.f32 %v9744, %v9798
      %v9880 = vadd.f32 %v9745, %v9798
      %v9881 = vadd.f32 %v9746, %v9798
      %v9882 = vadd.f32 %v9747, %v9798
      %v9883 = vadd.f32 %v9748, %v9798
      %v9884 = vadd.f32 %v9749, %v9798
      %v9885 = vadd.f32 %v9750, %v9798
      %v9886 = vadd.f32 %v9751, %v9798
      %v9887 = vadd.f32 %v9752, %v9798
      %v9888 = vadd.f32 %v9753, %v9798
      %v9889 = vadd.f32 %v9754, %v9798
      %v9890 = vadd.f32 %v9755, %v9798
      %v9891 = vadd.f32 %v9756, %v9798
      %v9892 = vadd.f32 %v9757, %v9798
      %v9893 = vadd.f32 %v9758, %v9798
      %v9894 = vadd.f32 %v9759, %v9798
      %v9895 = vadd.f32 %v9760, %v9798
      %v9896 = vadd.f32 %v9761, %v9798
      %v9897 = vadd.f32 %v9762, %v9798
      %v9898 = vadd.f32 %v9763, %v9798
      %v9899 = vadd.f32 %v9764, %v9798
      %v9900 = vadd.f32 %v9765, %v9798
      %v9901 = vadd.f32 %v9766, %v9798
      %v9902 = vadd.f32 %v9767, %v9798
      %v9903 = vadd.f32 %v9768, %v9798
      %v9904 = vadd.f32 %v9769, %v9798
      %v9905 = vadd.f32 %v9770, %v9798
      %v9906 = vadd.f32 %v9771, %v9798
      %v9907 = vadd.f32 %v9772, %v9798
      %v9908 = vadd.f32 %v9773, %v9798
      %v9909 = vadd.f32 %v9774, %v9798
      %v9910 = vadd.f32 %v9775, %v9798
      %v9911 = vadd.f32 %v9776, %v9798
      %v9912 = vadd.f32 %v9777, %v9798
      %v9913 = vadd.f32 %v9778, %v9798
      %v9914 = vadd.f32 %v9779, %v9798
      %v9915 = vadd.f32 %v9780, %v9798
      %v9916 = vadd.f32 %v9781, %v9798
      %v9917 = vadd.f32 %v9782, %v9798
      %v9918 = vadd.f32 %v9783, %v9798
      %v9919 = vadd.f32 %v9784, %v9798
      %v9920 = vadd.f32 %v9785, %v9798
      %v9921 = vadd.f32 %v9786, %v9798
      %v9922 = vadd.f32 %v9787, %v9798
      %v9923 = vadd.f32 %v9788, %v9798
      %v9924 = vadd.f32 %v9789, %v9798
      %v9925 = vadd.f32 %v9790, %v9798
      %v9926 = vadd.f32 %v9791, %v9798
      %v9927 = vadd.f32 %v9792, %v9798
      %9928 = vxpose.xlu0.b32.start [1/16] %v9800, 128
      %9929 = vxpose.xlu0.b32.cont [2/16] %v9801, 128
      %9930 = vxpose.xlu0.b32.cont [3/16] %v9802, 128
      %9931 = vxpose.xlu0.b32.cont [4/16] %v9803, 128
      %9932 = vxpose.xlu0.b32.cont [5/16] %v9804, 128
      %9933 = vxpose.xlu0.b32.cont [6/16] %v9805, 128
      %9934 = vxpose.xlu0.b32.cont [7/16] %v9806, 128
      %9935 = vxpose.xlu0.b32.cont [8/16] %v9807, 128
      %9936 = vxpose.xlu0.b32.cont [9/16] %v9808, 128
      %9937 = vxpose.xlu0.b32.cont [10/16] %v9809, 128
      %9938 = vxpose.xlu0.b32.cont [11/16] %v9810, 128
      %9939 = vxpose.xlu0.b32.cont [12/16] %v9811, 128
      %9940 = vxpose.xlu0.b32.cont [13/16] %v9812, 128
      %9941 = vxpose.xlu0.b32.cont [14/16] %v9813, 128
      %9942 = vxpose.xlu0.b32.cont [15/16] %v9814, 128
      %9943 = vxpose.xlu0.b32.end [16/16] %v9815, 128
      %v9944 = vpop.trf.xlu0
      %v9945 = vpop.trf.xlu0
      %v9946 = vpop.trf.xlu0
      %v9947 = vpop.trf.xlu0
      %v9948 = vpop.trf.xlu0
      %v9949 = vpop.trf.xlu0
      %v9950 = vpop.trf.xlu0
      %v9951 = vpop.trf.xlu0
      %v9952 = vpop.trf.xlu0
      %v9953 = vpop.trf.xlu0
      %v9954 = vpop.trf.xlu0
      %v9955 = vpop.trf.xlu0
      %v9956 = vpop.trf.xlu0
      %v9957 = vpop.trf.xlu0
      %v9958 = vpop.trf.xlu0
      %v9959 = vpop.trf.xlu0
      %9960 = vxpose.xlu0.b32.start [1/16] %v9816, 128
      %9961 = vxpose.xlu0.b32.cont [2/16] %v9817, 128
      %9962 = vxpose.xlu0.b32.cont [3/16] %v9818, 128
      %9963 = vxpose.xlu0.b32.cont [4/16] %v9819, 128
      %9964 = vxpose.xlu0.b32.cont [5/16] %v9820, 128
      %9965 = vxpose.xlu0.b32.cont [6/16] %v9821, 128
      %9966 = vxpose.xlu0.b32.cont [7/16] %v9822, 128
      %9967 = vxpose.xlu0.b32.cont [8/16] %v9823, 128
      %9968 = vxpose.xlu0.b32.cont [9/16] %v9824, 128
      %9969 = vxpose.xlu0.b32.cont [10/16] %v9825, 128
      %9970 = vxpose.xlu0.b32.cont [11/16] %v9826, 128
      %9971 = vxpose.xlu0.b32.cont [12/16] %v9827, 128
      %9972 = vxpose.xlu0.b32.cont [13/16] %v9828, 128
      %9973 = vxpose.xlu0.b32.cont [14/16] %v9829, 128
      %9974 = vxpose.xlu0.b32.cont [15/16] %v9830, 128
      %9975 = vxpose.xlu0.b32.end [16/16] %v9831, 128
      %v9976 = vpop.trf.xlu0
      %v9977 = vpop.trf.xlu0
      %v9978 = vpop.trf.xlu0
      %v9979 = vpop.trf.xlu0
      %v9980 = vpop.trf.xlu0
      %v9981 = vpop.trf.xlu0
      %v9982 = vpop.trf.xlu0
      %v9983 = vpop.trf.xlu0
      %v9984 = vpop.trf.xlu0
      %v9985 = vpop.trf.xlu0
      %v9986 = vpop.trf.xlu0
      %v9987 = vpop.trf.xlu0
      %v9988 = vpop.trf.xlu0
      %v9989 = vpop.trf.xlu0
      %v9990 = vpop.trf.xlu0
      %v9991 = vpop.trf.xlu0
      %9992 = vxpose.xlu0.b32.start [1/16] %v9832, 128
      %9993 = vxpose.xlu0.b32.cont [2/16] %v9833, 128
      %9994 = vxpose.xlu0.b32.cont [3/16] %v9834, 128
      %9995 = vxpose.xlu0.b32.cont [4/16] %v9835, 128
      %9996 = vxpose.xlu0.b32.cont [5/16] %v9836, 128
      %9997 = vxpose.xlu0.b32.cont [6/16] %v9837, 128
      %9998 = vxpose.xlu0.b32.cont [7/16] %v9838, 128
      %9999 = vxpose.xlu0.b32.cont [8/16] %v9839, 128
      %10000 = vxpose.xlu0.b32.cont [9/16] %v9840, 128
      %10001 = vxpose.xlu0.b32.cont [10/16] %v9841, 128
      %10002 = vxpose.xlu0.b32.cont [11/16] %v9842, 128
      %10003 = vxpose.xlu0.b32.cont [12/16] %v9843, 128
      %10004 = vxpose.xlu0.b32.cont [13/16] %v9844, 128
      %10005 = vxpose.xlu0.b32.cont [14/16] %v9845, 128
      %10006 = vxpose.xlu0.b32.cont [15/16] %v9846, 128
      %10007 = vxpose.xlu0.b32.end [16/16] %v9847, 128
      %v10008 = vpop.trf.xlu0
      %v10009 = vpop.trf.xlu0
      %v10010 = vpop.trf.xlu0
      %v10011 = vpop.trf.xlu0
      %v10012 = vpop.trf.xlu0
      %v10013 = vpop.trf.xlu0
      %v10014 = vpop.trf.xlu0
      %v10015 = vpop.trf.xlu0
      %v10016 = vpop.trf.xlu0
      %v10017 = vpop.trf.xlu0
      %v10018 = vpop.trf.xlu0
      %v10019 = vpop.trf.xlu0
      %v10020 = vpop.trf.xlu0
      %v10021 = vpop.trf.xlu0
      %v10022 = vpop.trf.xlu0
      %v10023 = vpop.trf.xlu0
      %10024 = vxpose.xlu0.b32.start [1/16] %v9848, 128
      %10025 = vxpose.xlu0.b32.cont [2/16] %v9849, 128
      %10026 = vxpose.xlu0.b32.cont [3/16] %v9850, 128
      %10027 = vxpose.xlu0.b32.cont [4/16] %v9851, 128
      %10028 = vxpose.xlu0.b32.cont [5/16] %v9852, 128
      %10029 = vxpose.xlu0.b32.cont [6/16] %v9853, 128
      %10030 = vxpose.xlu0.b32.cont [7/16] %v9854, 128
      %10031 = vxpose.xlu0.b32.cont [8/16] %v9855, 128
      %10032 = vxpose.xlu0.b32.cont [9/16] %v9856, 128
      %10033 = vxpose.xlu0.b32.cont [10/16] %v9857, 128
      %10034 = vxpose.xlu0.b32.cont [11/16] %v9858, 128
      %10035 = vxpose.xlu0.b32.cont [12/16] %v9859, 128
      %10036 = vxpose.xlu0.b32.cont [13/16] %v9860, 128
      %10037 = vxpose.xlu0.b32.cont [14/16] %v9861, 128
      %10038 = vxpose.xlu0.b32.cont [15/16] %v9862, 128
      %10039 = vxpose.xlu0.b32.end [16/16] %v9863, 128
      %v10040 = vpop.trf.xlu0
      %v10041 = vpop.trf.xlu0
      %v10042 = vpop.trf.xlu0
      %v10043 = vpop.trf.xlu0
      %v10044 = vpop.trf.xlu0
      %v10045 = vpop.trf.xlu0
      %v10046 = vpop.trf.xlu0
      %v10047 = vpop.trf.xlu0
      %v10048 = vpop.trf.xlu0
      %v10049 = vpop.trf.xlu0
      %v10050 = vpop.trf.xlu0
      %v10051 = vpop.trf.xlu0
      %v10052 = vpop.trf.xlu0
      %v10053 = vpop.trf.xlu0
      %v10054 = vpop.trf.xlu0
      %v10055 = vpop.trf.xlu0
      %10056 = vxpose.xlu0.b32.start [1/16] %v9864, 128
      %10057 = vxpose.xlu0.b32.cont [2/16] %v9865, 128
      %10058 = vxpose.xlu0.b32.cont [3/16] %v9866, 128
      %10059 = vxpose.xlu0.b32.cont [4/16] %v9867, 128
      %10060 = vxpose.xlu0.b32.cont [5/16] %v9868, 128
      %10061 = vxpose.xlu0.b32.cont [6/16] %v9869, 128
      %10062 = vxpose.xlu0.b32.cont [7/16] %v9870, 128
      %10063 = vxpose.xlu0.b32.cont [8/16] %v9871, 128
      %10064 = vxpose.xlu0.b32.cont [9/16] %v9872, 128
      %10065 = vxpose.xlu0.b32.cont [10/16] %v9873, 128
      %10066 = vxpose.xlu0.b32.cont [11/16] %v9874, 128
      %10067 = vxpose.xlu0.b32.cont [12/16] %v9875, 128
      %10068 = vxpose.xlu0.b32.cont [13/16] %v9876, 128
      %10069 = vxpose.xlu0.b32.cont [14/16] %v9877, 128
      %10070 = vxpose.xlu0.b32.cont [15/16] %v9878, 128
      %10071 = vxpose.xlu0.b32.end [16/16] %v9879, 128
      %v10072 = vpop.trf.xlu0
      %v10073 = vpop.trf.xlu0
      %v10074 = vpop.trf.xlu0
      %v10075 = vpop.trf.xlu0
      %v10076 = vpop.trf.xlu0
      %v10077 = vpop.trf.xlu0
      %v10078 = vpop.trf.xlu0
      %v10079 = vpop.trf.xlu0
      %v10080 = vpop.trf.xlu0
      %v10081 = vpop.trf.xlu0
      %v10082 = vpop.trf.xlu0
      %v10083 = vpop.trf.xlu0
      %v10084 = vpop.trf.xlu0
      %v10085 = vpop.trf.xlu0
      %v10086 = vpop.trf.xlu0
      %v10087 = vpop.trf.xlu0
      %10088 = vxpose.xlu0.b32.start [1/16] %v9880, 128
      %10089 = vxpose.xlu0.b32.cont [2/16] %v9881, 128
      %10090 = vxpose.xlu0.b32.cont [3/16] %v9882, 128
      %10091 = vxpose.xlu0.b32.cont [4/16] %v9883, 128
      %10092 = vxpose.xlu0.b32.cont [5/16] %v9884, 128
      %10093 = vxpose.xlu0.b32.cont [6/16] %v9885, 128
      %10094 = vxpose.xlu0.b32.cont [7/16] %v9886, 128
      %10095 = vxpose.xlu0.b32.cont [8/16] %v9887, 128
      %10096 = vxpose.xlu0.b32.cont [9/16] %v9888, 128
      %10097 = vxpose.xlu0.b32.cont [10/16] %v9889, 128
      %10098 = vxpose.xlu0.b32.cont [11/16] %v9890, 128
      %10099 = vxpose.xlu0.b32.cont [12/16] %v9891, 128
      %10100 = vxpose.xlu0.b32.cont [13/16] %v9892, 128
      %10101 = vxpose.xlu0.b32.cont [14/16] %v9893, 128
      %10102 = vxpose.xlu0.b32.cont [15/16] %v9894, 128
      %10103 = vxpose.xlu0.b32.end [16/16] %v9895, 128
      %v10104 = vpop.trf.xlu0
      %v10105 = vpop.trf.xlu0
      %v10106 = vpop.trf.xlu0
      %v10107 = vpop.trf.xlu0
      %v10108 = vpop.trf.xlu0
      %v10109 = vpop.trf.xlu0
      %v10110 = vpop.trf.xlu0
      %v10111 = vpop.trf.xlu0
      %v10112 = vpop.trf.xlu0
      %v10113 = vpop.trf.xlu0
      %v10114 = vpop.trf.xlu0
      %v10115 = vpop.trf.xlu0
      %v10116 = vpop.trf.xlu0
      %v10117 = vpop.trf.xlu0
      %v10118 = vpop.trf.xlu0
      %v10119 = vpop.trf.xlu0
      %10120 = vxpose.xlu0.b32.start [1/16] %v9896, 128
      %10121 = vxpose.xlu0.b32.cont [2/16] %v9897, 128
      %10122 = vxpose.xlu0.b32.cont [3/16] %v9898, 128
      %10123 = vxpose.xlu0.b32.cont [4/16] %v9899, 128
      %10124 = vxpose.xlu0.b32.cont [5/16] %v9900, 128
      %10125 = vxpose.xlu0.b32.cont [6/16] %v9901, 128
      %10126 = vxpose.xlu0.b32.cont [7/16] %v9902, 128
      %10127 = vxpose.xlu0.b32.cont [8/16] %v9903, 128
      %10128 = vxpose.xlu0.b32.cont [9/16] %v9904, 128
      %10129 = vxpose.xlu0.b32.cont [10/16] %v9905, 128
      %10130 = vxpose.xlu0.b32.cont [11/16] %v9906, 128
      %10131 = vxpose.xlu0.b32.cont [12/16] %v9907, 128
      %10132 = vxpose.xlu0.b32.cont [13/16] %v9908, 128
      %10133 = vxpose.xlu0.b32.cont [14/16] %v9909, 128
      %10134 = vxpose.xlu0.b32.cont [15/16] %v9910, 128
      %10135 = vxpose.xlu0.b32.end [16/16] %v9911, 128
      %v10136 = vpop.trf.xlu0
      %v10137 = vpop.trf.xlu0
      %v10138 = vpop.trf.xlu0
      %v10139 = vpop.trf.xlu0
      %v10140 = vpop.trf.xlu0
      %v10141 = vpop.trf.xlu0
      %v10142 = vpop.trf.xlu0
      %v10143 = vpop.trf.xlu0
      %v10144 = vpop.trf.xlu0
      %v10145 = vpop.trf.xlu0
      %v10146 = vpop.trf.xlu0
      %v10147 = vpop.trf.xlu0
      %v10148 = vpop.trf.xlu0
      %v10149 = vpop.trf.xlu0
      %v10150 = vpop.trf.xlu0
      %v10151 = vpop.trf.xlu0
      %10152 = vxpose.xlu0.b32.start [1/16] %v9912, 128
      %10153 = vxpose.xlu0.b32.cont [2/16] %v9913, 128
      %10154 = vxpose.xlu0.b32.cont [3/16] %v9914, 128
      %10155 = vxpose.xlu0.b32.cont [4/16] %v9915, 128
      %10156 = vxpose.xlu0.b32.cont [5/16] %v9916, 128
      %10157 = vxpose.xlu0.b32.cont [6/16] %v9917, 128
      %10158 = vxpose.xlu0.b32.cont [7/16] %v9918, 128
      %10159 = vxpose.xlu0.b32.cont [8/16] %v9919, 128
      %10160 = vxpose.xlu0.b32.cont [9/16] %v9920, 128
      %10161 = vxpose.xlu0.b32.cont [10/16] %v9921, 128
      %10162 = vxpose.xlu0.b32.cont [11/16] %v9922, 128
      %10163 = vxpose.xlu0.b32.cont [12/16] %v9923, 128
      %10164 = vxpose.xlu0.b32.cont [13/16] %v9924, 128
      %10165 = vxpose.xlu0.b32.cont [14/16] %v9925, 128
      %10166 = vxpose.xlu0.b32.cont [15/16] %v9926, 128
      %10167 = vxpose.xlu0.b32.end [16/16] %v9927, 128
      %v10168 = vpop.trf.xlu0
      %v10169 = vpop.trf.xlu0
      %v10170 = vpop.trf.xlu0
      %v10171 = vpop.trf.xlu0
      %v10172 = vpop.trf.xlu0
      %v10173 = vpop.trf.xlu0
      %v10174 = vpop.trf.xlu0
      %v10175 = vpop.trf.xlu0
      %v10176 = vpop.trf.xlu0
      %v10177 = vpop.trf.xlu0
      %v10178 = vpop.trf.xlu0
      %v10179 = vpop.trf.xlu0
      %v10180 = vpop.trf.xlu0
      %v10181 = vpop.trf.xlu0
      %v10182 = vpop.trf.xlu0
      %v10183 = vpop.trf.xlu0
      %v10192 = vcombine.low %v9944, %v9976
      %v10193 = vcombine.low %v10008, %v10040
      %v10194 = vcombine.low %v10072, %v10104
      %v10195 = vcombine.low %v10136, %v10168
      %10200 = vst [vmem:[%s192] sm:$0x77] %v10192
      %10201 = vst [vmem:[%s192 + $0x8] sm:$0x77] %v10193
      %10202 = vst [vmem:[%s192 + $0x10] sm:$0x77] %v10194
      %10203 = vst [vmem:[%s192 + $0x18] sm:$0x77] %v10195
      %s10204 = smul.u32 8, %s19
      %p10205 = scmp.lt.s32.totalorder %s18, 1
      %s10206 = scalar_select %p10205, %s18, 1
      %p10207 = scmp.lt.s32.totalorder %s10204, 7
      %s10208 = scalar_select %p10207, %s10204, 7
      %s10209 = smul.addr %s10206, 8
      %s10210 = sadd.s32 %s10208, %s10209
      %s10211 = smul.addr %s10210, 4
      %s10212 = scalar_lea.vmem %s3, %s10211
      // Predicated region
      $region33: #{_res_decoder_impl.5} parent=31 // pred_check
        %p10213 = pneg %p114
      $region34: #{_res_decoder_impl.5} parent=31 // pred_check_branch
        %10215 = sbr.rel (%p10213) target = $region36
      $region35: #{_res_decoder_impl.5} parent=31 // pred_region
        %s10216 = smul.u32 8, %s19
      $region36: #{_res_decoder_impl.5} parent=31 // pred_fallthru
        _
    $region32: #{_res_decoder_impl.5} parent=5 // pred_fallthru
      _
    %p10217 = scmp.le.s32.totalorder 2, %s9
    // Predicated region
    $region37: #{_res_decoder_impl.5} parent=5 // pred_check
      %p10218 = pneg %p10217
    $region38: #{_res_decoder_impl.5} parent=5 // pred_check_branch
      %10220 = sbr.rel (%p10218) target = $region40
    $region39: #{_res_decoder_impl.5} parent=5 // pred_region
      %s10221 = ssub.s32 %s9, 2
      // Predicated region
      $region41: #{_res_decoder_impl.5} parent=39 // pred_check
        %p10222 = pneg %p120
      $region42: #{_res_decoder_impl.5} parent=39 // pred_check_branch
        %10224 = sbr.rel (%p10222) target = $region44
      $region43: #{_res_decoder_impl.5} parent=39 // pred_region
        %s10225 = smul.u32 8, %s21
        %p10226 = scmp.lt.s32.totalorder %s20, 1
        %s10227 = scalar_select %p10226, %s20, 1
        %p10228 = scmp.lt.s32.totalorder %s10225, 7
        %s10229 = scalar_select %p10228, %s10225, 7
        %s10230 = smul.addr %s10227, 8
        %s10231 = sadd.s32 %s10229, %s10230
        %s10232 = smul.addr %s10231, 4
        %s10233 = scalar_lea.vmem %s3, %s10232
      $region44: #{_res_decoder_impl.5} parent=39 // pred_fallthru
        _
    $region40: #{_res_decoder_impl.5} parent=5 // pred_fallthru
      _
  $region6: #{_res_decoder_impl.5} parent=0 // loop_footer
    %s13 = sadd.s32 1, %s9
  $region7: #{_res_decoder_impl.5} parent=0 // loop_footer_branch
    %8 = sbr.rel target = $region3
  $region8: #{_res_decoder_impl.5} parent=0 // loop_exit
    _

</llo_original>
